<compile_context>
chip_gen: v7x
topology: tpu7x:2x2x1
jax: 0.10.0
libtpu: 0.0.40
codegen_flags: <defaults>
</compile_context>

<pallas_src>
import numpy as np
import jax
import jax.numpy as jnp
from jax import lax
from jax.experimental import pallas as pl
from jax.experimental.pallas import tpu as pltpu

H = W = 9            # spatial size implied by linear1 = Linear(64*9*9 + 3, 256)
P = H * W            # 81 spatial positions
C_IN = 4
C1 = 32
C2 = 64
N_EXTRA = 3
N_H1 = 256
N_H2 = 64
F_IMG = C2 * P       # 5184
VMEM_LIMIT = 48 * 1024 * 1024   # explicit (v5e default scoped VMEM is 16 MiB)


# --------------------------------------------------------------------------
# Pallas kernels
# --------------------------------------------------------------------------
def _shift_cols(v, off):
    """Circular column shift: out[:, j] = v[:, (j + off) mod n].

    Static lane slices + concat (== pltpu.roll(v, -off, axis=1)); runs on the
    VPU/XLU copy path, so the 3x3 taps never touch the MXU.  Wrap-around
    columns are killed by the boundary mask afterwards.
    """
    if off == 0:
        return v
    n = v.shape[1]
    s = off % n
    return jnp.concatenate([v[:, s:], v[:, :s]], axis=1)


def _conv_stack_kernel(x_ref, mask_ref, w1_ref, b1_ref, w2_ref, b2_ref, h2_ref):
    """Fused conv1+ReLU+conv2+ReLU on one batch tile, all in VMEM.

    x_ref:    (4, N)   board tile, channels on rows, column = b*81 + (h*9+w).
    mask_ref: (9, N)   per-tap 0/1 boundary masks (bf16).
    w*_ref:   (Cout, 9*Cin) stacked-tap weights (bf16); b*_ref: (Cout, 1) f32.
    h2_ref:   (64, N)  conv2 output tile (bf16, lane-dense).
    """
    f32 = jnp.float32
    bf16 = jnp.bfloat16
    masks = mask_ref[...]                                   # (9, N) bf16

    def conv3x3(act, w_ref, b_ref):
        # act: (Cin, N) bf16 -> (Cout, N) f32
        pieces = []
        for t in range(9):
            dy, dx = divmod(t, 3)
            off = (dy - 1) * W + (dx - 1)
            if off == 0:                                    # center tap: mask == 1
                pieces.append(act)
            else:
                pieces.append(_shift_cols(act, off) * masks[t:t + 1, :])
        stacked = jnp.concatenate(pieces, axis=0)           # (9*Cin, N) in-VMEM im2col
        z = jnp.dot(w_ref[...], stacked, preferred_element_type=f32)
        return jnp.maximum(z + b_ref[...], 0.0)

    h1 = conv3x3(x_ref[...], w1_ref, b1_ref).astype(bf16)   # (32, N)
    h2 = conv3x3(h1, w2_ref, b2_ref)                        # (64, N) f32
    h2_ref[...] = h2.astype(h2_ref.dtype)


def _mlp_head_kernel(feat_ref, wnt_ref, w1i_ref, w1w_ref, b1_ref,
                     w2_ref, b2_ref, w3_ref, b3_ref, o_ref):
    """Fused MLP head: split lin1 (img + walls) + ReLU -> lin2 + ReLU -> out."""
    f32 = jnp.float32
    bf16 = jnp.bfloat16
    h = jnp.dot(feat_ref[...], w1i_ref[...], preferred_element_type=f32)
    h = h + jnp.dot(wnt_ref[...].astype(bf16), w1w_ref[...],
                    preferred_element_type=f32)
    h = jnp.maximum(h + b1_ref[...], 0.0).astype(bf16)
    h = jnp.dot(h, w2_ref[...], preferred_element_type=f32)
    h = jnp.maximum(h + b2_ref[...], 0.0).astype(bf16)
    o_ref[...] = (jnp.dot(h, w3_ref[...], preferred_element_type=f32)
                  + b3_ref[...]).astype(o_ref.dtype)


# --------------------------------------------------------------------------
# One-time parameter preparation (hoisted out of the per-call path)
# --------------------------------------------------------------------------
def _boundary_masks():
    """mask[t, p] = 1 iff the 3x3 tap t has an in-bounds source for position p."""
    m = np.zeros((9, P), np.float32)
    for dy in range(3):
        for dx in range(3):
            t = dy * 3 + dx
            for h in range(H):
                for w in range(W):
                    if 0 <= h + dy - 1 < H and 0 <= w + dx - 1 < W:
                        m[t, h * W + w] = 1.0
    return m


def prepare_params(params):
    """Precompute kernel-ready bf16 weights: stacked-tap conv weights and all
    MLP transposes (done once, not per forward call)."""
    bf16, f32 = jnp.bfloat16, jnp.float32
    # stacked-tap weights: w[o, t*Cin + c] = conv_w[o, c, dy, dx], t = dy*3+dx
    w1s = jnp.transpose(params["conv1_w"], (0, 2, 3, 1)).reshape(C1, 9 * C_IN)
    w2s = jnp.transpose(params["conv2_w"], (0, 2, 3, 1)).reshape(C2, 9 * C1)
    lin1 = params["lin1_w"]                                   # (256, 5187)
    return {
        "mask_base": jnp.asarray(_boundary_masks()),          # (9, 81) f32
        "w1s": w1s.astype(bf16),
        "b1c": params["conv1_b"].reshape(C1, 1).astype(f32),
        "w2s": w2s.astype(bf16),
        "b2c": params["conv2_b"].reshape(C2, 1).astype(f32),
        "w1_img": lin1[:, :F_IMG].T.astype(bf16),             # (5184, 256), torch order
        "w1_wnt": lin1[:, F_IMG:].T.astype(bf16),              # (3, 256)
        "bl1": params["lin1_b"].reshape(1, N_H1).astype(f32),
        "w2l": params["lin2_w"].T.astype(bf16),                # (256, 64)
        "bl2": params["lin2_b"].reshape(1, N_H2).astype(f32),
        "w3": params["out_w"].T.astype(bf16),                  # (64, 1)
        "b3": params["out_b"].reshape(1, 1).astype(f32),
    }


# --------------------------------------------------------------------------
# pallas_call wrappers (batch-tiled grids, VMEM-resident bf16 weights)
# --------------------------------------------------------------------------
def _batch_tiling(b):
    """(tile_batch, padded_batch): minimal padding (multiple of 8, single tile)
    for b <= 128; multiples of 128 above (lane-dense layout needs 128 | tile)."""
    if b <= 128:
        b_pad = ((b + 7) // 8) * 8
        return b_pad, b_pad
    b_pad = ((b + 127) // 128) * 128
    return 128, b_pad


def _conv_stack(x2d, mask, prep, tb, b_pad):
    tilew = tb * P
    return pl.pallas_call(
        _conv_stack_kernel,
        out_shape=jax.ShapeDtypeStruct((C2, b_pad * P), jnp.bfloat16),
        grid=(b_pad // tb,),
        in_specs=[
            pl.BlockSpec((C_IN, tilew), lambda i: (0, i)),
            pl.BlockSpec((9, tilew), lambda i: (0, 0)),
            pl.BlockSpec((C1, 9 * C_IN), lambda i: (0, 0)),
            pl.BlockSpec((C1, 1), lambda i: (0, 0)),
            pl.BlockSpec((C2, 9 * C1), lambda i: (0, 0)),
            pl.BlockSpec((C2, 1), lambda i: (0, 0)),
        ],
        out_specs=pl.BlockSpec((C2, tilew), lambda i: (0, i)),
        compiler_params=pltpu.CompilerParams(
            dimension_semantics=("parallel",),      # pltpu.CORE_PARALLEL on v7x
            vmem_limit_bytes=VMEM_LIMIT),
    )(x2d, mask, prep["w1s"], prep["b1c"], prep["w2s"], prep["b2c"])


def _mlp_head(feat, wnt, prep, tb, b_pad):
    return pl.pallas_call(
        _mlp_head_kernel,
        out_shape=jax.ShapeDtypeStruct((b_pad, 1), jnp.float32),
        grid=(b_pad // tb,),
        in_specs=[
            pl.BlockSpec((tb, F_IMG), lambda i: (i, 0)),
            pl.BlockSpec((tb, N_EXTRA), lambda i: (i, 0)),
            pl.BlockSpec((F_IMG, N_H1), lambda i: (0, 0)),
            pl.BlockSpec((N_EXTRA, N_H1), lambda i: (0, 0)),
            pl.BlockSpec((1, N_H1), lambda i: (0, 0)),
            pl.BlockSpec((N_H1, N_H2), lambda i: (0, 0)),
            pl.BlockSpec((1, N_H2), lambda i: (0, 0)),
            pl.BlockSpec((N_H2, 1), lambda i: (0, 0)),
            pl.BlockSpec((1, 1), lambda i: (0, 0)),
        ],
        out_specs=pl.BlockSpec((tb, 1), lambda i: (i, 0)),
        compiler_params=pltpu.CompilerParams(
            dimension_semantics=("parallel",),
            vmem_limit_bytes=VMEM_LIMIT),
    )(feat, wnt, prep["w1_img"], prep["w1_wnt"], prep["bl1"],
      prep["w2l"], prep["bl2"], prep["w3"], prep["b3"])


@jax.jit
def scoring_forward(prep, board, walls_n_turn):
    """board: (B, 4, 9, 9) NCHW, walls_n_turn: (B, 3) -> (B, 1)."""
    b = board.shape[0]
    tb, b_pad = _batch_tiling(b)
    x = board.reshape(b, C_IN, P).astype(jnp.bfloat16)
    wnt = walls_n_turn.astype(jnp.float32)
    if b_pad != b:
        x = jnp.pad(x, ((0, b_pad - b), (0, 0), (0, 0)))
        wnt = jnp.pad(wnt, ((0, b_pad - b), (0, 0)))
    # lane-dense conv layout: row = channel, column = b*81 + p
    x2d = jnp.transpose(x, (1, 0, 2)).reshape(C_IN, b_pad * P)
    # per-tap boundary masks, repeated per batch element in the tile
    mask = jnp.tile(prep["mask_base"], (1, tb)).astype(jnp.bfloat16)
    h2 = _conv_stack(x2d, mask, prep, tb, b_pad)              # (64, b_pad*81) bf16
    # cheap XLA transpose to torch-flatten order (feature = d*81 + p)
    feat = jnp.transpose(h2.reshape(C2, b_pad, P), (1, 0, 2)).reshape(b_pad, F_IMG)
    out = _mlp_head(feat, wnt, prep, tb, b_pad)               # (b_pad, 1) f32
    return out[:b]


# --------------------------------------------------------------------------
# Pure-JAX reference (mirrors the PyTorch forward exactly, at full precision)
# --------------------------------------------------------------------------
def reference_forward(params, board, walls_n_turn):
    with jax.default_matmul_precision("highest"):
        dn = ("NCHW", "OIHW", "NCHW")
        x = lax.conv_general_dilated(board, params["conv1_w"], (1, 1), "SAME",
                                     dimension_numbers=dn)
        x = jax.nn.relu(x + params["conv1_b"][None, :, None, None])
        x = lax.conv_general_dilated(x, params["conv2_w"], (1, 1), "SAME",
                                     dimension_numbers=dn)
        x = jax.nn.relu(x + params["conv2_b"][None, :, None, None])
        x = x.reshape(x.shape[0], -1)
        x = jnp.concatenate([x, walls_n_turn], axis=1)
        x = jax.nn.relu(x @ params["lin1_w"].T + params["lin1_b"])
        x = jax.nn.relu(x @ params["lin2_w"].T + params["lin2_b"])
        return x @ params["out_w"].T + params["out_b"]


# --------------------------------------------------------------------------
# Deterministic parameter init (PyTorch-style U(-1/sqrt(fan_in), 1/sqrt(fan_in)))
# --------------------------------------------------------------------------
def init_params(key):
    ks = jax.random.split(key, 10)

    def u(k, shape, fan_in):
        bound = 1.0 / np.sqrt(fan_in)
        return jax.random.uniform(k, shape, jnp.float32, -bound, bound)

    return {
        "conv1_w": u(ks[0], (C1, C_IN, 3, 3), C_IN * 9),
        "conv1_b": u(ks[1], (C1,), C_IN * 9),
        "conv2_w": u(ks[2], (C2, C1, 3, 3), C1 * 9),
        "conv2_b": u(ks[3], (C2,), C1 * 9),
        "lin1_w": u(ks[4], (N_H1, F_IMG + N_EXTRA), F_IMG + N_EXTRA),
        "lin1_b": u(ks[5], (N_H1,), F_IMG + N_EXTRA),
        "lin2_w": u(ks[6], (N_H2, N_H1), N_H1),
        "lin2_b": u(ks[7], (N_H2,), N_H1),
        "out_w": u(ks[8], (1, N_H2), N_H2),
        "out_b": u(ks[9], (1,), N_H2),
    }


if __name__ == "__main__":
    key = jax.random.PRNGKey(0)
    k_data, k_params = jax.random.split(key)

    params = init_params(k_params)
    prep = prepare_params(params)          # one-time weight prep (hoisted)

    # batch=2: tiny single-tile path; batch=96: minimal-pad single tile (no
    # longer padded to 128); batch=200: multi-tile gridded path (tb=128).
    for batch in (2, 96, 200):
        kb, kw = jax.random.split(jax.random.fold_in(k_data, batch))
        board = jax.random.normal(kb, (batch, C_IN, H, W), jnp.float32)
        walls_n_turn = jax.random.normal(kw, (batch, N_EXTRA), jnp.float32)

        out = jax.block_until_ready(scoring_forward(prep, board, walls_n_turn))
        assert out.shape == (batch, 1), out.shape

        ref = jax.block_until_ready(
            reference_forward(params, board, walls_n_turn))
        # bf16 MXU operands (f32 accumulation) vs the full-f32 reference.
        np.testing.assert_allclose(np.asarray(out), np.asarray(ref),
                                   rtol=5e-2, atol=3e-2)

    print("KERNEL_OK")
</pallas_src>

<mosaic_0001>
module attributes {stable_mosaic.version = 11 : i64} {
  func.func @_conv_stack_kernel(%arg0: i32, %arg1: memref<4x648xbf16, #tpu.memory_space<vmem>>, %arg2: memref<9x648xbf16, #tpu.memory_space<vmem>>, %arg3: memref<32x36xbf16, #tpu.memory_space<vmem>>, %arg4: memref<32x1xf32, #tpu.memory_space<vmem>>, %arg5: memref<64x288xbf16, #tpu.memory_space<vmem>>, %arg6: memref<64x1xf32, #tpu.memory_space<vmem>>, %arg7: memref<64x648xbf16, #tpu.memory_space<vmem>>) attributes {dimension_semantics = [#tpu.dimension_semantics<parallel>], iteration_bounds = array<i64: 1>, scalar_prefetch = 0 : i64, scratch_operands = 0 : i64, tpu.core_type = #tpu.core_type<tc>, window_params = [{transform_indices = @transform_0, window_bounds = array<i64: 4, 648>}, {pipeline_mode = #tpu.pipeline_mode<synchronous>, transform_indices = @transform_1, window_bounds = array<i64: 9, 648>}, {pipeline_mode = #tpu.pipeline_mode<synchronous>, transform_indices = @transform_2, window_bounds = array<i64: 32, 36>}, {pipeline_mode = #tpu.pipeline_mode<synchronous>, transform_indices = @transform_3, window_bounds = array<i64: 32, 1>}, {pipeline_mode = #tpu.pipeline_mode<synchronous>, transform_indices = @transform_4, window_bounds = array<i64: 64, 288>}, {pipeline_mode = #tpu.pipeline_mode<synchronous>, transform_indices = @transform_5, window_bounds = array<i64: 64, 1>}, {transform_indices = @transform_6, window_bounds = array<i64: 64, 648>}]} {
    %c0 = arith.constant 0 : index
    %c0_0 = arith.constant 0 : index
    %0 = vector.load %arg2[%c0, %c0_0] : memref<9x648xbf16, #tpu.memory_space<vmem>>, vector<9x648xbf16>
    %c0_1 = arith.constant 0 : index
    %c0_2 = arith.constant 0 : index
    %1 = vector.load %arg1[%c0_1, %c0_2] : memref<4x648xbf16, #tpu.memory_space<vmem>>, vector<4x648xbf16>
    %2 = vector.extract_strided_slice %1 {offsets = [0, 638], sizes = [4, 10], strides = [1, 1]} : vector<4x648xbf16> to vector<4x10xbf16>
    %3 = vector.extract_strided_slice %1 {offsets = [0, 0], sizes = [4, 638], strides = [1, 1]} : vector<4x648xbf16> to vector<4x638xbf16>
    %4 = tpu.concatenate %2, %3 in 1 : vector<4x10xbf16>, vector<4x638xbf16> -> vector<4x648xbf16>
    %5 = vector.extract_strided_slice %0 {offsets = [0, 0], sizes = [1, 648], strides = [1, 1]} : vector<9x648xbf16> to vector<1x648xbf16>
    %6 = vector.broadcast %5 : vector<1x648xbf16> to vector<4x648xbf16>
    %7 = arith.mulf %4, %6 : vector<4x648xbf16>
    %8 = vector.extract_strided_slice %1 {offsets = [0, 639], sizes = [4, 9], strides = [1, 1]} : vector<4x648xbf16> to vector<4x9xbf16>
    %9 = vector.extract_strided_slice %1 {offsets = [0, 0], sizes = [4, 639], strides = [1, 1]} : vector<4x648xbf16> to vector<4x639xbf16>
    %10 = tpu.concatenate %8, %9 in 1 : vector<4x9xbf16>, vector<4x639xbf16> -> vector<4x648xbf16>
    %11 = vector.extract_strided_slice %0 {offsets = [1, 0], sizes = [1, 648], strides = [1, 1]} : vector<9x648xbf16> to vector<1x648xbf16>
    %12 = vector.broadcast %11 : vector<1x648xbf16> to vector<4x648xbf16>
    %13 = arith.mulf %10, %12 : vector<4x648xbf16>
    %14 = vector.extract_strided_slice %1 {offsets = [0, 640], sizes = [4, 8], strides = [1, 1]} : vector<4x648xbf16> to vector<4x8xbf16>
    %15 = vector.extract_strided_slice %1 {offsets = [0, 0], sizes = [4, 640], strides = [1, 1]} : vector<4x648xbf16> to vector<4x640xbf16>
    %16 = tpu.concatenate %14, %15 in 1 : vector<4x8xbf16>, vector<4x640xbf16> -> vector<4x648xbf16>
    %17 = vector.extract_strided_slice %0 {offsets = [2, 0], sizes = [1, 648], strides = [1, 1]} : vector<9x648xbf16> to vector<1x648xbf16>
    %18 = vector.broadcast %17 : vector<1x648xbf16> to vector<4x648xbf16>
    %19 = arith.mulf %16, %18 : vector<4x648xbf16>
    %20 = vector.extract_strided_slice %1 {offsets = [0, 647], sizes = [4, 1], strides = [1, 1]} : vector<4x648xbf16> to vector<4x1xbf16>
    %21 = vector.extract_strided_slice %1 {offsets = [0, 0], sizes = [4, 647], strides = [1, 1]} : vector<4x648xbf16> to vector<4x647xbf16>
    %22 = tpu.concatenate %20, %21 in 1 : vector<4x1xbf16>, vector<4x647xbf16> -> vector<4x648xbf16>
    %23 = vector.extract_strided_slice %0 {offsets = [3, 0], sizes = [1, 648], strides = [1, 1]} : vector<9x648xbf16> to vector<1x648xbf16>
    %24 = vector.broadcast %23 : vector<1x648xbf16> to vector<4x648xbf16>
    %25 = arith.mulf %22, %24 : vector<4x648xbf16>
    %26 = vector.extract_strided_slice %1 {offsets = [0, 1], sizes = [4, 647], strides = [1, 1]} : vector<4x648xbf16> to vector<4x647xbf16>
    %27 = vector.extract_strided_slice %1 {offsets = [0, 0], sizes = [4, 1], strides = [1, 1]} : vector<4x648xbf16> to vector<4x1xbf16>
    %28 = tpu.concatenate %26, %27 in 1 : vector<4x647xbf16>, vector<4x1xbf16> -> vector<4x648xbf16>
    %29 = vector.extract_strided_slice %0 {offsets = [5, 0], sizes = [1, 648], strides = [1, 1]} : vector<9x648xbf16> to vector<1x648xbf16>
    %30 = vector.broadcast %29 : vector<1x648xbf16> to vector<4x648xbf16>
    %31 = arith.mulf %28, %30 : vector<4x648xbf16>
    %32 = vector.extract_strided_slice %1 {offsets = [0, 8], sizes = [4, 640], strides = [1, 1]} : vector<4x648xbf16> to vector<4x640xbf16>
    %33 = vector.extract_strided_slice %1 {offsets = [0, 0], sizes = [4, 8], strides = [1, 1]} : vector<4x648xbf16> to vector<4x8xbf16>
    %34 = tpu.concatenate %32, %33 in 1 : vector<4x640xbf16>, vector<4x8xbf16> -> vector<4x648xbf16>
    %35 = vector.extract_strided_slice %0 {offsets = [6, 0], sizes = [1, 648], strides = [1, 1]} : vector<9x648xbf16> to vector<1x648xbf16>
    %36 = vector.broadcast %35 : vector<1x648xbf16> to vector<4x648xbf16>
    %37 = arith.mulf %34, %36 : vector<4x648xbf16>
    %38 = vector.extract_strided_slice %1 {offsets = [0, 9], sizes = [4, 639], strides = [1, 1]} : vector<4x648xbf16> to vector<4x639xbf16>
    %39 = vector.extract_strided_slice %1 {offsets = [0, 0], sizes = [4, 9], strides = [1, 1]} : vector<4x648xbf16> to vector<4x9xbf16>
    %40 = tpu.concatenate %38, %39 in 1 : vector<4x639xbf16>, vector<4x9xbf16> -> vector<4x648xbf16>
    %41 = vector.extract_strided_slice %0 {offsets = [7, 0], sizes = [1, 648], strides = [1, 1]} : vector<9x648xbf16> to vector<1x648xbf16>
    %42 = vector.broadcast %41 : vector<1x648xbf16> to vector<4x648xbf16>
    %43 = arith.mulf %40, %42 : vector<4x648xbf16>
    %44 = vector.extract_strided_slice %1 {offsets = [0, 10], sizes = [4, 638], strides = [1, 1]} : vector<4x648xbf16> to vector<4x638xbf16>
    %45 = vector.extract_strided_slice %1 {offsets = [0, 0], sizes = [4, 10], strides = [1, 1]} : vector<4x648xbf16> to vector<4x10xbf16>
    %46 = tpu.concatenate %44, %45 in 1 : vector<4x638xbf16>, vector<4x10xbf16> -> vector<4x648xbf16>
    %47 = vector.extract_strided_slice %0 {offsets = [8, 0], sizes = [1, 648], strides = [1, 1]} : vector<9x648xbf16> to vector<1x648xbf16>
    %48 = vector.broadcast %47 : vector<1x648xbf16> to vector<4x648xbf16>
    %49 = arith.mulf %46, %48 : vector<4x648xbf16>
    %50 = tpu.concatenate %7, %13, %19, %25, %1, %31, %37, %43, %49 in 0 : vector<4x648xbf16>, vector<4x648xbf16>, vector<4x648xbf16>, vector<4x648xbf16>, vector<4x648xbf16>, vector<4x648xbf16>, vector<4x648xbf16>, vector<4x648xbf16>, vector<4x648xbf16> -> vector<36x648xbf16>
    %c0_3 = arith.constant 0 : index
    %c0_4 = arith.constant 0 : index
    %51 = vector.load %arg3[%c0_3, %c0_4] : memref<32x36xbf16, #tpu.memory_space<vmem>>, vector<32x36xbf16>
    %cst = arith.constant dense<0.000000e+00> : vector<32x648xf32>
    %52 = tpu.matmul %51, %50, %cst {dimension_numbers = #tpu.dot_dimension_numbers<[1], [0], [0], [1], [0, 0, 1, 1], [], []>} : vector<32x36xbf16>, vector<36x648xbf16>, vector<32x648xf32> -> vector<32x648xf32>
    %c0_5 = arith.constant 0 : index
    %c0_6 = arith.constant 0 : index
    %53 = vector.load %arg4[%c0_5, %c0_6] : memref<32x1xf32, #tpu.memory_space<vmem>>, vector<32x1xf32>
    %54 = vector.broadcast %53 : vector<32x1xf32> to vector<32x648xf32>
    %55 = arith.addf %52, %54 : vector<32x648xf32>
    %cst_7 = arith.constant 0.000000e+00 : f32
    %56 = vector.broadcast %cst_7 : f32 to vector<32x648xf32>
    %57 = arith.maximumf %55, %56 : vector<32x648xf32>
    %58 = arith.truncf %57 : vector<32x648xf32> to vector<32x648xbf16>
    %59 = vector.extract_strided_slice %58 {offsets = [0, 638], sizes = [32, 10], strides = [1, 1]} : vector<32x648xbf16> to vector<32x10xbf16>
    %60 = vector.extract_strided_slice %58 {offsets = [0, 0], sizes = [32, 638], strides = [1, 1]} : vector<32x648xbf16> to vector<32x638xbf16>
    %61 = tpu.concatenate %59, %60 in 1 : vector<32x10xbf16>, vector<32x638xbf16> -> vector<32x648xbf16>
    %62 = vector.extract_strided_slice %0 {offsets = [0, 0], sizes = [1, 648], strides = [1, 1]} : vector<9x648xbf16> to vector<1x648xbf16>
    %63 = vector.broadcast %62 : vector<1x648xbf16> to vector<32x648xbf16>
    %64 = arith.mulf %61, %63 : vector<32x648xbf16>
    %65 = vector.extract_strided_slice %58 {offsets = [0, 639], sizes = [32, 9], strides = [1, 1]} : vector<32x648xbf16> to vector<32x9xbf16>
    %66 = vector.extract_strided_slice %58 {offsets = [0, 0], sizes = [32, 639], strides = [1, 1]} : vector<32x648xbf16> to vector<32x639xbf16>
    %67 = tpu.concatenate %65, %66 in 1 : vector<32x9xbf16>, vector<32x639xbf16> -> vector<32x648xbf16>
    %68 = vector.extract_strided_slice %0 {offsets = [1, 0], sizes = [1, 648], strides = [1, 1]} : vector<9x648xbf16> to vector<1x648xbf16>
    %69 = vector.broadcast %68 : vector<1x648xbf16> to vector<32x648xbf16>
    %70 = arith.mulf %67, %69 : vector<32x648xbf16>
    %71 = vector.extract_strided_slice %58 {offsets = [0, 640], sizes = [32, 8], strides = [1, 1]} : vector<32x648xbf16> to vector<32x8xbf16>
    %72 = vector.extract_strided_slice %58 {offsets = [0, 0], sizes = [32, 640], strides = [1, 1]} : vector<32x648xbf16> to vector<32x640xbf16>
    %73 = tpu.concatenate %71, %72 in 1 : vector<32x8xbf16>, vector<32x640xbf16> -> vector<32x648xbf16>
    %74 = vector.extract_strided_slice %0 {offsets = [2, 0], sizes = [1, 648], strides = [1, 1]} : vector<9x648xbf16> to vector<1x648xbf16>
    %75 = vector.broadcast %74 : vector<1x648xbf16> to vector<32x648xbf16>
    %76 = arith.mulf %73, %75 : vector<32x648xbf16>
    %77 = vector.extract_strided_slice %58 {offsets = [0, 647], sizes = [32, 1], strides = [1, 1]} : vector<32x648xbf16> to vector<32x1xbf16>
    %78 = vector.extract_strided_slice %58 {offsets = [0, 0], sizes = [32, 647], strides = [1, 1]} : vector<32x648xbf16> to vector<32x647xbf16>
    %79 = tpu.concatenate %77, %78 in 1 : vector<32x1xbf16>, vector<32x647xbf16> -> vector<32x648xbf16>
    %80 = vector.extract_strided_slice %0 {offsets = [3, 0], sizes = [1, 648], strides = [1, 1]} : vector<9x648xbf16> to vector<1x648xbf16>
    %81 = vector.broadcast %80 : vector<1x648xbf16> to vector<32x648xbf16>
    %82 = arith.mulf %79, %81 : vector<32x648xbf16>
    %83 = vector.extract_strided_slice %58 {offsets = [0, 1], sizes = [32, 647], strides = [1, 1]} : vector<32x648xbf16> to vector<32x647xbf16>
    %84 = vector.extract_strided_slice %58 {offsets = [0, 0], sizes = [32, 1], strides = [1, 1]} : vector<32x648xbf16> to vector<32x1xbf16>
    %85 = tpu.concatenate %83, %84 in 1 : vector<32x647xbf16>, vector<32x1xbf16> -> vector<32x648xbf16>
    %86 = vector.extract_strided_slice %0 {offsets = [5, 0], sizes = [1, 648], strides = [1, 1]} : vector<9x648xbf16> to vector<1x648xbf16>
    %87 = vector.broadcast %86 : vector<1x648xbf16> to vector<32x648xbf16>
    %88 = arith.mulf %85, %87 : vector<32x648xbf16>
    %89 = vector.extract_strided_slice %58 {offsets = [0, 8], sizes = [32, 640], strides = [1, 1]} : vector<32x648xbf16> to vector<32x640xbf16>
    %90 = vector.extract_strided_slice %58 {offsets = [0, 0], sizes = [32, 8], strides = [1, 1]} : vector<32x648xbf16> to vector<32x8xbf16>
    %91 = tpu.concatenate %89, %90 in 1 : vector<32x640xbf16>, vector<32x8xbf16> -> vector<32x648xbf16>
    %92 = vector.extract_strided_slice %0 {offsets = [6, 0], sizes = [1, 648], strides = [1, 1]} : vector<9x648xbf16> to vector<1x648xbf16>
    %93 = vector.broadcast %92 : vector<1x648xbf16> to vector<32x648xbf16>
    %94 = arith.mulf %91, %93 : vector<32x648xbf16>
    %95 = vector.extract_strided_slice %58 {offsets = [0, 9], sizes = [32, 639], strides = [1, 1]} : vector<32x648xbf16> to vector<32x639xbf16>
    %96 = vector.extract_strided_slice %58 {offsets = [0, 0], sizes = [32, 9], strides = [1, 1]} : vector<32x648xbf16> to vector<32x9xbf16>
    %97 = tpu.concatenate %95, %96 in 1 : vector<32x639xbf16>, vector<32x9xbf16> -> vector<32x648xbf16>
    %98 = vector.extract_strided_slice %0 {offsets = [7, 0], sizes = [1, 648], strides = [1, 1]} : vector<9x648xbf16> to vector<1x648xbf16>
    %99 = vector.broadcast %98 : vector<1x648xbf16> to vector<32x648xbf16>
    %100 = arith.mulf %97, %99 : vector<32x648xbf16>
    %101 = vector.extract_strided_slice %58 {offsets = [0, 10], sizes = [32, 638], strides = [1, 1]} : vector<32x648xbf16> to vector<32x638xbf16>
    %102 = vector.extract_strided_slice %58 {offsets = [0, 0], sizes = [32, 10], strides = [1, 1]} : vector<32x648xbf16> to vector<32x10xbf16>
    %103 = tpu.concatenate %101, %102 in 1 : vector<32x638xbf16>, vector<32x10xbf16> -> vector<32x648xbf16>
    %104 = vector.extract_strided_slice %0 {offsets = [8, 0], sizes = [1, 648], strides = [1, 1]} : vector<9x648xbf16> to vector<1x648xbf16>
    %105 = vector.broadcast %104 : vector<1x648xbf16> to vector<32x648xbf16>
    %106 = arith.mulf %103, %105 : vector<32x648xbf16>
    %107 = tpu.concatenate %64, %70, %76, %82, %58, %88, %94, %100, %106 in 0 : vector<32x648xbf16>, vector<32x648xbf16>, vector<32x648xbf16>, vector<32x648xbf16>, vector<32x648xbf16>, vector<32x648xbf16>, vector<32x648xbf16>, vector<32x648xbf16>, vector<32x648xbf16> -> vector<288x648xbf16>
    %c0_8 = arith.constant 0 : index
    %c0_9 = arith.constant 0 : index
    %108 = vector.load %arg5[%c0_8, %c0_9] : memref<64x288xbf16, #tpu.memory_space<vmem>>, vector<64x288xbf16>
    %cst_10 = arith.constant dense<0.000000e+00> : vector<64x648xf32>
    %109 = tpu.matmul %108, %107, %cst_10 {dimension_numbers = #tpu.dot_dimension_numbers<[1], [0], [0], [1], [0, 0, 1, 1], [], []>} : vector<64x288xbf16>, vector<288x648xbf16>, vector<64x648xf32> -> vector<64x648xf32>
    %c0_11 = arith.constant 0 : index
    %c0_12 = arith.constant 0 : index
    %110 = vector.load %arg6[%c0_11, %c0_12] : memref<64x1xf32, #tpu.memory_space<vmem>>, vector<64x1xf32>
    %111 = vector.broadcast %110 : vector<64x1xf32> to vector<64x648xf32>
    %112 = arith.addf %109, %111 : vector<64x648xf32>
    %cst_13 = arith.constant 0.000000e+00 : f32
    %113 = vector.broadcast %cst_13 : f32 to vector<64x648xf32>
    %114 = arith.maximumf %112, %113 : vector<64x648xf32>
    %115 = arith.truncf %114 : vector<64x648xf32> to vector<64x648xbf16>
    %c0_14 = arith.constant 0 : index
    %c0_15 = arith.constant 0 : index
    %116 = vector.load %arg7[%c0_14, %c0_15] : memref<64x648xbf16, #tpu.memory_space<vmem>>, vector<64x648xbf16>
    tpu.vector_store %arg7[%c0_14, %c0_15], %115 {strides = array<i32>} : memref<64x648xbf16, #tpu.memory_space<vmem>>, vector<64x648xbf16>,
    return
  }
  func.func @transform_0(%arg0: i32) -> (i32, i32) {
    %c0_i32 = arith.constant 0 : i32
    %c0_i32_0 = arith.constant 0 : i32
    return %c0_i32, %arg0 : i32, i32
  }
  func.func @transform_1(%arg0: i32) -> (i32, i32) {
    %c0_i32 = arith.constant 0 : i32
    %c0_i32_0 = arith.constant 0 : i32
    %c0_i32_1 = arith.constant 0 : i32
    return %c0_i32, %c0_i32_0 : i32, i32
  }
  func.func @transform_2(%arg0: i32) -> (i32, i32) {
    %c0_i32 = arith.constant 0 : i32
    %c0_i32_0 = arith.constant 0 : i32
    %c0_i32_1 = arith.constant 0 : i32
    return %c0_i32, %c0_i32_0 : i32, i32
  }
  func.func @transform_3(%arg0: i32) -> (i32, i32) {
    %c0_i32 = arith.constant 0 : i32
    %c0_i32_0 = arith.constant 0 : i32
    %c0_i32_1 = arith.constant 0 : i32
    return %c0_i32, %c0_i32_0 : i32, i32
  }
  func.func @transform_4(%arg0: i32) -> (i32, i32) {
    %c0_i32 = arith.constant 0 : i32
    %c0_i32_0 = arith.constant 0 : i32
    %c0_i32_1 = arith.constant 0 : i32
    return %c0_i32, %c0_i32_0 : i32, i32
  }
  func.func @transform_5(%arg0: i32) -> (i32, i32) {
    %c0_i32 = arith.constant 0 : i32
    %c0_i32_0 = arith.constant 0 : i32
    %c0_i32_1 = arith.constant 0 : i32
    return %c0_i32, %c0_i32_0 : i32, i32
  }
  func.func @transform_6(%arg0: i32) -> (i32, i32) {
    %c0_i32 = arith.constant 0 : i32
    %c0_i32_0 = arith.constant 0 : i32
    return %c0_i32, %arg0 : i32, i32
  }
}

module attributes {stable_mosaic.version = 11 : i64} {
  func.func @_mlp_head_kernel(%arg0: i32, %arg1: memref<8x5184xbf16, #tpu.memory_space<vmem>>, %arg2: memref<8x3xf32, #tpu.memory_space<vmem>>, %arg3: memref<5184x256xbf16, #tpu.memory_space<vmem>>, %arg4: memref<3x256xbf16, #tpu.memory_space<vmem>>, %arg5: memref<1x256xf32, #tpu.memory_space<vmem>>, %arg6: memref<256x64xbf16, #tpu.memory_space<vmem>>, %arg7: memref<1x64xf32, #tpu.memory_space<vmem>>, %arg8: memref<64x1xbf16, #tpu.memory_space<vmem>>, %arg9: memref<1x1xf32, #tpu.memory_space<vmem>>, %arg10: memref<8x1xf32, #tpu.memory_space<vmem>>) attributes {dimension_semantics = [#tpu.dimension_semantics<parallel>], iteration_bounds = array<i64: 1>, scalar_prefetch = 0 : i64, scratch_operands = 0 : i64, tpu.core_type = #tpu.core_type<tc>, window_params = [{transform_indices = @transform_0, window_bounds = array<i64: 8, 5184>}, {transform_indices = @transform_1, window_bounds = array<i64: 8, 3>}, {pipeline_mode = #tpu.pipeline_mode<synchronous>, transform_indices = @transform_2, window_bounds = array<i64: 5184, 256>}, {pipeline_mode = #tpu.pipeline_mode<synchronous>, transform_indices = @transform_3, window_bounds = array<i64: 3, 256>}, {pipeline_mode = #tpu.pipeline_mode<synchronous>, transform_indices = @transform_4, window_bounds = array<i64: 1, 256>}, {pipeline_mode = #tpu.pipeline_mode<synchronous>, transform_indices = @transform_5, window_bounds = array<i64: 256, 64>}, {pipeline_mode = #tpu.pipeline_mode<synchronous>, transform_indices = @transform_6, window_bounds = array<i64: 1, 64>}, {pipeline_mode = #tpu.pipeline_mode<synchronous>, transform_indices = @transform_7, window_bounds = array<i64: 64, 1>}, {pipeline_mode = #tpu.pipeline_mode<synchronous>, transform_indices = @transform_8, window_bounds = array<i64: 1, 1>}, {transform_indices = @transform_9, window_bounds = array<i64: 8, 1>}]} {
    %c0 = arith.constant 0 : index
    %c0_0 = arith.constant 0 : index
    %0 = vector.load %arg1[%c0, %c0_0] : memref<8x5184xbf16, #tpu.memory_space<vmem>>, vector<8x5184xbf16>
    %c0_1 = arith.constant 0 : index
    %c0_2 = arith.constant 0 : index
    %1 = vector.load %arg3[%c0_1, %c0_2] : memref<5184x256xbf16, #tpu.memory_space<vmem>>, vector<5184x256xbf16>
    %cst = arith.constant dense<0.000000e+00> : vector<8x256xf32>
    %2 = tpu.matmul %0, %1, %cst {dimension_numbers = #tpu.dot_dimension_numbers<[1], [0], [0], [1], [0, 0, 1, 1], [], []>} : vector<8x5184xbf16>, vector<5184x256xbf16>, vector<8x256xf32> -> vector<8x256xf32>
    %c0_3 = arith.constant 0 : index
    %c0_4 = arith.constant 0 : index
    %3 = vector.load %arg2[%c0_3, %c0_4] : memref<8x3xf32, #tpu.memory_space<vmem>>, vector<8x3xf32>
    %4 = arith.truncf %3 : vector<8x3xf32> to vector<8x3xbf16>
    %c0_5 = arith.constant 0 : index
    %c0_6 = arith.constant 0 : index
    %5 = vector.load %arg4[%c0_5, %c0_6] : memref<3x256xbf16, #tpu.memory_space<vmem>>, vector<3x256xbf16>
    %cst_7 = arith.constant dense<0.000000e+00> : vector<8x256xf32>
    %6 = tpu.matmul %4, %5, %cst_7 {dimension_numbers = #tpu.dot_dimension_numbers<[1], [0], [0], [1], [0, 0, 1, 1], [], []>} : vector<8x3xbf16>, vector<3x256xbf16>, vector<8x256xf32> -> vector<8x256xf32>
    %7 = arith.addf %2, %6 : vector<8x256xf32>
    %c0_8 = arith.constant 0 : index
    %c0_9 = arith.constant 0 : index
    %8 = vector.load %arg5[%c0_8, %c0_9] : memref<1x256xf32, #tpu.memory_space<vmem>>, vector<1x256xf32>
    %9 = vector.broadcast %8 : vector<1x256xf32> to vector<8x256xf32>
    %10 = arith.addf %7, %9 : vector<8x256xf32>
    %cst_10 = arith.constant 0.000000e+00 : f32
    %11 = vector.broadcast %cst_10 : f32 to vector<8x256xf32>
    %12 = arith.maximumf %10, %11 : vector<8x256xf32>
    %13 = arith.truncf %12 : vector<8x256xf32> to vector<8x256xbf16>
    %c0_11 = arith.constant 0 : index
    %c0_12 = arith.constant 0 : index
    %14 = vector.load %arg6[%c0_11, %c0_12] : memref<256x64xbf16, #tpu.memory_space<vmem>>, vector<256x64xbf16>
    %cst_13 = arith.constant dense<0.000000e+00> : vector<8x64xf32>
    %15 = tpu.matmul %13, %14, %cst_13 {dimension_numbers = #tpu.dot_dimension_numbers<[1], [0], [0], [1], [0, 0, 1, 1], [], []>} : vector<8x256xbf16>, vector<256x64xbf16>, vector<8x64xf32> -> vector<8x64xf32>
    %c0_14 = arith.constant 0 : index
    %c0_15 = arith.constant 0 : index
    %16 = vector.load %arg7[%c0_14, %c0_15] : memref<1x64xf32, #tpu.memory_space<vmem>>, vector<1x64xf32>
    %17 = vector.broadcast %16 : vector<1x64xf32> to vector<8x64xf32>
    %18 = arith.addf %15, %17 : vector<8x64xf32>
    %cst_16 = arith.constant 0.000000e+00 : f32
    %19 = vector.broadcast %cst_16 : f32 to vector<8x64xf32>
    %20 = arith.maximumf %18, %19 : vector<8x64xf32>
    %21 = arith.truncf %20 : vector<8x64xf32> to vector<8x64xbf16>
    %c0_17 = arith.constant 0 : index
    %c0_18 = arith.constant 0 : index
    %22 = vector.load %arg8[%c0_17, %c0_18] : memref<64x1xbf16, #tpu.memory_space<vmem>>, vector<64x1xbf16>
    %cst_19 = arith.constant dense<0.000000e+00> : vector<8x1xf32>
    %23 = tpu.matmul %21, %22, %cst_19 {dimension_numbers = #tpu.dot_dimension_numbers<[1], [0], [0], [1], [0, 0, 1, 1], [], []>} : vector<8x64xbf16>, vector<64x1xbf16>, vector<8x1xf32> -> vector<8x1xf32>
    %c0_20 = arith.constant 0 : index
    %c0_21 = arith.constant 0 : index
    %24 = vector.load %arg9[%c0_20, %c0_21] : memref<1x1xf32, #tpu.memory_space<vmem>>, vector<1x1xf32>
    %25 = vector.broadcast %24 : vector<1x1xf32> to vector<8x1xf32>
    %26 = arith.addf %23, %25 : vector<8x1xf32>
    %c0_22 = arith.constant 0 : index
    %c0_23 = arith.constant 0 : index
    %27 = vector.load %arg10[%c0_22, %c0_23] : memref<8x1xf32, #tpu.memory_space<vmem>>, vector<8x1xf32>
    tpu.vector_store %arg10[%c0_22, %c0_23], %26 {strides = array<i32>} : memref<8x1xf32, #tpu.memory_space<vmem>>, vector<8x1xf32>,
    return
  }
  func.func @transform_0(%arg0: i32) -> (i32, i32) {
    %c0_i32 = arith.constant 0 : i32
    %c0_i32_0 = arith.constant 0 : i32
    return %arg0, %c0_i32 : i32, i32
  }
  func.func @transform_1(%arg0: i32) -> (i32, i32) {
    %c0_i32 = arith.constant 0 : i32
    %c0_i32_0 = arith.constant 0 : i32
    return %arg0, %c0_i32 : i32, i32
  }
  func.func @transform_2(%arg0: i32) -> (i32, i32) {
    %c0_i32 = arith.constant 0 : i32
    %c0_i32_0 = arith.constant 0 : i32
    %c0_i32_1 = arith.constant 0 : i32
    return %c0_i32, %c0_i32_0 : i32, i32
  }
  func.func @transform_3(%arg0: i32) -> (i32, i32) {
    %c0_i32 = arith.constant 0 : i32
    %c0_i32_0 = arith.constant 0 : i32
    %c0_i32_1 = arith.constant 0 : i32
    return %c0_i32, %c0_i32_0 : i32, i32
  }
  func.func @transform_4(%arg0: i32) -> (i32, i32) {
    %c0_i32 = arith.constant 0 : i32
    %c0_i32_0 = arith.constant 0 : i32
    %c0_i32_1 = arith.constant 0 : i32
    return %c0_i32, %c0_i32_0 : i32, i32
  }
  func.func @transform_5(%arg0: i32) -> (i32, i32) {
    %c0_i32 = arith.constant 0 : i32
    %c0_i32_0 = arith.constant 0 : i32
    %c0_i32_1 = arith.constant 0 : i32
    return %c0_i32, %c0_i32_0 : i32, i32
  }
  func.func @transform_6(%arg0: i32) -> (i32, i32) {
    %c0_i32 = arith.constant 0 : i32
    %c0_i32_0 = arith.constant 0 : i32
    %c0_i32_1 = arith.constant 0 : i32
    return %c0_i32, %c0_i32_0 : i32, i32
  }
  func.func @transform_7(%arg0: i32) -> (i32, i32) {
    %c0_i32 = arith.constant 0 : i32
    %c0_i32_0 = arith.constant 0 : i32
    %c0_i32_1 = arith.constant 0 : i32
    return %c0_i32, %c0_i32_0 : i32, i32
  }
  func.func @transform_8(%arg0: i32) -> (i32, i32) {
    %c0_i32 = arith.constant 0 : i32
    %c0_i32_0 = arith.constant 0 : i32
    %c0_i32_1 = arith.constant 0 : i32
    return %c0_i32, %c0_i32_0 : i32, i32
  }
  func.func @transform_9(%arg0: i32) -> (i32, i32) {
    %c0_i32 = arith.constant 0 : i32
    %c0_i32_0 = arith.constant 0 : i32
    return %arg0, %c0_i32 : i32, i32
  }
}

</mosaic_0001>

<llo_original>
// kernel: scoring_forward.2
$region0: #{scoring_forward.2}
  #allocation0 [shape = 'u32[]', space=smem, size = 0x4, offset = 0x4, fixed_abs, tag = 'smem constant byte address 0x4 - core index']
  #allocation1 [shape = 'u32[144,128]{1,0:T(1,128)}', space=vmem, size = 0x12000, scoped, tag = 'internal scratch']
  %s0 = inlined_call_operand.vmem [shape: bf16[4,648], index: 0, kind: input, shape index: {}]
  %s1 = inlined_call_operand.vmem [shape: bf16[9,648], index: 1, kind: input, shape index: {}]
  %s2 = inlined_call_operand.hbm [shape: bf16[32,36], index: 2, kind: input, shape index: {}]
  %s3 = inlined_call_operand.vmem [shape: f32[32,1], index: 3, kind: input, shape index: {}]
  %s4 = inlined_call_operand.hbm [shape: bf16[64,288], index: 4, kind: input, shape index: {}]
  %s5 = inlined_call_operand.vmem [shape: f32[64,1], index: 5, kind: input, shape index: {}]
  %s6 = inlined_call_operand.vmem [shape: bf16[64,648], index: 6, kind: output, shape index: {}]
  %s7 = sld [smem:[#allocation0]]
  $region42: #{scoring_forward.2} parent=0
    _
  %s9 = ssub.s32 1, %s7
  %s10 = scalar_select 0, %s9, %s7
  $region1: #{scoring_forward.2} parent=0
    #allocation2 [shape = 'u8[8192]{0}', space=vmem, size = 0x2000, scoped, tag = 'input window, operand 2, single buffered']
    #allocation3 [shape = 's32[1]{0}', space=sflag, size = 0x4, scoped, tag = 'scoped memory for scoring_forward.2']
    #allocation4 [shape = 'u8[49152]{0}', space=vmem, size = 0xc000, scoped, tag = 'input window, operand 4, single buffered']
    #allocation5 [shape = 's32[1]{0}', space=sflag, size = 0x4, scoped, tag = 'scoped memory for scoring_forward.2']
    %11 = vsyncpa [#allocation3], 0
    %12 = vsyncpa [#allocation5], 0
    // Predicated region
    $region2: #{scoring_forward.2} parent=1 // pred_check
      _
    $region3: #{scoring_forward.2} parent=1 // pred_check_branch
      %14 = sbr.rel (0) target = $region5
    $region4: #{scoring_forward.2} parent=1 // pred_region
      _
    $region5: #{scoring_forward.2} parent=1 // pred_fallthru
      _
    // Predicated region
    $region6: #{scoring_forward.2} parent=1 // pred_check
      _
    $region7: #{scoring_forward.2} parent=1 // pred_check_branch
      %16 = sbr.rel (0) target = $region9
    $region8: #{scoring_forward.2} parent=1 // pred_region
      _
    $region9: #{scoring_forward.2} parent=1 // pred_fallthru
      _
    // Predicated region
    $region10: #{scoring_forward.2} parent=1 // pred_check
      _
    $region11: #{scoring_forward.2} parent=1 // pred_check_branch
      %18 = sbr.rel (0) target = $region13
    $region12: #{scoring_forward.2} parent=1 // pred_region
      %s20 = ssub.s32 256, 256
      %21 = vsyncadd [#allocation3], %s20
      %s22 = sshll.u32 [#allocation2], 4
      %s23 = int_to_ptr.vmem [resolvable:$true] %s22
      %28 = dma.hbm_to_vmem [thread:$0]  %s2, 256, %s23, [#allocation3], 64, 64, 4
    $region13: #{scoring_forward.2} parent=1 // pred_fallthru
      _
    // Predicated region
    $region14: #{scoring_forward.2} parent=1 // pred_check
      _
    $region15: #{scoring_forward.2} parent=1 // pred_check_branch
      %30 = sbr.rel (0) target = $region17
    $region16: #{scoring_forward.2} parent=1 // pred_region
      _
    $region17: #{scoring_forward.2} parent=1 // pred_fallthru
      _
    // Predicated region
    $region18: #{scoring_forward.2} parent=1 // pred_check
      _
    $region19: #{scoring_forward.2} parent=1 // pred_check_branch
      %32 = sbr.rel (0) target = $region21
    $region20: #{scoring_forward.2} parent=1 // pred_region
      %s34 = ssub.s32 1536, 1536
      %35 = vsyncadd [#allocation5], %s34
      %s36 = sshll.u32 [#allocation4], 4
      %s37 = int_to_ptr.vmem [resolvable:$true] %s36
      %42 = dma.hbm_to_vmem [thread:$0]  %s4, 1536, %s37, [#allocation5], 192, 192, 12
    $region21: #{scoring_forward.2} parent=1 // pred_fallthru
      _
    // Predicated region
    $region22: #{scoring_forward.2} parent=1 // pred_check
      _
    $region23: #{scoring_forward.2} parent=1 // pred_check_branch
      %44 = sbr.rel (0) target = $region25
    $region24: #{scoring_forward.2} parent=1 // pred_region
      _
    $region25: #{scoring_forward.2} parent=1 // pred_fallthru
      _
    // Predicated region
    $region26: #{scoring_forward.2} parent=1 // pred_check
      _
    $region27: #{scoring_forward.2} parent=1 // pred_check_branch
      %46 = sbr.rel (0) target = $region29
    $region28: #{scoring_forward.2} parent=1 // pred_region
      %47 = dma.done [#allocation3], 256
    $region29: #{scoring_forward.2} parent=1 // pred_fallthru
      _
    // Predicated region
    $region30: #{scoring_forward.2} parent=1 // pred_check
      _
    $region31: #{scoring_forward.2} parent=1 // pred_check_branch
      %49 = sbr.rel (0) target = $region33
    $region32: #{scoring_forward.2} parent=1 // pred_region
      %50 = dma.done [#allocation5], 1536
    $region33: #{scoring_forward.2} parent=1 // pred_fallthru
      _
    %v52 = vld [vmem:[%s1] sm:$0xff]
    %v53 = vld [vmem:[%s1 + $0x8] sm:$0xff]
    %v54 = vld [vmem:[%s1 + $0x10] sm:$0xff]
    %v55 = vld [vmem:[%s1 + $0x18] sm:$0x11]
    %v56 = vld [vmem:[%s1 + $0x20] sm:$0x11]
    %v57 = vld [vmem:[%s1 + $0x28] sm:$0x11]
    %v58 = vld [vmem:[%s0] sm:$0xff]
    %v59 = vld [vmem:[%s0 + $0x8] sm:$0xf]
    %v62 = vunpack.c.l.s4 1983009808
    %v63 = vunpack.c.0.s8 %v62
    %v64 = vlaneseq
    %v65 = vshrl.u32 %v64, 7
    %v66 = vsub.s32 %v63, %v65
    %v67 = vrot.slane %v59, %v66
    %v68 = vcombine.high %v67, %v67
    %69 = vrot.lane.b32.xlu0 %v67, 2
    %v70 = vpop.permute.xlu0 %69
    %71 = vrot.lane.b32.xlu0 %v68, 2
    %v72 = vpop.permute.xlu0 %71
    %vm73 = vcmask 15360
    %v74 = vsel %vm73, %v70, %v72
    %v76 = vcombine.high %v58, %v58
    %v78 = vunpack.c.l.s4 1983009808
    %v79 = vunpack.c.0.s8 %v78
    %v80 = vlaneseq
    %v81 = vshrl.u32 %v80, 7
    %v82 = vsub.s32 %v79, %v81
    %v83 = vrot.slane %v58, %v82
    %v85 = vunpack.c.l.s4 1983009808
    %v86 = vunpack.c.0.s8 %v85
    %v87 = vlaneseq
    %v88 = vshrl.u32 %v87, 7
    %v89 = vsub.s32 %v86, %v88
    %v90 = vrot.slane %v76, %v89
    %v91 = vcombine.high %v83, %v83
    %v92 = vcombine.high %v90, %v90
    %93 = vrot.lane.b32.xlu0 %v83, 10
    %v94 = vpop.permute.xlu0 %93
    %95 = vrot.lane.b32.xlu0 %v91, 10
    %v96 = vpop.permute.xlu0 %95
    %97 = vrot.lane.b32.xlu0 %v90, 10
    %v98 = vpop.permute.xlu0 %97
    %99 = vrot.lane.b32.xlu0 %v92, 10
    %v100 = vpop.permute.xlu0 %99
    %101 = vrot.lane.b32.xlu0 %v67, 10
    %v102 = vpop.permute.xlu0 %101
    %vm103 = vcmask 80896
    %v104 = vsel %vm103, %v94, %v96
    %v105 = vsel %vm103, %v96, %v98
    %v106 = vsel %vm103, %v98, %v100
    %v107 = vsel %vm103, %v100, %v102
    %vm113 = vcmask 80896
    %v116 = vsel %vm113, %v74, %v94
    %v121 = vunpack.c.l.b16 %v52
    %v122 = vunpack.c.h.b16 %v52
    %v123 = vunpack.c.l.b16 %v53
    %v124 = vunpack.c.h.b16 %v53
    %v125 = vunpack.c.l.b16 %v54
    %v126 = vunpack.c.h.b16 %v54
    %v127 = vpack.c.b16 %v121, %v121
    %v128 = vpack.c.b16 %v122, %v122
    %v129 = vpack.c.b16 %v123, %v123
    %v130 = vpack.c.b16 %v124, %v124
    %v131 = vpack.c.b16 %v125, %v125
    %v132 = vpack.c.b16 %v126, %v126
    %v134 = vpack.i.b16 %v127, %v127
    %v136 = vlaneseq
    %v137 = vshrl.u32 %v136, 7
    %v138 = vsub.s32 0, %v137
    %v139 = vrot.slane %v134, %v138
    %v141 = vpack.i.b16 %v128, %v128
    %v143 = vlaneseq
    %v144 = vshrl.u32 %v143, 7
    %v145 = vsub.s32 0, %v144
    %v146 = vrot.slane %v141, %v145
    %v148 = vpack.i.b16 %v129, %v129
    %v150 = vlaneseq
    %v151 = vshrl.u32 %v150, 7
    %v152 = vsub.s32 0, %v151
    %v153 = vrot.slane %v148, %v152
    %v155 = vpack.i.b16 %v130, %v130
    %v157 = vlaneseq
    %v158 = vshrl.u32 %v157, 7
    %v159 = vsub.s32 0, %v158
    %v160 = vrot.slane %v155, %v159
    %v162 = vpack.i.b16 %v131, %v131
    %v164 = vlaneseq
    %v165 = vshrl.u32 %v164, 7
    %v166 = vsub.s32 0, %v165
    %v167 = vrot.slane %v162, %v166
    %v169 = vpack.i.b16 %v132, %v132
    %v171 = vlaneseq
    %v172 = vshrl.u32 %v171, 7
    %v173 = vsub.s32 0, %v172
    %v174 = vrot.slane %v169, %v173
    %v175 = vmul.bf16 %v116, %v139
    %v176 = vmul.bf16 %v104, %v146
    %v177 = vmul.bf16 %v105, %v153
    %v178 = vmul.bf16 %v106, %v160
    %v179 = vmul.bf16 %v107, %v167
    %v180 = vmul.bf16 %v102, %v174
    %181 = vrot.lane.b32.xlu0 %v67, 1
    %v182 = vpop.permute.xlu0 %181
    %183 = vrot.lane.b32.xlu0 %v68, 1
    %v184 = vpop.permute.xlu0 %183
    %vm185 = vcmask 7168
    %v186 = vsel %vm185, %v182, %v184
    %187 = vrot.lane.b32.xlu0 %v83, 9
    %v188 = vpop.permute.xlu0 %187
    %189 = vrot.lane.b32.xlu0 %v91, 9
    %v190 = vpop.permute.xlu0 %189
    %191 = vrot.lane.b32.xlu0 %v90, 9
    %v192 = vpop.permute.xlu0 %191
    %193 = vrot.lane.b32.xlu0 %v92, 9
    %v194 = vpop.permute.xlu0 %193
    %195 = vrot.lane.b32.xlu0 %v67, 9
    %v196 = vpop.permute.xlu0 %195
    %vm197 = vcmask 72704
    %v198 = vsel %vm197, %v188, %v190
    %v199 = vsel %vm197, %v190, %v192
    %v200 = vsel %vm197, %v192, %v194
    %v201 = vsel %vm197, %v194, %v196
    %vm207 = vcmask 72704
    %v210 = vsel %vm207, %v186, %v188
    %v212 = vshrl.u32 %v127, 16
    %v213 = vpack.i.b16 %v212, %v212
    %v215 = vlaneseq
    %v216 = vshrl.u32 %v215, 7
    %v217 = vsub.s32 0, %v216
    %v218 = vrot.slane %v213, %v217
    %v219 = vshrl.u32 %v128, 16
    %v220 = vpack.i.b16 %v219, %v219
    %v222 = vlaneseq
    %v223 = vshrl.u32 %v222, 7
    %v224 = vsub.s32 0, %v223
    %v225 = vrot.slane %v220, %v224
    %v226 = vshrl.u32 %v129, 16
    %v227 = vpack.i.b16 %v226, %v226
    %v229 = vlaneseq
    %v230 = vshrl.u32 %v229, 7
    %v231 = vsub.s32 0, %v230
    %v232 = vrot.slane %v227, %v231
    %v233 = vshrl.u32 %v130, 16
    %v234 = vpack.i.b16 %v233, %v233
    %v236 = vlaneseq
    %v237 = vshrl.u32 %v236, 7
    %v238 = vsub.s32 0, %v237
    %v239 = vrot.slane %v234, %v238
    %v240 = vshrl.u32 %v131, 16
    %v241 = vpack.i.b16 %v240, %v240
    %v243 = vlaneseq
    %v244 = vshrl.u32 %v243, 7
    %v245 = vsub.s32 0, %v244
    %v246 = vrot.slane %v241, %v245
    %v247 = vshrl.u32 %v132, 16
    %v248 = vpack.i.b16 %v247, %v247
    %v250 = vlaneseq
    %v251 = vshrl.u32 %v250, 7
    %v252 = vsub.s32 0, %v251
    %v253 = vrot.slane %v248, %v252
    %v254 = vmul.bf16 %v210, %v218
    %v255 = vmul.bf16 %v198, %v225
    %v256 = vmul.bf16 %v199, %v232
    %v257 = vmul.bf16 %v200, %v239
    %v258 = vmul.bf16 %v201, %v246
    %v259 = vmul.bf16 %v196, %v253
    %260 = vrot.lane.b32.xlu0 %v83, 8
    %v261 = vpop.permute.xlu0 %260
    %262 = vrot.lane.b32.xlu0 %v91, 8
    %v263 = vpop.permute.xlu0 %262
    %264 = vrot.lane.b32.xlu0 %v90, 8
    %v265 = vpop.permute.xlu0 %264
    %266 = vrot.lane.b32.xlu0 %v92, 8
    %v267 = vpop.permute.xlu0 %266
    %268 = vrot.lane.b32.xlu0 %v67, 8
    %v269 = vpop.permute.xlu0 %268
    %vm270 = vcmask 64512
    %v271 = vsel %vm270, %v261, %v263
    %v272 = vsel %vm270, %v263, %v265
    %v273 = vsel %vm270, %v265, %v267
    %v274 = vsel %vm270, %v267, %v269
    %vm280 = vcmask 64512
    %v283 = vsel %vm280, %v68, %v261
    %v285 = vlaneseq
    %v286 = vshrl.u32 %v285, 7
    %v287 = vsub.s32 1, %v286
    %v288 = vrot.slane %v134, %v287
    %v289 = vlaneseq
    %v290 = vshrl.u32 %v289, 7
    %v291 = vsub.s32 1, %v290
    %v292 = vrot.slane %v141, %v291
    %v293 = vlaneseq
    %v294 = vshrl.u32 %v293, 7
    %v295 = vsub.s32 1, %v294
    %v296 = vrot.slane %v148, %v295
    %v297 = vlaneseq
    %v298 = vshrl.u32 %v297, 7
    %v299 = vsub.s32 1, %v298
    %v300 = vrot.slane %v155, %v299
    %v301 = vlaneseq
    %v302 = vshrl.u32 %v301, 7
    %v303 = vsub.s32 1, %v302
    %v304 = vrot.slane %v162, %v303
    %v305 = vlaneseq
    %v306 = vshrl.u32 %v305, 7
    %v307 = vsub.s32 1, %v306
    %v308 = vrot.slane %v169, %v307
    %v309 = vmul.bf16 %v283, %v288
    %v310 = vmul.bf16 %v271, %v292
    %v311 = vmul.bf16 %v272, %v296
    %v312 = vmul.bf16 %v273, %v300
    %v313 = vmul.bf16 %v274, %v304
    %v314 = vmul.bf16 %v269, %v308
    %315 = vrot.lane.b32.xlu0 %v68, 121
    %v316 = vpop.permute.xlu0 %315
    %317 = vrot.lane.b32.xlu0 %v83, 1
    %v318 = vpop.permute.xlu0 %317
    %319 = vrot.lane.b32.xlu0 %v91, 1
    %v320 = vpop.permute.xlu0 %319
    %321 = vrot.lane.b32.xlu0 %v90, 1
    %v322 = vpop.permute.xlu0 %321
    %323 = vrot.lane.b32.xlu0 %v92, 1
    %v324 = vpop.permute.xlu0 %323
    %v325 = vsel %vm185, %v318, %v320
    %v326 = vsel %vm185, %v320, %v322
    %v327 = vsel %vm185, %v322, %v324
    %v328 = vsel %vm185, %v324, %v182
    %vm334 = vcmask 7168
    %v337 = vsel %vm334, %v316, %v318
    %v339 = vlaneseq
    %v340 = vshrl.u32 %v339, 7
    %v341 = vsub.s32 1, %v340
    %v342 = vrot.slane %v213, %v341
    %v343 = vlaneseq
    %v344 = vshrl.u32 %v343, 7
    %v345 = vsub.s32 1, %v344
    %v346 = vrot.slane %v220, %v345
    %v347 = vlaneseq
    %v348 = vshrl.u32 %v347, 7
    %v349 = vsub.s32 1, %v348
    %v350 = vrot.slane %v227, %v349
    %v351 = vlaneseq
    %v352 = vshrl.u32 %v351, 7
    %v353 = vsub.s32 1, %v352
    %v354 = vrot.slane %v234, %v353
    %v355 = vlaneseq
    %v356 = vshrl.u32 %v355, 7
    %v357 = vsub.s32 1, %v356
    %v358 = vrot.slane %v241, %v357
    %v359 = vlaneseq
    %v360 = vshrl.u32 %v359, 7
    %v361 = vsub.s32 1, %v360
    %v362 = vrot.slane %v248, %v361
    %v363 = vmul.bf16 %v337, %v342
    %v364 = vmul.bf16 %v325, %v346
    %v365 = vmul.bf16 %v326, %v350
    %v366 = vmul.bf16 %v327, %v354
    %v367 = vmul.bf16 %v328, %v358
    %v368 = vmul.bf16 %v186, %v362
    %369 = vrot.lane.b32.xlu0 %v83, 127
    %v370 = vpop.permute.xlu0 %369
    %371 = vrot.lane.b32.xlu0 %v91, 127
    %v372 = vpop.permute.xlu0 %371
    %373 = vrot.lane.b32.xlu0 %v90, 127
    %v374 = vpop.permute.xlu0 %373
    %375 = vrot.lane.b32.xlu0 %v92, 127
    %v376 = vpop.permute.xlu0 %375
    %377 = vrot.lane.b32.xlu0 %v67, 127
    %v378 = vpop.permute.xlu0 %377
    %379 = vrot.lane.b32.xlu0 %v68, 127
    %v380 = vpop.permute.xlu0 %379
    %vm381 = vcmask 1039360
    %v382 = vsel %vm381, %v370, %v372
    %v383 = vsel %vm381, %v372, %v374
    %v384 = vsel %vm381, %v374, %v376
    %v385 = vsel %vm381, %v376, %v378
    %v386 = vsel %vm381, %v378, %v380
    %392 = vrot.lane.b32.xlu0 %v83, 7
    %v393 = vpop.permute.xlu0 %392
    %vm394 = vcmask 56320
    %v397 = vsel %vm394, %v380, %v393
    %v399 = vlaneseq
    %v400 = vshrl.u32 %v399, 7
    %v401 = vsub.s32 2, %v400
    %v402 = vrot.slane %v213, %v401
    %v403 = vlaneseq
    %v404 = vshrl.u32 %v403, 7
    %v405 = vsub.s32 2, %v404
    %v406 = vrot.slane %v220, %v405
    %v407 = vlaneseq
    %v408 = vshrl.u32 %v407, 7
    %v409 = vsub.s32 2, %v408
    %v410 = vrot.slane %v227, %v409
    %v411 = vlaneseq
    %v412 = vshrl.u32 %v411, 7
    %v413 = vsub.s32 2, %v412
    %v414 = vrot.slane %v234, %v413
    %v415 = vlaneseq
    %v416 = vshrl.u32 %v415, 7
    %v417 = vsub.s32 2, %v416
    %v418 = vrot.slane %v241, %v417
    %v419 = vlaneseq
    %v420 = vshrl.u32 %v419, 7
    %v421 = vsub.s32 2, %v420
    %v422 = vrot.slane %v248, %v421
    %v423 = vmul.bf16 %v382, %v402
    %v424 = vmul.bf16 %v383, %v406
    %v425 = vmul.bf16 %v384, %v410
    %v426 = vmul.bf16 %v385, %v414
    %v427 = vmul.bf16 %v386, %v418
    %v428 = vmul.bf16 %v397, %v422
    %429 = vrot.lane.b32.xlu0 %v83, 120
    %v430 = vpop.permute.xlu0 %429
    %431 = vrot.lane.b32.xlu0 %v91, 120
    %v432 = vpop.permute.xlu0 %431
    %433 = vrot.lane.b32.xlu0 %v90, 120
    %v434 = vpop.permute.xlu0 %433
    %435 = vrot.lane.b32.xlu0 %v92, 120
    %v436 = vpop.permute.xlu0 %435
    %437 = vrot.lane.b32.xlu0 %v67, 120
    %v438 = vpop.permute.xlu0 %437
    %439 = vrot.lane.b32.xlu0 %v68, 120
    %v440 = vpop.permute.xlu0 %439
    %vm441 = vcmask 982016
    %v442 = vsel %vm441, %v430, %v432
    %v443 = vsel %vm441, %v432, %v434
    %v444 = vsel %vm441, %v434, %v436
    %v445 = vsel %vm441, %v436, %v438
    %v446 = vsel %vm441, %v438, %v440
    %v452 = vlaneseq
    %v453 = vshrl.u32 %v452, 7
    %v454 = vsub.s32 3, %v453
    %v455 = vrot.slane %v134, %v454
    %v456 = vlaneseq
    %v457 = vshrl.u32 %v456, 7
    %v458 = vsub.s32 3, %v457
    %v459 = vrot.slane %v141, %v458
    %v460 = vlaneseq
    %v461 = vshrl.u32 %v460, 7
    %v462 = vsub.s32 3, %v461
    %v463 = vrot.slane %v148, %v462
    %v464 = vlaneseq
    %v465 = vshrl.u32 %v464, 7
    %v466 = vsub.s32 3, %v465
    %v467 = vrot.slane %v155, %v466
    %v468 = vlaneseq
    %v469 = vshrl.u32 %v468, 7
    %v470 = vsub.s32 3, %v469
    %v471 = vrot.slane %v162, %v470
    %v472 = vlaneseq
    %v473 = vshrl.u32 %v472, 7
    %v474 = vsub.s32 3, %v473
    %v475 = vrot.slane %v169, %v474
    %v476 = vmul.bf16 %v442, %v455
    %v477 = vmul.bf16 %v443, %v459
    %v478 = vmul.bf16 %v444, %v463
    %v479 = vmul.bf16 %v445, %v467
    %v480 = vmul.bf16 %v446, %v471
    %v481 = vmul.bf16 %v58, %v475
    %482 = vrot.lane.b32.xlu0 %v83, 119
    %v483 = vpop.permute.xlu0 %482
    %484 = vrot.lane.b32.xlu0 %v91, 119
    %v485 = vpop.permute.xlu0 %484
    %486 = vrot.lane.b32.xlu0 %v90, 119
    %v487 = vpop.permute.xlu0 %486
    %488 = vrot.lane.b32.xlu0 %v92, 119
    %v489 = vpop.permute.xlu0 %488
    %490 = vrot.lane.b32.xlu0 %v67, 119
    %v491 = vpop.permute.xlu0 %490
    %492 = vrot.lane.b32.xlu0 %v68, 119
    %v493 = vpop.permute.xlu0 %492
    %vm494 = vcmask 973824
    %v495 = vsel %vm494, %v483, %v485
    %v496 = vsel %vm494, %v485, %v487
    %v497 = vsel %vm494, %v487, %v489
    %v498 = vsel %vm494, %v489, %v491
    %v499 = vsel %vm494, %v491, %v493
    %vm505 = vcmask 1039360
    %v508 = vsel %vm505, %v499, %v370
    %v510 = vlaneseq
    %v511 = vshrl.u32 %v510, 7
    %v512 = vsub.s32 3, %v511
    %v513 = vrot.slane %v213, %v512
    %v514 = vlaneseq
    %v515 = vshrl.u32 %v514, 7
    %v516 = vsub.s32 3, %v515
    %v517 = vrot.slane %v220, %v516
    %v518 = vlaneseq
    %v519 = vshrl.u32 %v518, 7
    %v520 = vsub.s32 3, %v519
    %v521 = vrot.slane %v227, %v520
    %v522 = vlaneseq
    %v523 = vshrl.u32 %v522, 7
    %v524 = vsub.s32 3, %v523
    %v525 = vrot.slane %v234, %v524
    %v526 = vlaneseq
    %v527 = vshrl.u32 %v526, 7
    %v528 = vsub.s32 3, %v527
    %v529 = vrot.slane %v241, %v528
    %v530 = vlaneseq
    %v531 = vshrl.u32 %v530, 7
    %v532 = vsub.s32 3, %v531
    %v533 = vrot.slane %v248, %v532
    %v534 = vmul.bf16 %v495, %v513
    %v535 = vmul.bf16 %v496, %v517
    %v536 = vmul.bf16 %v497, %v521
    %v537 = vmul.bf16 %v498, %v525
    %v538 = vmul.bf16 %v508, %v529
    %v539 = vmul.bf16 %v370, %v533
    %540 = vrot.lane.b32.xlu0 %v83, 118
    %v541 = vpop.permute.xlu0 %540
    %542 = vrot.lane.b32.xlu0 %v91, 118
    %v543 = vpop.permute.xlu0 %542
    %544 = vrot.lane.b32.xlu0 %v90, 118
    %v545 = vpop.permute.xlu0 %544
    %546 = vrot.lane.b32.xlu0 %v92, 118
    %v547 = vpop.permute.xlu0 %546
    %548 = vrot.lane.b32.xlu0 %v67, 118
    %v549 = vpop.permute.xlu0 %548
    %550 = vrot.lane.b32.xlu0 %v68, 118
    %v551 = vpop.permute.xlu0 %550
    %vm552 = vcmask 965632
    %v553 = vsel %vm552, %v541, %v543
    %v554 = vsel %vm552, %v543, %v545
    %v555 = vsel %vm552, %v545, %v547
    %v556 = vsel %vm552, %v547, %v549
    %v557 = vsel %vm552, %v549, %v551
    %562 = vrot.lane.b32.xlu0 %v83, 126
    %v563 = vpop.permute.xlu0 %562
    %vm565 = vcmask 1031168
    %v568 = vsel %vm565, %v557, %v563
    %v573 = vunpack.c.l.b16 %v55
    %v574 = vunpack.c.h.b16 %v55
    %v575 = vunpack.c.l.b16 %v56
    %v576 = vunpack.c.h.b16 %v56
    %v577 = vunpack.c.l.b16 %v57
    %v578 = vunpack.c.h.b16 %v57
    %v579 = vpack.c.b16 %v573, %v573
    %v580 = vpack.c.b16 %v574, %v574
    %v581 = vpack.c.b16 %v575, %v575
    %v582 = vpack.c.b16 %v576, %v576
    %v583 = vpack.c.b16 %v577, %v577
    %v584 = vpack.c.b16 %v578, %v578
    %v586 = vpack.i.b16 %v579, %v579
    %v588 = vlaneseq
    %v589 = vshrl.u32 %v588, 7
    %v590 = vsub.s32 0, %v589
    %v591 = vrot.slane %v586, %v590
    %v593 = vpack.i.b16 %v580, %v580
    %v595 = vlaneseq
    %v596 = vshrl.u32 %v595, 7
    %v597 = vsub.s32 0, %v596
    %v598 = vrot.slane %v593, %v597
    %v600 = vpack.i.b16 %v581, %v581
    %v602 = vlaneseq
    %v603 = vshrl.u32 %v602, 7
    %v604 = vsub.s32 0, %v603
    %v605 = vrot.slane %v600, %v604
    %v607 = vpack.i.b16 %v582, %v582
    %v609 = vlaneseq
    %v610 = vshrl.u32 %v609, 7
    %v611 = vsub.s32 0, %v610
    %v612 = vrot.slane %v607, %v611
    %v614 = vpack.i.b16 %v583, %v583
    %v616 = vlaneseq
    %v617 = vshrl.u32 %v616, 7
    %v618 = vsub.s32 0, %v617
    %v619 = vrot.slane %v614, %v618
    %v621 = vpack.i.b16 %v584, %v584
    %v623 = vlaneseq
    %v624 = vshrl.u32 %v623, 7
    %v625 = vsub.s32 0, %v624
    %v626 = vrot.slane %v621, %v625
    %v627 = vmul.bf16 %v553, %v591
    %v628 = vmul.bf16 %v554, %v598
    %v629 = vmul.bf16 %v555, %v605
    %v630 = vmul.bf16 %v556, %v612
    %v631 = vmul.bf16 %v568, %v619
    %v632 = vmul.bf16 %v563, %v626
    %v639 = vrot.slane %v254, 6
    %v640 = vrot.slane %v255, 6
    %v641 = vrot.slane %v256, 6
    %v642 = vrot.slane %v257, 6
    %v643 = vrot.slane %v258, 6
    %v644 = vrot.slane %v259, 6
    %v651 = vrot.slane %v309, 4
    %v652 = vrot.slane %v310, 4
    %v653 = vrot.slane %v311, 4
    %v654 = vrot.slane %v312, 4
    %v655 = vrot.slane %v313, 4
    %v656 = vrot.slane %v314, 4
    %v663 = vrot.slane %v363, 2
    %v664 = vrot.slane %v364, 2
    %v665 = vrot.slane %v365, 2
    %v666 = vrot.slane %v366, 2
    %v667 = vrot.slane %v367, 2
    %v668 = vrot.slane %v368, 2
    %v675 = vrot.slane %v423, 6
    %v676 = vrot.slane %v424, 6
    %v677 = vrot.slane %v425, 6
    %v678 = vrot.slane %v426, 6
    %v679 = vrot.slane %v427, 6
    %v680 = vrot.slane %v428, 6
    %v687 = vrot.slane %v476, 4
    %v688 = vrot.slane %v477, 4
    %v689 = vrot.slane %v478, 4
    %v690 = vrot.slane %v479, 4
    %v691 = vrot.slane %v480, 4
    %v692 = vrot.slane %v481, 4
    %v699 = vrot.slane %v534, 2
    %v700 = vrot.slane %v535, 2
    %v701 = vrot.slane %v536, 2
    %v702 = vrot.slane %v537, 2
    %v703 = vrot.slane %v538, 2
    %v704 = vrot.slane %v539, 2
    %vm705 = vcmask 1041408
    %v708 = vsel %vm705, %v175, %v639
    %v711 = vsel %vm705, %v176, %v640
    %v714 = vsel %vm705, %v177, %v641
    %v717 = vsel %vm705, %v178, %v642
    %v720 = vsel %vm705, %v179, %v643
    %v723 = vsel %vm705, %v180, %v644
    %vm724 = vcmask 1043456
    %v726 = vsel %vm724, %v708, %v651
    %v728 = vsel %vm724, %v711, %v652
    %v730 = vsel %vm724, %v714, %v653
    %v732 = vsel %vm724, %v717, %v654
    %v734 = vsel %vm724, %v720, %v655
    %v736 = vsel %vm724, %v723, %v656
    %vm737 = vcmask 1045504
    %v739 = vsel %vm737, %v726, %v663
    %v742 = vsel %vm737, %v728, %v664
    %v745 = vsel %vm737, %v730, %v665
    %v748 = vsel %vm737, %v732, %v666
    %v751 = vsel %vm737, %v734, %v667
    %v754 = vsel %vm737, %v736, %v668
    %v758 = vsel %vm705, %v83, %v675
    %v761 = vsel %vm705, %v91, %v676
    %v764 = vsel %vm705, %v90, %v677
    %v767 = vsel %vm705, %v92, %v678
    %v770 = vsel %vm705, %v67, %v679
    %v772 = vsel %vm705, %v68, %v680
    %v774 = vsel %vm724, %v758, %v687
    %v776 = vsel %vm724, %v761, %v688
    %v778 = vsel %vm724, %v764, %v689
    %v780 = vsel %vm724, %v767, %v690
    %v782 = vsel %vm724, %v770, %v691
    %v784 = vsel %vm724, %v772, %v692
    %v786 = vsel %vm737, %v774, %v699
    %v789 = vsel %vm737, %v776, %v700
    %v792 = vsel %vm737, %v778, %v701
    %v795 = vsel %vm737, %v780, %v702
    %v798 = vsel %vm737, %v782, %v703
    %v801 = vsel %vm737, %v784, %v704
    %v803 = vld [vmem:[#allocation2] sm:$0xf]
    %v804 = vld [vmem:[#allocation2 + $0x4] sm:$0xf]
    %v805 = vld [vmem:[#allocation2 + $0x8] sm:$0xf]
    %v806 = vld [vmem:[#allocation2 + $0xc] sm:$0xf]
    %v807 = vld [vmem:[%s3] sm:$0xff]
    %v808 = vld [vmem:[%s3 + $0x8] sm:$0xff]
    %v809 = vld [vmem:[%s3 + $0x10] sm:$0xff]
    %v810 = vld [vmem:[%s3 + $0x18] sm:$0xff]
    %812 = vset.pattern.permute.xlu0 0
    %813 = vperm.xlu0 %812, %v807
    %v814 = vpop.permute.xlu0 %813
    %817 = vset.pattern.permute.xlu0 0
    %818 = vperm.xlu0 %817, %v808
    %v819 = vpop.permute.xlu0 %818
    %822 = vset.pattern.permute.xlu0 0
    %823 = vperm.xlu0 %822, %v809
    %v824 = vpop.permute.xlu0 %823
    %827 = vset.pattern.permute.xlu0 0
    %828 = vperm.xlu0 %827, %v810
    %v829 = vpop.permute.xlu0 %828
    %v835 = vunpack.c.l.b16 %v803
    %v836 = vunpack.c.l.b16 %v804
    %v837 = vunpack.c.l.b16 %v805
    %v838 = vunpack.c.l.b16 %v806
    %v839 = vpack.c.b16 %v836, %v835
    %v840 = vpack.c.b16 %v838, %v837
    %vm841 = vcmask 293888
    %v843 = vsel %vm841, %v839, 0
    %v846 = vsel %vm841, %v840, 0
    %v849 = vsel %vm705, %v627, 0
    %v852 = vsel %vm705, %v628, 0
    %v855 = vsel %vm705, %v629, 0
    %v858 = vsel %vm705, %v630, 0
    %v861 = vsel %vm705, %v631, 0
    %v864 = vsel %vm705, %v632, 0
    %866 = vmatprep.subr.bf16.mxu0 %v742
    %867 = vmatpush1.bf16.msra.mxu0 %v739
    %868 = vmatprep.subr.bf16.mxu0 %v789
    %869 = vmatpush1.bf16.msra.mxu0 %v786
    %870 = vmatprep.subr.bf16.mxu0 %v852
    %871 = vmatpush1.bf16.msra.mxu0 %v849
    %872 = vmatprep.subr.bf16.mxu0 0
    %873 = vmatpush1.bf16.msra.mxu0 0
    %874 = vmatprep.subr.bf16.mxu0 0
    %875 = vmatpush1.bf16.msra.mxu0 0
    %876 = vmatprep.subr.bf16.mxu0 0
    %877 = vmatpush1.bf16.msra.mxu0 0
    %878 = vmatprep.subr.bf16.mxu0 0
    %879 = vmatpush1.bf16.msra.mxu0 0
    %880 = vmatprep.subr.bf16.mxu0 0
    %881 = vmatpush1.bf16.msra.mxu0 0
    %882 = vmatprep.subr.bf16.mxu0 0
    %883 = vmatpush1.bf16.msra.mxu0 0
    %884 = vmatprep.subr.bf16.mxu0 0
    %885 = vmatpush1.bf16.msra.mxu0 0
    %886 = vmatprep.subr.bf16.mxu0 0
    %887 = vmatpush1.bf16.msra.mxu0 0
    %888 = vmatprep.subr.bf16.mxu0 0
    %889 = vmatpush1.bf16.msra.mxu0 0
    %890 = vmatprep.subr.bf16.mxu0 0
    %891 = vmatpush1.bf16.msra.mxu0 0
    %892 = vmatprep.subr.bf16.mxu0 0
    %893 = vmatpush1.bf16.msra.mxu0 0
    %894 = vmatprep.subr.bf16.mxu0 0
    %895 = vmatpush1.bf16.msra.mxu0 0
    %896 = vmatprep.subr.bf16.mxu0 0
    %897 = vmatpush1.bf16.msra.mxu0 0
    %898 = vmatprep.mubr.bf16.mxu0 0
    %899 = vmatmul.mubr.bf16.gmra.mrb[0].mxu0 %v843
    %v900 = vpop.f32.mrb[0].mxu0
    %v901 = vadd.f32 %v814, %v900
    %v902 = vpop.f32.mrb[0].mxu0
    %v903 = vadd.f32 %v814, %v902
    %v904 = vpop.f32.mrb[0].mxu0
    %v905 = vadd.f32 %v819, %v904
    %v906 = vpop.f32.mrb[0].mxu0
    %v907 = vadd.f32 %v819, %v906
    %908 = vmatprep.mubr.bf16.mxu0 0
    %909 = vmatmul.mubr.bf16.gmra.mrb[0].mxu0 %v846
    %v910 = vpop.f32.mrb[0].mxu0
    %v911 = vadd.f32 %v824, %v910
    %v912 = vpop.f32.mrb[0].mxu0
    %v913 = vadd.f32 %v824, %v912
    %v914 = vpop.f32.mrb[0].mxu0
    %v915 = vadd.f32 %v829, %v914
    %v916 = vpop.f32.mrb[0].mxu0
    %v917 = vadd.f32 %v829, %v916
    %918 = vdwg.mxu0
    %919 = vmatprep.subr.bf16.mxu0 %v748
    %920 = vmatpush1.bf16.msra.mxu0 %v745
    %921 = vmatprep.subr.bf16.mxu0 %v795
    %922 = vmatpush1.bf16.msra.mxu0 %v792
    %923 = vmatprep.subr.bf16.mxu0 %v858
    %924 = vmatpush1.bf16.msra.mxu0 %v855
    %925 = vmatprep.subr.bf16.mxu0 0
    %926 = vmatpush1.bf16.msra.mxu0 0
    %927 = vmatprep.subr.bf16.mxu0 0
    %928 = vmatpush1.bf16.msra.mxu0 0
    %929 = vmatprep.subr.bf16.mxu0 0
    %930 = vmatpush1.bf16.msra.mxu0 0
    %931 = vmatprep.subr.bf16.mxu0 0
    %932 = vmatpush1.bf16.msra.mxu0 0
    %933 = vmatprep.subr.bf16.mxu0 0
    %934 = vmatpush1.bf16.msra.mxu0 0
    %935 = vmatprep.subr.bf16.mxu0 0
    %936 = vmatpush1.bf16.msra.mxu0 0
    %937 = vmatprep.subr.bf16.mxu0 0
    %938 = vmatpush1.bf16.msra.mxu0 0
    %939 = vmatprep.subr.bf16.mxu0 0
    %940 = vmatpush1.bf16.msra.mxu0 0
    %941 = vmatprep.subr.bf16.mxu0 0
    %942 = vmatpush1.bf16.msra.mxu0 0
    %943 = vmatprep.subr.bf16.mxu0 0
    %944 = vmatpush1.bf16.msra.mxu0 0
    %945 = vmatprep.subr.bf16.mxu0 0
    %946 = vmatpush1.bf16.msra.mxu0 0
    %947 = vmatprep.subr.bf16.mxu0 0
    %948 = vmatpush1.bf16.msra.mxu0 0
    %949 = vmatprep.subr.bf16.mxu0 0
    %950 = vmatpush1.bf16.msra.mxu0 0
    %951 = vmatprep.mubr.bf16.mxu0 0
    %952 = vmatmul.mubr.bf16.gmra.mrb[0].mxu0 %v843
    %v953 = vpop.f32.mrb[0].mxu0
    %v954 = vadd.f32 %v814, %v953
    %v955 = vpop.f32.mrb[0].mxu0
    %v956 = vadd.f32 %v814, %v955
    %v957 = vpop.f32.mrb[0].mxu0
    %v958 = vadd.f32 %v819, %v957
    %v959 = vpop.f32.mrb[0].mxu0
    %v960 = vadd.f32 %v819, %v959
    %961 = vmatprep.mubr.bf16.mxu0 0
    %962 = vmatmul.mubr.bf16.gmra.mrb[0].mxu0 %v846
    %v963 = vpop.f32.mrb[0].mxu0
    %v964 = vadd.f32 %v824, %v963
    %v965 = vpop.f32.mrb[0].mxu0
    %v966 = vadd.f32 %v824, %v965
    %v967 = vpop.f32.mrb[0].mxu0
    %v968 = vadd.f32 %v829, %v967
    %v969 = vpop.f32.mrb[0].mxu0
    %v970 = vadd.f32 %v829, %v969
    %971 = vdwg.mxu0
    %972 = vmatprep.subr.bf16.mxu0 %v754
    %973 = vmatpush1.bf16.msra.mxu0 %v751
    %974 = vmatprep.subr.bf16.mxu0 %v801
    %975 = vmatpush1.bf16.msra.mxu0 %v798
    %976 = vmatprep.subr.bf16.mxu0 %v864
    %977 = vmatpush1.bf16.msra.mxu0 %v861
    %978 = vmatprep.subr.bf16.mxu0 0
    %979 = vmatpush1.bf16.msra.mxu0 0
    %980 = vmatprep.subr.bf16.mxu0 0
    %981 = vmatpush1.bf16.msra.mxu0 0
    %982 = vmatprep.subr.bf16.mxu0 0
    %983 = vmatpush1.bf16.msra.mxu0 0
    %984 = vmatprep.subr.bf16.mxu0 0
    %985 = vmatpush1.bf16.msra.mxu0 0
    %986 = vmatprep.subr.bf16.mxu0 0
    %987 = vmatpush1.bf16.msra.mxu0 0
    %988 = vmatprep.subr.bf16.mxu0 0
    %989 = vmatpush1.bf16.msra.mxu0 0
    %990 = vmatprep.subr.bf16.mxu0 0
    %991 = vmatpush1.bf16.msra.mxu0 0
    %992 = vmatprep.subr.bf16.mxu0 0
    %993 = vmatpush1.bf16.msra.mxu0 0
    %994 = vmatprep.subr.bf16.mxu0 0
    %995 = vmatpush1.bf16.msra.mxu0 0
    %996 = vmatprep.subr.bf16.mxu0 0
    %997 = vmatpush1.bf16.msra.mxu0 0
    %998 = vmatprep.subr.bf16.mxu0 0
    %999 = vmatpush1.bf16.msra.mxu0 0
    %1000 = vmatprep.subr.bf16.mxu0 0
    %1001 = vmatpush1.bf16.msra.mxu0 0
    %1002 = vmatprep.subr.bf16.mxu0 0
    %1003 = vmatpush1.bf16.msra.mxu0 0
    %1004 = vmatprep.mubr.bf16.mxu0 0
    %1005 = vmatmul.mubr.bf16.gmra.mrb[0].mxu0 %v843
    %v1006 = vpop.f32.mrb[0].mxu0
    %v1007 = vadd.f32 %v814, %v1006
    %v1008 = vpop.f32.mrb[0].mxu0
    %v1009 = vadd.f32 %v814, %v1008
    %v1010 = vpop.f32.mrb[0].mxu0
    %v1011 = vadd.f32 %v819, %v1010
    %v1012 = vpop.f32.mrb[0].mxu0
    %v1013 = vadd.f32 %v819, %v1012
    %1014 = vmatprep.mubr.bf16.mxu0 0
    %1015 = vmatmul.mubr.bf16.gmra.mrb[0].mxu0 %v846
    %v1016 = vpop.f32.mrb[0].mxu0
    %v1017 = vadd.f32 %v824, %v1016
    %v1018 = vpop.f32.mrb[0].mxu0
    %v1019 = vadd.f32 %v824, %v1018
    %v1020 = vpop.f32.mrb[0].mxu0
    %v1021 = vadd.f32 %v829, %v1020
    %v1022 = vpop.f32.mrb[0].mxu0
    %v1023 = vadd.f32 %v829, %v1022
    %1024 = vdwg.mxu0
    %v1025 = vmax.f32 %v901, 0.0
    %v1026 = vmax.f32 %v903, 0.0
    %v1027 = vmax.f32 %v954, 0.0
    %v1028 = vmax.f32 %v956, 0.0
    %v1029 = vmax.f32 %v1007, 0.0
    %v1030 = vmax.f32 %v1009, 0.0
    %v1031 = vmax.f32 %v905, 0.0
    %v1032 = vmax.f32 %v907, 0.0
    %v1033 = vmax.f32 %v958, 0.0
    %v1034 = vmax.f32 %v960, 0.0
    %v1035 = vmax.f32 %v1011, 0.0
    %v1036 = vmax.f32 %v1013, 0.0
    %v1037 = vmax.f32 %v911, 0.0
    %v1038 = vmax.f32 %v913, 0.0
    %v1039 = vmax.f32 %v964, 0.0
    %v1040 = vmax.f32 %v966, 0.0
    %v1041 = vmax.f32 %v1017, 0.0
    %v1042 = vmax.f32 %v1019, 0.0
    %v1043 = vmax.f32 %v915, 0.0
    %v1044 = vmax.f32 %v917, 0.0
    %v1045 = vmax.f32 %v968, 0.0
    %v1046 = vmax.f32 %v970, 0.0
    %v1047 = vmax.f32 %v1021, 0.0
    %v1048 = vmax.f32 %v1023, 0.0
    %v1049 = vpack.c.bf16 %v1031, %v1025
    %v1050 = vpack.c.bf16 %v1032, %v1026
    %v1051 = vpack.c.bf16 %v1033, %v1027
    %v1052 = vpack.c.bf16 %v1034, %v1028
    %v1053 = vpack.c.bf16 %v1035, %v1029
    %v1054 = vpack.c.bf16 %v1036, %v1030
    %v1055 = vpack.c.bf16 %v1043, %v1037
    %v1056 = vpack.c.bf16 %v1044, %v1038
    %v1057 = vpack.c.bf16 %v1045, %v1039
    %v1058 = vpack.c.bf16 %v1046, %v1040
    %v1059 = vpack.c.bf16 %v1047, %v1041
    %v1060 = vpack.c.bf16 %v1048, %v1042
    %1065 = vrot.lane.b32.xlu0 %v1053, 2
    %v1066 = vpop.permute.xlu0 %1065
    %1067 = vrot.lane.b32.xlu0 %v1054, 2
    %v1068 = vpop.permute.xlu0 %1067
    %1069 = vrot.lane.b32.xlu0 %v1059, 2
    %v1070 = vpop.permute.xlu0 %1069
    %1071 = vrot.lane.b32.xlu0 %v1060, 2
    %v1072 = vpop.permute.xlu0 %1071
    %v1073 = vsel %vm73, %v1066, %v1068
    %v1074 = vsel %vm73, %v1070, %v1072
    %1083 = vrot.lane.b32.xlu0 %v1049, 10
    %v1084 = vpop.permute.xlu0 %1083
    %1085 = vrot.lane.b32.xlu0 %v1050, 10
    %v1086 = vpop.permute.xlu0 %1085
    %1087 = vrot.lane.b32.xlu0 %v1051, 10
    %v1088 = vpop.permute.xlu0 %1087
    %1089 = vrot.lane.b32.xlu0 %v1052, 10
    %v1090 = vpop.permute.xlu0 %1089
    %1091 = vrot.lane.b32.xlu0 %v1053, 10
    %v1092 = vpop.permute.xlu0 %1091
    %1093 = vrot.lane.b32.xlu0 %v1055, 10
    %v1094 = vpop.permute.xlu0 %1093
    %1095 = vrot.lane.b32.xlu0 %v1056, 10
    %v1096 = vpop.permute.xlu0 %1095
    %1097 = vrot.lane.b32.xlu0 %v1057, 10
    %v1098 = vpop.permute.xlu0 %1097
    %1099 = vrot.lane.b32.xlu0 %v1058, 10
    %v1100 = vpop.permute.xlu0 %1099
    %1101 = vrot.lane.b32.xlu0 %v1059, 10
    %v1102 = vpop.permute.xlu0 %1101
    %v1103 = vsel %vm103, %v1084, %v1086
    %v1104 = vsel %vm103, %v1086, %v1088
    %v1105 = vsel %vm103, %v1088, %v1090
    %v1106 = vsel %vm103, %v1090, %v1092
    %v1107 = vsel %vm103, %v1094, %v1096
    %v1108 = vsel %vm103, %v1096, %v1098
    %v1109 = vsel %vm103, %v1098, %v1100
    %v1110 = vsel %vm103, %v1100, %v1102
    %v1123 = vsel %vm113, %v1073, %v1084
    %v1127 = vsel %vm113, %v1074, %v1094
    %v1129 = vmul.bf16 %v1123, %v139
    %v1130 = vmul.bf16 %v1103, %v146
    %v1131 = vmul.bf16 %v1104, %v153
    %v1132 = vmul.bf16 %v1105, %v160
    %v1133 = vmul.bf16 %v1106, %v167
    %v1134 = vmul.bf16 %v1092, %v174
    %v1135 = vmul.bf16 %v1127, %v139
    %v1136 = vmul.bf16 %v1107, %v146
    %v1137 = vmul.bf16 %v1108, %v153
    %v1138 = vmul.bf16 %v1109, %v160
    %v1139 = vmul.bf16 %v1110, %v167
    %v1140 = vmul.bf16 %v1102, %v174
    %1141 = vrot.lane.b32.xlu0 %v1053, 1
    %v1142 = vpop.permute.xlu0 %1141
    %1143 = vrot.lane.b32.xlu0 %v1054, 1
    %v1144 = vpop.permute.xlu0 %1143
    %1145 = vrot.lane.b32.xlu0 %v1059, 1
    %v1146 = vpop.permute.xlu0 %1145
    %1147 = vrot.lane.b32.xlu0 %v1060, 1
    %v1148 = vpop.permute.xlu0 %1147
    %v1149 = vsel %vm185, %v1142, %v1144
    %v1150 = vsel %vm185, %v1146, %v1148
    %1151 = vrot.lane.b32.xlu0 %v1049, 9
    %v1152 = vpop.permute.xlu0 %1151
    %1153 = vrot.lane.b32.xlu0 %v1050, 9
    %v1154 = vpop.permute.xlu0 %1153
    %1155 = vrot.lane.b32.xlu0 %v1051, 9
    %v1156 = vpop.permute.xlu0 %1155
    %1157 = vrot.lane.b32.xlu0 %v1052, 9
    %v1158 = vpop.permute.xlu0 %1157
    %1159 = vrot.lane.b32.xlu0 %v1053, 9
    %v1160 = vpop.permute.xlu0 %1159
    %1161 = vrot.lane.b32.xlu0 %v1055, 9
    %v1162 = vpop.permute.xlu0 %1161
    %1163 = vrot.lane.b32.xlu0 %v1056, 9
    %v1164 = vpop.permute.xlu0 %1163
    %1165 = vrot.lane.b32.xlu0 %v1057, 9
    %v1166 = vpop.permute.xlu0 %1165
    %1167 = vrot.lane.b32.xlu0 %v1058, 9
    %v1168 = vpop.permute.xlu0 %1167
    %1169 = vrot.lane.b32.xlu0 %v1059, 9
    %v1170 = vpop.permute.xlu0 %1169
    %v1171 = vsel %vm197, %v1152, %v1154
    %v1172 = vsel %vm197, %v1154, %v1156
    %v1173 = vsel %vm197, %v1156, %v1158
    %v1174 = vsel %vm197, %v1158, %v1160
    %v1175 = vsel %vm197, %v1162, %v1164
    %v1176 = vsel %vm197, %v1164, %v1166
    %v1177 = vsel %vm197, %v1166, %v1168
    %v1178 = vsel %vm197, %v1168, %v1170
    %v1191 = vsel %vm207, %v1149, %v1152
    %v1195 = vsel %vm207, %v1150, %v1162
    %v1197 = vmul.bf16 %v1191, %v218
    %v1198 = vmul.bf16 %v1171, %v225
    %v1199 = vmul.bf16 %v1172, %v232
    %v1200 = vmul.bf16 %v1173, %v239
    %v1201 = vmul.bf16 %v1174, %v246
    %v1202 = vmul.bf16 %v1160, %v253
    %v1203 = vmul.bf16 %v1195, %v218
    %v1204 = vmul.bf16 %v1175, %v225
    %v1205 = vmul.bf16 %v1176, %v232
    %v1206 = vmul.bf16 %v1177, %v239
    %v1207 = vmul.bf16 %v1178, %v246
    %v1208 = vmul.bf16 %v1170, %v253
    %1209 = vrot.lane.b32.xlu0 %v1049, 8
    %v1210 = vpop.permute.xlu0 %1209
    %1211 = vrot.lane.b32.xlu0 %v1050, 8
    %v1212 = vpop.permute.xlu0 %1211
    %1213 = vrot.lane.b32.xlu0 %v1051, 8
    %v1214 = vpop.permute.xlu0 %1213
    %1215 = vrot.lane.b32.xlu0 %v1052, 8
    %v1216 = vpop.permute.xlu0 %1215
    %1217 = vrot.lane.b32.xlu0 %v1053, 8
    %v1218 = vpop.permute.xlu0 %1217
    %1219 = vrot.lane.b32.xlu0 %v1055, 8
    %v1220 = vpop.permute.xlu0 %1219
    %1221 = vrot.lane.b32.xlu0 %v1056, 8
    %v1222 = vpop.permute.xlu0 %1221
    %1223 = vrot.lane.b32.xlu0 %v1057, 8
    %v1224 = vpop.permute.xlu0 %1223
    %1225 = vrot.lane.b32.xlu0 %v1058, 8
    %v1226 = vpop.permute.xlu0 %1225
    %1227 = vrot.lane.b32.xlu0 %v1059, 8
    %v1228 = vpop.permute.xlu0 %1227
    %v1229 = vsel %vm270, %v1210, %v1212
    %v1230 = vsel %vm270, %v1212, %v1214
    %v1231 = vsel %vm270, %v1214, %v1216
    %v1232 = vsel %vm270, %v1216, %v1218
    %v1233 = vsel %vm270, %v1220, %v1222
    %v1234 = vsel %vm270, %v1222, %v1224
    %v1235 = vsel %vm270, %v1224, %v1226
    %v1236 = vsel %vm270, %v1226, %v1228
    %v1249 = vsel %vm280, %v1054, %v1210
    %v1253 = vsel %vm280, %v1060, %v1220
    %v1255 = vmul.bf16 %v1249, %v288
    %v1256 = vmul.bf16 %v1229, %v292
    %v1257 = vmul.bf16 %v1230, %v296
    %v1258 = vmul.bf16 %v1231, %v300
    %v1259 = vmul.bf16 %v1232, %v304
    %v1260 = vmul.bf16 %v1218, %v308
    %v1261 = vmul.bf16 %v1253, %v288
    %v1262 = vmul.bf16 %v1233, %v292
    %v1263 = vmul.bf16 %v1234, %v296
    %v1264 = vmul.bf16 %v1235, %v300
    %v1265 = vmul.bf16 %v1236, %v304
    %v1266 = vmul.bf16 %v1228, %v308
    %1267 = vrot.lane.b32.xlu0 %v1054, 121
    %v1268 = vpop.permute.xlu0 %1267
    %1269 = vrot.lane.b32.xlu0 %v1060, 121
    %v1270 = vpop.permute.xlu0 %1269
    %1271 = vrot.lane.b32.xlu0 %v1049, 1
    %v1272 = vpop.permute.xlu0 %1271
    %1273 = vrot.lane.b32.xlu0 %v1050, 1
    %v1274 = vpop.permute.xlu0 %1273
    %1275 = vrot.lane.b32.xlu0 %v1051, 1
    %v1276 = vpop.permute.xlu0 %1275
    %1277 = vrot.lane.b32.xlu0 %v1052, 1
    %v1278 = vpop.permute.xlu0 %1277
    %1279 = vrot.lane.b32.xlu0 %v1055, 1
    %v1280 = vpop.permute.xlu0 %1279
    %1281 = vrot.lane.b32.xlu0 %v1056, 1
    %v1282 = vpop.permute.xlu0 %1281
    %1283 = vrot.lane.b32.xlu0 %v1057, 1
    %v1284 = vpop.permute.xlu0 %1283
    %1285 = vrot.lane.b32.xlu0 %v1058, 1
    %v1286 = vpop.permute.xlu0 %1285
    %v1287 = vsel %vm185, %v1272, %v1274
    %v1288 = vsel %vm185, %v1274, %v1276
    %v1289 = vsel %vm185, %v1276, %v1278
    %v1290 = vsel %vm185, %v1278, %v1142
    %v1291 = vsel %vm185, %v1280, %v1282
    %v1292 = vsel %vm185, %v1282, %v1284
    %v1293 = vsel %vm185, %v1284, %v1286
    %v1294 = vsel %vm185, %v1286, %v1146
    %v1307 = vsel %vm334, %v1268, %v1272
    %v1311 = vsel %vm334, %v1270, %v1280
    %v1313 = vmul.bf16 %v1307, %v342
    %v1314 = vmul.bf16 %v1287, %v346
    %v1315 = vmul.bf16 %v1288, %v350
    %v1316 = vmul.bf16 %v1289, %v354
    %v1317 = vmul.bf16 %v1290, %v358
    %v1318 = vmul.bf16 %v1149, %v362
    %v1319 = vmul.bf16 %v1311, %v342
    %v1320 = vmul.bf16 %v1291, %v346
    %v1321 = vmul.bf16 %v1292, %v350
    %v1322 = vmul.bf16 %v1293, %v354
    %v1323 = vmul.bf16 %v1294, %v358
    %v1324 = vmul.bf16 %v1150, %v362
    %1325 = vrot.lane.b32.xlu0 %v1049, 127
    %v1326 = vpop.permute.xlu0 %1325
    %1327 = vrot.lane.b32.xlu0 %v1050, 127
    %v1328 = vpop.permute.xlu0 %1327
    %1329 = vrot.lane.b32.xlu0 %v1051, 127
    %v1330 = vpop.permute.xlu0 %1329
    %1331 = vrot.lane.b32.xlu0 %v1052, 127
    %v1332 = vpop.permute.xlu0 %1331
    %1333 = vrot.lane.b32.xlu0 %v1053, 127
    %v1334 = vpop.permute.xlu0 %1333
    %1335 = vrot.lane.b32.xlu0 %v1054, 127
    %v1336 = vpop.permute.xlu0 %1335
    %1337 = vrot.lane.b32.xlu0 %v1055, 127
    %v1338 = vpop.permute.xlu0 %1337
    %1339 = vrot.lane.b32.xlu0 %v1056, 127
    %v1340 = vpop.permute.xlu0 %1339
    %1341 = vrot.lane.b32.xlu0 %v1057, 127
    %v1342 = vpop.permute.xlu0 %1341
    %1343 = vrot.lane.b32.xlu0 %v1058, 127
    %v1344 = vpop.permute.xlu0 %1343
    %1345 = vrot.lane.b32.xlu0 %v1059, 127
    %v1346 = vpop.permute.xlu0 %1345
    %1347 = vrot.lane.b32.xlu0 %v1060, 127
    %v1348 = vpop.permute.xlu0 %1347
    %v1349 = vsel %vm381, %v1326, %v1328
    %v1350 = vsel %vm381, %v1328, %v1330
    %v1351 = vsel %vm381, %v1330, %v1332
    %v1352 = vsel %vm381, %v1332, %v1334
    %v1353 = vsel %vm381, %v1334, %v1336
    %v1354 = vsel %vm381, %v1338, %v1340
    %v1355 = vsel %vm381, %v1340, %v1342
    %v1356 = vsel %vm381, %v1342, %v1344
    %v1357 = vsel %vm381, %v1344, %v1346
    %v1358 = vsel %vm381, %v1346, %v1348
    %1369 = vrot.lane.b32.xlu0 %v1049, 7
    %v1370 = vpop.permute.xlu0 %1369
    %1371 = vrot.lane.b32.xlu0 %v1055, 7
    %v1372 = vpop.permute.xlu0 %1371
    %v1375 = vsel %vm394, %v1336, %v1370
    %v1379 = vsel %vm394, %v1348, %v1372
    %v1381 = vmul.bf16 %v1349, %v402
    %v1382 = vmul.bf16 %v1350, %v406
    %v1383 = vmul.bf16 %v1351, %v410
    %v1384 = vmul.bf16 %v1352, %v414
    %v1385 = vmul.bf16 %v1353, %v418
    %v1386 = vmul.bf16 %v1375, %v422
    %v1387 = vmul.bf16 %v1354, %v402
    %v1388 = vmul.bf16 %v1355, %v406
    %v1389 = vmul.bf16 %v1356, %v410
    %v1390 = vmul.bf16 %v1357, %v414
    %v1391 = vmul.bf16 %v1358, %v418
    %v1392 = vmul.bf16 %v1379, %v422
    %1393 = vrot.lane.b32.xlu0 %v1049, 120
    %v1394 = vpop.permute.xlu0 %1393
    %1395 = vrot.lane.b32.xlu0 %v1050, 120
    %v1396 = vpop.permute.xlu0 %1395
    %1397 = vrot.lane.b32.xlu0 %v1051, 120
    %v1398 = vpop.permute.xlu0 %1397
    %1399 = vrot.lane.b32.xlu0 %v1052, 120
    %v1400 = vpop.permute.xlu0 %1399
    %1401 = vrot.lane.b32.xlu0 %v1053, 120
    %v1402 = vpop.permute.xlu0 %1401
    %1403 = vrot.lane.b32.xlu0 %v1054, 120
    %v1404 = vpop.permute.xlu0 %1403
    %1405 = vrot.lane.b32.xlu0 %v1055, 120
    %v1406 = vpop.permute.xlu0 %1405
    %1407 = vrot.lane.b32.xlu0 %v1056, 120
    %v1408 = vpop.permute.xlu0 %1407
    %1409 = vrot.lane.b32.xlu0 %v1057, 120
    %v1410 = vpop.permute.xlu0 %1409
    %1411 = vrot.lane.b32.xlu0 %v1058, 120
    %v1412 = vpop.permute.xlu0 %1411
    %1413 = vrot.lane.b32.xlu0 %v1059, 120
    %v1414 = vpop.permute.xlu0 %1413
    %1415 = vrot.lane.b32.xlu0 %v1060, 120
    %v1416 = vpop.permute.xlu0 %1415
    %v1417 = vsel %vm441, %v1394, %v1396
    %v1418 = vsel %vm441, %v1396, %v1398
    %v1419 = vsel %vm441, %v1398, %v1400
    %v1420 = vsel %vm441, %v1400, %v1402
    %v1421 = vsel %vm441, %v1402, %v1404
    %v1422 = vsel %vm441, %v1406, %v1408
    %v1423 = vsel %vm441, %v1408, %v1410
    %v1424 = vsel %vm441, %v1410, %v1412
    %v1425 = vsel %vm441, %v1412, %v1414
    %v1426 = vsel %vm441, %v1414, %v1416
    %v1437 = vmul.bf16 %v1417, %v455
    %v1438 = vmul.bf16 %v1418, %v459
    %v1439 = vmul.bf16 %v1419, %v463
    %v1440 = vmul.bf16 %v1420, %v467
    %v1441 = vmul.bf16 %v1421, %v471
    %v1442 = vmul.bf16 %v1049, %v475
    %v1443 = vmul.bf16 %v1422, %v455
    %v1444 = vmul.bf16 %v1423, %v459
    %v1445 = vmul.bf16 %v1424, %v463
    %v1446 = vmul.bf16 %v1425, %v467
    %v1447 = vmul.bf16 %v1426, %v471
    %v1448 = vmul.bf16 %v1055, %v475
    %1449 = vrot.lane.b32.xlu0 %v1049, 119
    %v1450 = vpop.permute.xlu0 %1449
    %1451 = vrot.lane.b32.xlu0 %v1050, 119
    %v1452 = vpop.permute.xlu0 %1451
    %1453 = vrot.lane.b32.xlu0 %v1051, 119
    %v1454 = vpop.permute.xlu0 %1453
    %1455 = vrot.lane.b32.xlu0 %v1052, 119
    %v1456 = vpop.permute.xlu0 %1455
    %1457 = vrot.lane.b32.xlu0 %v1053, 119
    %v1458 = vpop.permute.xlu0 %1457
    %1459 = vrot.lane.b32.xlu0 %v1054, 119
    %v1460 = vpop.permute.xlu0 %1459
    %1461 = vrot.lane.b32.xlu0 %v1055, 119
    %v1462 = vpop.permute.xlu0 %1461
    %1463 = vrot.lane.b32.xlu0 %v1056, 119
    %v1464 = vpop.permute.xlu0 %1463
    %1465 = vrot.lane.b32.xlu0 %v1057, 119
    %v1466 = vpop.permute.xlu0 %1465
    %1467 = vrot.lane.b32.xlu0 %v1058, 119
    %v1468 = vpop.permute.xlu0 %1467
    %1469 = vrot.lane.b32.xlu0 %v1059, 119
    %v1470 = vpop.permute.xlu0 %1469
    %1471 = vrot.lane.b32.xlu0 %v1060, 119
    %v1472 = vpop.permute.xlu0 %1471
    %v1473 = vsel %vm494, %v1450, %v1452
    %v1474 = vsel %vm494, %v1452, %v1454
    %v1475 = vsel %vm494, %v1454, %v1456
    %v1476 = vsel %vm494, %v1456, %v1458
    %v1477 = vsel %vm494, %v1458, %v1460
    %v1478 = vsel %vm494, %v1462, %v1464
    %v1479 = vsel %vm494, %v1464, %v1466
    %v1480 = vsel %vm494, %v1466, %v1468
    %v1481 = vsel %vm494, %v1468, %v1470
    %v1482 = vsel %vm494, %v1470, %v1472
    %v1495 = vsel %vm505, %v1477, %v1326
    %v1499 = vsel %vm505, %v1482, %v1338
    %v1501 = vmul.bf16 %v1473, %v513
    %v1502 = vmul.bf16 %v1474, %v517
    %v1503 = vmul.bf16 %v1475, %v521
    %v1504 = vmul.bf16 %v1476, %v525
    %v1505 = vmul.bf16 %v1495, %v529
    %v1506 = vmul.bf16 %v1326, %v533
    %v1507 = vmul.bf16 %v1478, %v513
    %v1508 = vmul.bf16 %v1479, %v517
    %v1509 = vmul.bf16 %v1480, %v521
    %v1510 = vmul.bf16 %v1481, %v525
    %v1511 = vmul.bf16 %v1499, %v529
    %v1512 = vmul.bf16 %v1338, %v533
    %1513 = vrot.lane.b32.xlu0 %v1049, 118
    %v1514 = vpop.permute.xlu0 %1513
    %1515 = vrot.lane.b32.xlu0 %v1050, 118
    %v1516 = vpop.permute.xlu0 %1515
    %1517 = vrot.lane.b32.xlu0 %v1051, 118
    %v1518 = vpop.permute.xlu0 %1517
    %1519 = vrot.lane.b32.xlu0 %v1052, 118
    %v1520 = vpop.permute.xlu0 %1519
    %1521 = vrot.lane.b32.xlu0 %v1053, 118
    %v1522 = vpop.permute.xlu0 %1521
    %1523 = vrot.lane.b32.xlu0 %v1054, 118
    %v1524 = vpop.permute.xlu0 %1523
    %1525 = vrot.lane.b32.xlu0 %v1055, 118
    %v1526 = vpop.permute.xlu0 %1525
    %1527 = vrot.lane.b32.xlu0 %v1056, 118
    %v1528 = vpop.permute.xlu0 %1527
    %1529 = vrot.lane.b32.xlu0 %v1057, 118
    %v1530 = vpop.permute.xlu0 %1529
    %1531 = vrot.lane.b32.xlu0 %v1058, 118
    %v1532 = vpop.permute.xlu0 %1531
    %1533 = vrot.lane.b32.xlu0 %v1059, 118
    %v1534 = vpop.permute.xlu0 %1533
    %1535 = vrot.lane.b32.xlu0 %v1060, 118
    %v1536 = vpop.permute.xlu0 %1535
    %v1537 = vsel %vm552, %v1514, %v1516
    %v1538 = vsel %vm552, %v1516, %v1518
    %v1539 = vsel %vm552, %v1518, %v1520
    %v1540 = vsel %vm552, %v1520, %v1522
    %v1541 = vsel %vm552, %v1522, %v1524
    %v1542 = vsel %vm552, %v1526, %v1528
    %v1543 = vsel %vm552, %v1528, %v1530
    %v1544 = vsel %vm552, %v1530, %v1532
    %v1545 = vsel %vm552, %v1532, %v1534
    %v1546 = vsel %vm552, %v1534, %v1536
    %1555 = vrot.lane.b32.xlu0 %v1049, 126
    %v1556 = vpop.permute.xlu0 %1555
    %1557 = vrot.lane.b32.xlu0 %v1055, 126
    %v1558 = vpop.permute.xlu0 %1557
    %v1563 = vsel %vm565, %v1541, %v1556
    %v1567 = vsel %vm565, %v1546, %v1558
    %v1569 = vmul.bf16 %v1537, %v591
    %v1570 = vmul.bf16 %v1538, %v598
    %v1571 = vmul.bf16 %v1539, %v605
    %v1572 = vmul.bf16 %v1540, %v612
    %v1573 = vmul.bf16 %v1563, %v619
    %v1574 = vmul.bf16 %v1556, %v626
    %v1575 = vmul.bf16 %v1542, %v591
    %v1576 = vmul.bf16 %v1543, %v598
    %v1577 = vmul.bf16 %v1544, %v605
    %v1578 = vmul.bf16 %v1545, %v612
    %v1579 = vmul.bf16 %v1567, %v619
    %v1580 = vmul.bf16 %v1558, %v626
    %v1581 = vld [vmem:[#allocation4] sm:$0xff]
    %v1582 = vld [vmem:[#allocation4 + $0x8] sm:$0xf]
    %v1583 = vld [vmem:[#allocation4 + $0xc] sm:$0xff]
    %v1584 = vld [vmem:[#allocation4 + $0x14] sm:$0xf]
    %v1585 = vld [vmem:[#allocation4 + $0x18] sm:$0xff]
    %v1586 = vld [vmem:[#allocation4 + $0x20] sm:$0xf]
    %v1587 = vld [vmem:[#allocation4 + $0x24] sm:$0xff]
    %v1588 = vld [vmem:[#allocation4 + $0x2c] sm:$0xf]
    %v1589 = vld [vmem:[#allocation4 + $0x30] sm:$0xff]
    %v1590 = vld [vmem:[#allocation4 + $0x38] sm:$0xf]
    %v1591 = vld [vmem:[#allocation4 + $0x3c] sm:$0xff]
    %v1592 = vld [vmem:[#allocation4 + $0x44] sm:$0xf]
    %v1593 = vld [vmem:[#allocation4 + $0x48] sm:$0xff]
    %v1594 = vld [vmem:[#allocation4 + $0x50] sm:$0xf]
    %v1595 = vld [vmem:[#allocation4 + $0x54] sm:$0xff]
    %v1596 = vld [vmem:[#allocation4 + $0x5c] sm:$0xf]
    %v1597 = vld [vmem:[%s5] sm:$0xff]
    %v1598 = vld [vmem:[%s5 + $0x8] sm:$0xff]
    %v1599 = vld [vmem:[%s5 + $0x10] sm:$0xff]
    %v1600 = vld [vmem:[%s5 + $0x18] sm:$0xff]
    %v1601 = vld [vmem:[%s5 + $0x20] sm:$0xff]
    %v1602 = vld [vmem:[%s5 + $0x28] sm:$0xff]
    %v1603 = vld [vmem:[%s5 + $0x30] sm:$0xff]
    %v1604 = vld [vmem:[%s5 + $0x38] sm:$0xff]
    %1606 = vset.pattern.permute.xlu0 0
    %1607 = vperm.xlu0 %1606, %v1597
    %v1608 = vpop.permute.xlu0 %1607
    %1611 = vset.pattern.permute.xlu0 0
    %1612 = vperm.xlu0 %1611, %v1598
    %v1613 = vpop.permute.xlu0 %1612
    %1616 = vset.pattern.permute.xlu0 0
    %1617 = vperm.xlu0 %1616, %v1599
    %v1618 = vpop.permute.xlu0 %1617
    %1621 = vset.pattern.permute.xlu0 0
    %1622 = vperm.xlu0 %1621, %v1600
    %v1623 = vpop.permute.xlu0 %1622
    %1626 = vset.pattern.permute.xlu0 0
    %1627 = vperm.xlu0 %1626, %v1601
    %v1628 = vpop.permute.xlu0 %1627
    %1631 = vset.pattern.permute.xlu0 0
    %1632 = vperm.xlu0 %1631, %v1602
    %v1633 = vpop.permute.xlu0 %1632
    %1636 = vset.pattern.permute.xlu0 0
    %1637 = vperm.xlu0 %1636, %v1603
    %v1638 = vpop.permute.xlu0 %1637
    %1641 = vset.pattern.permute.xlu0 0
    %1642 = vperm.xlu0 %1641, %v1604
    %v1643 = vpop.permute.xlu0 %1642
    %v1661 = vunpack.c.l.b16 %v1581
    %v1662 = vunpack.c.h.b16 %v1581
    %v1663 = vunpack.c.l.b16 %v1582
    %v1664 = vunpack.c.l.b16 %v1583
    %v1665 = vunpack.c.h.b16 %v1583
    %v1666 = vunpack.c.l.b16 %v1584
    %v1667 = vunpack.c.l.b16 %v1585
    %v1668 = vunpack.c.h.b16 %v1585
    %v1669 = vunpack.c.l.b16 %v1586
    %v1670 = vunpack.c.l.b16 %v1587
    %v1671 = vunpack.c.h.b16 %v1587
    %v1672 = vunpack.c.l.b16 %v1588
    %v1673 = vunpack.c.l.b16 %v1589
    %v1674 = vunpack.c.h.b16 %v1589
    %v1675 = vunpack.c.l.b16 %v1590
    %v1676 = vunpack.c.l.b16 %v1591
    %v1677 = vunpack.c.h.b16 %v1591
    %v1678 = vunpack.c.l.b16 %v1592
    %v1679 = vunpack.c.l.b16 %v1593
    %v1680 = vunpack.c.h.b16 %v1593
    %v1681 = vunpack.c.l.b16 %v1594
    %v1682 = vunpack.c.l.b16 %v1595
    %v1683 = vunpack.c.h.b16 %v1595
    %v1684 = vunpack.c.l.b16 %v1596
    %v1685 = vpack.c.b16 %v1664, %v1661
    %v1686 = vpack.c.b16 %v1665, %v1662
    %v1687 = vpack.c.b16 %v1666, %v1663
    %v1688 = vpack.c.b16 %v1670, %v1667
    %v1689 = vpack.c.b16 %v1671, %v1668
    %v1690 = vpack.c.b16 %v1672, %v1669
    %v1691 = vpack.c.b16 %v1676, %v1673
    %v1692 = vpack.c.b16 %v1677, %v1674
    %v1693 = vpack.c.b16 %v1678, %v1675
    %v1694 = vpack.c.b16 %v1682, %v1679
    %v1695 = vpack.c.b16 %v1683, %v1680
    %v1696 = vpack.c.b16 %v1684, %v1681
    %vm1705 = vcmask 261120
    %v1707 = vsel %vm1705, %v1687, 0
    %v1710 = vsel %vm1705, %v1690, 0
    %v1713 = vsel %vm1705, %v1693, 0
    %v1716 = vsel %vm1705, %v1696, 0
    %1718 = vmatprep.subr.bf16.mxu0 %v1130
    %1719 = vmatpush1.bf16.msra.mxu0 %v1129
    %1720 = vmatprep.subr.bf16.mxu0 %v1136
    %1721 = vmatpush1.bf16.msra.mxu0 %v1135
    %1722 = vmatprep.subr.bf16.mxu0 %v1198
    %1723 = vmatpush1.bf16.msra.mxu0 %v1197
    %1724 = vmatprep.subr.bf16.mxu0 %v1204
    %1725 = vmatpush1.bf16.msra.mxu0 %v1203
    %1726 = vmatprep.subr.bf16.mxu0 %v1256
    %1727 = vmatpush1.bf16.msra.mxu0 %v1255
    %1728 = vmatprep.subr.bf16.mxu0 %v1262
    %1729 = vmatpush1.bf16.msra.mxu0 %v1261
    %1730 = vmatprep.subr.bf16.mxu0 %v1314
    %1731 = vmatpush1.bf16.msra.mxu0 %v1313
    %1732 = vmatprep.subr.bf16.mxu0 %v1320
    %1733 = vmatpush1.bf16.msra.mxu0 %v1319
    %1734 = vmatprep.subr.bf16.mxu0 %v1050
    %1735 = vmatpush1.bf16.msra.mxu0 %v1049
    %1736 = vmatprep.subr.bf16.mxu0 %v1056
    %1737 = vmatpush1.bf16.msra.mxu0 %v1055
    %1738 = vmatprep.subr.bf16.mxu0 %v1382
    %1739 = vmatpush1.bf16.msra.mxu0 %v1381
    %1740 = vmatprep.subr.bf16.mxu0 %v1388
    %1741 = vmatpush1.bf16.msra.mxu0 %v1387
    %1742 = vmatprep.subr.bf16.mxu0 %v1438
    %1743 = vmatpush1.bf16.msra.mxu0 %v1437
    %1744 = vmatprep.subr.bf16.mxu0 %v1444
    %1745 = vmatpush1.bf16.msra.mxu0 %v1443
    %1746 = vmatprep.subr.bf16.mxu0 %v1502
    %1747 = vmatpush1.bf16.msra.mxu0 %v1501
    %1748 = vmatprep.subr.bf16.mxu0 %v1508
    %1749 = vmatpush1.bf16.msra.mxu0 %v1507
    %1750 = vmatprep.mubr.bf16.mxu0 %v1686
    %1751 = vmatmul.mubr.bf16.gmra.mrb[0].mxu0 %v1685
    %v1752 = vpop.f32.mrb[0].mxu0
    %v1753 = vadd.f32 %v1608, %v1752
    %v1754 = vpop.f32.mrb[0].mxu0
    %v1755 = vadd.f32 %v1608, %v1754
    %v1756 = vpop.f32.mrb[0].mxu0
    %v1757 = vadd.f32 %v1613, %v1756
    %v1758 = vpop.f32.mrb[0].mxu0
    %v1759 = vadd.f32 %v1613, %v1758
    %1760 = vmatprep.mubr.bf16.mxu0 %v1689
    %1761 = vmatmul.mubr.bf16.gmra.mrb[0].mxu0 %v1688
    %v1762 = vpop.f32.mrb[0].mxu0
    %v1763 = vadd.f32 %v1618, %v1762
    %v1764 = vpop.f32.mrb[0].mxu0
    %v1765 = vadd.f32 %v1618, %v1764
    %v1766 = vpop.f32.mrb[0].mxu0
    %v1767 = vadd.f32 %v1623, %v1766
    %v1768 = vpop.f32.mrb[0].mxu0
    %v1769 = vadd.f32 %v1623, %v1768
    %1770 = vmatprep.mubr.bf16.mxu0 %v1692
    %1771 = vmatmul.mubr.bf16.gmra.mrb[0].mxu0 %v1691
    %v1772 = vpop.f32.mrb[0].mxu0
    %v1773 = vadd.f32 %v1628, %v1772
    %v1774 = vpop.f32.mrb[0].mxu0
    %v1775 = vadd.f32 %v1628, %v1774
    %v1776 = vpop.f32.mrb[0].mxu0
    %v1777 = vadd.f32 %v1633, %v1776
    %v1778 = vpop.f32.mrb[0].mxu0
    %v1779 = vadd.f32 %v1633, %v1778
    %1780 = vmatprep.mubr.bf16.mxu0 %v1695
    %1781 = vmatmul.mubr.bf16.gmra.mrb[0].mxu0 %v1694
    %v1782 = vpop.f32.mrb[0].mxu0
    %v1783 = vadd.f32 %v1638, %v1782
    %v1784 = vpop.f32.mrb[0].mxu0
    %v1785 = vadd.f32 %v1638, %v1784
    %v1786 = vpop.f32.mrb[0].mxu0
    %v1787 = vadd.f32 %v1643, %v1786
    %v1788 = vpop.f32.mrb[0].mxu0
    %v1789 = vadd.f32 %v1643, %v1788
    %1790 = vdwg.mxu0
    %1791 = vmatprep.subr.bf16.mxu0 %v1570
    %1792 = vmatpush1.bf16.msra.mxu0 %v1569
    %1793 = vmatprep.subr.bf16.mxu0 %v1576
    %1794 = vmatpush1.bf16.msra.mxu0 %v1575
    %1795 = vmatprep.subr.bf16.mxu0 0
    %1796 = vmatpush1.bf16.msra.mxu0 0
    %1797 = vmatprep.subr.bf16.mxu0 0
    %1798 = vmatpush1.bf16.msra.mxu0 0
    %1799 = vmatprep.subr.bf16.mxu0 0
    %1800 = vmatpush1.bf16.msra.mxu0 0
    %1801 = vmatprep.subr.bf16.mxu0 0
    %1802 = vmatpush1.bf16.msra.mxu0 0
    %1803 = vmatprep.subr.bf16.mxu0 0
    %1804 = vmatpush1.bf16.msra.mxu0 0
    %1805 = vmatprep.subr.bf16.mxu0 0
    %1806 = vmatpush1.bf16.msra.mxu0 0
    %1807 = vmatprep.subr.bf16.mxu0 0
    %1808 = vmatpush1.bf16.msra.mxu0 0
    %1809 = vmatprep.subr.bf16.mxu0 0
    %1810 = vmatpush1.bf16.msra.mxu0 0
    %1811 = vmatprep.subr.bf16.mxu0 0
    %1812 = vmatpush1.bf16.msra.mxu0 0
    %1813 = vmatprep.subr.bf16.mxu0 0
    %1814 = vmatpush1.bf16.msra.mxu0 0
    %1815 = vmatprep.subr.bf16.mxu0 0
    %1816 = vmatpush1.bf16.msra.mxu0 0
    %1817 = vmatprep.subr.bf16.mxu0 0
    %1818 = vmatpush1.bf16.msra.mxu0 0
    %1819 = vmatprep.subr.bf16.mxu0 0
    %1820 = vmatpush1.bf16.msra.mxu0 0
    %1821 = vmatprep.subr.bf16.mxu0 0
    %1822 = vmatpush1.bf16.msra.mxu0 0
    %1823 = vmatprep.mubr.bf16.mxu0 0
    %1824 = vmatmul.mubr.bf16.gmra.mrb[0].mxu0 %v1707
    %v1825 = vpop.f32.mrb[0].mxu0
    %v1826 = vadd.f32 %v1753, %v1825
    %v1827 = vpop.f32.mrb[0].mxu0
    %v1828 = vadd.f32 %v1755, %v1827
    %v1829 = vpop.f32.mrb[0].mxu0
    %v1830 = vadd.f32 %v1757, %v1829
    %v1831 = vpop.f32.mrb[0].mxu0
    %v1832 = vadd.f32 %v1759, %v1831
    %1833 = vmatprep.mubr.bf16.mxu0 0
    %1834 = vmatmul.mubr.bf16.gmra.mrb[0].mxu0 %v1710
    %v1835 = vpop.f32.mrb[0].mxu0
    %v1836 = vadd.f32 %v1763, %v1835
    %v1837 = vpop.f32.mrb[0].mxu0
    %v1838 = vadd.f32 %v1765, %v1837
    %v1839 = vpop.f32.mrb[0].mxu0
    %v1840 = vadd.f32 %v1767, %v1839
    %v1841 = vpop.f32.mrb[0].mxu0
    %v1842 = vadd.f32 %v1769, %v1841
    %1843 = vmatprep.mubr.bf16.mxu0 0
    %1844 = vmatmul.mubr.bf16.gmra.mrb[0].mxu0 %v1713
    %v1845 = vpop.f32.mrb[0].mxu0
    %v1846 = vadd.f32 %v1773, %v1845
    %v1847 = vpop.f32.mrb[0].mxu0
    %v1848 = vadd.f32 %v1775, %v1847
    %v1849 = vpop.f32.mrb[0].mxu0
    %v1850 = vadd.f32 %v1777, %v1849
    %v1851 = vpop.f32.mrb[0].mxu0
    %v1852 = vadd.f32 %v1779, %v1851
    %1853 = vmatprep.mubr.bf16.mxu0 0
    %1854 = vmatmul.mubr.bf16.gmra.mrb[0].mxu0 %v1716
    %v1855 = vpop.f32.mrb[0].mxu0
    %v1856 = vadd.f32 %v1783, %v1855
    %v1857 = vpop.f32.mrb[0].mxu0
    %v1858 = vadd.f32 %v1785, %v1857
    %v1859 = vpop.f32.mrb[0].mxu0
    %v1860 = vadd.f32 %v1787, %v1859
    %v1861 = vpop.f32.mrb[0].mxu0
    %v1862 = vadd.f32 %v1789, %v1861
    %1863 = vdwg.mxu0
    %1864 = vmatprep.subr.bf16.mxu0 %v1132
    %1865 = vmatpush1.bf16.msra.mxu0 %v1131
    %1866 = vmatprep.subr.bf16.mxu0 %v1138
    %1867 = vmatpush1.bf16.msra.mxu0 %v1137
    %1868 = vmatprep.subr.bf16.mxu0 %v1200
    %1869 = vmatpush1.bf16.msra.mxu0 %v1199
    %1870 = vmatprep.subr.bf16.mxu0 %v1206
    %1871 = vmatpush1.bf16.msra.mxu0 %v1205
    %1872 = vmatprep.subr.bf16.mxu0 %v1258
    %1873 = vmatpush1.bf16.msra.mxu0 %v1257
    %1874 = vmatprep.subr.bf16.mxu0 %v1264
    %1875 = vmatpush1.bf16.msra.mxu0 %v1263
    %1876 = vmatprep.subr.bf16.mxu0 %v1316
    %1877 = vmatpush1.bf16.msra.mxu0 %v1315
    %1878 = vmatprep.subr.bf16.mxu0 %v1322
    %1879 = vmatpush1.bf16.msra.mxu0 %v1321
    %1880 = vmatprep.subr.bf16.mxu0 %v1052
    %1881 = vmatpush1.bf16.msra.mxu0 %v1051
    %1882 = vmatprep.subr.bf16.mxu0 %v1058
    %1883 = vmatpush1.bf16.msra.mxu0 %v1057
    %1884 = vmatprep.subr.bf16.mxu0 %v1384
    %1885 = vmatpush1.bf16.msra.mxu0 %v1383
    %1886 = vmatprep.subr.bf16.mxu0 %v1390
    %1887 = vmatpush1.bf16.msra.mxu0 %v1389
    %1888 = vmatprep.subr.bf16.mxu0 %v1440
    %1889 = vmatpush1.bf16.msra.mxu0 %v1439
    %1890 = vmatprep.subr.bf16.mxu0 %v1446
    %1891 = vmatpush1.bf16.msra.mxu0 %v1445
    %1892 = vmatprep.subr.bf16.mxu0 %v1504
    %1893 = vmatpush1.bf16.msra.mxu0 %v1503
    %1894 = vmatprep.subr.bf16.mxu0 %v1510
    %1895 = vmatpush1.bf16.msra.mxu0 %v1509
    %1896 = vmatprep.mubr.bf16.mxu0 %v1686
    %1897 = vmatmul.mubr.bf16.gmra.mrb[0].mxu0 %v1685
    %v1898 = vpop.f32.mrb[0].mxu0
    %v1899 = vadd.f32 %v1608, %v1898
    %v1900 = vpop.f32.mrb[0].mxu0
    %v1901 = vadd.f32 %v1608, %v1900
    %v1902 = vpop.f32.mrb[0].mxu0
    %v1903 = vadd.f32 %v1613, %v1902
    %v1904 = vpop.f32.mrb[0].mxu0
    %v1905 = vadd.f32 %v1613, %v1904
    %1906 = vmatprep.mubr.bf16.mxu0 %v1689
    %1907 = vmatmul.mubr.bf16.gmra.mrb[0].mxu0 %v1688
    %v1908 = vpop.f32.mrb[0].mxu0
    %v1909 = vadd.f32 %v1618, %v1908
    %v1910 = vpop.f32.mrb[0].mxu0
    %v1911 = vadd.f32 %v1618, %v1910
    %v1912 = vpop.f32.mrb[0].mxu0
    %v1913 = vadd.f32 %v1623, %v1912
    %v1914 = vpop.f32.mrb[0].mxu0
    %v1915 = vadd.f32 %v1623, %v1914
    %1916 = vmatprep.mubr.bf16.mxu0 %v1692
    %1917 = vmatmul.mubr.bf16.gmra.mrb[0].mxu0 %v1691
    %v1918 = vpop.f32.mrb[0].mxu0
    %v1919 = vadd.f32 %v1628, %v1918
    %v1920 = vpop.f32.mrb[0].mxu0
    %v1921 = vadd.f32 %v1628, %v1920
    %v1922 = vpop.f32.mrb[0].mxu0
    %v1923 = vadd.f32 %v1633, %v1922
    %v1924 = vpop.f32.mrb[0].mxu0
    %v1925 = vadd.f32 %v1633, %v1924
    %1926 = vmatprep.mubr.bf16.mxu0 %v1695
    %1927 = vmatmul.mubr.bf16.gmra.mrb[0].mxu0 %v1694
    %v1928 = vpop.f32.mrb[0].mxu0
    %v1929 = vadd.f32 %v1638, %v1928
    %v1930 = vpop.f32.mrb[0].mxu0
    %v1931 = vadd.f32 %v1638, %v1930
    %v1932 = vpop.f32.mrb[0].mxu0
    %v1933 = vadd.f32 %v1643, %v1932
    %v1934 = vpop.f32.mrb[0].mxu0
    %v1935 = vadd.f32 %v1643, %v1934
    %1936 = vdwg.mxu0
    %1937 = vmatprep.subr.bf16.mxu0 %v1572
    %1938 = vmatpush1.bf16.msra.mxu0 %v1571
    %1939 = vmatprep.subr.bf16.mxu0 %v1578
    %1940 = vmatpush1.bf16.msra.mxu0 %v1577
    %1941 = vmatprep.subr.bf16.mxu0 0
    %1942 = vmatpush1.bf16.msra.mxu0 0
    %1943 = vmatprep.subr.bf16.mxu0 0
    %1944 = vmatpush1.bf16.msra.mxu0 0
    %1945 = vmatprep.subr.bf16.mxu0 0
    %1946 = vmatpush1.bf16.msra.mxu0 0
    %1947 = vmatprep.subr.bf16.mxu0 0
    %1948 = vmatpush1.bf16.msra.mxu0 0
    %1949 = vmatprep.subr.bf16.mxu0 0
    %1950 = vmatpush1.bf16.msra.mxu0 0
    %1951 = vmatprep.subr.bf16.mxu0 0
    %1952 = vmatpush1.bf16.msra.mxu0 0
    %1953 = vmatprep.subr.bf16.mxu0 0
    %1954 = vmatpush1.bf16.msra.mxu0 0
    %1955 = vmatprep.subr.bf16.mxu0 0
    %1956 = vmatpush1.bf16.msra.mxu0 0
    %1957 = vmatprep.subr.bf16.mxu0 0
    %1958 = vmatpush1.bf16.msra.mxu0 0
    %1959 = vmatprep.subr.bf16.mxu0 0
    %1960 = vmatpush1.bf16.msra.mxu0 0
    %1961 = vmatprep.subr.bf16.mxu0 0
    %1962 = vmatpush1.bf16.msra.mxu0 0
    %1963 = vmatprep.subr.bf16.mxu0 0
    %1964 = vmatpush1.bf16.msra.mxu0 0
    %1965 = vmatprep.subr.bf16.mxu0 0
    %1966 = vmatpush1.bf16.msra.mxu0 0
    %1967 = vmatprep.subr.bf16.mxu0 0
    %1968 = vmatpush1.bf16.msra.mxu0 0
    %1969 = vmatprep.mubr.bf16.mxu0 0
    %1970 = vmatmul.mubr.bf16.gmra.mrb[0].mxu0 %v1707
    %v1971 = vpop.f32.mrb[0].mxu0
    %v1972 = vadd.f32 %v1899, %v1971
    %v1973 = vpop.f32.mrb[0].mxu0
    %v1974 = vadd.f32 %v1901, %v1973
    %v1975 = vpop.f32.mrb[0].mxu0
    %v1976 = vadd.f32 %v1903, %v1975
    %v1977 = vpop.f32.mrb[0].mxu0
    %v1978 = vadd.f32 %v1905, %v1977
    %1979 = vmatprep.mubr.bf16.mxu0 0
    %1980 = vmatmul.mubr.bf16.gmra.mrb[0].mxu0 %v1710
    %v1981 = vpop.f32.mrb[0].mxu0
    %v1982 = vadd.f32 %v1909, %v1981
    %v1983 = vpop.f32.mrb[0].mxu0
    %v1984 = vadd.f32 %v1911, %v1983
    %v1985 = vpop.f32.mrb[0].mxu0
    %v1986 = vadd.f32 %v1913, %v1985
    %v1987 = vpop.f32.mrb[0].mxu0
    %v1988 = vadd.f32 %v1915, %v1987
    %1989 = vmatprep.mubr.bf16.mxu0 0
    %1990 = vmatmul.mubr.bf16.gmra.mrb[0].mxu0 %v1713
    %v1991 = vpop.f32.mrb[0].mxu0
    %v1992 = vadd.f32 %v1919, %v1991
    %v1993 = vpop.f32.mrb[0].mxu0
    %v1994 = vadd.f32 %v1921, %v1993
    %v1995 = vpop.f32.mrb[0].mxu0
    %v1996 = vadd.f32 %v1923, %v1995
    %v1997 = vpop.f32.mrb[0].mxu0
    %v1998 = vadd.f32 %v1925, %v1997
    %1999 = vmatprep.mubr.bf16.mxu0 0
    %2000 = vmatmul.mubr.bf16.gmra.mrb[0].mxu0 %v1716
    %v2001 = vpop.f32.mrb[0].mxu0
    %v2002 = vadd.f32 %v1929, %v2001
    %v2003 = vpop.f32.mrb[0].mxu0
    %v2004 = vadd.f32 %v1931, %v2003
    %v2005 = vpop.f32.mrb[0].mxu0
    %v2006 = vadd.f32 %v1933, %v2005
    %v2007 = vpop.f32.mrb[0].mxu0
    %v2008 = vadd.f32 %v1935, %v2007
    %2009 = vdwg.mxu0
    %2010 = vmatprep.subr.bf16.mxu0 %v1134
    %2011 = vmatpush1.bf16.msra.mxu0 %v1133
    %2012 = vmatprep.subr.bf16.mxu0 %v1140
    %2013 = vmatpush1.bf16.msra.mxu0 %v1139
    %2014 = vmatprep.subr.bf16.mxu0 %v1202
    %2015 = vmatpush1.bf16.msra.mxu0 %v1201
    %2016 = vmatprep.subr.bf16.mxu0 %v1208
    %2017 = vmatpush1.bf16.msra.mxu0 %v1207
    %2018 = vmatprep.subr.bf16.mxu0 %v1260
    %2019 = vmatpush1.bf16.msra.mxu0 %v1259
    %2020 = vmatprep.subr.bf16.mxu0 %v1266
    %2021 = vmatpush1.bf16.msra.mxu0 %v1265
    %2022 = vmatprep.subr.bf16.mxu0 %v1318
    %2023 = vmatpush1.bf16.msra.mxu0 %v1317
    %2024 = vmatprep.subr.bf16.mxu0 %v1324
    %2025 = vmatpush1.bf16.msra.mxu0 %v1323
    %2026 = vmatprep.subr.bf16.mxu0 %v1054
    %2027 = vmatpush1.bf16.msra.mxu0 %v1053
    %2028 = vmatprep.subr.bf16.mxu0 %v1060
    %2029 = vmatpush1.bf16.msra.mxu0 %v1059
    %2030 = vmatprep.subr.bf16.mxu0 %v1386
    %2031 = vmatpush1.bf16.msra.mxu0 %v1385
    %2032 = vmatprep.subr.bf16.mxu0 %v1392
    %2033 = vmatpush1.bf16.msra.mxu0 %v1391
    %2034 = vmatprep.subr.bf16.mxu0 %v1442
    %2035 = vmatpush1.bf16.msra.mxu0 %v1441
    %2036 = vmatprep.subr.bf16.mxu0 %v1448
    %2037 = vmatpush1.bf16.msra.mxu0 %v1447
    %2038 = vmatprep.subr.bf16.mxu0 %v1506
    %2039 = vmatpush1.bf16.msra.mxu0 %v1505
    %2040 = vmatprep.subr.bf16.mxu0 %v1512
    %2041 = vmatpush1.bf16.msra.mxu0 %v1511
    %2042 = vmatprep.mubr.bf16.mxu0 %v1686
    %2043 = vmatmul.mubr.bf16.gmra.mrb[0].mxu0 %v1685
    %v2044 = vpop.f32.mrb[0].mxu0
    %v2045 = vadd.f32 %v1608, %v2044
    %v2046 = vpop.f32.mrb[0].mxu0
    %v2047 = vadd.f32 %v1608, %v2046
    %v2048 = vpop.f32.mrb[0].mxu0
    %v2049 = vadd.f32 %v1613, %v2048
    %v2050 = vpop.f32.mrb[0].mxu0
    %v2051 = vadd.f32 %v1613, %v2050
    %2052 = vmatprep.mubr.bf16.mxu0 %v1689
    %2053 = vmatmul.mubr.bf16.gmra.mrb[0].mxu0 %v1688
    %v2054 = vpop.f32.mrb[0].mxu0
    %v2055 = vadd.f32 %v1618, %v2054
    %v2056 = vpop.f32.mrb[0].mxu0
    %v2057 = vadd.f32 %v1618, %v2056
    %v2058 = vpop.f32.mrb[0].mxu0
    %v2059 = vadd.f32 %v1623, %v2058
    %v2060 = vpop.f32.mrb[0].mxu0
    %v2061 = vadd.f32 %v1623, %v2060
    %2062 = vmatprep.mubr.bf16.mxu0 %v1692
    %2063 = vmatmul.mubr.bf16.gmra.mrb[0].mxu0 %v1691
    %v2064 = vpop.f32.mrb[0].mxu0
    %v2065 = vadd.f32 %v1628, %v2064
    %v2066 = vpop.f32.mrb[0].mxu0
    %v2067 = vadd.f32 %v1628, %v2066
    %v2068 = vpop.f32.mrb[0].mxu0
    %v2069 = vadd.f32 %v1633, %v2068
    %v2070 = vpop.f32.mrb[0].mxu0
    %v2071 = vadd.f32 %v1633, %v2070
    %2072 = vmatprep.mubr.bf16.mxu0 %v1695
    %2073 = vmatmul.mubr.bf16.gmra.mrb[0].mxu0 %v1694
    %v2074 = vpop.f32.mrb[0].mxu0
    %v2075 = vadd.f32 %v1638, %v2074
    %v2076 = vpop.f32.mrb[0].mxu0
    %v2077 = vadd.f32 %v1638, %v2076
    %v2078 = vpop.f32.mrb[0].mxu0
    %v2079 = vadd.f32 %v1643, %v2078
    %v2080 = vpop.f32.mrb[0].mxu0
    %v2081 = vadd.f32 %v1643, %v2080
    %2082 = vdwg.mxu0
    %2083 = vmatprep.subr.bf16.mxu0 %v1574
    %2084 = vmatpush1.bf16.msra.mxu0 %v1573
    %2085 = vmatprep.subr.bf16.mxu0 %v1580
    %2086 = vmatpush1.bf16.msra.mxu0 %v1579
    %2087 = vmatprep.subr.bf16.mxu0 0
    %2088 = vmatpush1.bf16.msra.mxu0 0
    %2089 = vmatprep.subr.bf16.mxu0 0
    %2090 = vmatpush1.bf16.msra.mxu0 0
    %2091 = vmatprep.subr.bf16.mxu0 0
    %2092 = vmatpush1.bf16.msra.mxu0 0
    %2093 = vmatprep.subr.bf16.mxu0 0
    %2094 = vmatpush1.bf16.msra.mxu0 0
    %2095 = vmatprep.subr.bf16.mxu0 0
    %2096 = vmatpush1.bf16.msra.mxu0 0
    %2097 = vmatprep.subr.bf16.mxu0 0
    %2098 = vmatpush1.bf16.msra.mxu0 0
    %2099 = vmatprep.subr.bf16.mxu0 0
    %2100 = vmatpush1.bf16.msra.mxu0 0
    %2101 = vmatprep.subr.bf16.mxu0 0
    %2102 = vmatpush1.bf16.msra.mxu0 0
    %2103 = vmatprep.subr.bf16.mxu0 0
    %2104 = vmatpush1.bf16.msra.mxu0 0
    %2105 = vmatprep.subr.bf16.mxu0 0
    %2106 = vmatpush1.bf16.msra.mxu0 0
    %2107 = vmatprep.subr.bf16.mxu0 0
    %2108 = vmatpush1.bf16.msra.mxu0 0
    %2109 = vmatprep.subr.bf16.mxu0 0
    %2110 = vmatpush1.bf16.msra.mxu0 0
    %2111 = vmatprep.subr.bf16.mxu0 0
    %2112 = vmatpush1.bf16.msra.mxu0 0
    %2113 = vmatprep.subr.bf16.mxu0 0
    %2114 = vmatpush1.bf16.msra.mxu0 0
    %2115 = vmatprep.mubr.bf16.mxu0 0
    %2116 = vmatmul.mubr.bf16.gmra.mrb[0].mxu0 %v1707
    %v2117 = vpop.f32.mrb[0].mxu0
    %v2118 = vadd.f32 %v2045, %v2117
    %v2119 = vpop.f32.mrb[0].mxu0
    %v2120 = vadd.f32 %v2047, %v2119
    %v2121 = vpop.f32.mrb[0].mxu0
    %v2122 = vadd.f32 %v2049, %v2121
    %v2123 = vpop.f32.mrb[0].mxu0
    %v2124 = vadd.f32 %v2051, %v2123
    %2125 = vmatprep.mubr.bf16.mxu0 0
    %2126 = vmatmul.mubr.bf16.gmra.mrb[0].mxu0 %v1710
    %v2127 = vpop.f32.mrb[0].mxu0
    %v2128 = vadd.f32 %v2055, %v2127
    %v2129 = vpop.f32.mrb[0].mxu0
    %v2130 = vadd.f32 %v2057, %v2129
    %v2131 = vpop.f32.mrb[0].mxu0
    %v2132 = vadd.f32 %v2059, %v2131
    %v2133 = vpop.f32.mrb[0].mxu0
    %v2134 = vadd.f32 %v2061, %v2133
    %2135 = vmatprep.mubr.bf16.mxu0 0
    %2136 = vmatmul.mubr.bf16.gmra.mrb[0].mxu0 %v1713
    %v2137 = vpop.f32.mrb[0].mxu0
    %v2138 = vadd.f32 %v2065, %v2137
    %v2139 = vpop.f32.mrb[0].mxu0
    %v2140 = vadd.f32 %v2067, %v2139
    %v2141 = vpop.f32.mrb[0].mxu0
    %v2142 = vadd.f32 %v2069, %v2141
    %v2143 = vpop.f32.mrb[0].mxu0
    %v2144 = vadd.f32 %v2071, %v2143
    %2145 = vmatprep.mubr.bf16.mxu0 0
    %2146 = vmatmul.mubr.bf16.gmra.mrb[0].mxu0 %v1716
    %v2147 = vpop.f32.mrb[0].mxu0
    %v2148 = vadd.f32 %v2075, %v2147
    %v2149 = vpop.f32.mrb[0].mxu0
    %v2150 = vadd.f32 %v2077, %v2149
    %v2151 = vpop.f32.mrb[0].mxu0
    %v2152 = vadd.f32 %v2079, %v2151
    %v2153 = vpop.f32.mrb[0].mxu0
    %v2154 = vadd.f32 %v2081, %v2153
    %2155 = vdwg.mxu0
    %v2156 = vmax.f32 %v1826, 0.0
    %v2157 = vmax.f32 %v1828, 0.0
    %v2158 = vmax.f32 %v1972, 0.0
    %v2159 = vmax.f32 %v1974, 0.0
    %v2160 = vmax.f32 %v2118, 0.0
    %v2161 = vmax.f32 %v2120, 0.0
    %v2162 = vmax.f32 %v1830, 0.0
    %v2163 = vmax.f32 %v1832, 0.0
    %v2164 = vmax.f32 %v1976, 0.0
    %v2165 = vmax.f32 %v1978, 0.0
    %v2166 = vmax.f32 %v2122, 0.0
    %v2167 = vmax.f32 %v2124, 0.0
    %v2168 = vmax.f32 %v1836, 0.0
    %v2169 = vmax.f32 %v1838, 0.0
    %v2170 = vmax.f32 %v1982, 0.0
    %v2171 = vmax.f32 %v1984, 0.0
    %v2172 = vmax.f32 %v2128, 0.0
    %v2173 = vmax.f32 %v2130, 0.0
    %v2174 = vmax.f32 %v1840, 0.0
    %v2175 = vmax.f32 %v1842, 0.0
    %v2176 = vmax.f32 %v1986, 0.0
    %v2177 = vmax.f32 %v1988, 0.0
    %v2178 = vmax.f32 %v2132, 0.0
    %v2179 = vmax.f32 %v2134, 0.0
    %v2180 = vmax.f32 %v1846, 0.0
    %v2181 = vmax.f32 %v1848, 0.0
    %v2182 = vmax.f32 %v1992, 0.0
    %v2183 = vmax.f32 %v1994, 0.0
    %v2184 = vmax.f32 %v2138, 0.0
    %v2185 = vmax.f32 %v2140, 0.0
    %v2186 = vmax.f32 %v1850, 0.0
    %v2187 = vmax.f32 %v1852, 0.0
    %v2188 = vmax.f32 %v1996, 0.0
    %v2189 = vmax.f32 %v1998, 0.0
    %v2190 = vmax.f32 %v2142, 0.0
    %v2191 = vmax.f32 %v2144, 0.0
    %v2192 = vmax.f32 %v1856, 0.0
    %v2193 = vmax.f32 %v1858, 0.0
    %v2194 = vmax.f32 %v2002, 0.0
    %v2195 = vmax.f32 %v2004, 0.0
    %v2196 = vmax.f32 %v2148, 0.0
    %v2197 = vmax.f32 %v2150, 0.0
    %v2198 = vmax.f32 %v1860, 0.0
    %v2199 = vmax.f32 %v1862, 0.0
    %v2200 = vmax.f32 %v2006, 0.0
    %v2201 = vmax.f32 %v2008, 0.0
    %v2202 = vmax.f32 %v2152, 0.0
    %v2203 = vmax.f32 %v2154, 0.0
    %v2204 = vpack.c.bf16 %v2162, %v2156
    %v2205 = vpack.c.bf16 %v2163, %v2157
    %v2206 = vpack.c.bf16 %v2164, %v2158
    %v2207 = vpack.c.bf16 %v2165, %v2159
    %v2208 = vpack.c.bf16 %v2166, %v2160
    %v2209 = vpack.c.bf16 %v2167, %v2161
    %v2210 = vpack.c.bf16 %v2174, %v2168
    %v2211 = vpack.c.bf16 %v2175, %v2169
    %v2212 = vpack.c.bf16 %v2176, %v2170
    %v2213 = vpack.c.bf16 %v2177, %v2171
    %v2214 = vpack.c.bf16 %v2178, %v2172
    %v2215 = vpack.c.bf16 %v2179, %v2173
    %v2216 = vpack.c.bf16 %v2186, %v2180
    %v2217 = vpack.c.bf16 %v2187, %v2181
    %v2218 = vpack.c.bf16 %v2188, %v2182
    %v2219 = vpack.c.bf16 %v2189, %v2183
    %v2220 = vpack.c.bf16 %v2190, %v2184
    %v2221 = vpack.c.bf16 %v2191, %v2185
    %v2222 = vpack.c.bf16 %v2198, %v2192
    %v2223 = vpack.c.bf16 %v2199, %v2193
    %v2224 = vpack.c.bf16 %v2200, %v2194
    %v2225 = vpack.c.bf16 %v2201, %v2195
    %v2226 = vpack.c.bf16 %v2202, %v2196
    %v2227 = vpack.c.bf16 %v2203, %v2197
    %v2252 = vunpack.c.l.b16 %v2204
    %v2253 = vunpack.c.l.b16 %v2205
    %v2254 = vunpack.c.l.b16 %v2206
    %v2255 = vunpack.c.l.b16 %v2207
    %v2256 = vunpack.c.l.b16 %v2208
    %v2257 = vunpack.c.l.b16 %v2209
    %v2258 = vunpack.c.h.b16 %v2204
    %v2259 = vunpack.c.h.b16 %v2205
    %v2260 = vunpack.c.h.b16 %v2206
    %v2261 = vunpack.c.h.b16 %v2207
    %v2262 = vunpack.c.h.b16 %v2208
    %v2263 = vunpack.c.h.b16 %v2209
    %v2264 = vunpack.c.l.b16 %v2210
    %v2265 = vunpack.c.l.b16 %v2211
    %v2266 = vunpack.c.l.b16 %v2212
    %v2267 = vunpack.c.l.b16 %v2213
    %v2268 = vunpack.c.l.b16 %v2214
    %v2269 = vunpack.c.l.b16 %v2215
    %v2270 = vunpack.c.h.b16 %v2210
    %v2271 = vunpack.c.h.b16 %v2211
    %v2272 = vunpack.c.h.b16 %v2212
    %v2273 = vunpack.c.h.b16 %v2213
    %v2274 = vunpack.c.h.b16 %v2214
    %v2275 = vunpack.c.h.b16 %v2215
    %v2276 = vunpack.c.l.b16 %v2216
    %v2277 = vunpack.c.l.b16 %v2217
    %v2278 = vunpack.c.l.b16 %v2218
    %v2279 = vunpack.c.l.b16 %v2219
    %v2280 = vunpack.c.l.b16 %v2220
    %v2281 = vunpack.c.l.b16 %v2221
    %v2282 = vunpack.c.h.b16 %v2216
    %v2283 = vunpack.c.h.b16 %v2217
    %v2284 = vunpack.c.h.b16 %v2218
    %v2285 = vunpack.c.h.b16 %v2219
    %v2286 = vunpack.c.h.b16 %v2220
    %v2287 = vunpack.c.h.b16 %v2221
    %v2288 = vunpack.c.l.b16 %v2222
    %v2289 = vunpack.c.l.b16 %v2223
    %v2290 = vunpack.c.l.b16 %v2224
    %v2291 = vunpack.c.l.b16 %v2225
    %v2292 = vunpack.c.l.b16 %v2226
    %v2293 = vunpack.c.l.b16 %v2227
    %v2294 = vunpack.c.h.b16 %v2222
    %v2295 = vunpack.c.h.b16 %v2223
    %v2296 = vunpack.c.h.b16 %v2224
    %v2297 = vunpack.c.h.b16 %v2225
    %v2298 = vunpack.c.h.b16 %v2226
    %v2299 = vunpack.c.h.b16 %v2227
    %v2300 = vpack.c.b16 %v2253, %v2252
    %v2301 = vpack.c.b16 %v2255, %v2254
    %v2302 = vpack.c.b16 %v2257, %v2256
    %v2303 = vpack.c.b16 %v2259, %v2258
    %v2304 = vpack.c.b16 %v2261, %v2260
    %v2305 = vpack.c.b16 %v2263, %v2262
    %v2306 = vpack.c.b16 %v2265, %v2264
    %v2307 = vpack.c.b16 %v2267, %v2266
    %v2308 = vpack.c.b16 %v2269, %v2268
    %v2309 = vpack.c.b16 %v2271, %v2270
    %v2310 = vpack.c.b16 %v2273, %v2272
    %v2311 = vpack.c.b16 %v2275, %v2274
    %v2312 = vpack.c.b16 %v2277, %v2276
    %v2313 = vpack.c.b16 %v2279, %v2278
    %v2314 = vpack.c.b16 %v2281, %v2280
    %v2315 = vpack.c.b16 %v2283, %v2282
    %v2316 = vpack.c.b16 %v2285, %v2284
    %v2317 = vpack.c.b16 %v2287, %v2286
    %v2318 = vpack.c.b16 %v2289, %v2288
    %v2319 = vpack.c.b16 %v2291, %v2290
    %v2320 = vpack.c.b16 %v2293, %v2292
    %v2321 = vpack.c.b16 %v2295, %v2294
    %v2322 = vpack.c.b16 %v2297, %v2296
    %v2323 = vpack.c.b16 %v2299, %v2298
    %2348 = vst [vmem:[%s6] sm:$0xff] %v2300
    %2349 = vst [vmem:[%s6 + $0x8] sm:$0xff] %v2301
    %vm2350 = vcmask 64516
    %vm2351 = vmor %vm2350, %vm724
    %2352 = vst.msk [vmem:[%s6 + $0x10] sm:$0xff] %vm2351, %v2302
    %2353 = vst [vmem:[%s6 + $0x18] sm:$0xff] %v2303
    %2354 = vst [vmem:[%s6 + $0x20] sm:$0xff] %v2304
    %2355 = vst.msk [vmem:[%s6 + $0x28] sm:$0xff] %vm2351, %v2305
    %2356 = vst [vmem:[%s6 + $0x30] sm:$0xff] %v2306
    %2357 = vst [vmem:[%s6 + $0x38] sm:$0xff] %v2307
    %2358 = vst.msk [vmem:[%s6 + $0x40] sm:$0xff] %vm2351, %v2308
    %2359 = vst [vmem:[%s6 + $0x48] sm:$0xff] %v2309
    %2360 = vst [vmem:[%s6 + $0x50] sm:$0xff] %v2310
    %2361 = vst.msk [vmem:[%s6 + $0x58] sm:$0xff] %vm2351, %v2311
    %2362 = vst [vmem:[%s6 + $0x60] sm:$0xff] %v2312
    %2363 = vst [vmem:[%s6 + $0x68] sm:$0xff] %v2313
    %2364 = vst.msk [vmem:[%s6 + $0x70] sm:$0xff] %vm2351, %v2314
    %2365 = vst [vmem:[%s6 + $0x78] sm:$0xff] %v2315
    %2366 = vst [vmem:[%s6 + $0x80] sm:$0xff] %v2316
    %2367 = vst.msk [vmem:[%s6 + $0x88] sm:$0xff] %vm2351, %v2317
    %2368 = vst [vmem:[%s6 + $0x90] sm:$0xff] %v2318
    %2369 = vst [vmem:[%s6 + $0x98] sm:$0xff] %v2319
    %2370 = vst.msk [vmem:[%s6 + $0xa0] sm:$0xff] %vm2351, %v2320
    %2371 = vst [vmem:[%s6 + $0xa8] sm:$0xff] %v2321
    %2372 = vst [vmem:[%s6 + $0xb0] sm:$0xff] %v2322
    %2373 = vst.msk [vmem:[%s6 + $0xb8] sm:$0xff] %vm2351, %v2323
    // Predicated region
    $region34: #{scoring_forward.2} parent=1 // pred_check
      _
    $region35: #{scoring_forward.2} parent=1 // pred_check_branch
      %2375 = sbr.rel (0) target = $region37
    $region36: #{scoring_forward.2} parent=1 // pred_region
      _
    $region37: #{scoring_forward.2} parent=1 // pred_fallthru
      _
    // Predicated region
    $region38: #{scoring_forward.2} parent=1 // pred_check
      _
    $region39: #{scoring_forward.2} parent=1 // pred_check_branch
      %2377 = sbr.rel (0) target = $region41
    $region40: #{scoring_forward.2} parent=1 // pred_region
      _
    $region41: #{scoring_forward.2} parent=1 // pred_fallthru
      _
    %2378 = vsyncpa [#allocation3], 1
    %2379 = vsyncpa [#allocation5], 1

// kernel: scoring_forward.3
$region0: #{scoring_forward.3}
  #allocation0 [shape = 'u32[]', space=smem, size = 0x4, offset = 0x4, fixed_abs, tag = 'smem constant byte address 0x4 - core index']
  #allocation1 [shape = 'u32[144,128]{1,0:T(1,128)}', space=vmem, size = 0x12000, scoped, tag = 'internal scratch']
  #allocation2 [shape = 'f32[1,1]{1,0:T(1,128)S(1)}', space=vmem, size = 0x200, scoped, tag = 'scoped memory for scoring_forward.3']
  %s0 = inlined_call_operand.vmem [shape: bf16[8,5184], index: 0, kind: input, shape index: {}]
  %s1 = inlined_call_operand.vmem [shape: f32[8,3], index: 1, kind: input, shape index: {}]
  %s2 = inlined_call_operand.hbm [shape: bf16[5184,256], index: 2, kind: input, shape index: {}]
  %s3 = inlined_call_operand.hbm [shape: bf16[3,256], index: 3, kind: input, shape index: {}]
  %s4 = inlined_call_operand.hbm [shape: f32[1,256], index: 4, kind: input, shape index: {}]
  %s5 = inlined_call_operand.vmem [shape: bf16[256,64], index: 5, kind: input, shape index: {}]
  %s6 = inlined_call_operand.hbm [shape: f32[1,64], index: 6, kind: input, shape index: {}]
  %s7 = inlined_call_operand.vmem [shape: bf16[64,1], index: 7, kind: input, shape index: {}]
  %s8 = inlined_call_operand.<no memory space> [shape: f32[1,1], index: 8, kind: input, shape index: {}]
  %s9 = inlined_call_operand.vmem [shape: f32[8,1], index: 9, kind: output, shape index: {}]
  %s10 = sld [smem:[#allocation0]]
  $region62: #{scoring_forward.3} parent=0
    _
  %s12 = ssub.s32 1, %s10
  %s13 = scalar_select 0, %s12, %s10
  %v14 = vstv %s8
  %15 = vst [vmem:[#allocation2] sm:$0x1] %v14
  $region1: #{scoring_forward.3} parent=0
    #allocation3 [shape = 'u8[2654208]{0}', space=vmem, size = 0x288000, scoped, tag = 'input window, operand 2, single buffered']
    #allocation4 [shape = 's32[1]{0}', space=sflag, size = 0x4, scoped, tag = 'scoped memory for scoring_forward.3']
    #allocation5 [shape = 'u8[2048]{0}', space=vmem, size = 0x800, scoped, tag = 'input window, operand 3, single buffered']
    #allocation6 [shape = 's32[1]{0}', space=sflag, size = 0x4, scoped, tag = 'scoped memory for scoring_forward.3']
    #allocation7 [shape = 'u8[1024]{0}', space=vmem, size = 0x400, scoped, tag = 'input window, operand 4, single buffered']
    #allocation8 [shape = 'u8[512]{0}', space=vmem, size = 0x400, scoped, tag = 'input window, operand 6, single buffered']
    #allocation9 [shape = 's32[1]{0}', space=sflag, size = 0x4, scoped, tag = 'scoped memory for scoring_forward.3']
    %16 = vsyncpa [#allocation4], 0
    %17 = vsyncpa [#allocation6], 0
    %18 = vsyncpa [#allocation9], 0
    // Predicated region
    $region2: #{scoring_forward.3} parent=1 // pred_check
      _
    $region3: #{scoring_forward.3} parent=1 // pred_check_branch
      %20 = sbr.rel (0) target = $region5
    $region4: #{scoring_forward.3} parent=1 // pred_region
      _
    $region5: #{scoring_forward.3} parent=1 // pred_fallthru
      _
    // Predicated region
    $region6: #{scoring_forward.3} parent=1 // pred_check
      _
    $region7: #{scoring_forward.3} parent=1 // pred_check_branch
      %22 = sbr.rel (0) target = $region9
    $region8: #{scoring_forward.3} parent=1 // pred_region
      _
    $region9: #{scoring_forward.3} parent=1 // pred_fallthru
      _
    // Predicated region
    $region10: #{scoring_forward.3} parent=1 // pred_check
      _
    $region11: #{scoring_forward.3} parent=1 // pred_check_branch
      %24 = sbr.rel (0) target = $region13
    $region12: #{scoring_forward.3} parent=1 // pred_region
      %s26 = ssub.s32 82944, 82944
      %27 = vsyncadd [#allocation4], %s26
      %s28 = sshll.u32 [#allocation3], 4
      %s29 = int_to_ptr.vmem [resolvable:$true] %s28
      %34 = dma.hbm_to_vmem [thread:$0]  %s2, 82944, %s29, [#allocation4], 128, 128, 8
    $region13: #{scoring_forward.3} parent=1 // pred_fallthru
      _
    // Predicated region
    $region14: #{scoring_forward.3} parent=1 // pred_check
      _
    $region15: #{scoring_forward.3} parent=1 // pred_check_branch
      %36 = sbr.rel (0) target = $region17
    $region16: #{scoring_forward.3} parent=1 // pred_region
      %s38 = ssub.s32 64, 64
      %39 = vsyncadd [#allocation6], %s38
      %s41 = sshll.u32 [#allocation5], 4
      %s42 = int_to_ptr.vmem [resolvable:$true] %s41
      %44 = dma.hbm_to_vmem [thread:$0]  %s3, 64, %s42, [#allocation6]
    $region17: #{scoring_forward.3} parent=1 // pred_fallthru
      _
    // Predicated region
    $region18: #{scoring_forward.3} parent=1 // pred_check
      _
    $region19: #{scoring_forward.3} parent=1 // pred_check_branch
      %46 = sbr.rel (0) target = $region21
    $region20: #{scoring_forward.3} parent=1 // pred_region
      %s48 = ssub.s32 32, 32
      %49 = vsyncadd [#allocation6], %s48
      %s51 = sshll.u32 [#allocation7], 4
      %s52 = int_to_ptr.vmem [resolvable:$true] %s51
      %54 = dma.hbm_to_vmem [thread:$0]  %s4, 32, %s52, [#allocation6]
    $region21: #{scoring_forward.3} parent=1 // pred_fallthru
      _
    // Predicated region
    $region22: #{scoring_forward.3} parent=1 // pred_check
      _
    $region23: #{scoring_forward.3} parent=1 // pred_check_branch
      %56 = sbr.rel (0) target = $region25
    $region24: #{scoring_forward.3} parent=1 // pred_region
      _
    $region25: #{scoring_forward.3} parent=1 // pred_fallthru
      _
    // Predicated region
    $region26: #{scoring_forward.3} parent=1 // pred_check
      _
    $region27: #{scoring_forward.3} parent=1 // pred_check_branch
      %58 = sbr.rel (0) target = $region29
    $region28: #{scoring_forward.3} parent=1 // pred_region
      %s60 = ssub.s32 16, 16
      %61 = vsyncadd [#allocation9], %s60
      %s63 = sshll.u32 [#allocation8], 4
      %s64 = int_to_ptr.vmem [resolvable:$true] %s63
      %66 = dma.hbm_to_vmem [thread:$0]  %s6, 16, %s64, [#allocation9]
    $region29: #{scoring_forward.3} parent=1 // pred_fallthru
      _
    // Predicated region
    $region30: #{scoring_forward.3} parent=1 // pred_check
      _
    $region31: #{scoring_forward.3} parent=1 // pred_check_branch
      %68 = sbr.rel (0) target = $region33
    $region32: #{scoring_forward.3} parent=1 // pred_region
      _
    $region33: #{scoring_forward.3} parent=1 // pred_fallthru
      _
    // Predicated region
    $region34: #{scoring_forward.3} parent=1 // pred_check
      _
    $region35: #{scoring_forward.3} parent=1 // pred_check_branch
      %70 = sbr.rel (0) target = $region37
    $region36: #{scoring_forward.3} parent=1 // pred_region
      _
    $region37: #{scoring_forward.3} parent=1 // pred_fallthru
      _
    // Predicated region
    $region38: #{scoring_forward.3} parent=1 // pred_check
      _
    $region39: #{scoring_forward.3} parent=1 // pred_check_branch
      %72 = sbr.rel (0) target = $region41
    $region40: #{scoring_forward.3} parent=1 // pred_region
      %73 = dma.done [#allocation4], 82944
    $region41: #{scoring_forward.3} parent=1 // pred_fallthru
      _
    // Predicated region
    $region42: #{scoring_forward.3} parent=1 // pred_check
      _
    $region43: #{scoring_forward.3} parent=1 // pred_check_branch
      %75 = sbr.rel (0) target = $region45
    $region44: #{scoring_forward.3} parent=1 // pred_region
      %76 = dma.done [#allocation6], 64
    $region45: #{scoring_forward.3} parent=1 // pred_fallthru
      _
    // Predicated region
    $region46: #{scoring_forward.3} parent=1 // pred_check
      _
    $region47: #{scoring_forward.3} parent=1 // pred_check_branch
      %78 = sbr.rel (0) target = $region49
    $region48: #{scoring_forward.3} parent=1 // pred_region
      %79 = dma.done [#allocation6], 32
    $region49: #{scoring_forward.3} parent=1 // pred_fallthru
      _
    // Predicated region
    $region50: #{scoring_forward.3} parent=1 // pred_check
      _
    $region51: #{scoring_forward.3} parent=1 // pred_check_branch
      %81 = sbr.rel (0) target = $region53
    $region52: #{scoring_forward.3} parent=1 // pred_region
      %82 = dma.done [#allocation9], 16
    $region53: #{scoring_forward.3} parent=1 // pred_fallthru
      _
    %v84 = vld [vmem:[%s0] sm:$0xff]
    %v85 = vld [vmem:[%s0 + $0x8] sm:$0xff]
    %v86 = vld [vmem:[%s0 + $0x10] sm:$0xff]
    %v87 = vld [vmem:[%s0 + $0x18] sm:$0xff]
    %v88 = vld [vmem:[%s0 + $0x20] sm:$0xff]
    %v89 = vld [vmem:[%s0 + $0x28] sm:$0xff]
    %v90 = vld [vmem:[%s0 + $0x30] sm:$0xff]
    %v91 = vld [vmem:[%s0 + $0x38] sm:$0xff]
    %v92 = vld [vmem:[%s0 + $0x40] sm:$0xff]
    %v93 = vld [vmem:[%s0 + $0x48] sm:$0xff]
    %v94 = vld [vmem:[%s0 + $0x50] sm:$0xff]
    %v95 = vld [vmem:[%s0 + $0x58] sm:$0xff]
    %v96 = vld [vmem:[%s0 + $0x60] sm:$0xff]
    %v97 = vld [vmem:[%s0 + $0x68] sm:$0xff]
    %v98 = vld [vmem:[%s0 + $0x70] sm:$0xff]
    %v99 = vld [vmem:[%s0 + $0x78] sm:$0xff]
    %v100 = vld [vmem:[%s0 + $0x80] sm:$0xff]
    %v101 = vld [vmem:[%s0 + $0x88] sm:$0xff]
    %v102 = vld [vmem:[%s0 + $0x90] sm:$0xff]
    %v103 = vld [vmem:[%s0 + $0x98] sm:$0xff]
    %v104 = vld [vmem:[%s0 + $0xa0] sm:$0xf]
    %v105 = vld [vmem:[#allocation3] sm:$0xff]
    %v106 = vld [vmem:[#allocation3 + $0x8] sm:$0xff]
    %v107 = vld [vmem:[#allocation3 + $0x10] sm:$0xff]
    %v108 = vld [vmem:[#allocation3 + $0x18] sm:$0xff]
    %v109 = vld [vmem:[#allocation3 + $0x20] sm:$0xff]
    %v110 = vld [vmem:[#allocation3 + $0x28] sm:$0xff]
    %v111 = vld [vmem:[#allocation3 + $0x30] sm:$0xff]
    %v112 = vld [vmem:[#allocation3 + $0x38] sm:$0xff]
    %v113 = vld [vmem:[#allocation3 + $0x40] sm:$0xff]
    %v114 = vld [vmem:[#allocation3 + $0x48] sm:$0xff]
    %v115 = vld [vmem:[#allocation3 + $0x50] sm:$0xff]
    %v116 = vld [vmem:[#allocation3 + $0x58] sm:$0xff]
    %v117 = vld [vmem:[#allocation3 + $0x60] sm:$0xff]
    %v118 = vld [vmem:[#allocation3 + $0x68] sm:$0xff]
    %v119 = vld [vmem:[#allocation3 + $0x70] sm:$0xff]
    %v120 = vld [vmem:[#allocation3 + $0x78] sm:$0xff]
    %v121 = vld [vmem:[#allocation3 + $0x80] sm:$0xff]
    %v122 = vld [vmem:[#allocation3 + $0x88] sm:$0xff]
    %v123 = vld [vmem:[#allocation3 + $0x90] sm:$0xff]
    %v124 = vld [vmem:[#allocation3 + $0x98] sm:$0xff]
    %v125 = vld [vmem:[#allocation3 + $0xa0] sm:$0xff]
    %v126 = vld [vmem:[#allocation3 + $0xa8] sm:$0xff]
    %v127 = vld [vmem:[#allocation3 + $0xb0] sm:$0xff]
    %v128 = vld [vmem:[#allocation3 + $0xb8] sm:$0xff]
    %v129 = vld [vmem:[#allocation3 + $0xc0] sm:$0xff]
    %v130 = vld [vmem:[#allocation3 + $0xc8] sm:$0xff]
    %v131 = vld [vmem:[#allocation3 + $0xd0] sm:$0xff]
    %v132 = vld [vmem:[#allocation3 + $0xd8] sm:$0xff]
    %v133 = vld [vmem:[#allocation3 + $0xe0] sm:$0xff]
    %v134 = vld [vmem:[#allocation3 + $0xe8] sm:$0xff]
    %v135 = vld [vmem:[#allocation3 + $0xf0] sm:$0xff]
    %v136 = vld [vmem:[#allocation3 + $0xf8] sm:$0xff]
    %v137 = vld [vmem:[#allocation3 + $0x100] sm:$0xff]
    %v138 = vld [vmem:[#allocation3 + $0x108] sm:$0xff]
    %v139 = vld [vmem:[#allocation3 + $0x110] sm:$0xff]
    %v140 = vld [vmem:[#allocation3 + $0x118] sm:$0xff]
    %v141 = vld [vmem:[#allocation3 + $0x120] sm:$0xff]
    %v142 = vld [vmem:[#allocation3 + $0x128] sm:$0xff]
    %v143 = vld [vmem:[#allocation3 + $0x130] sm:$0xff]
    %v144 = vld [vmem:[#allocation3 + $0x138] sm:$0xff]
    %v145 = vld [vmem:[#allocation3 + $0x140] sm:$0xff]
    %v146 = vld [vmem:[#allocation3 + $0x148] sm:$0xff]
    %v147 = vld [vmem:[#allocation3 + $0x150] sm:$0xff]
    %v148 = vld [vmem:[#allocation3 + $0x158] sm:$0xff]
    %v149 = vld [vmem:[#allocation3 + $0x160] sm:$0xff]
    %v150 = vld [vmem:[#allocation3 + $0x168] sm:$0xff]
    %v151 = vld [vmem:[#allocation3 + $0x170] sm:$0xff]
    %v152 = vld [vmem:[#allocation3 + $0x178] sm:$0xff]
    %v153 = vld [vmem:[#allocation3 + $0x180] sm:$0xff]
    %v154 = vld [vmem:[#allocation3 + $0x188] sm:$0xff]
    %v155 = vld [vmem:[#allocation3 + $0x190] sm:$0xff]
    %v156 = vld [vmem:[#allocation3 + $0x198] sm:$0xff]
    %v157 = vld [vmem:[#allocation3 + $0x1a0] sm:$0xff]
    %v158 = vld [vmem:[#allocation3 + $0x1a8] sm:$0xff]
    %v159 = vld [vmem:[#allocation3 + $0x1b0] sm:$0xff]
    %v160 = vld [vmem:[#allocation3 + $0x1b8] sm:$0xff]
    %v161 = vld [vmem:[#allocation3 + $0x1c0] sm:$0xff]
    %v162 = vld [vmem:[#allocation3 + $0x1c8] sm:$0xff]
    %v163 = vld [vmem:[#allocation3 + $0x1d0] sm:$0xff]
    %v164 = vld [vmem:[#allocation3 + $0x1d8] sm:$0xff]
    %v165 = vld [vmem:[#allocation3 + $0x1e0] sm:$0xff]
    %v166 = vld [vmem:[#allocation3 + $0x1e8] sm:$0xff]
    %v167 = vld [vmem:[#allocation3 + $0x1f0] sm:$0xff]
    %v168 = vld [vmem:[#allocation3 + $0x1f8] sm:$0xff]
    %v169 = vld [vmem:[#allocation3 + $0x200] sm:$0xff]
    %v170 = vld [vmem:[#allocation3 + $0x208] sm:$0xff]
    %v171 = vld [vmem:[#allocation3 + $0x210] sm:$0xff]
    %v172 = vld [vmem:[#allocation3 + $0x218] sm:$0xff]
    %v173 = vld [vmem:[#allocation3 + $0x220] sm:$0xff]
    %v174 = vld [vmem:[#allocation3 + $0x228] sm:$0xff]
    %v175 = vld [vmem:[#allocation3 + $0x230] sm:$0xff]
    %v176 = vld [vmem:[#allocation3 + $0x238] sm:$0xff]
    %v177 = vld [vmem:[#allocation3 + $0x240] sm:$0xff]
    %v178 = vld [vmem:[#allocation3 + $0x248] sm:$0xff]
    %v179 = vld [vmem:[#allocation3 + $0x250] sm:$0xff]
    %v180 = vld [vmem:[#allocation3 + $0x258] sm:$0xff]
    %v181 = vld [vmem:[#allocation3 + $0x260] sm:$0xff]
    %v182 = vld [vmem:[#allocation3 + $0x268] sm:$0xff]
    %v183 = vld [vmem:[#allocation3 + $0x270] sm:$0xff]
    %v184 = vld [vmem:[#allocation3 + $0x278] sm:$0xff]
    %v185 = vld [vmem:[#allocation3 + $0x280] sm:$0xff]
    %v186 = vld [vmem:[#allocation3 + $0x288] sm:$0xff]
    %v187 = vld [vmem:[#allocation3 + $0x290] sm:$0xff]
    %v188 = vld [vmem:[#allocation3 + $0x298] sm:$0xff]
    %v189 = vld [vmem:[#allocation3 + $0x2a0] sm:$0xff]
    %v190 = vld [vmem:[#allocation3 + $0x2a8] sm:$0xff]
    %v191 = vld [vmem:[#allocation3 + $0x2b0] sm:$0xff]
    %v192 = vld [vmem:[#allocation3 + $0x2b8] sm:$0xff]
    %v193 = vld [vmem:[#allocation3 + $0x2c0] sm:$0xff]
    %v194 = vld [vmem:[#allocation3 + $0x2c8] sm:$0xff]
    %v195 = vld [vmem:[#allocation3 + $0x2d0] sm:$0xff]
    %v196 = vld [vmem:[#allocation3 + $0x2d8] sm:$0xff]
    %v197 = vld [vmem:[#allocation3 + $0x2e0] sm:$0xff]
    %v198 = vld [vmem:[#allocation3 + $0x2e8] sm:$0xff]
    %v199 = vld [vmem:[#allocation3 + $0x2f0] sm:$0xff]
    %v200 = vld [vmem:[#allocation3 + $0x2f8] sm:$0xff]
    %v201 = vld [vmem:[#allocation3 + $0x300] sm:$0xff]
    %v202 = vld [vmem:[#allocation3 + $0x308] sm:$0xff]
    %v203 = vld [vmem:[#allocation3 + $0x310] sm:$0xff]
    %v204 = vld [vmem:[#allocation3 + $0x318] sm:$0xff]
    %v205 = vld [vmem:[#allocation3 + $0x320] sm:$0xff]
    %v206 = vld [vmem:[#allocation3 + $0x328] sm:$0xff]
    %v207 = vld [vmem:[#allocation3 + $0x330] sm:$0xff]
    %v208 = vld [vmem:[#allocation3 + $0x338] sm:$0xff]
    %v209 = vld [vmem:[#allocation3 + $0x340] sm:$0xff]
    %v210 = vld [vmem:[#allocation3 + $0x348] sm:$0xff]
    %v211 = vld [vmem:[#allocation3 + $0x350] sm:$0xff]
    %v212 = vld [vmem:[#allocation3 + $0x358] sm:$0xff]
    %v213 = vld [vmem:[#allocation3 + $0x360] sm:$0xff]
    %v214 = vld [vmem:[#allocation3 + $0x368] sm:$0xff]
    %v215 = vld [vmem:[#allocation3 + $0x370] sm:$0xff]
    %v216 = vld [vmem:[#allocation3 + $0x378] sm:$0xff]
    %v217 = vld [vmem:[#allocation3 + $0x380] sm:$0xff]
    %v218 = vld [vmem:[#allocation3 + $0x388] sm:$0xff]
    %v219 = vld [vmem:[#allocation3 + $0x390] sm:$0xff]
    %v220 = vld [vmem:[#allocation3 + $0x398] sm:$0xff]
    %v221 = vld [vmem:[#allocation3 + $0x3a0] sm:$0xff]
    %v222 = vld [vmem:[#allocation3 + $0x3a8] sm:$0xff]
    %v223 = vld [vmem:[#allocation3 + $0x3b0] sm:$0xff]
    %v224 = vld [vmem:[#allocation3 + $0x3b8] sm:$0xff]
    %v225 = vld [vmem:[#allocation3 + $0x3c0] sm:$0xff]
    %v226 = vld [vmem:[#allocation3 + $0x3c8] sm:$0xff]
    %v227 = vld [vmem:[#allocation3 + $0x3d0] sm:$0xff]
    %v228 = vld [vmem:[#allocation3 + $0x3d8] sm:$0xff]
    %v229 = vld [vmem:[#allocation3 + $0x3e0] sm:$0xff]
    %v230 = vld [vmem:[#allocation3 + $0x3e8] sm:$0xff]
    %v231 = vld [vmem:[#allocation3 + $0x3f0] sm:$0xff]
    %v232 = vld [vmem:[#allocation3 + $0x3f8] sm:$0xff]
    %v233 = vld [vmem:[#allocation3 + $0x400] sm:$0xff]
    %v234 = vld [vmem:[#allocation3 + $0x408] sm:$0xff]
    %v235 = vld [vmem:[#allocation3 + $0x410] sm:$0xff]
    %v236 = vld [vmem:[#allocation3 + $0x418] sm:$0xff]
    %v237 = vld [vmem:[#allocation3 + $0x420] sm:$0xff]
    %v238 = vld [vmem:[#allocation3 + $0x428] sm:$0xff]
    %v239 = vld [vmem:[#allocation3 + $0x430] sm:$0xff]
    %v240 = vld [vmem:[#allocation3 + $0x438] sm:$0xff]
    %v241 = vld [vmem:[#allocation3 + $0x440] sm:$0xff]
    %v242 = vld [vmem:[#allocation3 + $0x448] sm:$0xff]
    %v243 = vld [vmem:[#allocation3 + $0x450] sm:$0xff]
    %v244 = vld [vmem:[#allocation3 + $0x458] sm:$0xff]
    %v245 = vld [vmem:[#allocation3 + $0x460] sm:$0xff]
    %v246 = vld [vmem:[#allocation3 + $0x468] sm:$0xff]
    %v247 = vld [vmem:[#allocation3 + $0x470] sm:$0xff]
    %v248 = vld [vmem:[#allocation3 + $0x478] sm:$0xff]
    %v249 = vld [vmem:[#allocation3 + $0x480] sm:$0xff]
    %v250 = vld [vmem:[#allocation3 + $0x488] sm:$0xff]
    %v251 = vld [vmem:[#allocation3 + $0x490] sm:$0xff]
    %v252 = vld [vmem:[#allocation3 + $0x498] sm:$0xff]
    %v253 = vld [vmem:[#allocation3 + $0x4a0] sm:$0xff]
    %v254 = vld [vmem:[#allocation3 + $0x4a8] sm:$0xff]
    %v255 = vld [vmem:[#allocation3 + $0x4b0] sm:$0xff]
    %v256 = vld [vmem:[#allocation3 + $0x4b8] sm:$0xff]
    %v257 = vld [vmem:[#allocation3 + $0x4c0] sm:$0xff]
    %v258 = vld [vmem:[#allocation3 + $0x4c8] sm:$0xff]
    %v259 = vld [vmem:[#allocation3 + $0x4d0] sm:$0xff]
    %v260 = vld [vmem:[#allocation3 + $0x4d8] sm:$0xff]
    %v261 = vld [vmem:[#allocation3 + $0x4e0] sm:$0xff]
    %v262 = vld [vmem:[#allocation3 + $0x4e8] sm:$0xff]
    %v263 = vld [vmem:[#allocation3 + $0x4f0] sm:$0xff]
    %v264 = vld [vmem:[#allocation3 + $0x4f8] sm:$0xff]
    %v265 = vld [vmem:[#allocation3 + $0x500] sm:$0xff]
    %v266 = vld [vmem:[#allocation3 + $0x508] sm:$0xff]
    %v267 = vld [vmem:[#allocation3 + $0x510] sm:$0xff]
    %v268 = vld [vmem:[#allocation3 + $0x518] sm:$0xff]
    %v269 = vld [vmem:[#allocation3 + $0x520] sm:$0xff]
    %v270 = vld [vmem:[#allocation3 + $0x528] sm:$0xff]
    %v271 = vld [vmem:[#allocation3 + $0x530] sm:$0xff]
    %v272 = vld [vmem:[#allocation3 + $0x538] sm:$0xff]
    %v273 = vld [vmem:[#allocation3 + $0x540] sm:$0xff]
    %v274 = vld [vmem:[#allocation3 + $0x548] sm:$0xff]
    %v275 = vld [vmem:[#allocation3 + $0x550] sm:$0xff]
    %v276 = vld [vmem:[#allocation3 + $0x558] sm:$0xff]
    %v277 = vld [vmem:[#allocation3 + $0x560] sm:$0xff]
    %v278 = vld [vmem:[#allocation3 + $0x568] sm:$0xff]
    %v279 = vld [vmem:[#allocation3 + $0x570] sm:$0xff]
    %v280 = vld [vmem:[#allocation3 + $0x578] sm:$0xff]
    %v281 = vld [vmem:[#allocation3 + $0x580] sm:$0xff]
    %v282 = vld [vmem:[#allocation3 + $0x588] sm:$0xff]
    %v283 = vld [vmem:[#allocation3 + $0x590] sm:$0xff]
    %v284 = vld [vmem:[#allocation3 + $0x598] sm:$0xff]
    %v285 = vld [vmem:[#allocation3 + $0x5a0] sm:$0xff]
    %v286 = vld [vmem:[#allocation3 + $0x5a8] sm:$0xff]
    %v287 = vld [vmem:[#allocation3 + $0x5b0] sm:$0xff]
    %v288 = vld [vmem:[#allocation3 + $0x5b8] sm:$0xff]
    %v289 = vld [vmem:[#allocation3 + $0x5c0] sm:$0xff]
    %v290 = vld [vmem:[#allocation3 + $0x5c8] sm:$0xff]
    %v291 = vld [vmem:[#allocation3 + $0x5d0] sm:$0xff]
    %v292 = vld [vmem:[#allocation3 + $0x5d8] sm:$0xff]
    %v293 = vld [vmem:[#allocation3 + $0x5e0] sm:$0xff]
    %v294 = vld [vmem:[#allocation3 + $0x5e8] sm:$0xff]
    %v295 = vld [vmem:[#allocation3 + $0x5f0] sm:$0xff]
    %v296 = vld [vmem:[#allocation3 + $0x5f8] sm:$0xff]
    %v297 = vld [vmem:[#allocation3 + $0x600] sm:$0xff]
    %v298 = vld [vmem:[#allocation3 + $0x608] sm:$0xff]
    %v299 = vld [vmem:[#allocation3 + $0x610] sm:$0xff]
    %v300 = vld [vmem:[#allocation3 + $0x618] sm:$0xff]
    %v301 = vld [vmem:[#allocation3 + $0x620] sm:$0xff]
    %v302 = vld [vmem:[#allocation3 + $0x628] sm:$0xff]
    %v303 = vld [vmem:[#allocation3 + $0x630] sm:$0xff]
    %v304 = vld [vmem:[#allocation3 + $0x638] sm:$0xff]
    %v305 = vld [vmem:[#allocation3 + $0x640] sm:$0xff]
    %v306 = vld [vmem:[#allocation3 + $0x648] sm:$0xff]
    %v307 = vld [vmem:[#allocation3 + $0x650] sm:$0xff]
    %v308 = vld [vmem:[#allocation3 + $0x658] sm:$0xff]
    %v309 = vld [vmem:[#allocation3 + $0x660] sm:$0xff]
    %v310 = vld [vmem:[#allocation3 + $0x668] sm:$0xff]
    %v311 = vld [vmem:[#allocation3 + $0x670] sm:$0xff]
    %v312 = vld [vmem:[#allocation3 + $0x678] sm:$0xff]
    %v313 = vld [vmem:[#allocation3 + $0x680] sm:$0xff]
    %v314 = vld [vmem:[#allocation3 + $0x688] sm:$0xff]
    %v315 = vld [vmem:[#allocation3 + $0x690] sm:$0xff]
    %v316 = vld [vmem:[#allocation3 + $0x698] sm:$0xff]
    %v317 = vld [vmem:[#allocation3 + $0x6a0] sm:$0xff]
    %v318 = vld [vmem:[#allocation3 + $0x6a8] sm:$0xff]
    %v319 = vld [vmem:[#allocation3 + $0x6b0] sm:$0xff]
    %v320 = vld [vmem:[#allocation3 + $0x6b8] sm:$0xff]
    %v321 = vld [vmem:[#allocation3 + $0x6c0] sm:$0xff]
    %v322 = vld [vmem:[#allocation3 + $0x6c8] sm:$0xff]
    %v323 = vld [vmem:[#allocation3 + $0x6d0] sm:$0xff]
    %v324 = vld [vmem:[#allocation3 + $0x6d8] sm:$0xff]
    %v325 = vld [vmem:[#allocation3 + $0x6e0] sm:$0xff]
    %v326 = vld [vmem:[#allocation3 + $0x6e8] sm:$0xff]
    %v327 = vld [vmem:[#allocation3 + $0x6f0] sm:$0xff]
    %v328 = vld [vmem:[#allocation3 + $0x6f8] sm:$0xff]
    %v329 = vld [vmem:[#allocation3 + $0x700] sm:$0xff]
    %v330 = vld [vmem:[#allocation3 + $0x708] sm:$0xff]
    %v331 = vld [vmem:[#allocation3 + $0x710] sm:$0xff]
    %v332 = vld [vmem:[#allocation3 + $0x718] sm:$0xff]
    %v333 = vld [vmem:[#allocation3 + $0x720] sm:$0xff]
    %v334 = vld [vmem:[#allocation3 + $0x728] sm:$0xff]
    %v335 = vld [vmem:[#allocation3 + $0x730] sm:$0xff]
    %v336 = vld [vmem:[#allocation3 + $0x738] sm:$0xff]
    %v337 = vld [vmem:[#allocation3 + $0x740] sm:$0xff]
    %v338 = vld [vmem:[#allocation3 + $0x748] sm:$0xff]
    %v339 = vld [vmem:[#allocation3 + $0x750] sm:$0xff]
    %v340 = vld [vmem:[#allocation3 + $0x758] sm:$0xff]
    %v341 = vld [vmem:[#allocation3 + $0x760] sm:$0xff]
    %v342 = vld [vmem:[#allocation3 + $0x768] sm:$0xff]
    %v343 = vld [vmem:[#allocation3 + $0x770] sm:$0xff]
    %v344 = vld [vmem:[#allocation3 + $0x778] sm:$0xff]
    %v345 = vld [vmem:[#allocation3 + $0x780] sm:$0xff]
    %v346 = vld [vmem:[#allocation3 + $0x788] sm:$0xff]
    %v347 = vld [vmem:[#allocation3 + $0x790] sm:$0xff]
    %v348 = vld [vmem:[#allocation3 + $0x798] sm:$0xff]
    %v349 = vld [vmem:[#allocation3 + $0x7a0] sm:$0xff]
    %v350 = vld [vmem:[#allocation3 + $0x7a8] sm:$0xff]
    %v351 = vld [vmem:[#allocation3 + $0x7b0] sm:$0xff]
    %v352 = vld [vmem:[#allocation3 + $0x7b8] sm:$0xff]
    %v353 = vld [vmem:[#allocation3 + $0x7c0] sm:$0xff]
    %v354 = vld [vmem:[#allocation3 + $0x7c8] sm:$0xff]
    %v355 = vld [vmem:[#allocation3 + $0x7d0] sm:$0xff]
    %v356 = vld [vmem:[#allocation3 + $0x7d8] sm:$0xff]
    %v357 = vld [vmem:[#allocation3 + $0x7e0] sm:$0xff]
    %v358 = vld [vmem:[#allocation3 + $0x7e8] sm:$0xff]
    %v359 = vld [vmem:[#allocation3 + $0x7f0] sm:$0xff]
    %v360 = vld [vmem:[#allocation3 + $0x7f8] sm:$0xff]
    %v361 = vld [vmem:[#allocation3 + $0x800] sm:$0xff]
    %v362 = vld [vmem:[#allocation3 + $0x808] sm:$0xff]
    %v363 = vld [vmem:[#allocation3 + $0x810] sm:$0xff]
    %v364 = vld [vmem:[#allocation3 + $0x818] sm:$0xff]
    %v365 = vld [vmem:[#allocation3 + $0x820] sm:$0xff]
    %v366 = vld [vmem:[#allocation3 + $0x828] sm:$0xff]
    %v367 = vld [vmem:[#allocation3 + $0x830] sm:$0xff]
    %v368 = vld [vmem:[#allocation3 + $0x838] sm:$0xff]
    %v369 = vld [vmem:[#allocation3 + $0x840] sm:$0xff]
    %v370 = vld [vmem:[#allocation3 + $0x848] sm:$0xff]
    %v371 = vld [vmem:[#allocation3 + $0x850] sm:$0xff]
    %v372 = vld [vmem:[#allocation3 + $0x858] sm:$0xff]
    %v373 = vld [vmem:[#allocation3 + $0x860] sm:$0xff]
    %v374 = vld [vmem:[#allocation3 + $0x868] sm:$0xff]
    %v375 = vld [vmem:[#allocation3 + $0x870] sm:$0xff]
    %v376 = vld [vmem:[#allocation3 + $0x878] sm:$0xff]
    %v377 = vld [vmem:[#allocation3 + $0x880] sm:$0xff]
    %v378 = vld [vmem:[#allocation3 + $0x888] sm:$0xff]
    %v379 = vld [vmem:[#allocation3 + $0x890] sm:$0xff]
    %v380 = vld [vmem:[#allocation3 + $0x898] sm:$0xff]
    %v381 = vld [vmem:[#allocation3 + $0x8a0] sm:$0xff]
    %v382 = vld [vmem:[#allocation3 + $0x8a8] sm:$0xff]
    %v383 = vld [vmem:[#allocation3 + $0x8b0] sm:$0xff]
    %v384 = vld [vmem:[#allocation3 + $0x8b8] sm:$0xff]
    %v385 = vld [vmem:[#allocation3 + $0x8c0] sm:$0xff]
    %v386 = vld [vmem:[#allocation3 + $0x8c8] sm:$0xff]
    %v387 = vld [vmem:[#allocation3 + $0x8d0] sm:$0xff]
    %v388 = vld [vmem:[#allocation3 + $0x8d8] sm:$0xff]
    %v389 = vld [vmem:[#allocation3 + $0x8e0] sm:$0xff]
    %v390 = vld [vmem:[#allocation3 + $0x8e8] sm:$0xff]
    %v391 = vld [vmem:[#allocation3 + $0x8f0] sm:$0xff]
    %v392 = vld [vmem:[#allocation3 + $0x8f8] sm:$0xff]
    %v393 = vld [vmem:[#allocation3 + $0x900] sm:$0xff]
    %v394 = vld [vmem:[#allocation3 + $0x908] sm:$0xff]
    %v395 = vld [vmem:[#allocation3 + $0x910] sm:$0xff]
    %v396 = vld [vmem:[#allocation3 + $0x918] sm:$0xff]
    %v397 = vld [vmem:[#allocation3 + $0x920] sm:$0xff]
    %v398 = vld [vmem:[#allocation3 + $0x928] sm:$0xff]
    %v399 = vld [vmem:[#allocation3 + $0x930] sm:$0xff]
    %v400 = vld [vmem:[#allocation3 + $0x938] sm:$0xff]
    %v401 = vld [vmem:[#allocation3 + $0x940] sm:$0xff]
    %v402 = vld [vmem:[#allocation3 + $0x948] sm:$0xff]
    %v403 = vld [vmem:[#allocation3 + $0x950] sm:$0xff]
    %v404 = vld [vmem:[#allocation3 + $0x958] sm:$0xff]
    %v405 = vld [vmem:[#allocation3 + $0x960] sm:$0xff]
    %v406 = vld [vmem:[#allocation3 + $0x968] sm:$0xff]
    %v407 = vld [vmem:[#allocation3 + $0x970] sm:$0xff]
    %v408 = vld [vmem:[#allocation3 + $0x978] sm:$0xff]
    %v409 = vld [vmem:[#allocation3 + $0x980] sm:$0xff]
    %v410 = vld [vmem:[#allocation3 + $0x988] sm:$0xff]
    %v411 = vld [vmem:[#allocation3 + $0x990] sm:$0xff]
    %v412 = vld [vmem:[#allocation3 + $0x998] sm:$0xff]
    %v413 = vld [vmem:[#allocation3 + $0x9a0] sm:$0xff]
    %v414 = vld [vmem:[#allocation3 + $0x9a8] sm:$0xff]
    %v415 = vld [vmem:[#allocation3 + $0x9b0] sm:$0xff]
    %v416 = vld [vmem:[#allocation3 + $0x9b8] sm:$0xff]
    %v417 = vld [vmem:[#allocation3 + $0x9c0] sm:$0xff]
    %v418 = vld [vmem:[#allocation3 + $0x9c8] sm:$0xff]
    %v419 = vld [vmem:[#allocation3 + $0x9d0] sm:$0xff]
    %v420 = vld [vmem:[#allocation3 + $0x9d8] sm:$0xff]
    %v421 = vld [vmem:[#allocation3 + $0x9e0] sm:$0xff]
    %v422 = vld [vmem:[#allocation3 + $0x9e8] sm:$0xff]
    %v423 = vld [vmem:[#allocation3 + $0x9f0] sm:$0xff]
    %v424 = vld [vmem:[#allocation3 + $0x9f8] sm:$0xff]
    %v425 = vld [vmem:[#allocation3 + $0xa00] sm:$0xff]
    %v426 = vld [vmem:[#allocation3 + $0xa08] sm:$0xff]
    %v427 = vld [vmem:[#allocation3 + $0xa10] sm:$0xff]
    %v428 = vld [vmem:[#allocation3 + $0xa18] sm:$0xff]
    %v429 = vld [vmem:[#allocation3 + $0xa20] sm:$0xff]
    %v430 = vld [vmem:[#allocation3 + $0xa28] sm:$0xff]
    %v431 = vld [vmem:[#allocation3 + $0xa30] sm:$0xff]
    %v432 = vld [vmem:[#allocation3 + $0xa38] sm:$0xff]
    %v433 = vld [vmem:[#allocation3 + $0xa40] sm:$0xff]
    %v434 = vld [vmem:[#allocation3 + $0xa48] sm:$0xff]
    %v435 = vld [vmem:[#allocation3 + $0xa50] sm:$0xff]
    %v436 = vld [vmem:[#allocation3 + $0xa58] sm:$0xff]
    %v437 = vld [vmem:[#allocation3 + $0xa60] sm:$0xff]
    %v438 = vld [vmem:[#allocation3 + $0xa68] sm:$0xff]
    %v439 = vld [vmem:[#allocation3 + $0xa70] sm:$0xff]
    %v440 = vld [vmem:[#allocation3 + $0xa78] sm:$0xff]
    %v441 = vld [vmem:[#allocation3 + $0xa80] sm:$0xff]
    %v442 = vld [vmem:[#allocation3 + $0xa88] sm:$0xff]
    %v443 = vld [vmem:[#allocation3 + $0xa90] sm:$0xff]
    %v444 = vld [vmem:[#allocation3 + $0xa98] sm:$0xff]
    %v445 = vld [vmem:[#allocation3 + $0xaa0] sm:$0xff]
    %v446 = vld [vmem:[#allocation3 + $0xaa8] sm:$0xff]
    %v447 = vld [vmem:[#allocation3 + $0xab0] sm:$0xff]
    %v448 = vld [vmem:[#allocation3 + $0xab8] sm:$0xff]
    %v449 = vld [vmem:[#allocation3 + $0xac0] sm:$0xff]
    %v450 = vld [vmem:[#allocation3 + $0xac8] sm:$0xff]
    %v451 = vld [vmem:[#allocation3 + $0xad0] sm:$0xff]
    %v452 = vld [vmem:[#allocation3 + $0xad8] sm:$0xff]
    %v453 = vld [vmem:[#allocation3 + $0xae0] sm:$0xff]
    %v454 = vld [vmem:[#allocation3 + $0xae8] sm:$0xff]
    %v455 = vld [vmem:[#allocation3 + $0xaf0] sm:$0xff]
    %v456 = vld [vmem:[#allocation3 + $0xaf8] sm:$0xff]
    %v457 = vld [vmem:[#allocation3 + $0xb00] sm:$0xff]
    %v458 = vld [vmem:[#allocation3 + $0xb08] sm:$0xff]
    %v459 = vld [vmem:[#allocation3 + $0xb10] sm:$0xff]
    %v460 = vld [vmem:[#allocation3 + $0xb18] sm:$0xff]
    %v461 = vld [vmem:[#allocation3 + $0xb20] sm:$0xff]
    %v462 = vld [vmem:[#allocation3 + $0xb28] sm:$0xff]
    %v463 = vld [vmem:[#allocation3 + $0xb30] sm:$0xff]
    %v464 = vld [vmem:[#allocation3 + $0xb38] sm:$0xff]
    %v465 = vld [vmem:[#allocation3 + $0xb40] sm:$0xff]
    %v466 = vld [vmem:[#allocation3 + $0xb48] sm:$0xff]
    %v467 = vld [vmem:[#allocation3 + $0xb50] sm:$0xff]
    %v468 = vld [vmem:[#allocation3 + $0xb58] sm:$0xff]
    %v469 = vld [vmem:[#allocation3 + $0xb60] sm:$0xff]
    %v470 = vld [vmem:[#allocation3 + $0xb68] sm:$0xff]
    %v471 = vld [vmem:[#allocation3 + $0xb70] sm:$0xff]
    %v472 = vld [vmem:[#allocation3 + $0xb78] sm:$0xff]
    %v473 = vld [vmem:[#allocation3 + $0xb80] sm:$0xff]
    %v474 = vld [vmem:[#allocation3 + $0xb88] sm:$0xff]
    %v475 = vld [vmem:[#allocation3 + $0xb90] sm:$0xff]
    %v476 = vld [vmem:[#allocation3 + $0xb98] sm:$0xff]
    %v477 = vld [vmem:[#allocation3 + $0xba0] sm:$0xff]
    %v478 = vld [vmem:[#allocation3 + $0xba8] sm:$0xff]
    %v479 = vld [vmem:[#allocation3 + $0xbb0] sm:$0xff]
    %v480 = vld [vmem:[#allocation3 + $0xbb8] sm:$0xff]
    %v481 = vld [vmem:[#allocation3 + $0xbc0] sm:$0xff]
    %v482 = vld [vmem:[#allocation3 + $0xbc8] sm:$0xff]
    %v483 = vld [vmem:[#allocation3 + $0xbd0] sm:$0xff]
    %v484 = vld [vmem:[#allocation3 + $0xbd8] sm:$0xff]
    %v485 = vld [vmem:[#allocation3 + $0xbe0] sm:$0xff]
    %v486 = vld [vmem:[#allocation3 + $0xbe8] sm:$0xff]
    %v487 = vld [vmem:[#allocation3 + $0xbf0] sm:$0xff]
    %v488 = vld [vmem:[#allocation3 + $0xbf8] sm:$0xff]
    %v489 = vld [vmem:[#allocation3 + $0xc00] sm:$0xff]
    %v490 = vld [vmem:[#allocation3 + $0xc08] sm:$0xff]
    %v491 = vld [vmem:[#allocation3 + $0xc10] sm:$0xff]
    %v492 = vld [vmem:[#allocation3 + $0xc18] sm:$0xff]
    %v493 = vld [vmem:[#allocation3 + $0xc20] sm:$0xff]
    %v494 = vld [vmem:[#allocation3 + $0xc28] sm:$0xff]
    %v495 = vld [vmem:[#allocation3 + $0xc30] sm:$0xff]
    %v496 = vld [vmem:[#allocation3 + $0xc38] sm:$0xff]
    %v497 = vld [vmem:[#allocation3 + $0xc40] sm:$0xff]
    %v498 = vld [vmem:[#allocation3 + $0xc48] sm:$0xff]
    %v499 = vld [vmem:[#allocation3 + $0xc50] sm:$0xff]
    %v500 = vld [vmem:[#allocation3 + $0xc58] sm:$0xff]
    %v501 = vld [vmem:[#allocation3 + $0xc60] sm:$0xff]
    %v502 = vld [vmem:[#allocation3 + $0xc68] sm:$0xff]
    %v503 = vld [vmem:[#allocation3 + $0xc70] sm:$0xff]
    %v504 = vld [vmem:[#allocation3 + $0xc78] sm:$0xff]
    %v505 = vld [vmem:[#allocation3 + $0xc80] sm:$0xff]
    %v506 = vld [vmem:[#allocation3 + $0xc88] sm:$0xff]
    %v507 = vld [vmem:[#allocation3 + $0xc90] sm:$0xff]
    %v508 = vld [vmem:[#allocation3 + $0xc98] sm:$0xff]
    %v509 = vld [vmem:[#allocation3 + $0xca0] sm:$0xff]
    %v510 = vld [vmem:[#allocation3 + $0xca8] sm:$0xff]
    %v511 = vld [vmem:[#allocation3 + $0xcb0] sm:$0xff]
    %v512 = vld [vmem:[#allocation3 + $0xcb8] sm:$0xff]
    %v513 = vld [vmem:[#allocation3 + $0xcc0] sm:$0xff]
    %v514 = vld [vmem:[#allocation3 + $0xcc8] sm:$0xff]
    %v515 = vld [vmem:[#allocation3 + $0xcd0] sm:$0xff]
    %v516 = vld [vmem:[#allocation3 + $0xcd8] sm:$0xff]
    %v517 = vld [vmem:[#allocation3 + $0xce0] sm:$0xff]
    %v518 = vld [vmem:[#allocation3 + $0xce8] sm:$0xff]
    %v519 = vld [vmem:[#allocation3 + $0xcf0] sm:$0xff]
    %v520 = vld [vmem:[#allocation3 + $0xcf8] sm:$0xff]
    %v521 = vld [vmem:[#allocation3 + $0xd00] sm:$0xff]
    %v522 = vld [vmem:[#allocation3 + $0xd08] sm:$0xff]
    %v523 = vld [vmem:[#allocation3 + $0xd10] sm:$0xff]
    %v524 = vld [vmem:[#allocation3 + $0xd18] sm:$0xff]
    %v525 = vld [vmem:[#allocation3 + $0xd20] sm:$0xff]
    %v526 = vld [vmem:[#allocation3 + $0xd28] sm:$0xff]
    %v527 = vld [vmem:[#allocation3 + $0xd30] sm:$0xff]
    %v528 = vld [vmem:[#allocation3 + $0xd38] sm:$0xff]
    %v529 = vld [vmem:[#allocation3 + $0xd40] sm:$0xff]
    %v530 = vld [vmem:[#allocation3 + $0xd48] sm:$0xff]
    %v531 = vld [vmem:[#allocation3 + $0xd50] sm:$0xff]
    %v532 = vld [vmem:[#allocation3 + $0xd58] sm:$0xff]
    %v533 = vld [vmem:[#allocation3 + $0xd60] sm:$0xff]
    %v534 = vld [vmem:[#allocation3 + $0xd68] sm:$0xff]
    %v535 = vld [vmem:[#allocation3 + $0xd70] sm:$0xff]
    %v536 = vld [vmem:[#allocation3 + $0xd78] sm:$0xff]
    %v537 = vld [vmem:[#allocation3 + $0xd80] sm:$0xff]
    %v538 = vld [vmem:[#allocation3 + $0xd88] sm:$0xff]
    %v539 = vld [vmem:[#allocation3 + $0xd90] sm:$0xff]
    %v540 = vld [vmem:[#allocation3 + $0xd98] sm:$0xff]
    %v541 = vld [vmem:[#allocation3 + $0xda0] sm:$0xff]
    %v542 = vld [vmem:[#allocation3 + $0xda8] sm:$0xff]
    %v543 = vld [vmem:[#allocation3 + $0xdb0] sm:$0xff]
    %v544 = vld [vmem:[#allocation3 + $0xdb8] sm:$0xff]
    %v545 = vld [vmem:[#allocation3 + $0xdc0] sm:$0xff]
    %v546 = vld [vmem:[#allocation3 + $0xdc8] sm:$0xff]
    %v547 = vld [vmem:[#allocation3 + $0xdd0] sm:$0xff]
    %v548 = vld [vmem:[#allocation3 + $0xdd8] sm:$0xff]
    %v549 = vld [vmem:[#allocation3 + $0xde0] sm:$0xff]
    %v550 = vld [vmem:[#allocation3 + $0xde8] sm:$0xff]
    %v551 = vld [vmem:[#allocation3 + $0xdf0] sm:$0xff]
    %v552 = vld [vmem:[#allocation3 + $0xdf8] sm:$0xff]
    %v553 = vld [vmem:[#allocation3 + $0xe00] sm:$0xff]
    %v554 = vld [vmem:[#allocation3 + $0xe08] sm:$0xff]
    %v555 = vld [vmem:[#allocation3 + $0xe10] sm:$0xff]
    %v556 = vld [vmem:[#allocation3 + $0xe18] sm:$0xff]
    %v557 = vld [vmem:[#allocation3 + $0xe20] sm:$0xff]
    %v558 = vld [vmem:[#allocation3 + $0xe28] sm:$0xff]
    %v559 = vld [vmem:[#allocation3 + $0xe30] sm:$0xff]
    %v560 = vld [vmem:[#allocation3 + $0xe38] sm:$0xff]
    %v561 = vld [vmem:[#allocation3 + $0xe40] sm:$0xff]
    %v562 = vld [vmem:[#allocation3 + $0xe48] sm:$0xff]
    %v563 = vld [vmem:[#allocation3 + $0xe50] sm:$0xff]
    %v564 = vld [vmem:[#allocation3 + $0xe58] sm:$0xff]
    %v565 = vld [vmem:[#allocation3 + $0xe60] sm:$0xff]
    %v566 = vld [vmem:[#allocation3 + $0xe68] sm:$0xff]
    %v567 = vld [vmem:[#allocation3 + $0xe70] sm:$0xff]
    %v568 = vld [vmem:[#allocation3 + $0xe78] sm:$0xff]
    %v569 = vld [vmem:[#allocation3 + $0xe80] sm:$0xff]
    %v570 = vld [vmem:[#allocation3 + $0xe88] sm:$0xff]
    %v571 = vld [vmem:[#allocation3 + $0xe90] sm:$0xff]
    %v572 = vld [vmem:[#allocation3 + $0xe98] sm:$0xff]
    %v573 = vld [vmem:[#allocation3 + $0xea0] sm:$0xff]
    %v574 = vld [vmem:[#allocation3 + $0xea8] sm:$0xff]
    %v575 = vld [vmem:[#allocation3 + $0xeb0] sm:$0xff]
    %v576 = vld [vmem:[#allocation3 + $0xeb8] sm:$0xff]
    %v577 = vld [vmem:[#allocation3 + $0xec0] sm:$0xff]
    %v578 = vld [vmem:[#allocation3 + $0xec8] sm:$0xff]
    %v579 = vld [vmem:[#allocation3 + $0xed0] sm:$0xff]
    %v580 = vld [vmem:[#allocation3 + $0xed8] sm:$0xff]
    %v581 = vld [vmem:[#allocation3 + $0xee0] sm:$0xff]
    %v582 = vld [vmem:[#allocation3 + $0xee8] sm:$0xff]
    %v583 = vld [vmem:[#allocation3 + $0xef0] sm:$0xff]
    %v584 = vld [vmem:[#allocation3 + $0xef8] sm:$0xff]
    %v585 = vld [vmem:[#allocation3 + $0xf00] sm:$0xff]
    %v586 = vld [vmem:[#allocation3 + $0xf08] sm:$0xff]
    %v587 = vld [vmem:[#allocation3 + $0xf10] sm:$0xff]
    %v588 = vld [vmem:[#allocation3 + $0xf18] sm:$0xff]
    %v589 = vld [vmem:[#allocation3 + $0xf20] sm:$0xff]
    %v590 = vld [vmem:[#allocation3 + $0xf28] sm:$0xff]
    %v591 = vld [vmem:[#allocation3 + $0xf30] sm:$0xff]
    %v592 = vld [vmem:[#allocation3 + $0xf38] sm:$0xff]
    %v593 = vld [vmem:[#allocation3 + $0xf40] sm:$0xff]
    %v594 = vld [vmem:[#allocation3 + $0xf48] sm:$0xff]
    %v595 = vld [vmem:[#allocation3 + $0xf50] sm:$0xff]
    %v596 = vld [vmem:[#allocation3 + $0xf58] sm:$0xff]
    %v597 = vld [vmem:[#allocation3 + $0xf60] sm:$0xff]
    %v598 = vld [vmem:[#allocation3 + $0xf68] sm:$0xff]
    %v599 = vld [vmem:[#allocation3 + $0xf70] sm:$0xff]
    %v600 = vld [vmem:[#allocation3 + $0xf78] sm:$0xff]
    %v601 = vld [vmem:[#allocation3 + $0xf80] sm:$0xff]
    %v602 = vld [vmem:[#allocation3 + $0xf88] sm:$0xff]
    %v603 = vld [vmem:[#allocation3 + $0xf90] sm:$0xff]
    %v604 = vld [vmem:[#allocation3 + $0xf98] sm:$0xff]
    %v605 = vld [vmem:[#allocation3 + $0xfa0] sm:$0xff]
    %v606 = vld [vmem:[#allocation3 + $0xfa8] sm:$0xff]
    %v607 = vld [vmem:[#allocation3 + $0xfb0] sm:$0xff]
    %v608 = vld [vmem:[#allocation3 + $0xfb8] sm:$0xff]
    %v609 = vld [vmem:[#allocation3 + $0xfc0] sm:$0xff]
    %v610 = vld [vmem:[#allocation3 + $0xfc8] sm:$0xff]
    %v611 = vld [vmem:[#allocation3 + $0xfd0] sm:$0xff]
    %v612 = vld [vmem:[#allocation3 + $0xfd8] sm:$0xff]
    %v613 = vld [vmem:[#allocation3 + $0xfe0] sm:$0xff]
    %v614 = vld [vmem:[#allocation3 + $0xfe8] sm:$0xff]
    %v615 = vld [vmem:[#allocation3 + $0xff0] sm:$0xff]
    %v616 = vld [vmem:[#allocation3 + $0xff8] sm:$0xff]
    %v617 = vld [vmem:[#allocation3 + $0x1000] sm:$0xff]
    %v618 = vld [vmem:[#allocation3 + $0x1008] sm:$0xff]
    %v619 = vld [vmem:[#allocation3 + $0x1010] sm:$0xff]
    %v620 = vld [vmem:[#allocation3 + $0x1018] sm:$0xff]
    %v621 = vld [vmem:[#allocation3 + $0x1020] sm:$0xff]
    %v622 = vld [vmem:[#allocation3 + $0x1028] sm:$0xff]
    %v623 = vld [vmem:[#allocation3 + $0x1030] sm:$0xff]
    %v624 = vld [vmem:[#allocation3 + $0x1038] sm:$0xff]
    %v625 = vld [vmem:[#allocation3 + $0x1040] sm:$0xff]
    %v626 = vld [vmem:[#allocation3 + $0x1048] sm:$0xff]
    %v627 = vld [vmem:[#allocation3 + $0x1050] sm:$0xff]
    %v628 = vld [vmem:[#allocation3 + $0x1058] sm:$0xff]
    %v629 = vld [vmem:[#allocation3 + $0x1060] sm:$0xff]
    %v630 = vld [vmem:[#allocation3 + $0x1068] sm:$0xff]
    %v631 = vld [vmem:[#allocation3 + $0x1070] sm:$0xff]
    %v632 = vld [vmem:[#allocation3 + $0x1078] sm:$0xff]
    %v633 = vld [vmem:[#allocation3 + $0x1080] sm:$0xff]
    %v634 = vld [vmem:[#allocation3 + $0x1088] sm:$0xff]
    %v635 = vld [vmem:[#allocation3 + $0x1090] sm:$0xff]
    %v636 = vld [vmem:[#allocation3 + $0x1098] sm:$0xff]
    %v637 = vld [vmem:[#allocation3 + $0x10a0] sm:$0xff]
    %v638 = vld [vmem:[#allocation3 + $0x10a8] sm:$0xff]
    %v639 = vld [vmem:[#allocation3 + $0x10b0] sm:$0xff]
    %v640 = vld [vmem:[#allocation3 + $0x10b8] sm:$0xff]
    %v641 = vld [vmem:[#allocation3 + $0x10c0] sm:$0xff]
    %v642 = vld [vmem:[#allocation3 + $0x10c8] sm:$0xff]
    %v643 = vld [vmem:[#allocation3 + $0x10d0] sm:$0xff]
    %v644 = vld [vmem:[#allocation3 + $0x10d8] sm:$0xff]
    %v645 = vld [vmem:[#allocation3 + $0x10e0] sm:$0xff]
    %v646 = vld [vmem:[#allocation3 + $0x10e8] sm:$0xff]
    %v647 = vld [vmem:[#allocation3 + $0x10f0] sm:$0xff]
    %v648 = vld [vmem:[#allocation3 + $0x10f8] sm:$0xff]
    %v649 = vld [vmem:[#allocation3 + $0x1100] sm:$0xff]
    %v650 = vld [vmem:[#allocation3 + $0x1108] sm:$0xff]
    %v651 = vld [vmem:[#allocation3 + $0x1110] sm:$0xff]
    %v652 = vld [vmem:[#allocation3 + $0x1118] sm:$0xff]
    %v653 = vld [vmem:[#allocation3 + $0x1120] sm:$0xff]
    %v654 = vld [vmem:[#allocation3 + $0x1128] sm:$0xff]
    %v655 = vld [vmem:[#allocation3 + $0x1130] sm:$0xff]
    %v656 = vld [vmem:[#allocation3 + $0x1138] sm:$0xff]
    %v657 = vld [vmem:[#allocation3 + $0x1140] sm:$0xff]
    %v658 = vld [vmem:[#allocation3 + $0x1148] sm:$0xff]
    %v659 = vld [vmem:[#allocation3 + $0x1150] sm:$0xff]
    %v660 = vld [vmem:[#allocation3 + $0x1158] sm:$0xff]
    %v661 = vld [vmem:[#allocation3 + $0x1160] sm:$0xff]
    %v662 = vld [vmem:[#allocation3 + $0x1168] sm:$0xff]
    %v663 = vld [vmem:[#allocation3 + $0x1170] sm:$0xff]
    %v664 = vld [vmem:[#allocation3 + $0x1178] sm:$0xff]
    %v665 = vld [vmem:[#allocation3 + $0x1180] sm:$0xff]
    %v666 = vld [vmem:[#allocation3 + $0x1188] sm:$0xff]
    %v667 = vld [vmem:[#allocation3 + $0x1190] sm:$0xff]
    %v668 = vld [vmem:[#allocation3 + $0x1198] sm:$0xff]
    %v669 = vld [vmem:[#allocation3 + $0x11a0] sm:$0xff]
    %v670 = vld [vmem:[#allocation3 + $0x11a8] sm:$0xff]
    %v671 = vld [vmem:[#allocation3 + $0x11b0] sm:$0xff]
    %v672 = vld [vmem:[#allocation3 + $0x11b8] sm:$0xff]
    %v673 = vld [vmem:[#allocation3 + $0x11c0] sm:$0xff]
    %v674 = vld [vmem:[#allocation3 + $0x11c8] sm:$0xff]
    %v675 = vld [vmem:[#allocation3 + $0x11d0] sm:$0xff]
    %v676 = vld [vmem:[#allocation3 + $0x11d8] sm:$0xff]
    %v677 = vld [vmem:[#allocation3 + $0x11e0] sm:$0xff]
    %v678 = vld [vmem:[#allocation3 + $0x11e8] sm:$0xff]
    %v679 = vld [vmem:[#allocation3 + $0x11f0] sm:$0xff]
    %v680 = vld [vmem:[#allocation3 + $0x11f8] sm:$0xff]
    %v681 = vld [vmem:[#allocation3 + $0x1200] sm:$0xff]
    %v682 = vld [vmem:[#allocation3 + $0x1208] sm:$0xff]
    %v683 = vld [vmem:[#allocation3 + $0x1210] sm:$0xff]
    %v684 = vld [vmem:[#allocation3 + $0x1218] sm:$0xff]
    %v685 = vld [vmem:[#allocation3 + $0x1220] sm:$0xff]
    %v686 = vld [vmem:[#allocation3 + $0x1228] sm:$0xff]
    %v687 = vld [vmem:[#allocation3 + $0x1230] sm:$0xff]
    %v688 = vld [vmem:[#allocation3 + $0x1238] sm:$0xff]
    %v689 = vld [vmem:[#allocation3 + $0x1240] sm:$0xff]
    %v690 = vld [vmem:[#allocation3 + $0x1248] sm:$0xff]
    %v691 = vld [vmem:[#allocation3 + $0x1250] sm:$0xff]
    %v692 = vld [vmem:[#allocation3 + $0x1258] sm:$0xff]
    %v693 = vld [vmem:[#allocation3 + $0x1260] sm:$0xff]
    %v694 = vld [vmem:[#allocation3 + $0x1268] sm:$0xff]
    %v695 = vld [vmem:[#allocation3 + $0x1270] sm:$0xff]
    %v696 = vld [vmem:[#allocation3 + $0x1278] sm:$0xff]
    %v697 = vld [vmem:[#allocation3 + $0x1280] sm:$0xff]
    %v698 = vld [vmem:[#allocation3 + $0x1288] sm:$0xff]
    %v699 = vld [vmem:[#allocation3 + $0x1290] sm:$0xff]
    %v700 = vld [vmem:[#allocation3 + $0x1298] sm:$0xff]
    %v701 = vld [vmem:[#allocation3 + $0x12a0] sm:$0xff]
    %v702 = vld [vmem:[#allocation3 + $0x12a8] sm:$0xff]
    %v703 = vld [vmem:[#allocation3 + $0x12b0] sm:$0xff]
    %v704 = vld [vmem:[#allocation3 + $0x12b8] sm:$0xff]
    %v705 = vld [vmem:[#allocation3 + $0x12c0] sm:$0xff]
    %v706 = vld [vmem:[#allocation3 + $0x12c8] sm:$0xff]
    %v707 = vld [vmem:[#allocation3 + $0x12d0] sm:$0xff]
    %v708 = vld [vmem:[#allocation3 + $0x12d8] sm:$0xff]
    %v709 = vld [vmem:[#allocation3 + $0x12e0] sm:$0xff]
    %v710 = vld [vmem:[#allocation3 + $0x12e8] sm:$0xff]
    %v711 = vld [vmem:[#allocation3 + $0x12f0] sm:$0xff]
    %v712 = vld [vmem:[#allocation3 + $0x12f8] sm:$0xff]
    %v713 = vld [vmem:[#allocation3 + $0x1300] sm:$0xff]
    %v714 = vld [vmem:[#allocation3 + $0x1308] sm:$0xff]
    %v715 = vld [vmem:[#allocation3 + $0x1310] sm:$0xff]
    %v716 = vld [vmem:[#allocation3 + $0x1318] sm:$0xff]
    %v717 = vld [vmem:[#allocation3 + $0x1320] sm:$0xff]
    %v718 = vld [vmem:[#allocation3 + $0x1328] sm:$0xff]
    %v719 = vld [vmem:[#allocation3 + $0x1330] sm:$0xff]
    %v720 = vld [vmem:[#allocation3 + $0x1338] sm:$0xff]
    %v721 = vld [vmem:[#allocation3 + $0x1340] sm:$0xff]
    %v722 = vld [vmem:[#allocation3 + $0x1348] sm:$0xff]
    %v723 = vld [vmem:[#allocation3 + $0x1350] sm:$0xff]
    %v724 = vld [vmem:[#allocation3 + $0x1358] sm:$0xff]
    %v725 = vld [vmem:[#allocation3 + $0x1360] sm:$0xff]
    %v726 = vld [vmem:[#allocation3 + $0x1368] sm:$0xff]
    %v727 = vld [vmem:[#allocation3 + $0x1370] sm:$0xff]
    %v728 = vld [vmem:[#allocation3 + $0x1378] sm:$0xff]
    %v729 = vld [vmem:[#allocation3 + $0x1380] sm:$0xff]
    %v730 = vld [vmem:[#allocation3 + $0x1388] sm:$0xff]
    %v731 = vld [vmem:[#allocation3 + $0x1390] sm:$0xff]
    %v732 = vld [vmem:[#allocation3 + $0x1398] sm:$0xff]
    %v733 = vld [vmem:[#allocation3 + $0x13a0] sm:$0xff]
    %v734 = vld [vmem:[#allocation3 + $0x13a8] sm:$0xff]
    %v735 = vld [vmem:[#allocation3 + $0x13b0] sm:$0xff]
    %v736 = vld [vmem:[#allocation3 + $0x13b8] sm:$0xff]
    %v737 = vld [vmem:[#allocation3 + $0x13c0] sm:$0xff]
    %v738 = vld [vmem:[#allocation3 + $0x13c8] sm:$0xff]
    %v739 = vld [vmem:[#allocation3 + $0x13d0] sm:$0xff]
    %v740 = vld [vmem:[#allocation3 + $0x13d8] sm:$0xff]
    %v741 = vld [vmem:[#allocation3 + $0x13e0] sm:$0xff]
    %v742 = vld [vmem:[#allocation3 + $0x13e8] sm:$0xff]
    %v743 = vld [vmem:[#allocation3 + $0x13f0] sm:$0xff]
    %v744 = vld [vmem:[#allocation3 + $0x13f8] sm:$0xff]
    %v745 = vld [vmem:[#allocation3 + $0x1400] sm:$0xff]
    %v746 = vld [vmem:[#allocation3 + $0x1408] sm:$0xff]
    %v747 = vld [vmem:[#allocation3 + $0x1410] sm:$0xff]
    %v748 = vld [vmem:[#allocation3 + $0x1418] sm:$0xff]
    %v749 = vld [vmem:[#allocation3 + $0x1420] sm:$0xff]
    %v750 = vld [vmem:[#allocation3 + $0x1428] sm:$0xff]
    %v751 = vld [vmem:[#allocation3 + $0x1430] sm:$0xff]
    %v752 = vld [vmem:[#allocation3 + $0x1438] sm:$0xff]
    %v753 = vld [vmem:[%s1] sm:$0xff]
    %v754 = vpack.c.bf16 %v753, %v753
    %v755 = vld [vmem:[#allocation5] sm:$0xf]
    %v758 = vunpack.c.l.s4 1983009808
    %v759 = vunpack.c.0.s8 %v758
    %v760 = vlaneseq
    %v761 = vshrl.u32 %v760, 7
    %v762 = vsub.s32 %v759, %v761
    %v763 = vrot.slane %v755, %v762
    %v764 = vcombine.high %v763, %v763
    %vm765 = vcmask 23552
    %v767 = vsel %vm765, %v754, 0
    %vm769 = vcmask 1040384
    %vm770 = vcmask 1041408
    %v771 = vsel %vm769, 4294967295, 65535
    %v772 = vsel %vm770, %v771, 0
    %v774 = vand.u32 %v763, %v772
    %v777 = vand.u32 %v764, %v772
    %779 = vmatprep.subr.bf16.mxu0 %v777
    %780 = vmatpush1.bf16.msra.mxu0 %v774
    %781 = vmatprep.subr.bf16.mxu0 0
    %782 = vmatpush1.bf16.msra.mxu0 0
    %783 = vmatprep.subr.bf16.mxu0 0
    %784 = vmatpush1.bf16.msra.mxu0 0
    %785 = vmatprep.subr.bf16.mxu0 0
    %786 = vmatpush1.bf16.msra.mxu0 0
    %787 = vmatprep.subr.bf16.mxu0 0
    %788 = vmatpush1.bf16.msra.mxu0 0
    %789 = vmatprep.subr.bf16.mxu0 0
    %790 = vmatpush1.bf16.msra.mxu0 0
    %791 = vmatprep.subr.bf16.mxu0 0
    %792 = vmatpush1.bf16.msra.mxu0 0
    %793 = vmatprep.subr.bf16.mxu0 0
    %794 = vmatpush1.bf16.msra.mxu0 0
    %795 = vmatprep.subr.bf16.mxu0 0
    %796 = vmatpush1.bf16.msra.mxu0 0
    %797 = vmatprep.subr.bf16.mxu0 0
    %798 = vmatpush1.bf16.msra.mxu0 0
    %799 = vmatprep.subr.bf16.mxu0 0
    %800 = vmatpush1.bf16.msra.mxu0 0
    %801 = vmatprep.subr.bf16.mxu0 0
    %802 = vmatpush1.bf16.msra.mxu0 0
    %803 = vmatprep.subr.bf16.mxu0 0
    %804 = vmatpush1.bf16.msra.mxu0 0
    %805 = vmatprep.subr.bf16.mxu0 0
    %806 = vmatpush1.bf16.msra.mxu0 0
    %807 = vmatprep.subr.bf16.mxu0 0
    %808 = vmatpush1.bf16.msra.mxu0 0
    %809 = vmatprep.subr.bf16.mxu0 0
    %810 = vmatpush1.bf16.msra.mxu0 0
    %811 = vmatprep.mubr.bf16.mxu0 0
    %812 = vmatmul.mubr.bf16.gmra.mrb[0].mxu0 %v767
    %v813 = vpop.f32.mrb[0].mxu0
    %v814 = vadd.f32 0.0, %v813
    %v815 = vpop.f32.mrb[0].mxu0
    %v816 = vadd.f32 0.0, %v815
    %v817 = vpop.f32.mrb[0].mxu0
    %v818 = vpop.f32.mrb[0].mxu0
    %819 = vdwg.mxu0
    %v841 = vunpack.c.l.b16 %v84
    %v842 = vunpack.c.h.b16 %v84
    %v843 = vunpack.c.l.b16 %v85
    %v844 = vunpack.c.h.b16 %v85
    %v845 = vunpack.c.l.b16 %v86
    %v846 = vunpack.c.h.b16 %v86
    %v847 = vunpack.c.l.b16 %v87
    %v848 = vunpack.c.h.b16 %v87
    %v849 = vunpack.c.l.b16 %v88
    %v850 = vunpack.c.h.b16 %v88
    %v851 = vunpack.c.l.b16 %v89
    %v852 = vunpack.c.h.b16 %v89
    %v853 = vunpack.c.l.b16 %v90
    %v854 = vunpack.c.h.b16 %v90
    %v855 = vunpack.c.l.b16 %v91
    %v856 = vunpack.c.h.b16 %v91
    %v857 = vunpack.c.l.b16 %v92
    %v858 = vunpack.c.h.b16 %v92
    %v859 = vunpack.c.l.b16 %v93
    %v860 = vunpack.c.h.b16 %v93
    %v861 = vunpack.c.l.b16 %v94
    %v862 = vunpack.c.h.b16 %v94
    %v863 = vunpack.c.l.b16 %v95
    %v864 = vunpack.c.h.b16 %v95
    %v865 = vunpack.c.l.b16 %v96
    %v866 = vunpack.c.h.b16 %v96
    %v867 = vunpack.c.l.b16 %v97
    %v868 = vunpack.c.h.b16 %v97
    %v869 = vunpack.c.l.b16 %v98
    %v870 = vunpack.c.h.b16 %v98
    %v871 = vunpack.c.l.b16 %v99
    %v872 = vunpack.c.h.b16 %v99
    %v873 = vunpack.c.l.b16 %v100
    %v874 = vunpack.c.h.b16 %v100
    %v875 = vunpack.c.l.b16 %v101
    %v876 = vunpack.c.h.b16 %v101
    %v877 = vunpack.c.l.b16 %v102
    %v878 = vunpack.c.h.b16 %v102
    %v879 = vunpack.c.l.b16 %v103
    %v880 = vunpack.c.h.b16 %v103
    %v881 = vunpack.c.l.b16 %v104
    %v882 = vpack.c.b16 %v841, %v841
    %v883 = vpack.c.b16 %v842, %v842
    %v884 = vpack.c.b16 %v843, %v843
    %v885 = vpack.c.b16 %v844, %v844
    %v886 = vpack.c.b16 %v845, %v845
    %v887 = vpack.c.b16 %v846, %v846
    %v888 = vpack.c.b16 %v847, %v847
    %v889 = vpack.c.b16 %v848, %v848
    %v890 = vpack.c.b16 %v849, %v849
    %v891 = vpack.c.b16 %v850, %v850
    %v892 = vpack.c.b16 %v851, %v851
    %v893 = vpack.c.b16 %v852, %v852
    %v894 = vpack.c.b16 %v853, %v853
    %v895 = vpack.c.b16 %v854, %v854
    %v896 = vpack.c.b16 %v855, %v855
    %v897 = vpack.c.b16 %v856, %v856
    %v898 = vpack.c.b16 %v857, %v857
    %v899 = vpack.c.b16 %v858, %v858
    %v900 = vpack.c.b16 %v859, %v859
    %v901 = vpack.c.b16 %v860, %v860
    %v902 = vpack.c.b16 %v861, %v861
    %v903 = vpack.c.b16 %v862, %v862
    %v904 = vpack.c.b16 %v863, %v863
    %v905 = vpack.c.b16 %v864, %v864
    %v906 = vpack.c.b16 %v865, %v865
    %v907 = vpack.c.b16 %v866, %v866
    %v908 = vpack.c.b16 %v867, %v867
    %v909 = vpack.c.b16 %v868, %v868
    %v910 = vpack.c.b16 %v869, %v869
    %v911 = vpack.c.b16 %v870, %v870
    %v912 = vpack.c.b16 %v871, %v871
    %v913 = vpack.c.b16 %v872, %v872
    %v914 = vpack.c.b16 %v873, %v873
    %v915 = vpack.c.b16 %v874, %v874
    %v916 = vpack.c.b16 %v875, %v875
    %v917 = vpack.c.b16 %v876, %v876
    %v918 = vpack.c.b16 %v877, %v877
    %v919 = vpack.c.b16 %v878, %v878
    %v920 = vpack.c.b16 %v879, %v879
    %v921 = vpack.c.b16 %v880, %v880
    %v922 = vpack.c.b16 %v881, %v881
    %v1611 = vunpack.c.l.b16 %v105
    %v1612 = vunpack.c.h.b16 %v105
    %v1613 = vunpack.c.l.b16 %v106
    %v1614 = vunpack.c.h.b16 %v106
    %v1615 = vunpack.c.l.b16 %v107
    %v1616 = vunpack.c.h.b16 %v107
    %v1617 = vunpack.c.l.b16 %v108
    %v1618 = vunpack.c.h.b16 %v108
    %v1619 = vunpack.c.l.b16 %v109
    %v1620 = vunpack.c.h.b16 %v109
    %v1621 = vunpack.c.l.b16 %v110
    %v1622 = vunpack.c.h.b16 %v110
    %v1623 = vunpack.c.l.b16 %v111
    %v1624 = vunpack.c.h.b16 %v111
    %v1625 = vunpack.c.l.b16 %v112
    %v1626 = vunpack.c.h.b16 %v112
    %v1627 = vunpack.c.l.b16 %v113
    %v1628 = vunpack.c.h.b16 %v113
    %v1629 = vunpack.c.l.b16 %v114
    %v1630 = vunpack.c.h.b16 %v114
    %v1631 = vunpack.c.l.b16 %v115
    %v1632 = vunpack.c.h.b16 %v115
    %v1633 = vunpack.c.l.b16 %v116
    %v1634 = vunpack.c.h.b16 %v116
    %v1635 = vunpack.c.l.b16 %v117
    %v1636 = vunpack.c.h.b16 %v117
    %v1637 = vunpack.c.l.b16 %v118
    %v1638 = vunpack.c.h.b16 %v118
    %v1639 = vunpack.c.l.b16 %v119
    %v1640 = vunpack.c.h.b16 %v119
    %v1641 = vunpack.c.l.b16 %v120
    %v1642 = vunpack.c.h.b16 %v120
    %v1643 = vunpack.c.l.b16 %v121
    %v1644 = vunpack.c.h.b16 %v121
    %v1645 = vunpack.c.l.b16 %v122
    %v1646 = vunpack.c.h.b16 %v122
    %v1647 = vunpack.c.l.b16 %v123
    %v1648 = vunpack.c.h.b16 %v123
    %v1649 = vunpack.c.l.b16 %v124
    %v1650 = vunpack.c.h.b16 %v124
    %v1651 = vunpack.c.l.b16 %v125
    %v1652 = vunpack.c.h.b16 %v125
    %v1653 = vunpack.c.l.b16 %v126
    %v1654 = vunpack.c.h.b16 %v126
    %v1655 = vunpack.c.l.b16 %v127
    %v1656 = vunpack.c.h.b16 %v127
    %v1657 = vunpack.c.l.b16 %v128
    %v1658 = vunpack.c.h.b16 %v128
    %v1659 = vunpack.c.l.b16 %v129
    %v1660 = vunpack.c.h.b16 %v129
    %v1661 = vunpack.c.l.b16 %v130
    %v1662 = vunpack.c.h.b16 %v130
    %v1663 = vunpack.c.l.b16 %v131
    %v1664 = vunpack.c.h.b16 %v131
    %v1665 = vunpack.c.l.b16 %v132
    %v1666 = vunpack.c.h.b16 %v132
    %v1667 = vunpack.c.l.b16 %v133
    %v1668 = vunpack.c.h.b16 %v133
    %v1669 = vunpack.c.l.b16 %v134
    %v1670 = vunpack.c.h.b16 %v134
    %v1671 = vunpack.c.l.b16 %v135
    %v1672 = vunpack.c.h.b16 %v135
    %v1673 = vunpack.c.l.b16 %v136
    %v1674 = vunpack.c.h.b16 %v136
    %v1675 = vunpack.c.l.b16 %v137
    %v1676 = vunpack.c.h.b16 %v137
    %v1677 = vunpack.c.l.b16 %v138
    %v1678 = vunpack.c.h.b16 %v138
    %v1679 = vunpack.c.l.b16 %v139
    %v1680 = vunpack.c.h.b16 %v139
    %v1681 = vunpack.c.l.b16 %v140
    %v1682 = vunpack.c.h.b16 %v140
    %v1683 = vunpack.c.l.b16 %v141
    %v1684 = vunpack.c.h.b16 %v141
    %v1685 = vunpack.c.l.b16 %v142
    %v1686 = vunpack.c.h.b16 %v142
    %v1687 = vunpack.c.l.b16 %v143
    %v1688 = vunpack.c.h.b16 %v143
    %v1689 = vunpack.c.l.b16 %v144
    %v1690 = vunpack.c.h.b16 %v144
    %v1691 = vunpack.c.l.b16 %v145
    %v1692 = vunpack.c.h.b16 %v145
    %v1693 = vunpack.c.l.b16 %v146
    %v1694 = vunpack.c.h.b16 %v146
    %v1695 = vunpack.c.l.b16 %v147
    %v1696 = vunpack.c.h.b16 %v147
    %v1697 = vunpack.c.l.b16 %v148
    %v1698 = vunpack.c.h.b16 %v148
    %v1699 = vunpack.c.l.b16 %v149
    %v1700 = vunpack.c.h.b16 %v149
    %v1701 = vunpack.c.l.b16 %v150
    %v1702 = vunpack.c.h.b16 %v150
    %v1703 = vunpack.c.l.b16 %v151
    %v1704 = vunpack.c.h.b16 %v151
    %v1705 = vunpack.c.l.b16 %v152
    %v1706 = vunpack.c.h.b16 %v152
    %v1707 = vunpack.c.l.b16 %v153
    %v1708 = vunpack.c.h.b16 %v153
    %v1709 = vunpack.c.l.b16 %v154
    %v1710 = vunpack.c.h.b16 %v154
    %v1711 = vunpack.c.l.b16 %v155
    %v1712 = vunpack.c.h.b16 %v155
    %v1713 = vunpack.c.l.b16 %v156
    %v1714 = vunpack.c.h.b16 %v156
    %v1715 = vunpack.c.l.b16 %v157
    %v1716 = vunpack.c.h.b16 %v157
    %v1717 = vunpack.c.l.b16 %v158
    %v1718 = vunpack.c.h.b16 %v158
    %v1719 = vunpack.c.l.b16 %v159
    %v1720 = vunpack.c.h.b16 %v159
    %v1721 = vunpack.c.l.b16 %v160
    %v1722 = vunpack.c.h.b16 %v160
    %v1723 = vunpack.c.l.b16 %v161
    %v1724 = vunpack.c.h.b16 %v161
    %v1725 = vunpack.c.l.b16 %v162
    %v1726 = vunpack.c.h.b16 %v162
    %v1727 = vunpack.c.l.b16 %v163
    %v1728 = vunpack.c.h.b16 %v163
    %v1729 = vunpack.c.l.b16 %v164
    %v1730 = vunpack.c.h.b16 %v164
    %v1731 = vunpack.c.l.b16 %v165
    %v1732 = vunpack.c.h.b16 %v165
    %v1733 = vunpack.c.l.b16 %v166
    %v1734 = vunpack.c.h.b16 %v166
    %v1735 = vunpack.c.l.b16 %v167
    %v1736 = vunpack.c.h.b16 %v167
    %v1737 = vunpack.c.l.b16 %v168
    %v1738 = vunpack.c.h.b16 %v168
    %v1739 = vunpack.c.l.b16 %v169
    %v1740 = vunpack.c.h.b16 %v169
    %v1741 = vunpack.c.l.b16 %v170
    %v1742 = vunpack.c.h.b16 %v170
    %v1743 = vunpack.c.l.b16 %v171
    %v1744 = vunpack.c.h.b16 %v171
    %v1745 = vunpack.c.l.b16 %v172
    %v1746 = vunpack.c.h.b16 %v172
    %v1747 = vunpack.c.l.b16 %v173
    %v1748 = vunpack.c.h.b16 %v173
    %v1749 = vunpack.c.l.b16 %v174
    %v1750 = vunpack.c.h.b16 %v174
    %v1751 = vunpack.c.l.b16 %v175
    %v1752 = vunpack.c.h.b16 %v175
    %v1753 = vunpack.c.l.b16 %v176
    %v1754 = vunpack.c.h.b16 %v176
    %v1755 = vunpack.c.l.b16 %v177
    %v1756 = vunpack.c.h.b16 %v177
    %v1757 = vunpack.c.l.b16 %v178
    %v1758 = vunpack.c.h.b16 %v178
    %v1759 = vunpack.c.l.b16 %v179
    %v1760 = vunpack.c.h.b16 %v179
    %v1761 = vunpack.c.l.b16 %v180
    %v1762 = vunpack.c.h.b16 %v180
    %v1763 = vunpack.c.l.b16 %v181
    %v1764 = vunpack.c.h.b16 %v181
    %v1765 = vunpack.c.l.b16 %v182
    %v1766 = vunpack.c.h.b16 %v182
    %v1767 = vunpack.c.l.b16 %v183
    %v1768 = vunpack.c.h.b16 %v183
    %v1769 = vunpack.c.l.b16 %v184
    %v1770 = vunpack.c.h.b16 %v184
    %v1771 = vunpack.c.l.b16 %v185
    %v1772 = vunpack.c.h.b16 %v185
    %v1773 = vunpack.c.l.b16 %v186
    %v1774 = vunpack.c.h.b16 %v186
    %v1775 = vunpack.c.l.b16 %v187
    %v1776 = vunpack.c.h.b16 %v187
    %v1777 = vunpack.c.l.b16 %v188
    %v1778 = vunpack.c.h.b16 %v188
    %v1779 = vunpack.c.l.b16 %v189
    %v1780 = vunpack.c.h.b16 %v189
    %v1781 = vunpack.c.l.b16 %v190
    %v1782 = vunpack.c.h.b16 %v190
    %v1783 = vunpack.c.l.b16 %v191
    %v1784 = vunpack.c.h.b16 %v191
    %v1785 = vunpack.c.l.b16 %v192
    %v1786 = vunpack.c.h.b16 %v192
    %v1787 = vunpack.c.l.b16 %v193
    %v1788 = vunpack.c.h.b16 %v193
    %v1789 = vunpack.c.l.b16 %v194
    %v1790 = vunpack.c.h.b16 %v194
    %v1791 = vunpack.c.l.b16 %v195
    %v1792 = vunpack.c.h.b16 %v195
    %v1793 = vunpack.c.l.b16 %v196
    %v1794 = vunpack.c.h.b16 %v196
    %v1795 = vunpack.c.l.b16 %v197
    %v1796 = vunpack.c.h.b16 %v197
    %v1797 = vunpack.c.l.b16 %v198
    %v1798 = vunpack.c.h.b16 %v198
    %v1799 = vunpack.c.l.b16 %v199
    %v1800 = vunpack.c.h.b16 %v199
    %v1801 = vunpack.c.l.b16 %v200
    %v1802 = vunpack.c.h.b16 %v200
    %v1803 = vunpack.c.l.b16 %v201
    %v1804 = vunpack.c.h.b16 %v201
    %v1805 = vunpack.c.l.b16 %v202
    %v1806 = vunpack.c.h.b16 %v202
    %v1807 = vunpack.c.l.b16 %v203
    %v1808 = vunpack.c.h.b16 %v203
    %v1809 = vunpack.c.l.b16 %v204
    %v1810 = vunpack.c.h.b16 %v204
    %v1811 = vunpack.c.l.b16 %v205
    %v1812 = vunpack.c.h.b16 %v205
    %v1813 = vunpack.c.l.b16 %v206
    %v1814 = vunpack.c.h.b16 %v206
    %v1815 = vunpack.c.l.b16 %v207
    %v1816 = vunpack.c.h.b16 %v207
    %v1817 = vunpack.c.l.b16 %v208
    %v1818 = vunpack.c.h.b16 %v208
    %v1819 = vunpack.c.l.b16 %v209
    %v1820 = vunpack.c.h.b16 %v209
    %v1821 = vunpack.c.l.b16 %v210
    %v1822 = vunpack.c.h.b16 %v210
    %v1823 = vunpack.c.l.b16 %v211
    %v1824 = vunpack.c.h.b16 %v211
    %v1825 = vunpack.c.l.b16 %v212
    %v1826 = vunpack.c.h.b16 %v212
    %v1827 = vunpack.c.l.b16 %v213
    %v1828 = vunpack.c.h.b16 %v213
    %v1829 = vunpack.c.l.b16 %v214
    %v1830 = vunpack.c.h.b16 %v214
    %v1831 = vunpack.c.l.b16 %v215
    %v1832 = vunpack.c.h.b16 %v215
    %v1833 = vunpack.c.l.b16 %v216
    %v1834 = vunpack.c.h.b16 %v216
    %v1835 = vunpack.c.l.b16 %v217
    %v1836 = vunpack.c.h.b16 %v217
    %v1837 = vunpack.c.l.b16 %v218
    %v1838 = vunpack.c.h.b16 %v218
    %v1839 = vunpack.c.l.b16 %v219
    %v1840 = vunpack.c.h.b16 %v219
    %v1841 = vunpack.c.l.b16 %v220
    %v1842 = vunpack.c.h.b16 %v220
    %v1843 = vunpack.c.l.b16 %v221
    %v1844 = vunpack.c.h.b16 %v221
    %v1845 = vunpack.c.l.b16 %v222
    %v1846 = vunpack.c.h.b16 %v222
    %v1847 = vunpack.c.l.b16 %v223
    %v1848 = vunpack.c.h.b16 %v223
    %v1849 = vunpack.c.l.b16 %v224
    %v1850 = vunpack.c.h.b16 %v224
    %v1851 = vunpack.c.l.b16 %v225
    %v1852 = vunpack.c.h.b16 %v225
    %v1853 = vunpack.c.l.b16 %v226
    %v1854 = vunpack.c.h.b16 %v226
    %v1855 = vunpack.c.l.b16 %v227
    %v1856 = vunpack.c.h.b16 %v227
    %v1857 = vunpack.c.l.b16 %v228
    %v1858 = vunpack.c.h.b16 %v228
    %v1859 = vunpack.c.l.b16 %v229
    %v1860 = vunpack.c.h.b16 %v229
    %v1861 = vunpack.c.l.b16 %v230
    %v1862 = vunpack.c.h.b16 %v230
    %v1863 = vunpack.c.l.b16 %v231
    %v1864 = vunpack.c.h.b16 %v231
    %v1865 = vunpack.c.l.b16 %v232
    %v1866 = vunpack.c.h.b16 %v232
    %v1867 = vunpack.c.l.b16 %v233
    %v1868 = vunpack.c.h.b16 %v233
    %v1869 = vunpack.c.l.b16 %v234
    %v1870 = vunpack.c.h.b16 %v234
    %v1871 = vunpack.c.l.b16 %v235
    %v1872 = vunpack.c.h.b16 %v235
    %v1873 = vunpack.c.l.b16 %v236
    %v1874 = vunpack.c.h.b16 %v236
    %v1875 = vunpack.c.l.b16 %v237
    %v1876 = vunpack.c.h.b16 %v237
    %v1877 = vunpack.c.l.b16 %v238
    %v1878 = vunpack.c.h.b16 %v238
    %v1879 = vunpack.c.l.b16 %v239
    %v1880 = vunpack.c.h.b16 %v239
    %v1881 = vunpack.c.l.b16 %v240
    %v1882 = vunpack.c.h.b16 %v240
    %v1883 = vunpack.c.l.b16 %v241
    %v1884 = vunpack.c.h.b16 %v241
    %v1885 = vunpack.c.l.b16 %v242
    %v1886 = vunpack.c.h.b16 %v242
    %v1887 = vunpack.c.l.b16 %v243
    %v1888 = vunpack.c.h.b16 %v243
    %v1889 = vunpack.c.l.b16 %v244
    %v1890 = vunpack.c.h.b16 %v244
    %v1891 = vunpack.c.l.b16 %v245
    %v1892 = vunpack.c.h.b16 %v245
    %v1893 = vunpack.c.l.b16 %v246
    %v1894 = vunpack.c.h.b16 %v246
    %v1895 = vunpack.c.l.b16 %v247
    %v1896 = vunpack.c.h.b16 %v247
    %v1897 = vunpack.c.l.b16 %v248
    %v1898 = vunpack.c.h.b16 %v248
    %v1899 = vunpack.c.l.b16 %v249
    %v1900 = vunpack.c.h.b16 %v249
    %v1901 = vunpack.c.l.b16 %v250
    %v1902 = vunpack.c.h.b16 %v250
    %v1903 = vunpack.c.l.b16 %v251
    %v1904 = vunpack.c.h.b16 %v251
    %v1905 = vunpack.c.l.b16 %v252
    %v1906 = vunpack.c.h.b16 %v252
    %v1907 = vunpack.c.l.b16 %v253
    %v1908 = vunpack.c.h.b16 %v253
    %v1909 = vunpack.c.l.b16 %v254
    %v1910 = vunpack.c.h.b16 %v254
    %v1911 = vunpack.c.l.b16 %v255
    %v1912 = vunpack.c.h.b16 %v255
    %v1913 = vunpack.c.l.b16 %v256
    %v1914 = vunpack.c.h.b16 %v256
    %v1915 = vunpack.c.l.b16 %v257
    %v1916 = vunpack.c.h.b16 %v257
    %v1917 = vunpack.c.l.b16 %v258
    %v1918 = vunpack.c.h.b16 %v258
    %v1919 = vunpack.c.l.b16 %v259
    %v1920 = vunpack.c.h.b16 %v259
    %v1921 = vunpack.c.l.b16 %v260
    %v1922 = vunpack.c.h.b16 %v260
    %v1923 = vunpack.c.l.b16 %v261
    %v1924 = vunpack.c.h.b16 %v261
    %v1925 = vunpack.c.l.b16 %v262
    %v1926 = vunpack.c.h.b16 %v262
    %v1927 = vunpack.c.l.b16 %v263
    %v1928 = vunpack.c.h.b16 %v263
    %v1929 = vunpack.c.l.b16 %v264
    %v1930 = vunpack.c.h.b16 %v264
    %v1931 = vunpack.c.l.b16 %v265
    %v1932 = vunpack.c.h.b16 %v265
    %v1933 = vunpack.c.l.b16 %v266
    %v1934 = vunpack.c.h.b16 %v266
    %v1935 = vunpack.c.l.b16 %v267
    %v1936 = vunpack.c.h.b16 %v267
    %v1937 = vunpack.c.l.b16 %v268
    %v1938 = vunpack.c.h.b16 %v268
    %v1939 = vunpack.c.l.b16 %v269
    %v1940 = vunpack.c.h.b16 %v269
    %v1941 = vunpack.c.l.b16 %v270
    %v1942 = vunpack.c.h.b16 %v270
    %v1943 = vunpack.c.l.b16 %v271
    %v1944 = vunpack.c.h.b16 %v271
    %v1945 = vunpack.c.l.b16 %v272
    %v1946 = vunpack.c.h.b16 %v272
    %v1947 = vunpack.c.l.b16 %v273
    %v1948 = vunpack.c.h.b16 %v273
    %v1949 = vunpack.c.l.b16 %v274
    %v1950 = vunpack.c.h.b16 %v274
    %v1951 = vunpack.c.l.b16 %v275
    %v1952 = vunpack.c.h.b16 %v275
    %v1953 = vunpack.c.l.b16 %v276
    %v1954 = vunpack.c.h.b16 %v276
    %v1955 = vunpack.c.l.b16 %v277
    %v1956 = vunpack.c.h.b16 %v277
    %v1957 = vunpack.c.l.b16 %v278
    %v1958 = vunpack.c.h.b16 %v278
    %v1959 = vunpack.c.l.b16 %v279
    %v1960 = vunpack.c.h.b16 %v279
    %v1961 = vunpack.c.l.b16 %v280
    %v1962 = vunpack.c.h.b16 %v280
    %v1963 = vunpack.c.l.b16 %v281
    %v1964 = vunpack.c.h.b16 %v281
    %v1965 = vunpack.c.l.b16 %v282
    %v1966 = vunpack.c.h.b16 %v282
    %v1967 = vunpack.c.l.b16 %v283
    %v1968 = vunpack.c.h.b16 %v283
    %v1969 = vunpack.c.l.b16 %v284
    %v1970 = vunpack.c.h.b16 %v284
    %v1971 = vunpack.c.l.b16 %v285
    %v1972 = vunpack.c.h.b16 %v285
    %v1973 = vunpack.c.l.b16 %v286
    %v1974 = vunpack.c.h.b16 %v286
    %v1975 = vunpack.c.l.b16 %v287
    %v1976 = vunpack.c.h.b16 %v287
    %v1977 = vunpack.c.l.b16 %v288
    %v1978 = vunpack.c.h.b16 %v288
    %v1979 = vunpack.c.l.b16 %v289
    %v1980 = vunpack.c.h.b16 %v289
    %v1981 = vunpack.c.l.b16 %v290
    %v1982 = vunpack.c.h.b16 %v290
    %v1983 = vunpack.c.l.b16 %v291
    %v1984 = vunpack.c.h.b16 %v291
    %v1985 = vunpack.c.l.b16 %v292
    %v1986 = vunpack.c.h.b16 %v292
    %v1987 = vunpack.c.l.b16 %v293
    %v1988 = vunpack.c.h.b16 %v293
    %v1989 = vunpack.c.l.b16 %v294
    %v1990 = vunpack.c.h.b16 %v294
    %v1991 = vunpack.c.l.b16 %v295
    %v1992 = vunpack.c.h.b16 %v295
    %v1993 = vunpack.c.l.b16 %v296
    %v1994 = vunpack.c.h.b16 %v296
    %v1995 = vunpack.c.l.b16 %v297
    %v1996 = vunpack.c.h.b16 %v297
    %v1997 = vunpack.c.l.b16 %v298
    %v1998 = vunpack.c.h.b16 %v298
    %v1999 = vunpack.c.l.b16 %v299
    %v2000 = vunpack.c.h.b16 %v299
    %v2001 = vunpack.c.l.b16 %v300
    %v2002 = vunpack.c.h.b16 %v300
    %v2003 = vunpack.c.l.b16 %v301
    %v2004 = vunpack.c.h.b16 %v301
    %v2005 = vunpack.c.l.b16 %v302
    %v2006 = vunpack.c.h.b16 %v302
    %v2007 = vunpack.c.l.b16 %v303
    %v2008 = vunpack.c.h.b16 %v303
    %v2009 = vunpack.c.l.b16 %v304
    %v2010 = vunpack.c.h.b16 %v304
    %v2011 = vunpack.c.l.b16 %v305
    %v2012 = vunpack.c.h.b16 %v305
    %v2013 = vunpack.c.l.b16 %v306
    %v2014 = vunpack.c.h.b16 %v306
    %v2015 = vunpack.c.l.b16 %v307
    %v2016 = vunpack.c.h.b16 %v307
    %v2017 = vunpack.c.l.b16 %v308
    %v2018 = vunpack.c.h.b16 %v308
    %v2019 = vunpack.c.l.b16 %v309
    %v2020 = vunpack.c.h.b16 %v309
    %v2021 = vunpack.c.l.b16 %v310
    %v2022 = vunpack.c.h.b16 %v310
    %v2023 = vunpack.c.l.b16 %v311
    %v2024 = vunpack.c.h.b16 %v311
    %v2025 = vunpack.c.l.b16 %v312
    %v2026 = vunpack.c.h.b16 %v312
    %v2027 = vunpack.c.l.b16 %v313
    %v2028 = vunpack.c.h.b16 %v313
    %v2029 = vunpack.c.l.b16 %v314
    %v2030 = vunpack.c.h.b16 %v314
    %v2031 = vunpack.c.l.b16 %v315
    %v2032 = vunpack.c.h.b16 %v315
    %v2033 = vunpack.c.l.b16 %v316
    %v2034 = vunpack.c.h.b16 %v316
    %v2035 = vunpack.c.l.b16 %v317
    %v2036 = vunpack.c.h.b16 %v317
    %v2037 = vunpack.c.l.b16 %v318
    %v2038 = vunpack.c.h.b16 %v318
    %v2039 = vunpack.c.l.b16 %v319
    %v2040 = vunpack.c.h.b16 %v319
    %v2041 = vunpack.c.l.b16 %v320
    %v2042 = vunpack.c.h.b16 %v320
    %v2043 = vunpack.c.l.b16 %v321
    %v2044 = vunpack.c.h.b16 %v321
    %v2045 = vunpack.c.l.b16 %v322
    %v2046 = vunpack.c.h.b16 %v322
    %v2047 = vunpack.c.l.b16 %v323
    %v2048 = vunpack.c.h.b16 %v323
    %v2049 = vunpack.c.l.b16 %v324
    %v2050 = vunpack.c.h.b16 %v324
    %v2051 = vunpack.c.l.b16 %v325
    %v2052 = vunpack.c.h.b16 %v325
    %v2053 = vunpack.c.l.b16 %v326
    %v2054 = vunpack.c.h.b16 %v326
    %v2055 = vunpack.c.l.b16 %v327
    %v2056 = vunpack.c.h.b16 %v327
    %v2057 = vunpack.c.l.b16 %v328
    %v2058 = vunpack.c.h.b16 %v328
    %v2059 = vunpack.c.l.b16 %v329
    %v2060 = vunpack.c.h.b16 %v329
    %v2061 = vunpack.c.l.b16 %v330
    %v2062 = vunpack.c.h.b16 %v330
    %v2063 = vunpack.c.l.b16 %v331
    %v2064 = vunpack.c.h.b16 %v331
    %v2065 = vunpack.c.l.b16 %v332
    %v2066 = vunpack.c.h.b16 %v332
    %v2067 = vunpack.c.l.b16 %v333
    %v2068 = vunpack.c.h.b16 %v333
    %v2069 = vunpack.c.l.b16 %v334
    %v2070 = vunpack.c.h.b16 %v334
    %v2071 = vunpack.c.l.b16 %v335
    %v2072 = vunpack.c.h.b16 %v335
    %v2073 = vunpack.c.l.b16 %v336
    %v2074 = vunpack.c.h.b16 %v336
    %v2075 = vunpack.c.l.b16 %v337
    %v2076 = vunpack.c.h.b16 %v337
    %v2077 = vunpack.c.l.b16 %v338
    %v2078 = vunpack.c.h.b16 %v338
    %v2079 = vunpack.c.l.b16 %v339
    %v2080 = vunpack.c.h.b16 %v339
    %v2081 = vunpack.c.l.b16 %v340
    %v2082 = vunpack.c.h.b16 %v340
    %v2083 = vunpack.c.l.b16 %v341
    %v2084 = vunpack.c.h.b16 %v341
    %v2085 = vunpack.c.l.b16 %v342
    %v2086 = vunpack.c.h.b16 %v342
    %v2087 = vunpack.c.l.b16 %v343
    %v2088 = vunpack.c.h.b16 %v343
    %v2089 = vunpack.c.l.b16 %v344
    %v2090 = vunpack.c.h.b16 %v344
    %v2091 = vunpack.c.l.b16 %v345
    %v2092 = vunpack.c.h.b16 %v345
    %v2093 = vunpack.c.l.b16 %v346
    %v2094 = vunpack.c.h.b16 %v346
    %v2095 = vunpack.c.l.b16 %v347
    %v2096 = vunpack.c.h.b16 %v347
    %v2097 = vunpack.c.l.b16 %v348
    %v2098 = vunpack.c.h.b16 %v348
    %v2099 = vunpack.c.l.b16 %v349
    %v2100 = vunpack.c.h.b16 %v349
    %v2101 = vunpack.c.l.b16 %v350
    %v2102 = vunpack.c.h.b16 %v350
    %v2103 = vunpack.c.l.b16 %v351
    %v2104 = vunpack.c.h.b16 %v351
    %v2105 = vunpack.c.l.b16 %v352
    %v2106 = vunpack.c.h.b16 %v352
    %v2107 = vunpack.c.l.b16 %v353
    %v2108 = vunpack.c.h.b16 %v353
    %v2109 = vunpack.c.l.b16 %v354
    %v2110 = vunpack.c.h.b16 %v354
    %v2111 = vunpack.c.l.b16 %v355
    %v2112 = vunpack.c.h.b16 %v355
    %v2113 = vunpack.c.l.b16 %v356
    %v2114 = vunpack.c.h.b16 %v356
    %v2115 = vunpack.c.l.b16 %v357
    %v2116 = vunpack.c.h.b16 %v357
    %v2117 = vunpack.c.l.b16 %v358
    %v2118 = vunpack.c.h.b16 %v358
    %v2119 = vunpack.c.l.b16 %v359
    %v2120 = vunpack.c.h.b16 %v359
    %v2121 = vunpack.c.l.b16 %v360
    %v2122 = vunpack.c.h.b16 %v360
    %v2123 = vunpack.c.l.b16 %v361
    %v2124 = vunpack.c.h.b16 %v361
    %v2125 = vunpack.c.l.b16 %v362
    %v2126 = vunpack.c.h.b16 %v362
    %v2127 = vunpack.c.l.b16 %v363
    %v2128 = vunpack.c.h.b16 %v363
    %v2129 = vunpack.c.l.b16 %v364
    %v2130 = vunpack.c.h.b16 %v364
    %v2131 = vunpack.c.l.b16 %v365
    %v2132 = vunpack.c.h.b16 %v365
    %v2133 = vunpack.c.l.b16 %v366
    %v2134 = vunpack.c.h.b16 %v366
    %v2135 = vunpack.c.l.b16 %v367
    %v2136 = vunpack.c.h.b16 %v367
    %v2137 = vunpack.c.l.b16 %v368
    %v2138 = vunpack.c.h.b16 %v368
    %v2139 = vunpack.c.l.b16 %v369
    %v2140 = vunpack.c.h.b16 %v369
    %v2141 = vunpack.c.l.b16 %v370
    %v2142 = vunpack.c.h.b16 %v370
    %v2143 = vunpack.c.l.b16 %v371
    %v2144 = vunpack.c.h.b16 %v371
    %v2145 = vunpack.c.l.b16 %v372
    %v2146 = vunpack.c.h.b16 %v372
    %v2147 = vunpack.c.l.b16 %v373
    %v2148 = vunpack.c.h.b16 %v373
    %v2149 = vunpack.c.l.b16 %v374
    %v2150 = vunpack.c.h.b16 %v374
    %v2151 = vunpack.c.l.b16 %v375
    %v2152 = vunpack.c.h.b16 %v375
    %v2153 = vunpack.c.l.b16 %v376
    %v2154 = vunpack.c.h.b16 %v376
    %v2155 = vunpack.c.l.b16 %v377
    %v2156 = vunpack.c.h.b16 %v377
    %v2157 = vunpack.c.l.b16 %v378
    %v2158 = vunpack.c.h.b16 %v378
    %v2159 = vunpack.c.l.b16 %v379
    %v2160 = vunpack.c.h.b16 %v379
    %v2161 = vunpack.c.l.b16 %v380
    %v2162 = vunpack.c.h.b16 %v380
    %v2163 = vunpack.c.l.b16 %v381
    %v2164 = vunpack.c.h.b16 %v381
    %v2165 = vunpack.c.l.b16 %v382
    %v2166 = vunpack.c.h.b16 %v382
    %v2167 = vunpack.c.l.b16 %v383
    %v2168 = vunpack.c.h.b16 %v383
    %v2169 = vunpack.c.l.b16 %v384
    %v2170 = vunpack.c.h.b16 %v384
    %v2171 = vunpack.c.l.b16 %v385
    %v2172 = vunpack.c.h.b16 %v385
    %v2173 = vunpack.c.l.b16 %v386
    %v2174 = vunpack.c.h.b16 %v386
    %v2175 = vunpack.c.l.b16 %v387
    %v2176 = vunpack.c.h.b16 %v387
    %v2177 = vunpack.c.l.b16 %v388
    %v2178 = vunpack.c.h.b16 %v388
    %v2179 = vunpack.c.l.b16 %v389
    %v2180 = vunpack.c.h.b16 %v389
    %v2181 = vunpack.c.l.b16 %v390
    %v2182 = vunpack.c.h.b16 %v390
    %v2183 = vunpack.c.l.b16 %v391
    %v2184 = vunpack.c.h.b16 %v391
    %v2185 = vunpack.c.l.b16 %v392
    %v2186 = vunpack.c.h.b16 %v392
    %v2187 = vunpack.c.l.b16 %v393
    %v2188 = vunpack.c.h.b16 %v393
    %v2189 = vunpack.c.l.b16 %v394
    %v2190 = vunpack.c.h.b16 %v394
    %v2191 = vunpack.c.l.b16 %v395
    %v2192 = vunpack.c.h.b16 %v395
    %v2193 = vunpack.c.l.b16 %v396
    %v2194 = vunpack.c.h.b16 %v396
    %v2195 = vunpack.c.l.b16 %v397
    %v2196 = vunpack.c.h.b16 %v397
    %v2197 = vunpack.c.l.b16 %v398
    %v2198 = vunpack.c.h.b16 %v398
    %v2199 = vunpack.c.l.b16 %v399
    %v2200 = vunpack.c.h.b16 %v399
    %v2201 = vunpack.c.l.b16 %v400
    %v2202 = vunpack.c.h.b16 %v400
    %v2203 = vunpack.c.l.b16 %v401
    %v2204 = vunpack.c.h.b16 %v401
    %v2205 = vunpack.c.l.b16 %v402
    %v2206 = vunpack.c.h.b16 %v402
    %v2207 = vunpack.c.l.b16 %v403
    %v2208 = vunpack.c.h.b16 %v403
    %v2209 = vunpack.c.l.b16 %v404
    %v2210 = vunpack.c.h.b16 %v404
    %v2211 = vunpack.c.l.b16 %v405
    %v2212 = vunpack.c.h.b16 %v405
    %v2213 = vunpack.c.l.b16 %v406
    %v2214 = vunpack.c.h.b16 %v406
    %v2215 = vunpack.c.l.b16 %v407
    %v2216 = vunpack.c.h.b16 %v407
    %v2217 = vunpack.c.l.b16 %v408
    %v2218 = vunpack.c.h.b16 %v408
    %v2219 = vunpack.c.l.b16 %v409
    %v2220 = vunpack.c.h.b16 %v409
    %v2221 = vunpack.c.l.b16 %v410
    %v2222 = vunpack.c.h.b16 %v410
    %v2223 = vunpack.c.l.b16 %v411
    %v2224 = vunpack.c.h.b16 %v411
    %v2225 = vunpack.c.l.b16 %v412
    %v2226 = vunpack.c.h.b16 %v412
    %v2227 = vunpack.c.l.b16 %v413
    %v2228 = vunpack.c.h.b16 %v413
    %v2229 = vunpack.c.l.b16 %v414
    %v2230 = vunpack.c.h.b16 %v414
    %v2231 = vunpack.c.l.b16 %v415
    %v2232 = vunpack.c.h.b16 %v415
    %v2233 = vunpack.c.l.b16 %v416
    %v2234 = vunpack.c.h.b16 %v416
    %v2235 = vunpack.c.l.b16 %v417
    %v2236 = vunpack.c.h.b16 %v417
    %v2237 = vunpack.c.l.b16 %v418
    %v2238 = vunpack.c.h.b16 %v418
    %v2239 = vunpack.c.l.b16 %v419
    %v2240 = vunpack.c.h.b16 %v419
    %v2241 = vunpack.c.l.b16 %v420
    %v2242 = vunpack.c.h.b16 %v420
    %v2243 = vunpack.c.l.b16 %v421
    %v2244 = vunpack.c.h.b16 %v421
    %v2245 = vunpack.c.l.b16 %v422
    %v2246 = vunpack.c.h.b16 %v422
    %v2247 = vunpack.c.l.b16 %v423
    %v2248 = vunpack.c.h.b16 %v423
    %v2249 = vunpack.c.l.b16 %v424
    %v2250 = vunpack.c.h.b16 %v424
    %v2251 = vunpack.c.l.b16 %v425
    %v2252 = vunpack.c.h.b16 %v425
    %v2253 = vunpack.c.l.b16 %v426
    %v2254 = vunpack.c.h.b16 %v426
    %v2255 = vunpack.c.l.b16 %v427
    %v2256 = vunpack.c.h.b16 %v427
    %v2257 = vunpack.c.l.b16 %v428
    %v2258 = vunpack.c.h.b16 %v428
    %v2259 = vunpack.c.l.b16 %v429
    %v2260 = vunpack.c.h.b16 %v429
    %v2261 = vunpack.c.l.b16 %v430
    %v2262 = vunpack.c.h.b16 %v430
    %v2263 = vunpack.c.l.b16 %v431
    %v2264 = vunpack.c.h.b16 %v431
    %v2265 = vunpack.c.l.b16 %v432
    %v2266 = vunpack.c.h.b16 %v432
    %v2267 = vunpack.c.l.b16 %v433
    %v2268 = vunpack.c.h.b16 %v433
    %v2269 = vunpack.c.l.b16 %v434
    %v2270 = vunpack.c.h.b16 %v434
    %v2271 = vunpack.c.l.b16 %v435
    %v2272 = vunpack.c.h.b16 %v435
    %v2273 = vunpack.c.l.b16 %v436
    %v2274 = vunpack.c.h.b16 %v436
    %v2275 = vunpack.c.l.b16 %v437
    %v2276 = vunpack.c.h.b16 %v437
    %v2277 = vunpack.c.l.b16 %v438
    %v2278 = vunpack.c.h.b16 %v438
    %v2279 = vunpack.c.l.b16 %v439
    %v2280 = vunpack.c.h.b16 %v439
    %v2281 = vunpack.c.l.b16 %v440
    %v2282 = vunpack.c.h.b16 %v440
    %v2283 = vunpack.c.l.b16 %v441
    %v2284 = vunpack.c.h.b16 %v441
    %v2285 = vunpack.c.l.b16 %v442
    %v2286 = vunpack.c.h.b16 %v442
    %v2287 = vunpack.c.l.b16 %v443
    %v2288 = vunpack.c.h.b16 %v443
    %v2289 = vunpack.c.l.b16 %v444
    %v2290 = vunpack.c.h.b16 %v444
    %v2291 = vunpack.c.l.b16 %v445
    %v2292 = vunpack.c.h.b16 %v445
    %v2293 = vunpack.c.l.b16 %v446
    %v2294 = vunpack.c.h.b16 %v446
    %v2295 = vunpack.c.l.b16 %v447
    %v2296 = vunpack.c.h.b16 %v447
    %v2297 = vunpack.c.l.b16 %v448
    %v2298 = vunpack.c.h.b16 %v448
    %v2299 = vunpack.c.l.b16 %v449
    %v2300 = vunpack.c.h.b16 %v449
    %v2301 = vunpack.c.l.b16 %v450
    %v2302 = vunpack.c.h.b16 %v450
    %v2303 = vunpack.c.l.b16 %v451
    %v2304 = vunpack.c.h.b16 %v451
    %v2305 = vunpack.c.l.b16 %v452
    %v2306 = vunpack.c.h.b16 %v452
    %v2307 = vunpack.c.l.b16 %v453
    %v2308 = vunpack.c.h.b16 %v453
    %v2309 = vunpack.c.l.b16 %v454
    %v2310 = vunpack.c.h.b16 %v454
    %v2311 = vunpack.c.l.b16 %v455
    %v2312 = vunpack.c.h.b16 %v455
    %v2313 = vunpack.c.l.b16 %v456
    %v2314 = vunpack.c.h.b16 %v456
    %v2315 = vunpack.c.l.b16 %v457
    %v2316 = vunpack.c.h.b16 %v457
    %v2317 = vunpack.c.l.b16 %v458
    %v2318 = vunpack.c.h.b16 %v458
    %v2319 = vunpack.c.l.b16 %v459
    %v2320 = vunpack.c.h.b16 %v459
    %v2321 = vunpack.c.l.b16 %v460
    %v2322 = vunpack.c.h.b16 %v460
    %v2323 = vunpack.c.l.b16 %v461
    %v2324 = vunpack.c.h.b16 %v461
    %v2325 = vunpack.c.l.b16 %v462
    %v2326 = vunpack.c.h.b16 %v462
    %v2327 = vunpack.c.l.b16 %v463
    %v2328 = vunpack.c.h.b16 %v463
    %v2329 = vunpack.c.l.b16 %v464
    %v2330 = vunpack.c.h.b16 %v464
    %v2331 = vunpack.c.l.b16 %v465
    %v2332 = vunpack.c.h.b16 %v465
    %v2333 = vunpack.c.l.b16 %v466
    %v2334 = vunpack.c.h.b16 %v466
    %v2335 = vunpack.c.l.b16 %v467
    %v2336 = vunpack.c.h.b16 %v467
    %v2337 = vunpack.c.l.b16 %v468
    %v2338 = vunpack.c.h.b16 %v468
    %v2339 = vunpack.c.l.b16 %v469
    %v2340 = vunpack.c.h.b16 %v469
    %v2341 = vunpack.c.l.b16 %v470
    %v2342 = vunpack.c.h.b16 %v470
    %v2343 = vunpack.c.l.b16 %v471
    %v2344 = vunpack.c.h.b16 %v471
    %v2345 = vunpack.c.l.b16 %v472
    %v2346 = vunpack.c.h.b16 %v472
    %v2347 = vunpack.c.l.b16 %v473
    %v2348 = vunpack.c.h.b16 %v473
    %v2349 = vunpack.c.l.b16 %v474
    %v2350 = vunpack.c.h.b16 %v474
    %v2351 = vunpack.c.l.b16 %v475
    %v2352 = vunpack.c.h.b16 %v475
    %v2353 = vunpack.c.l.b16 %v476
    %v2354 = vunpack.c.h.b16 %v476
    %v2355 = vunpack.c.l.b16 %v477
    %v2356 = vunpack.c.h.b16 %v477
    %v2357 = vunpack.c.l.b16 %v478
    %v2358 = vunpack.c.h.b16 %v478
    %v2359 = vunpack.c.l.b16 %v479
    %v2360 = vunpack.c.h.b16 %v479
    %v2361 = vunpack.c.l.b16 %v480
    %v2362 = vunpack.c.h.b16 %v480
    %v2363 = vunpack.c.l.b16 %v481
    %v2364 = vunpack.c.h.b16 %v481
    %v2365 = vunpack.c.l.b16 %v482
    %v2366 = vunpack.c.h.b16 %v482
    %v2367 = vunpack.c.l.b16 %v483
    %v2368 = vunpack.c.h.b16 %v483
    %v2369 = vunpack.c.l.b16 %v484
    %v2370 = vunpack.c.h.b16 %v484
    %v2371 = vunpack.c.l.b16 %v485
    %v2372 = vunpack.c.h.b16 %v485
    %v2373 = vunpack.c.l.b16 %v486
    %v2374 = vunpack.c.h.b16 %v486
    %v2375 = vunpack.c.l.b16 %v487
    %v2376 = vunpack.c.h.b16 %v487
    %v2377 = vunpack.c.l.b16 %v488
    %v2378 = vunpack.c.h.b16 %v488
    %v2379 = vunpack.c.l.b16 %v489
    %v2380 = vunpack.c.h.b16 %v489
    %v2381 = vunpack.c.l.b16 %v490
    %v2382 = vunpack.c.h.b16 %v490
    %v2383 = vunpack.c.l.b16 %v491
    %v2384 = vunpack.c.h.b16 %v491
    %v2385 = vunpack.c.l.b16 %v492
    %v2386 = vunpack.c.h.b16 %v492
    %v2387 = vunpack.c.l.b16 %v493
    %v2388 = vunpack.c.h.b16 %v493
    %v2389 = vunpack.c.l.b16 %v494
    %v2390 = vunpack.c.h.b16 %v494
    %v2391 = vunpack.c.l.b16 %v495
    %v2392 = vunpack.c.h.b16 %v495
    %v2393 = vunpack.c.l.b16 %v496
    %v2394 = vunpack.c.h.b16 %v496
    %v2395 = vunpack.c.l.b16 %v497
    %v2396 = vunpack.c.h.b16 %v497
    %v2397 = vunpack.c.l.b16 %v498
    %v2398 = vunpack.c.h.b16 %v498
    %v2399 = vunpack.c.l.b16 %v499
    %v2400 = vunpack.c.h.b16 %v499
    %v2401 = vunpack.c.l.b16 %v500
    %v2402 = vunpack.c.h.b16 %v500
    %v2403 = vunpack.c.l.b16 %v501
    %v2404 = vunpack.c.h.b16 %v501
    %v2405 = vunpack.c.l.b16 %v502
    %v2406 = vunpack.c.h.b16 %v502
    %v2407 = vunpack.c.l.b16 %v503
    %v2408 = vunpack.c.h.b16 %v503
    %v2409 = vunpack.c.l.b16 %v504
    %v2410 = vunpack.c.h.b16 %v504
    %v2411 = vunpack.c.l.b16 %v505
    %v2412 = vunpack.c.h.b16 %v505
    %v2413 = vunpack.c.l.b16 %v506
    %v2414 = vunpack.c.h.b16 %v506
    %v2415 = vunpack.c.l.b16 %v507
    %v2416 = vunpack.c.h.b16 %v507
    %v2417 = vunpack.c.l.b16 %v508
    %v2418 = vunpack.c.h.b16 %v508
    %v2419 = vunpack.c.l.b16 %v509
    %v2420 = vunpack.c.h.b16 %v509
    %v2421 = vunpack.c.l.b16 %v510
    %v2422 = vunpack.c.h.b16 %v510
    %v2423 = vunpack.c.l.b16 %v511
    %v2424 = vunpack.c.h.b16 %v511
    %v2425 = vunpack.c.l.b16 %v512
    %v2426 = vunpack.c.h.b16 %v512
    %v2427 = vunpack.c.l.b16 %v513
    %v2428 = vunpack.c.h.b16 %v513
    %v2429 = vunpack.c.l.b16 %v514
    %v2430 = vunpack.c.h.b16 %v514
    %v2431 = vunpack.c.l.b16 %v515
    %v2432 = vunpack.c.h.b16 %v515
    %v2433 = vunpack.c.l.b16 %v516
    %v2434 = vunpack.c.h.b16 %v516
    %v2435 = vunpack.c.l.b16 %v517
    %v2436 = vunpack.c.h.b16 %v517
    %v2437 = vunpack.c.l.b16 %v518
    %v2438 = vunpack.c.h.b16 %v518
    %v2439 = vunpack.c.l.b16 %v519
    %v2440 = vunpack.c.h.b16 %v519
    %v2441 = vunpack.c.l.b16 %v520
    %v2442 = vunpack.c.h.b16 %v520
    %v2443 = vunpack.c.l.b16 %v521
    %v2444 = vunpack.c.h.b16 %v521
    %v2445 = vunpack.c.l.b16 %v522
    %v2446 = vunpack.c.h.b16 %v522
    %v2447 = vunpack.c.l.b16 %v523
    %v2448 = vunpack.c.h.b16 %v523
    %v2449 = vunpack.c.l.b16 %v524
    %v2450 = vunpack.c.h.b16 %v524
    %v2451 = vunpack.c.l.b16 %v525
    %v2452 = vunpack.c.h.b16 %v525
    %v2453 = vunpack.c.l.b16 %v526
    %v2454 = vunpack.c.h.b16 %v526
    %v2455 = vunpack.c.l.b16 %v527
    %v2456 = vunpack.c.h.b16 %v527
    %v2457 = vunpack.c.l.b16 %v528
    %v2458 = vunpack.c.h.b16 %v528
    %v2459 = vunpack.c.l.b16 %v529
    %v2460 = vunpack.c.h.b16 %v529
    %v2461 = vunpack.c.l.b16 %v530
    %v2462 = vunpack.c.h.b16 %v530
    %v2463 = vunpack.c.l.b16 %v531
    %v2464 = vunpack.c.h.b16 %v531
    %v2465 = vunpack.c.l.b16 %v532
    %v2466 = vunpack.c.h.b16 %v532
    %v2467 = vunpack.c.l.b16 %v533
    %v2468 = vunpack.c.h.b16 %v533
    %v2469 = vunpack.c.l.b16 %v534
    %v2470 = vunpack.c.h.b16 %v534
    %v2471 = vunpack.c.l.b16 %v535
    %v2472 = vunpack.c.h.b16 %v535
    %v2473 = vunpack.c.l.b16 %v536
    %v2474 = vunpack.c.h.b16 %v536
    %v2475 = vunpack.c.l.b16 %v537
    %v2476 = vunpack.c.h.b16 %v537
    %v2477 = vunpack.c.l.b16 %v538
    %v2478 = vunpack.c.h.b16 %v538
    %v2479 = vunpack.c.l.b16 %v539
    %v2480 = vunpack.c.h.b16 %v539
    %v2481 = vunpack.c.l.b16 %v540
    %v2482 = vunpack.c.h.b16 %v540
    %v2483 = vunpack.c.l.b16 %v541
    %v2484 = vunpack.c.h.b16 %v541
    %v2485 = vunpack.c.l.b16 %v542
    %v2486 = vunpack.c.h.b16 %v542
    %v2487 = vunpack.c.l.b16 %v543
    %v2488 = vunpack.c.h.b16 %v543
    %v2489 = vunpack.c.l.b16 %v544
    %v2490 = vunpack.c.h.b16 %v544
    %v2491 = vunpack.c.l.b16 %v545
    %v2492 = vunpack.c.h.b16 %v545
    %v2493 = vunpack.c.l.b16 %v546
    %v2494 = vunpack.c.h.b16 %v546
    %v2495 = vunpack.c.l.b16 %v547
    %v2496 = vunpack.c.h.b16 %v547
    %v2497 = vunpack.c.l.b16 %v548
    %v2498 = vunpack.c.h.b16 %v548
    %v2499 = vunpack.c.l.b16 %v549
    %v2500 = vunpack.c.h.b16 %v549
    %v2501 = vunpack.c.l.b16 %v550
    %v2502 = vunpack.c.h.b16 %v550
    %v2503 = vunpack.c.l.b16 %v551
    %v2504 = vunpack.c.h.b16 %v551
    %v2505 = vunpack.c.l.b16 %v552
    %v2506 = vunpack.c.h.b16 %v552
    %v2507 = vunpack.c.l.b16 %v553
    %v2508 = vunpack.c.h.b16 %v553
    %v2509 = vunpack.c.l.b16 %v554
    %v2510 = vunpack.c.h.b16 %v554
    %v2511 = vunpack.c.l.b16 %v555
    %v2512 = vunpack.c.h.b16 %v555
    %v2513 = vunpack.c.l.b16 %v556
    %v2514 = vunpack.c.h.b16 %v556
    %v2515 = vunpack.c.l.b16 %v557
    %v2516 = vunpack.c.h.b16 %v557
    %v2517 = vunpack.c.l.b16 %v558
    %v2518 = vunpack.c.h.b16 %v558
    %v2519 = vunpack.c.l.b16 %v559
    %v2520 = vunpack.c.h.b16 %v559
    %v2521 = vunpack.c.l.b16 %v560
    %v2522 = vunpack.c.h.b16 %v560
    %v2523 = vunpack.c.l.b16 %v561
    %v2524 = vunpack.c.h.b16 %v561
    %v2525 = vunpack.c.l.b16 %v562
    %v2526 = vunpack.c.h.b16 %v562
    %v2527 = vunpack.c.l.b16 %v563
    %v2528 = vunpack.c.h.b16 %v563
    %v2529 = vunpack.c.l.b16 %v564
    %v2530 = vunpack.c.h.b16 %v564
    %v2531 = vunpack.c.l.b16 %v565
    %v2532 = vunpack.c.h.b16 %v565
    %v2533 = vunpack.c.l.b16 %v566
    %v2534 = vunpack.c.h.b16 %v566
    %v2535 = vunpack.c.l.b16 %v567
    %v2536 = vunpack.c.h.b16 %v567
    %v2537 = vunpack.c.l.b16 %v568
    %v2538 = vunpack.c.h.b16 %v568
    %v2539 = vunpack.c.l.b16 %v569
    %v2540 = vunpack.c.h.b16 %v569
    %v2541 = vunpack.c.l.b16 %v570
    %v2542 = vunpack.c.h.b16 %v570
    %v2543 = vunpack.c.l.b16 %v571
    %v2544 = vunpack.c.h.b16 %v571
    %v2545 = vunpack.c.l.b16 %v572
    %v2546 = vunpack.c.h.b16 %v572
    %v2547 = vunpack.c.l.b16 %v573
    %v2548 = vunpack.c.h.b16 %v573
    %v2549 = vunpack.c.l.b16 %v574
    %v2550 = vunpack.c.h.b16 %v574
    %v2551 = vunpack.c.l.b16 %v575
    %v2552 = vunpack.c.h.b16 %v575
    %v2553 = vunpack.c.l.b16 %v576
    %v2554 = vunpack.c.h.b16 %v576
    %v2555 = vunpack.c.l.b16 %v577
    %v2556 = vunpack.c.h.b16 %v577
    %v2557 = vunpack.c.l.b16 %v578
    %v2558 = vunpack.c.h.b16 %v578
    %v2559 = vunpack.c.l.b16 %v579
    %v2560 = vunpack.c.h.b16 %v579
    %v2561 = vunpack.c.l.b16 %v580
    %v2562 = vunpack.c.h.b16 %v580
    %v2563 = vunpack.c.l.b16 %v581
    %v2564 = vunpack.c.h.b16 %v581
    %v2565 = vunpack.c.l.b16 %v582
    %v2566 = vunpack.c.h.b16 %v582
    %v2567 = vunpack.c.l.b16 %v583
    %v2568 = vunpack.c.h.b16 %v583
    %v2569 = vunpack.c.l.b16 %v584
    %v2570 = vunpack.c.h.b16 %v584
    %v2571 = vunpack.c.l.b16 %v585
    %v2572 = vunpack.c.h.b16 %v585
    %v2573 = vunpack.c.l.b16 %v586
    %v2574 = vunpack.c.h.b16 %v586
    %v2575 = vunpack.c.l.b16 %v587
    %v2576 = vunpack.c.h.b16 %v587
    %v2577 = vunpack.c.l.b16 %v588
    %v2578 = vunpack.c.h.b16 %v588
    %v2579 = vunpack.c.l.b16 %v589
    %v2580 = vunpack.c.h.b16 %v589
    %v2581 = vunpack.c.l.b16 %v590
    %v2582 = vunpack.c.h.b16 %v590
    %v2583 = vunpack.c.l.b16 %v591
    %v2584 = vunpack.c.h.b16 %v591
    %v2585 = vunpack.c.l.b16 %v592
    %v2586 = vunpack.c.h.b16 %v592
    %v2587 = vunpack.c.l.b16 %v593
    %v2588 = vunpack.c.h.b16 %v593
    %v2589 = vunpack.c.l.b16 %v594
    %v2590 = vunpack.c.h.b16 %v594
    %v2591 = vunpack.c.l.b16 %v595
    %v2592 = vunpack.c.h.b16 %v595
    %v2593 = vunpack.c.l.b16 %v596
    %v2594 = vunpack.c.h.b16 %v596
    %v2595 = vunpack.c.l.b16 %v597
    %v2596 = vunpack.c.h.b16 %v597
    %v2597 = vunpack.c.l.b16 %v598
    %v2598 = vunpack.c.h.b16 %v598
    %v2599 = vunpack.c.l.b16 %v599
    %v2600 = vunpack.c.h.b16 %v599
    %v2601 = vunpack.c.l.b16 %v600
    %v2602 = vunpack.c.h.b16 %v600
    %v2603 = vunpack.c.l.b16 %v601
    %v2604 = vunpack.c.h.b16 %v601
    %v2605 = vunpack.c.l.b16 %v602
    %v2606 = vunpack.c.h.b16 %v602
    %v2607 = vunpack.c.l.b16 %v603
    %v2608 = vunpack.c.h.b16 %v603
    %v2609 = vunpack.c.l.b16 %v604
    %v2610 = vunpack.c.h.b16 %v604
    %v2611 = vunpack.c.l.b16 %v605
    %v2612 = vunpack.c.h.b16 %v605
    %v2613 = vunpack.c.l.b16 %v606
    %v2614 = vunpack.c.h.b16 %v606
    %v2615 = vunpack.c.l.b16 %v607
    %v2616 = vunpack.c.h.b16 %v607
    %v2617 = vunpack.c.l.b16 %v608
    %v2618 = vunpack.c.h.b16 %v608
    %v2619 = vunpack.c.l.b16 %v609
    %v2620 = vunpack.c.h.b16 %v609
    %v2621 = vunpack.c.l.b16 %v610
    %v2622 = vunpack.c.h.b16 %v610
    %v2623 = vunpack.c.l.b16 %v611
    %v2624 = vunpack.c.h.b16 %v611
    %v2625 = vunpack.c.l.b16 %v612
    %v2626 = vunpack.c.h.b16 %v612
    %v2627 = vunpack.c.l.b16 %v613
    %v2628 = vunpack.c.h.b16 %v613
    %v2629 = vunpack.c.l.b16 %v614
    %v2630 = vunpack.c.h.b16 %v614
    %v2631 = vunpack.c.l.b16 %v615
    %v2632 = vunpack.c.h.b16 %v615
    %v2633 = vunpack.c.l.b16 %v616
    %v2634 = vunpack.c.h.b16 %v616
    %v2635 = vunpack.c.l.b16 %v617
    %v2636 = vunpack.c.h.b16 %v617
    %v2637 = vunpack.c.l.b16 %v618
    %v2638 = vunpack.c.h.b16 %v618
    %v2639 = vunpack.c.l.b16 %v619
    %v2640 = vunpack.c.h.b16 %v619
    %v2641 = vunpack.c.l.b16 %v620
    %v2642 = vunpack.c.h.b16 %v620
    %v2643 = vunpack.c.l.b16 %v621
    %v2644 = vunpack.c.h.b16 %v621
    %v2645 = vunpack.c.l.b16 %v622
    %v2646 = vunpack.c.h.b16 %v622
    %v2647 = vunpack.c.l.b16 %v623
    %v2648 = vunpack.c.h.b16 %v623
    %v2649 = vunpack.c.l.b16 %v624
    %v2650 = vunpack.c.h.b16 %v624
    %v2651 = vunpack.c.l.b16 %v625
    %v2652 = vunpack.c.h.b16 %v625
    %v2653 = vunpack.c.l.b16 %v626
    %v2654 = vunpack.c.h.b16 %v626
    %v2655 = vunpack.c.l.b16 %v627
    %v2656 = vunpack.c.h.b16 %v627
    %v2657 = vunpack.c.l.b16 %v628
    %v2658 = vunpack.c.h.b16 %v628
    %v2659 = vunpack.c.l.b16 %v629
    %v2660 = vunpack.c.h.b16 %v629
    %v2661 = vunpack.c.l.b16 %v630
    %v2662 = vunpack.c.h.b16 %v630
    %v2663 = vunpack.c.l.b16 %v631
    %v2664 = vunpack.c.h.b16 %v631
    %v2665 = vunpack.c.l.b16 %v632
    %v2666 = vunpack.c.h.b16 %v632
    %v2667 = vunpack.c.l.b16 %v633
    %v2668 = vunpack.c.h.b16 %v633
    %v2669 = vunpack.c.l.b16 %v634
    %v2670 = vunpack.c.h.b16 %v634
    %v2671 = vunpack.c.l.b16 %v635
    %v2672 = vunpack.c.h.b16 %v635
    %v2673 = vunpack.c.l.b16 %v636
    %v2674 = vunpack.c.h.b16 %v636
    %v2675 = vunpack.c.l.b16 %v637
    %v2676 = vunpack.c.h.b16 %v637
    %v2677 = vunpack.c.l.b16 %v638
    %v2678 = vunpack.c.h.b16 %v638
    %v2679 = vunpack.c.l.b16 %v639
    %v2680 = vunpack.c.h.b16 %v639
    %v2681 = vunpack.c.l.b16 %v640
    %v2682 = vunpack.c.h.b16 %v640
    %v2683 = vunpack.c.l.b16 %v641
    %v2684 = vunpack.c.h.b16 %v641
    %v2685 = vunpack.c.l.b16 %v642
    %v2686 = vunpack.c.h.b16 %v642
    %v2687 = vunpack.c.l.b16 %v643
    %v2688 = vunpack.c.h.b16 %v643
    %v2689 = vunpack.c.l.b16 %v644
    %v2690 = vunpack.c.h.b16 %v644
    %v2691 = vunpack.c.l.b16 %v645
    %v2692 = vunpack.c.h.b16 %v645
    %v2693 = vunpack.c.l.b16 %v646
    %v2694 = vunpack.c.h.b16 %v646
    %v2695 = vunpack.c.l.b16 %v647
    %v2696 = vunpack.c.h.b16 %v647
    %v2697 = vunpack.c.l.b16 %v648
    %v2698 = vunpack.c.h.b16 %v648
    %v2699 = vunpack.c.l.b16 %v649
    %v2700 = vunpack.c.h.b16 %v649
    %v2701 = vunpack.c.l.b16 %v650
    %v2702 = vunpack.c.h.b16 %v650
    %v2703 = vunpack.c.l.b16 %v651
    %v2704 = vunpack.c.h.b16 %v651
    %v2705 = vunpack.c.l.b16 %v652
    %v2706 = vunpack.c.h.b16 %v652
    %v2707 = vunpack.c.l.b16 %v653
    %v2708 = vunpack.c.h.b16 %v653
    %v2709 = vunpack.c.l.b16 %v654
    %v2710 = vunpack.c.h.b16 %v654
    %v2711 = vunpack.c.l.b16 %v655
    %v2712 = vunpack.c.h.b16 %v655
    %v2713 = vunpack.c.l.b16 %v656
    %v2714 = vunpack.c.h.b16 %v656
    %v2715 = vunpack.c.l.b16 %v657
    %v2716 = vunpack.c.h.b16 %v657
    %v2717 = vunpack.c.l.b16 %v658
    %v2718 = vunpack.c.h.b16 %v658
    %v2719 = vunpack.c.l.b16 %v659
    %v2720 = vunpack.c.h.b16 %v659
    %v2721 = vunpack.c.l.b16 %v660
    %v2722 = vunpack.c.h.b16 %v660
    %v2723 = vunpack.c.l.b16 %v661
    %v2724 = vunpack.c.h.b16 %v661
    %v2725 = vunpack.c.l.b16 %v662
    %v2726 = vunpack.c.h.b16 %v662
    %v2727 = vunpack.c.l.b16 %v663
    %v2728 = vunpack.c.h.b16 %v663
    %v2729 = vunpack.c.l.b16 %v664
    %v2730 = vunpack.c.h.b16 %v664
    %v2731 = vunpack.c.l.b16 %v665
    %v2732 = vunpack.c.h.b16 %v665
    %v2733 = vunpack.c.l.b16 %v666
    %v2734 = vunpack.c.h.b16 %v666
    %v2735 = vunpack.c.l.b16 %v667
    %v2736 = vunpack.c.h.b16 %v667
    %v2737 = vunpack.c.l.b16 %v668
    %v2738 = vunpack.c.h.b16 %v668
    %v2739 = vunpack.c.l.b16 %v669
    %v2740 = vunpack.c.h.b16 %v669
    %v2741 = vunpack.c.l.b16 %v670
    %v2742 = vunpack.c.h.b16 %v670
    %v2743 = vunpack.c.l.b16 %v671
    %v2744 = vunpack.c.h.b16 %v671
    %v2745 = vunpack.c.l.b16 %v672
    %v2746 = vunpack.c.h.b16 %v672
    %v2747 = vunpack.c.l.b16 %v673
    %v2748 = vunpack.c.h.b16 %v673
    %v2749 = vunpack.c.l.b16 %v674
    %v2750 = vunpack.c.h.b16 %v674
    %v2751 = vunpack.c.l.b16 %v675
    %v2752 = vunpack.c.h.b16 %v675
    %v2753 = vunpack.c.l.b16 %v676
    %v2754 = vunpack.c.h.b16 %v676
    %v2755 = vunpack.c.l.b16 %v677
    %v2756 = vunpack.c.h.b16 %v677
    %v2757 = vunpack.c.l.b16 %v678
    %v2758 = vunpack.c.h.b16 %v678
    %v2759 = vunpack.c.l.b16 %v679
    %v2760 = vunpack.c.h.b16 %v679
    %v2761 = vunpack.c.l.b16 %v680
    %v2762 = vunpack.c.h.b16 %v680
    %v2763 = vunpack.c.l.b16 %v681
    %v2764 = vunpack.c.h.b16 %v681
    %v2765 = vunpack.c.l.b16 %v682
    %v2766 = vunpack.c.h.b16 %v682
    %v2767 = vunpack.c.l.b16 %v683
    %v2768 = vunpack.c.h.b16 %v683
    %v2769 = vunpack.c.l.b16 %v684
    %v2770 = vunpack.c.h.b16 %v684
    %v2771 = vunpack.c.l.b16 %v685
    %v2772 = vunpack.c.h.b16 %v685
    %v2773 = vunpack.c.l.b16 %v686
    %v2774 = vunpack.c.h.b16 %v686
    %v2775 = vunpack.c.l.b16 %v687
    %v2776 = vunpack.c.h.b16 %v687
    %v2777 = vunpack.c.l.b16 %v688
    %v2778 = vunpack.c.h.b16 %v688
    %v2779 = vunpack.c.l.b16 %v689
    %v2780 = vunpack.c.h.b16 %v689
    %v2781 = vunpack.c.l.b16 %v690
    %v2782 = vunpack.c.h.b16 %v690
    %v2783 = vunpack.c.l.b16 %v691
    %v2784 = vunpack.c.h.b16 %v691
    %v2785 = vunpack.c.l.b16 %v692
    %v2786 = vunpack.c.h.b16 %v692
    %v2787 = vunpack.c.l.b16 %v693
    %v2788 = vunpack.c.h.b16 %v693
    %v2789 = vunpack.c.l.b16 %v694
    %v2790 = vunpack.c.h.b16 %v694
    %v2791 = vunpack.c.l.b16 %v695
    %v2792 = vunpack.c.h.b16 %v695
    %v2793 = vunpack.c.l.b16 %v696
    %v2794 = vunpack.c.h.b16 %v696
    %v2795 = vunpack.c.l.b16 %v697
    %v2796 = vunpack.c.h.b16 %v697
    %v2797 = vunpack.c.l.b16 %v698
    %v2798 = vunpack.c.h.b16 %v698
    %v2799 = vunpack.c.l.b16 %v699
    %v2800 = vunpack.c.h.b16 %v699
    %v2801 = vunpack.c.l.b16 %v700
    %v2802 = vunpack.c.h.b16 %v700
    %v2803 = vunpack.c.l.b16 %v701
    %v2804 = vunpack.c.h.b16 %v701
    %v2805 = vunpack.c.l.b16 %v702
    %v2806 = vunpack.c.h.b16 %v702
    %v2807 = vunpack.c.l.b16 %v703
    %v2808 = vunpack.c.h.b16 %v703
    %v2809 = vunpack.c.l.b16 %v704
    %v2810 = vunpack.c.h.b16 %v704
    %v2811 = vunpack.c.l.b16 %v705
    %v2812 = vunpack.c.h.b16 %v705
    %v2813 = vunpack.c.l.b16 %v706
    %v2814 = vunpack.c.h.b16 %v706
    %v2815 = vunpack.c.l.b16 %v707
    %v2816 = vunpack.c.h.b16 %v707
    %v2817 = vunpack.c.l.b16 %v708
    %v2818 = vunpack.c.h.b16 %v708
    %v2819 = vunpack.c.l.b16 %v709
    %v2820 = vunpack.c.h.b16 %v709
    %v2821 = vunpack.c.l.b16 %v710
    %v2822 = vunpack.c.h.b16 %v710
    %v2823 = vunpack.c.l.b16 %v711
    %v2824 = vunpack.c.h.b16 %v711
    %v2825 = vunpack.c.l.b16 %v712
    %v2826 = vunpack.c.h.b16 %v712
    %v2827 = vunpack.c.l.b16 %v713
    %v2828 = vunpack.c.h.b16 %v713
    %v2829 = vunpack.c.l.b16 %v714
    %v2830 = vunpack.c.h.b16 %v714
    %v2831 = vunpack.c.l.b16 %v715
    %v2832 = vunpack.c.h.b16 %v715
    %v2833 = vunpack.c.l.b16 %v716
    %v2834 = vunpack.c.h.b16 %v716
    %v2835 = vunpack.c.l.b16 %v717
    %v2836 = vunpack.c.h.b16 %v717
    %v2837 = vunpack.c.l.b16 %v718
    %v2838 = vunpack.c.h.b16 %v718
    %v2839 = vunpack.c.l.b16 %v719
    %v2840 = vunpack.c.h.b16 %v719
    %v2841 = vunpack.c.l.b16 %v720
    %v2842 = vunpack.c.h.b16 %v720
    %v2843 = vunpack.c.l.b16 %v721
    %v2844 = vunpack.c.h.b16 %v721
    %v2845 = vunpack.c.l.b16 %v722
    %v2846 = vunpack.c.h.b16 %v722
    %v2847 = vunpack.c.l.b16 %v723
    %v2848 = vunpack.c.h.b16 %v723
    %v2849 = vunpack.c.l.b16 %v724
    %v2850 = vunpack.c.h.b16 %v724
    %v2851 = vunpack.c.l.b16 %v725
    %v2852 = vunpack.c.h.b16 %v725
    %v2853 = vunpack.c.l.b16 %v726
    %v2854 = vunpack.c.h.b16 %v726
    %v2855 = vunpack.c.l.b16 %v727
    %v2856 = vunpack.c.h.b16 %v727
    %v2857 = vunpack.c.l.b16 %v728
    %v2858 = vunpack.c.h.b16 %v728
    %v2859 = vunpack.c.l.b16 %v729
    %v2860 = vunpack.c.h.b16 %v729
    %v2861 = vunpack.c.l.b16 %v730
    %v2862 = vunpack.c.h.b16 %v730
    %v2863 = vunpack.c.l.b16 %v731
    %v2864 = vunpack.c.h.b16 %v731
    %v2865 = vunpack.c.l.b16 %v732
    %v2866 = vunpack.c.h.b16 %v732
    %v2867 = vunpack.c.l.b16 %v733
    %v2868 = vunpack.c.h.b16 %v733
    %v2869 = vunpack.c.l.b16 %v734
    %v2870 = vunpack.c.h.b16 %v734
    %v2871 = vunpack.c.l.b16 %v735
    %v2872 = vunpack.c.h.b16 %v735
    %v2873 = vunpack.c.l.b16 %v736
    %v2874 = vunpack.c.h.b16 %v736
    %v2875 = vunpack.c.l.b16 %v737
    %v2876 = vunpack.c.h.b16 %v737
    %v2877 = vunpack.c.l.b16 %v738
    %v2878 = vunpack.c.h.b16 %v738
    %v2879 = vunpack.c.l.b16 %v739
    %v2880 = vunpack.c.h.b16 %v739
    %v2881 = vunpack.c.l.b16 %v740
    %v2882 = vunpack.c.h.b16 %v740
    %v2883 = vunpack.c.l.b16 %v741
    %v2884 = vunpack.c.h.b16 %v741
    %v2885 = vunpack.c.l.b16 %v742
    %v2886 = vunpack.c.h.b16 %v742
    %v2887 = vunpack.c.l.b16 %v743
    %v2888 = vunpack.c.h.b16 %v743
    %v2889 = vunpack.c.l.b16 %v744
    %v2890 = vunpack.c.h.b16 %v744
    %v2891 = vunpack.c.l.b16 %v745
    %v2892 = vunpack.c.h.b16 %v745
    %v2893 = vunpack.c.l.b16 %v746
    %v2894 = vunpack.c.h.b16 %v746
    %v2895 = vunpack.c.l.b16 %v747
    %v2896 = vunpack.c.h.b16 %v747
    %v2897 = vunpack.c.l.b16 %v748
    %v2898 = vunpack.c.h.b16 %v748
    %v2899 = vunpack.c.l.b16 %v749
    %v2900 = vunpack.c.h.b16 %v749
    %v2901 = vunpack.c.l.b16 %v750
    %v2902 = vunpack.c.h.b16 %v750
    %v2903 = vunpack.c.l.b16 %v751
    %v2904 = vunpack.c.h.b16 %v751
    %v2905 = vunpack.c.l.b16 %v752
    %v2906 = vunpack.c.h.b16 %v752
    %v2907 = vpack.c.b16 %v1613, %v1611
    %v2908 = vpack.c.b16 %v1614, %v1612
    %v2909 = vpack.c.b16 %v1617, %v1615
    %v2910 = vpack.c.b16 %v1618, %v1616
    %v2911 = vpack.c.b16 %v1621, %v1619
    %v2912 = vpack.c.b16 %v1622, %v1620
    %v2913 = vpack.c.b16 %v1625, %v1623
    %v2914 = vpack.c.b16 %v1626, %v1624
    %v2915 = vpack.c.b16 %v1629, %v1627
    %v2916 = vpack.c.b16 %v1630, %v1628
    %v2917 = vpack.c.b16 %v1633, %v1631
    %v2918 = vpack.c.b16 %v1634, %v1632
    %v2919 = vpack.c.b16 %v1637, %v1635
    %v2920 = vpack.c.b16 %v1638, %v1636
    %v2921 = vpack.c.b16 %v1641, %v1639
    %v2922 = vpack.c.b16 %v1642, %v1640
    %v2923 = vpack.c.b16 %v1645, %v1643
    %v2924 = vpack.c.b16 %v1646, %v1644
    %v2925 = vpack.c.b16 %v1649, %v1647
    %v2926 = vpack.c.b16 %v1650, %v1648
    %v2927 = vpack.c.b16 %v1653, %v1651
    %v2928 = vpack.c.b16 %v1654, %v1652
    %v2929 = vpack.c.b16 %v1657, %v1655
    %v2930 = vpack.c.b16 %v1658, %v1656
    %v2931 = vpack.c.b16 %v1661, %v1659
    %v2932 = vpack.c.b16 %v1662, %v1660
    %v2933 = vpack.c.b16 %v1665, %v1663
    %v2934 = vpack.c.b16 %v1666, %v1664
    %v2935 = vpack.c.b16 %v1669, %v1667
    %v2936 = vpack.c.b16 %v1670, %v1668
    %v2937 = vpack.c.b16 %v1673, %v1671
    %v2938 = vpack.c.b16 %v1674, %v1672
    %v2939 = vpack.c.b16 %v1677, %v1675
    %v2940 = vpack.c.b16 %v1678, %v1676
    %v2941 = vpack.c.b16 %v1681, %v1679
    %v2942 = vpack.c.b16 %v1682, %v1680
    %v2943 = vpack.c.b16 %v1685, %v1683
    %v2944 = vpack.c.b16 %v1686, %v1684
    %v2945 = vpack.c.b16 %v1689, %v1687
    %v2946 = vpack.c.b16 %v1690, %v1688
    %v2947 = vpack.c.b16 %v1693, %v1691
    %v2948 = vpack.c.b16 %v1694, %v1692
    %v2949 = vpack.c.b16 %v1697, %v1695
    %v2950 = vpack.c.b16 %v1698, %v1696
    %v2951 = vpack.c.b16 %v1701, %v1699
    %v2952 = vpack.c.b16 %v1702, %v1700
    %v2953 = vpack.c.b16 %v1705, %v1703
    %v2954 = vpack.c.b16 %v1706, %v1704
    %v2955 = vpack.c.b16 %v1709, %v1707
    %v2956 = vpack.c.b16 %v1710, %v1708
    %v2957 = vpack.c.b16 %v1713, %v1711
    %v2958 = vpack.c.b16 %v1714, %v1712
    %v2959 = vpack.c.b16 %v1717, %v1715
    %v2960 = vpack.c.b16 %v1718, %v1716
    %v2961 = vpack.c.b16 %v1721, %v1719
    %v2962 = vpack.c.b16 %v1722, %v1720
    %v2963 = vpack.c.b16 %v1725, %v1723
    %v2964 = vpack.c.b16 %v1726, %v1724
    %v2965 = vpack.c.b16 %v1729, %v1727
    %v2966 = vpack.c.b16 %v1730, %v1728
    %v2967 = vpack.c.b16 %v1733, %v1731
    %v2968 = vpack.c.b16 %v1734, %v1732
    %v2969 = vpack.c.b16 %v1737, %v1735
    %v2970 = vpack.c.b16 %v1738, %v1736
    %v2971 = vpack.c.b16 %v1741, %v1739
    %v2972 = vpack.c.b16 %v1742, %v1740
    %v2973 = vpack.c.b16 %v1745, %v1743
    %v2974 = vpack.c.b16 %v1746, %v1744
    %v2975 = vpack.c.b16 %v1749, %v1747
    %v2976 = vpack.c.b16 %v1750, %v1748
    %v2977 = vpack.c.b16 %v1753, %v1751
    %v2978 = vpack.c.b16 %v1754, %v1752
    %v2979 = vpack.c.b16 %v1757, %v1755
    %v2980 = vpack.c.b16 %v1758, %v1756
    %v2981 = vpack.c.b16 %v1761, %v1759
    %v2982 = vpack.c.b16 %v1762, %v1760
    %v2983 = vpack.c.b16 %v1765, %v1763
    %v2984 = vpack.c.b16 %v1766, %v1764
    %v2985 = vpack.c.b16 %v1769, %v1767
    %v2986 = vpack.c.b16 %v1770, %v1768
    %v2987 = vpack.c.b16 %v1773, %v1771
    %v2988 = vpack.c.b16 %v1774, %v1772
    %v2989 = vpack.c.b16 %v1777, %v1775
    %v2990 = vpack.c.b16 %v1778, %v1776
    %v2991 = vpack.c.b16 %v1781, %v1779
    %v2992 = vpack.c.b16 %v1782, %v1780
    %v2993 = vpack.c.b16 %v1785, %v1783
    %v2994 = vpack.c.b16 %v1786, %v1784
    %v2995 = vpack.c.b16 %v1789, %v1787
    %v2996 = vpack.c.b16 %v1790, %v1788
    %v2997 = vpack.c.b16 %v1793, %v1791
    %v2998 = vpack.c.b16 %v1794, %v1792
    %v2999 = vpack.c.b16 %v1797, %v1795
    %v3000 = vpack.c.b16 %v1798, %v1796
    %v3001 = vpack.c.b16 %v1801, %v1799
    %v3002 = vpack.c.b16 %v1802, %v1800
    %v3003 = vpack.c.b16 %v1805, %v1803
    %v3004 = vpack.c.b16 %v1806, %v1804
    %v3005 = vpack.c.b16 %v1809, %v1807
    %v3006 = vpack.c.b16 %v1810, %v1808
    %v3007 = vpack.c.b16 %v1813, %v1811
    %v3008 = vpack.c.b16 %v1814, %v1812
    %v3009 = vpack.c.b16 %v1817, %v1815
    %v3010 = vpack.c.b16 %v1818, %v1816
    %v3011 = vpack.c.b16 %v1821, %v1819
    %v3012 = vpack.c.b16 %v1822, %v1820
    %v3013 = vpack.c.b16 %v1825, %v1823
    %v3014 = vpack.c.b16 %v1826, %v1824
    %v3015 = vpack.c.b16 %v1829, %v1827
    %v3016 = vpack.c.b16 %v1830, %v1828
    %v3017 = vpack.c.b16 %v1833, %v1831
    %v3018 = vpack.c.b16 %v1834, %v1832
    %v3019 = vpack.c.b16 %v1837, %v1835
    %v3020 = vpack.c.b16 %v1838, %v1836
    %v3021 = vpack.c.b16 %v1841, %v1839
    %v3022 = vpack.c.b16 %v1842, %v1840
    %v3023 = vpack.c.b16 %v1845, %v1843
    %v3024 = vpack.c.b16 %v1846, %v1844
    %v3025 = vpack.c.b16 %v1849, %v1847
    %v3026 = vpack.c.b16 %v1850, %v1848
    %v3027 = vpack.c.b16 %v1853, %v1851
    %v3028 = vpack.c.b16 %v1854, %v1852
    %v3029 = vpack.c.b16 %v1857, %v1855
    %v3030 = vpack.c.b16 %v1858, %v1856
    %v3031 = vpack.c.b16 %v1861, %v1859
    %v3032 = vpack.c.b16 %v1862, %v1860
    %v3033 = vpack.c.b16 %v1865, %v1863
    %v3034 = vpack.c.b16 %v1866, %v1864
    %v3035 = vpack.c.b16 %v1869, %v1867
    %v3036 = vpack.c.b16 %v1870, %v1868
    %v3037 = vpack.c.b16 %v1873, %v1871
    %v3038 = vpack.c.b16 %v1874, %v1872
    %v3039 = vpack.c.b16 %v1877, %v1875
    %v3040 = vpack.c.b16 %v1878, %v1876
    %v3041 = vpack.c.b16 %v1881, %v1879
    %v3042 = vpack.c.b16 %v1882, %v1880
    %v3043 = vpack.c.b16 %v1885, %v1883
    %v3044 = vpack.c.b16 %v1886, %v1884
    %v3045 = vpack.c.b16 %v1889, %v1887
    %v3046 = vpack.c.b16 %v1890, %v1888
    %v3047 = vpack.c.b16 %v1893, %v1891
    %v3048 = vpack.c.b16 %v1894, %v1892
    %v3049 = vpack.c.b16 %v1897, %v1895
    %v3050 = vpack.c.b16 %v1898, %v1896
    %v3051 = vpack.c.b16 %v1901, %v1899
    %v3052 = vpack.c.b16 %v1902, %v1900
    %v3053 = vpack.c.b16 %v1905, %v1903
    %v3054 = vpack.c.b16 %v1906, %v1904
    %v3055 = vpack.c.b16 %v1909, %v1907
    %v3056 = vpack.c.b16 %v1910, %v1908
    %v3057 = vpack.c.b16 %v1913, %v1911
    %v3058 = vpack.c.b16 %v1914, %v1912
    %v3059 = vpack.c.b16 %v1917, %v1915
    %v3060 = vpack.c.b16 %v1918, %v1916
    %v3061 = vpack.c.b16 %v1921, %v1919
    %v3062 = vpack.c.b16 %v1922, %v1920
    %v3063 = vpack.c.b16 %v1925, %v1923
    %v3064 = vpack.c.b16 %v1926, %v1924
    %v3065 = vpack.c.b16 %v1929, %v1927
    %v3066 = vpack.c.b16 %v1930, %v1928
    %v3067 = vpack.c.b16 %v1933, %v1931
    %v3068 = vpack.c.b16 %v1934, %v1932
    %v3069 = vpack.c.b16 %v1937, %v1935
    %v3070 = vpack.c.b16 %v1938, %v1936
    %v3071 = vpack.c.b16 %v1941, %v1939
    %v3072 = vpack.c.b16 %v1942, %v1940
    %v3073 = vpack.c.b16 %v1945, %v1943
    %v3074 = vpack.c.b16 %v1946, %v1944
    %v3075 = vpack.c.b16 %v1949, %v1947
    %v3076 = vpack.c.b16 %v1950, %v1948
    %v3077 = vpack.c.b16 %v1953, %v1951
    %v3078 = vpack.c.b16 %v1954, %v1952
    %v3079 = vpack.c.b16 %v1957, %v1955
    %v3080 = vpack.c.b16 %v1958, %v1956
    %v3081 = vpack.c.b16 %v1961, %v1959
    %v3082 = vpack.c.b16 %v1962, %v1960
    %v3083 = vpack.c.b16 %v1965, %v1963
    %v3084 = vpack.c.b16 %v1966, %v1964
    %v3085 = vpack.c.b16 %v1969, %v1967
    %v3086 = vpack.c.b16 %v1970, %v1968
    %v3087 = vpack.c.b16 %v1973, %v1971
    %v3088 = vpack.c.b16 %v1974, %v1972
    %v3089 = vpack.c.b16 %v1977, %v1975
    %v3090 = vpack.c.b16 %v1978, %v1976
    %v3091 = vpack.c.b16 %v1981, %v1979
    %v3092 = vpack.c.b16 %v1982, %v1980
    %v3093 = vpack.c.b16 %v1985, %v1983
    %v3094 = vpack.c.b16 %v1986, %v1984
    %v3095 = vpack.c.b16 %v1989, %v1987
    %v3096 = vpack.c.b16 %v1990, %v1988
    %v3097 = vpack.c.b16 %v1993, %v1991
    %v3098 = vpack.c.b16 %v1994, %v1992
    %v3099 = vpack.c.b16 %v1997, %v1995
    %v3100 = vpack.c.b16 %v1998, %v1996
    %v3101 = vpack.c.b16 %v2001, %v1999
    %v3102 = vpack.c.b16 %v2002, %v2000
    %v3103 = vpack.c.b16 %v2005, %v2003
    %v3104 = vpack.c.b16 %v2006, %v2004
    %v3105 = vpack.c.b16 %v2009, %v2007
    %v3106 = vpack.c.b16 %v2010, %v2008
    %v3107 = vpack.c.b16 %v2013, %v2011
    %v3108 = vpack.c.b16 %v2014, %v2012
    %v3109 = vpack.c.b16 %v2017, %v2015
    %v3110 = vpack.c.b16 %v2018, %v2016
    %v3111 = vpack.c.b16 %v2021, %v2019
    %v3112 = vpack.c.b16 %v2022, %v2020
    %v3113 = vpack.c.b16 %v2025, %v2023
    %v3114 = vpack.c.b16 %v2026, %v2024
    %v3115 = vpack.c.b16 %v2029, %v2027
    %v3116 = vpack.c.b16 %v2030, %v2028
    %v3117 = vpack.c.b16 %v2033, %v2031
    %v3118 = vpack.c.b16 %v2034, %v2032
    %v3119 = vpack.c.b16 %v2037, %v2035
    %v3120 = vpack.c.b16 %v2038, %v2036
    %v3121 = vpack.c.b16 %v2041, %v2039
    %v3122 = vpack.c.b16 %v2042, %v2040
    %v3123 = vpack.c.b16 %v2045, %v2043
    %v3124 = vpack.c.b16 %v2046, %v2044
    %v3125 = vpack.c.b16 %v2049, %v2047
    %v3126 = vpack.c.b16 %v2050, %v2048
    %v3127 = vpack.c.b16 %v2053, %v2051
    %v3128 = vpack.c.b16 %v2054, %v2052
    %v3129 = vpack.c.b16 %v2057, %v2055
    %v3130 = vpack.c.b16 %v2058, %v2056
    %v3131 = vpack.c.b16 %v2061, %v2059
    %v3132 = vpack.c.b16 %v2062, %v2060
    %v3133 = vpack.c.b16 %v2065, %v2063
    %v3134 = vpack.c.b16 %v2066, %v2064
    %v3135 = vpack.c.b16 %v2069, %v2067
    %v3136 = vpack.c.b16 %v2070, %v2068
    %v3137 = vpack.c.b16 %v2073, %v2071
    %v3138 = vpack.c.b16 %v2074, %v2072
    %v3139 = vpack.c.b16 %v2077, %v2075
    %v3140 = vpack.c.b16 %v2078, %v2076
    %v3141 = vpack.c.b16 %v2081, %v2079
    %v3142 = vpack.c.b16 %v2082, %v2080
    %v3143 = vpack.c.b16 %v2085, %v2083
    %v3144 = vpack.c.b16 %v2086, %v2084
    %v3145 = vpack.c.b16 %v2089, %v2087
    %v3146 = vpack.c.b16 %v2090, %v2088
    %v3147 = vpack.c.b16 %v2093, %v2091
    %v3148 = vpack.c.b16 %v2094, %v2092
    %v3149 = vpack.c.b16 %v2097, %v2095
    %v3150 = vpack.c.b16 %v2098, %v2096
    %v3151 = vpack.c.b16 %v2101, %v2099
    %v3152 = vpack.c.b16 %v2102, %v2100
    %v3153 = vpack.c.b16 %v2105, %v2103
    %v3154 = vpack.c.b16 %v2106, %v2104
    %v3155 = vpack.c.b16 %v2109, %v2107
    %v3156 = vpack.c.b16 %v2110, %v2108
    %v3157 = vpack.c.b16 %v2113, %v2111
    %v3158 = vpack.c.b16 %v2114, %v2112
    %v3159 = vpack.c.b16 %v2117, %v2115
    %v3160 = vpack.c.b16 %v2118, %v2116
    %v3161 = vpack.c.b16 %v2121, %v2119
    %v3162 = vpack.c.b16 %v2122, %v2120
    %v3163 = vpack.c.b16 %v2125, %v2123
    %v3164 = vpack.c.b16 %v2126, %v2124
    %v3165 = vpack.c.b16 %v2129, %v2127
    %v3166 = vpack.c.b16 %v2130, %v2128
    %v3167 = vpack.c.b16 %v2133, %v2131
    %v3168 = vpack.c.b16 %v2134, %v2132
    %v3169 = vpack.c.b16 %v2137, %v2135
    %v3170 = vpack.c.b16 %v2138, %v2136
    %v3171 = vpack.c.b16 %v2141, %v2139
    %v3172 = vpack.c.b16 %v2142, %v2140
    %v3173 = vpack.c.b16 %v2145, %v2143
    %v3174 = vpack.c.b16 %v2146, %v2144
    %v3175 = vpack.c.b16 %v2149, %v2147
    %v3176 = vpack.c.b16 %v2150, %v2148
    %v3177 = vpack.c.b16 %v2153, %v2151
    %v3178 = vpack.c.b16 %v2154, %v2152
    %v3179 = vpack.c.b16 %v2157, %v2155
    %v3180 = vpack.c.b16 %v2158, %v2156
    %v3181 = vpack.c.b16 %v2161, %v2159
    %v3182 = vpack.c.b16 %v2162, %v2160
    %v3183 = vpack.c.b16 %v2165, %v2163
    %v3184 = vpack.c.b16 %v2166, %v2164
    %v3185 = vpack.c.b16 %v2169, %v2167
    %v3186 = vpack.c.b16 %v2170, %v2168
    %v3187 = vpack.c.b16 %v2173, %v2171
    %v3188 = vpack.c.b16 %v2174, %v2172
    %v3189 = vpack.c.b16 %v2177, %v2175
    %v3190 = vpack.c.b16 %v2178, %v2176
    %v3191 = vpack.c.b16 %v2181, %v2179
    %v3192 = vpack.c.b16 %v2182, %v2180
    %v3193 = vpack.c.b16 %v2185, %v2183
    %v3194 = vpack.c.b16 %v2186, %v2184
    %v3195 = vpack.c.b16 %v2189, %v2187
    %v3196 = vpack.c.b16 %v2190, %v2188
    %v3197 = vpack.c.b16 %v2193, %v2191
    %v3198 = vpack.c.b16 %v2194, %v2192
    %v3199 = vpack.c.b16 %v2197, %v2195
    %v3200 = vpack.c.b16 %v2198, %v2196
    %v3201 = vpack.c.b16 %v2201, %v2199
    %v3202 = vpack.c.b16 %v2202, %v2200
    %v3203 = vpack.c.b16 %v2205, %v2203
    %v3204 = vpack.c.b16 %v2206, %v2204
    %v3205 = vpack.c.b16 %v2209, %v2207
    %v3206 = vpack.c.b16 %v2210, %v2208
    %v3207 = vpack.c.b16 %v2213, %v2211
    %v3208 = vpack.c.b16 %v2214, %v2212
    %v3209 = vpack.c.b16 %v2217, %v2215
    %v3210 = vpack.c.b16 %v2218, %v2216
    %v3211 = vpack.c.b16 %v2221, %v2219
    %v3212 = vpack.c.b16 %v2222, %v2220
    %v3213 = vpack.c.b16 %v2225, %v2223
    %v3214 = vpack.c.b16 %v2226, %v2224
    %v3215 = vpack.c.b16 %v2229, %v2227
    %v3216 = vpack.c.b16 %v2230, %v2228
    %v3217 = vpack.c.b16 %v2233, %v2231
    %v3218 = vpack.c.b16 %v2234, %v2232
    %v3219 = vpack.c.b16 %v2237, %v2235
    %v3220 = vpack.c.b16 %v2238, %v2236
    %v3221 = vpack.c.b16 %v2241, %v2239
    %v3222 = vpack.c.b16 %v2242, %v2240
    %v3223 = vpack.c.b16 %v2245, %v2243
    %v3224 = vpack.c.b16 %v2246, %v2244
    %v3225 = vpack.c.b16 %v2249, %v2247
    %v3226 = vpack.c.b16 %v2250, %v2248
    %v3227 = vpack.c.b16 %v2253, %v2251
    %v3228 = vpack.c.b16 %v2254, %v2252
    %v3229 = vpack.c.b16 %v2257, %v2255
    %v3230 = vpack.c.b16 %v2258, %v2256
    %v3231 = vpack.c.b16 %v2261, %v2259
    %v3232 = vpack.c.b16 %v2262, %v2260
    %v3233 = vpack.c.b16 %v2265, %v2263
    %v3234 = vpack.c.b16 %v2266, %v2264
    %v3235 = vpack.c.b16 %v2269, %v2267
    %v3236 = vpack.c.b16 %v2270, %v2268
    %v3237 = vpack.c.b16 %v2273, %v2271
    %v3238 = vpack.c.b16 %v2274, %v2272
    %v3239 = vpack.c.b16 %v2277, %v2275
    %v3240 = vpack.c.b16 %v2278, %v2276
    %v3241 = vpack.c.b16 %v2281, %v2279
    %v3242 = vpack.c.b16 %v2282, %v2280
    %v3243 = vpack.c.b16 %v2285, %v2283
    %v3244 = vpack.c.b16 %v2286, %v2284
    %v3245 = vpack.c.b16 %v2289, %v2287
    %v3246 = vpack.c.b16 %v2290, %v2288
    %v3247 = vpack.c.b16 %v2293, %v2291
    %v3248 = vpack.c.b16 %v2294, %v2292
    %v3249 = vpack.c.b16 %v2297, %v2295
    %v3250 = vpack.c.b16 %v2298, %v2296
    %v3251 = vpack.c.b16 %v2301, %v2299
    %v3252 = vpack.c.b16 %v2302, %v2300
    %v3253 = vpack.c.b16 %v2305, %v2303
    %v3254 = vpack.c.b16 %v2306, %v2304
    %v3255 = vpack.c.b16 %v2309, %v2307
    %v3256 = vpack.c.b16 %v2310, %v2308
    %v3257 = vpack.c.b16 %v2313, %v2311
    %v3258 = vpack.c.b16 %v2314, %v2312
    %v3259 = vpack.c.b16 %v2317, %v2315
    %v3260 = vpack.c.b16 %v2318, %v2316
    %v3261 = vpack.c.b16 %v2321, %v2319
    %v3262 = vpack.c.b16 %v2322, %v2320
    %v3263 = vpack.c.b16 %v2325, %v2323
    %v3264 = vpack.c.b16 %v2326, %v2324
    %v3265 = vpack.c.b16 %v2329, %v2327
    %v3266 = vpack.c.b16 %v2330, %v2328
    %v3267 = vpack.c.b16 %v2333, %v2331
    %v3268 = vpack.c.b16 %v2334, %v2332
    %v3269 = vpack.c.b16 %v2337, %v2335
    %v3270 = vpack.c.b16 %v2338, %v2336
    %v3271 = vpack.c.b16 %v2341, %v2339
    %v3272 = vpack.c.b16 %v2342, %v2340
    %v3273 = vpack.c.b16 %v2345, %v2343
    %v3274 = vpack.c.b16 %v2346, %v2344
    %v3275 = vpack.c.b16 %v2349, %v2347
    %v3276 = vpack.c.b16 %v2350, %v2348
    %v3277 = vpack.c.b16 %v2353, %v2351
    %v3278 = vpack.c.b16 %v2354, %v2352
    %v3279 = vpack.c.b16 %v2357, %v2355
    %v3280 = vpack.c.b16 %v2358, %v2356
    %v3281 = vpack.c.b16 %v2361, %v2359
    %v3282 = vpack.c.b16 %v2362, %v2360
    %v3283 = vpack.c.b16 %v2365, %v2363
    %v3284 = vpack.c.b16 %v2366, %v2364
    %v3285 = vpack.c.b16 %v2369, %v2367
    %v3286 = vpack.c.b16 %v2370, %v2368
    %v3287 = vpack.c.b16 %v2373, %v2371
    %v3288 = vpack.c.b16 %v2374, %v2372
    %v3289 = vpack.c.b16 %v2377, %v2375
    %v3290 = vpack.c.b16 %v2378, %v2376
    %v3291 = vpack.c.b16 %v2381, %v2379
    %v3292 = vpack.c.b16 %v2382, %v2380
    %v3293 = vpack.c.b16 %v2385, %v2383
    %v3294 = vpack.c.b16 %v2386, %v2384
    %v3295 = vpack.c.b16 %v2389, %v2387
    %v3296 = vpack.c.b16 %v2390, %v2388
    %v3297 = vpack.c.b16 %v2393, %v2391
    %v3298 = vpack.c.b16 %v2394, %v2392
    %v3299 = vpack.c.b16 %v2397, %v2395
    %v3300 = vpack.c.b16 %v2398, %v2396
    %v3301 = vpack.c.b16 %v2401, %v2399
    %v3302 = vpack.c.b16 %v2402, %v2400
    %v3303 = vpack.c.b16 %v2405, %v2403
    %v3304 = vpack.c.b16 %v2406, %v2404
    %v3305 = vpack.c.b16 %v2409, %v2407
    %v3306 = vpack.c.b16 %v2410, %v2408
    %v3307 = vpack.c.b16 %v2413, %v2411
    %v3308 = vpack.c.b16 %v2414, %v2412
    %v3309 = vpack.c.b16 %v2417, %v2415
    %v3310 = vpack.c.b16 %v2418, %v2416
    %v3311 = vpack.c.b16 %v2421, %v2419
    %v3312 = vpack.c.b16 %v2422, %v2420
    %v3313 = vpack.c.b16 %v2425, %v2423
    %v3314 = vpack.c.b16 %v2426, %v2424
    %v3315 = vpack.c.b16 %v2429, %v2427
    %v3316 = vpack.c.b16 %v2430, %v2428
    %v3317 = vpack.c.b16 %v2433, %v2431
    %v3318 = vpack.c.b16 %v2434, %v2432
    %v3319 = vpack.c.b16 %v2437, %v2435
    %v3320 = vpack.c.b16 %v2438, %v2436
    %v3321 = vpack.c.b16 %v2441, %v2439
    %v3322 = vpack.c.b16 %v2442, %v2440
    %v3323 = vpack.c.b16 %v2445, %v2443
    %v3324 = vpack.c.b16 %v2446, %v2444
    %v3325 = vpack.c.b16 %v2449, %v2447
    %v3326 = vpack.c.b16 %v2450, %v2448
    %v3327 = vpack.c.b16 %v2453, %v2451
    %v3328 = vpack.c.b16 %v2454, %v2452
    %v3329 = vpack.c.b16 %v2457, %v2455
    %v3330 = vpack.c.b16 %v2458, %v2456
    %v3331 = vpack.c.b16 %v2461, %v2459
    %v3332 = vpack.c.b16 %v2462, %v2460
    %v3333 = vpack.c.b16 %v2465, %v2463
    %v3334 = vpack.c.b16 %v2466, %v2464
    %v3335 = vpack.c.b16 %v2469, %v2467
    %v3336 = vpack.c.b16 %v2470, %v2468
    %v3337 = vpack.c.b16 %v2473, %v2471
    %v3338 = vpack.c.b16 %v2474, %v2472
    %v3339 = vpack.c.b16 %v2477, %v2475
    %v3340 = vpack.c.b16 %v2478, %v2476
    %v3341 = vpack.c.b16 %v2481, %v2479
    %v3342 = vpack.c.b16 %v2482, %v2480
    %v3343 = vpack.c.b16 %v2485, %v2483
    %v3344 = vpack.c.b16 %v2486, %v2484
    %v3345 = vpack.c.b16 %v2489, %v2487
    %v3346 = vpack.c.b16 %v2490, %v2488
    %v3347 = vpack.c.b16 %v2493, %v2491
    %v3348 = vpack.c.b16 %v2494, %v2492
    %v3349 = vpack.c.b16 %v2497, %v2495
    %v3350 = vpack.c.b16 %v2498, %v2496
    %v3351 = vpack.c.b16 %v2501, %v2499
    %v3352 = vpack.c.b16 %v2502, %v2500
    %v3353 = vpack.c.b16 %v2505, %v2503
    %v3354 = vpack.c.b16 %v2506, %v2504
    %v3355 = vpack.c.b16 %v2509, %v2507
    %v3356 = vpack.c.b16 %v2510, %v2508
    %v3357 = vpack.c.b16 %v2513, %v2511
    %v3358 = vpack.c.b16 %v2514, %v2512
    %v3359 = vpack.c.b16 %v2517, %v2515
    %v3360 = vpack.c.b16 %v2518, %v2516
    %v3361 = vpack.c.b16 %v2521, %v2519
    %v3362 = vpack.c.b16 %v2522, %v2520
    %v3363 = vpack.c.b16 %v2525, %v2523
    %v3364 = vpack.c.b16 %v2526, %v2524
    %v3365 = vpack.c.b16 %v2529, %v2527
    %v3366 = vpack.c.b16 %v2530, %v2528
    %v3367 = vpack.c.b16 %v2533, %v2531
    %v3368 = vpack.c.b16 %v2534, %v2532
    %v3369 = vpack.c.b16 %v2537, %v2535
    %v3370 = vpack.c.b16 %v2538, %v2536
    %v3371 = vpack.c.b16 %v2541, %v2539
    %v3372 = vpack.c.b16 %v2542, %v2540
    %v3373 = vpack.c.b16 %v2545, %v2543
    %v3374 = vpack.c.b16 %v2546, %v2544
    %v3375 = vpack.c.b16 %v2549, %v2547
    %v3376 = vpack.c.b16 %v2550, %v2548
    %v3377 = vpack.c.b16 %v2553, %v2551
    %v3378 = vpack.c.b16 %v2554, %v2552
    %v3379 = vpack.c.b16 %v2557, %v2555
    %v3380 = vpack.c.b16 %v2558, %v2556
    %v3381 = vpack.c.b16 %v2561, %v2559
    %v3382 = vpack.c.b16 %v2562, %v2560
    %v3383 = vpack.c.b16 %v2565, %v2563
    %v3384 = vpack.c.b16 %v2566, %v2564
    %v3385 = vpack.c.b16 %v2569, %v2567
    %v3386 = vpack.c.b16 %v2570, %v2568
    %v3387 = vpack.c.b16 %v2573, %v2571
    %v3388 = vpack.c.b16 %v2574, %v2572
    %v3389 = vpack.c.b16 %v2577, %v2575
    %v3390 = vpack.c.b16 %v2578, %v2576
    %v3391 = vpack.c.b16 %v2581, %v2579
    %v3392 = vpack.c.b16 %v2582, %v2580
    %v3393 = vpack.c.b16 %v2585, %v2583
    %v3394 = vpack.c.b16 %v2586, %v2584
    %v3395 = vpack.c.b16 %v2589, %v2587
    %v3396 = vpack.c.b16 %v2590, %v2588
    %v3397 = vpack.c.b16 %v2593, %v2591
    %v3398 = vpack.c.b16 %v2594, %v2592
    %v3399 = vpack.c.b16 %v2597, %v2595
    %v3400 = vpack.c.b16 %v2598, %v2596
    %v3401 = vpack.c.b16 %v2601, %v2599
    %v3402 = vpack.c.b16 %v2602, %v2600
    %v3403 = vpack.c.b16 %v2605, %v2603
    %v3404 = vpack.c.b16 %v2606, %v2604
    %v3405 = vpack.c.b16 %v2609, %v2607
    %v3406 = vpack.c.b16 %v2610, %v2608
    %v3407 = vpack.c.b16 %v2613, %v2611
    %v3408 = vpack.c.b16 %v2614, %v2612
    %v3409 = vpack.c.b16 %v2617, %v2615
    %v3410 = vpack.c.b16 %v2618, %v2616
    %v3411 = vpack.c.b16 %v2621, %v2619
    %v3412 = vpack.c.b16 %v2622, %v2620
    %v3413 = vpack.c.b16 %v2625, %v2623
    %v3414 = vpack.c.b16 %v2626, %v2624
    %v3415 = vpack.c.b16 %v2629, %v2627
    %v3416 = vpack.c.b16 %v2630, %v2628
    %v3417 = vpack.c.b16 %v2633, %v2631
    %v3418 = vpack.c.b16 %v2634, %v2632
    %v3419 = vpack.c.b16 %v2637, %v2635
    %v3420 = vpack.c.b16 %v2638, %v2636
    %v3421 = vpack.c.b16 %v2641, %v2639
    %v3422 = vpack.c.b16 %v2642, %v2640
    %v3423 = vpack.c.b16 %v2645, %v2643
    %v3424 = vpack.c.b16 %v2646, %v2644
    %v3425 = vpack.c.b16 %v2649, %v2647
    %v3426 = vpack.c.b16 %v2650, %v2648
    %v3427 = vpack.c.b16 %v2653, %v2651
    %v3428 = vpack.c.b16 %v2654, %v2652
    %v3429 = vpack.c.b16 %v2657, %v2655
    %v3430 = vpack.c.b16 %v2658, %v2656
    %v3431 = vpack.c.b16 %v2661, %v2659
    %v3432 = vpack.c.b16 %v2662, %v2660
    %v3433 = vpack.c.b16 %v2665, %v2663
    %v3434 = vpack.c.b16 %v2666, %v2664
    %v3435 = vpack.c.b16 %v2669, %v2667
    %v3436 = vpack.c.b16 %v2670, %v2668
    %v3437 = vpack.c.b16 %v2673, %v2671
    %v3438 = vpack.c.b16 %v2674, %v2672
    %v3439 = vpack.c.b16 %v2677, %v2675
    %v3440 = vpack.c.b16 %v2678, %v2676
    %v3441 = vpack.c.b16 %v2681, %v2679
    %v3442 = vpack.c.b16 %v2682, %v2680
    %v3443 = vpack.c.b16 %v2685, %v2683
    %v3444 = vpack.c.b16 %v2686, %v2684
    %v3445 = vpack.c.b16 %v2689, %v2687
    %v3446 = vpack.c.b16 %v2690, %v2688
    %v3447 = vpack.c.b16 %v2693, %v2691
    %v3448 = vpack.c.b16 %v2694, %v2692
    %v3449 = vpack.c.b16 %v2697, %v2695
    %v3450 = vpack.c.b16 %v2698, %v2696
    %v3451 = vpack.c.b16 %v2701, %v2699
    %v3452 = vpack.c.b16 %v2702, %v2700
    %v3453 = vpack.c.b16 %v2705, %v2703
    %v3454 = vpack.c.b16 %v2706, %v2704
    %v3455 = vpack.c.b16 %v2709, %v2707
    %v3456 = vpack.c.b16 %v2710, %v2708
    %v3457 = vpack.c.b16 %v2713, %v2711
    %v3458 = vpack.c.b16 %v2714, %v2712
    %v3459 = vpack.c.b16 %v2717, %v2715
    %v3460 = vpack.c.b16 %v2718, %v2716
    %v3461 = vpack.c.b16 %v2721, %v2719
    %v3462 = vpack.c.b16 %v2722, %v2720
    %v3463 = vpack.c.b16 %v2725, %v2723
    %v3464 = vpack.c.b16 %v2726, %v2724
    %v3465 = vpack.c.b16 %v2729, %v2727
    %v3466 = vpack.c.b16 %v2730, %v2728
    %v3467 = vpack.c.b16 %v2733, %v2731
    %v3468 = vpack.c.b16 %v2734, %v2732
    %v3469 = vpack.c.b16 %v2737, %v2735
    %v3470 = vpack.c.b16 %v2738, %v2736
    %v3471 = vpack.c.b16 %v2741, %v2739
    %v3472 = vpack.c.b16 %v2742, %v2740
    %v3473 = vpack.c.b16 %v2745, %v2743
    %v3474 = vpack.c.b16 %v2746, %v2744
    %v3475 = vpack.c.b16 %v2749, %v2747
    %v3476 = vpack.c.b16 %v2750, %v2748
    %v3477 = vpack.c.b16 %v2753, %v2751
    %v3478 = vpack.c.b16 %v2754, %v2752
    %v3479 = vpack.c.b16 %v2757, %v2755
    %v3480 = vpack.c.b16 %v2758, %v2756
    %v3481 = vpack.c.b16 %v2761, %v2759
    %v3482 = vpack.c.b16 %v2762, %v2760
    %v3483 = vpack.c.b16 %v2765, %v2763
    %v3484 = vpack.c.b16 %v2766, %v2764
    %v3485 = vpack.c.b16 %v2769, %v2767
    %v3486 = vpack.c.b16 %v2770, %v2768
    %v3487 = vpack.c.b16 %v2773, %v2771
    %v3488 = vpack.c.b16 %v2774, %v2772
    %v3489 = vpack.c.b16 %v2777, %v2775
    %v3490 = vpack.c.b16 %v2778, %v2776
    %v3491 = vpack.c.b16 %v2781, %v2779
    %v3492 = vpack.c.b16 %v2782, %v2780
    %v3493 = vpack.c.b16 %v2785, %v2783
    %v3494 = vpack.c.b16 %v2786, %v2784
    %v3495 = vpack.c.b16 %v2789, %v2787
    %v3496 = vpack.c.b16 %v2790, %v2788
    %v3497 = vpack.c.b16 %v2793, %v2791
    %v3498 = vpack.c.b16 %v2794, %v2792
    %v3499 = vpack.c.b16 %v2797, %v2795
    %v3500 = vpack.c.b16 %v2798, %v2796
    %v3501 = vpack.c.b16 %v2801, %v2799
    %v3502 = vpack.c.b16 %v2802, %v2800
    %v3503 = vpack.c.b16 %v2805, %v2803
    %v3504 = vpack.c.b16 %v2806, %v2804
    %v3505 = vpack.c.b16 %v2809, %v2807
    %v3506 = vpack.c.b16 %v2810, %v2808
    %v3507 = vpack.c.b16 %v2813, %v2811
    %v3508 = vpack.c.b16 %v2814, %v2812
    %v3509 = vpack.c.b16 %v2817, %v2815
    %v3510 = vpack.c.b16 %v2818, %v2816
    %v3511 = vpack.c.b16 %v2821, %v2819
    %v3512 = vpack.c.b16 %v2822, %v2820
    %v3513 = vpack.c.b16 %v2825, %v2823
    %v3514 = vpack.c.b16 %v2826, %v2824
    %v3515 = vpack.c.b16 %v2829, %v2827
    %v3516 = vpack.c.b16 %v2830, %v2828
    %v3517 = vpack.c.b16 %v2833, %v2831
    %v3518 = vpack.c.b16 %v2834, %v2832
    %v3519 = vpack.c.b16 %v2837, %v2835
    %v3520 = vpack.c.b16 %v2838, %v2836
    %v3521 = vpack.c.b16 %v2841, %v2839
    %v3522 = vpack.c.b16 %v2842, %v2840
    %v3523 = vpack.c.b16 %v2845, %v2843
    %v3524 = vpack.c.b16 %v2846, %v2844
    %v3525 = vpack.c.b16 %v2849, %v2847
    %v3526 = vpack.c.b16 %v2850, %v2848
    %v3527 = vpack.c.b16 %v2853, %v2851
    %v3528 = vpack.c.b16 %v2854, %v2852
    %v3529 = vpack.c.b16 %v2857, %v2855
    %v3530 = vpack.c.b16 %v2858, %v2856
    %v3531 = vpack.c.b16 %v2861, %v2859
    %v3532 = vpack.c.b16 %v2862, %v2860
    %v3533 = vpack.c.b16 %v2865, %v2863
    %v3534 = vpack.c.b16 %v2866, %v2864
    %v3535 = vpack.c.b16 %v2869, %v2867
    %v3536 = vpack.c.b16 %v2870, %v2868
    %v3537 = vpack.c.b16 %v2873, %v2871
    %v3538 = vpack.c.b16 %v2874, %v2872
    %v3539 = vpack.c.b16 %v2877, %v2875
    %v3540 = vpack.c.b16 %v2878, %v2876
    %v3541 = vpack.c.b16 %v2881, %v2879
    %v3542 = vpack.c.b16 %v2882, %v2880
    %v3543 = vpack.c.b16 %v2885, %v2883
    %v3544 = vpack.c.b16 %v2886, %v2884
    %v3545 = vpack.c.b16 %v2889, %v2887
    %v3546 = vpack.c.b16 %v2890, %v2888
    %v3547 = vpack.c.b16 %v2893, %v2891
    %v3548 = vpack.c.b16 %v2894, %v2892
    %v3549 = vpack.c.b16 %v2897, %v2895
    %v3550 = vpack.c.b16 %v2898, %v2896
    %v3551 = vpack.c.b16 %v2901, %v2899
    %v3552 = vpack.c.b16 %v2902, %v2900
    %v3553 = vpack.c.b16 %v2905, %v2903
    %v3554 = vpack.c.b16 %v2906, %v2904
    %vm4203 = vcmask 523264
    %v4205 = vsel %vm4203, %v922, 0
    %4207 = vmatprep.subr.bf16.mxu0 %v2908
    %4208 = vmatpush1.bf16.msra.mxu0 %v2907
    %4209 = vmatprep.subr.bf16.mxu0 %v2910
    %4210 = vmatpush1.bf16.msra.mxu0 %v2909
    %4211 = vmatprep.subr.bf16.mxu0 %v2912
    %4212 = vmatpush1.bf16.msra.mxu0 %v2911
    %4213 = vmatprep.subr.bf16.mxu0 %v2914
    %4214 = vmatpush1.bf16.msra.mxu0 %v2913
    %4215 = vmatprep.subr.bf16.mxu0 %v2916
    %4216 = vmatpush1.bf16.msra.mxu0 %v2915
    %4217 = vmatprep.subr.bf16.mxu0 %v2918
    %4218 = vmatpush1.bf16.msra.mxu0 %v2917
    %4219 = vmatprep.subr.bf16.mxu0 %v2920
    %4220 = vmatpush1.bf16.msra.mxu0 %v2919
    %4221 = vmatprep.subr.bf16.mxu0 %v2922
    %4222 = vmatpush1.bf16.msra.mxu0 %v2921
    %4223 = vmatprep.subr.bf16.mxu0 %v2924
    %4224 = vmatpush1.bf16.msra.mxu0 %v2923
    %4225 = vmatprep.subr.bf16.mxu0 %v2926
    %4226 = vmatpush1.bf16.msra.mxu0 %v2925
    %4227 = vmatprep.subr.bf16.mxu0 %v2928
    %4228 = vmatpush1.bf16.msra.mxu0 %v2927
    %4229 = vmatprep.subr.bf16.mxu0 %v2930
    %4230 = vmatpush1.bf16.msra.mxu0 %v2929
    %4231 = vmatprep.subr.bf16.mxu0 %v2932
    %4232 = vmatpush1.bf16.msra.mxu0 %v2931
    %4233 = vmatprep.subr.bf16.mxu0 %v2934
    %4234 = vmatpush1.bf16.msra.mxu0 %v2933
    %4235 = vmatprep.subr.bf16.mxu0 %v2936
    %4236 = vmatpush1.bf16.msra.mxu0 %v2935
    %4237 = vmatprep.subr.bf16.mxu0 %v2938
    %4238 = vmatpush1.bf16.msra.mxu0 %v2937
    %4239 = vmatprep.mubr.bf16.mxu0 %v883
    %4240 = vmatmul.mubr.bf16.gmra.mrb[0].mxu0 %v882
    %v4241 = vpop.f32.mrb[0].mxu0
    %v4242 = vadd.f32 %v814, %v4241
    %v4243 = vpop.f32.mrb[0].mxu0
    %v4244 = vadd.f32 %v816, %v4243
    %v4245 = vpop.f32.mrb[0].mxu0
    %v4246 = vpop.f32.mrb[0].mxu0
    %4247 = vdwg.mxu0
    %4248 = vmatprep.subr.bf16.mxu0 %v2940
    %4249 = vmatpush1.bf16.msra.mxu0 %v2939
    %4250 = vmatprep.subr.bf16.mxu0 %v2942
    %4251 = vmatpush1.bf16.msra.mxu0 %v2941
    %4252 = vmatprep.subr.bf16.mxu0 %v2944
    %4253 = vmatpush1.bf16.msra.mxu0 %v2943
    %4254 = vmatprep.subr.bf16.mxu0 %v2946
    %4255 = vmatpush1.bf16.msra.mxu0 %v2945
    %4256 = vmatprep.subr.bf16.mxu0 %v2948
    %4257 = vmatpush1.bf16.msra.mxu0 %v2947
    %4258 = vmatprep.subr.bf16.mxu0 %v2950
    %4259 = vmatpush1.bf16.msra.mxu0 %v2949
    %4260 = vmatprep.subr.bf16.mxu0 %v2952
    %4261 = vmatpush1.bf16.msra.mxu0 %v2951
    %4262 = vmatprep.subr.bf16.mxu0 %v2954
    %4263 = vmatpush1.bf16.msra.mxu0 %v2953
    %4264 = vmatprep.subr.bf16.mxu0 %v2956
    %4265 = vmatpush1.bf16.msra.mxu0 %v2955
    %4266 = vmatprep.subr.bf16.mxu0 %v2958
    %4267 = vmatpush1.bf16.msra.mxu0 %v2957
    %4268 = vmatprep.subr.bf16.mxu0 %v2960
    %4269 = vmatpush1.bf16.msra.mxu0 %v2959
    %4270 = vmatprep.subr.bf16.mxu0 %v2962
    %4271 = vmatpush1.bf16.msra.mxu0 %v2961
    %4272 = vmatprep.subr.bf16.mxu0 %v2964
    %4273 = vmatpush1.bf16.msra.mxu0 %v2963
    %4274 = vmatprep.subr.bf16.mxu0 %v2966
    %4275 = vmatpush1.bf16.msra.mxu0 %v2965
    %4276 = vmatprep.subr.bf16.mxu0 %v2968
    %4277 = vmatpush1.bf16.msra.mxu0 %v2967
    %4278 = vmatprep.subr.bf16.mxu0 %v2970
    %4279 = vmatpush1.bf16.msra.mxu0 %v2969
    %4280 = vmatprep.mubr.bf16.mxu0 %v885
    %4281 = vmatmul.mubr.bf16.gmra.mrb[0].mxu0 %v884
    %v4282 = vpop.f32.mrb[0].mxu0
    %v4283 = vadd.f32 %v4242, %v4282
    %v4284 = vpop.f32.mrb[0].mxu0
    %v4285 = vadd.f32 %v4244, %v4284
    %v4286 = vpop.f32.mrb[0].mxu0
    %v4287 = vpop.f32.mrb[0].mxu0
    %4288 = vdwg.mxu0
    %4289 = vmatprep.subr.bf16.mxu0 %v2972
    %4290 = vmatpush1.bf16.msra.mxu0 %v2971
    %4291 = vmatprep.subr.bf16.mxu0 %v2974
    %4292 = vmatpush1.bf16.msra.mxu0 %v2973
    %4293 = vmatprep.subr.bf16.mxu0 %v2976
    %4294 = vmatpush1.bf16.msra.mxu0 %v2975
    %4295 = vmatprep.subr.bf16.mxu0 %v2978
    %4296 = vmatpush1.bf16.msra.mxu0 %v2977
    %4297 = vmatprep.subr.bf16.mxu0 %v2980
    %4298 = vmatpush1.bf16.msra.mxu0 %v2979
    %4299 = vmatprep.subr.bf16.mxu0 %v2982
    %4300 = vmatpush1.bf16.msra.mxu0 %v2981
    %4301 = vmatprep.subr.bf16.mxu0 %v2984
    %4302 = vmatpush1.bf16.msra.mxu0 %v2983
    %4303 = vmatprep.subr.bf16.mxu0 %v2986
    %4304 = vmatpush1.bf16.msra.mxu0 %v2985
    %4305 = vmatprep.subr.bf16.mxu0 %v2988
    %4306 = vmatpush1.bf16.msra.mxu0 %v2987
    %4307 = vmatprep.subr.bf16.mxu0 %v2990
    %4308 = vmatpush1.bf16.msra.mxu0 %v2989
    %4309 = vmatprep.subr.bf16.mxu0 %v2992
    %4310 = vmatpush1.bf16.msra.mxu0 %v2991
    %4311 = vmatprep.subr.bf16.mxu0 %v2994
    %4312 = vmatpush1.bf16.msra.mxu0 %v2993
    %4313 = vmatprep.subr.bf16.mxu0 %v2996
    %4314 = vmatpush1.bf16.msra.mxu0 %v2995
    %4315 = vmatprep.subr.bf16.mxu0 %v2998
    %4316 = vmatpush1.bf16.msra.mxu0 %v2997
    %4317 = vmatprep.subr.bf16.mxu0 %v3000
    %4318 = vmatpush1.bf16.msra.mxu0 %v2999
    %4319 = vmatprep.subr.bf16.mxu0 %v3002
    %4320 = vmatpush1.bf16.msra.mxu0 %v3001
    %4321 = vmatprep.mubr.bf16.mxu0 %v887
    %4322 = vmatmul.mubr.bf16.gmra.mrb[0].mxu0 %v886
    %v4323 = vpop.f32.mrb[0].mxu0
    %v4324 = vadd.f32 %v4283, %v4323
    %v4325 = vpop.f32.mrb[0].mxu0
    %v4326 = vadd.f32 %v4285, %v4325
    %v4327 = vpop.f32.mrb[0].mxu0
    %v4328 = vpop.f32.mrb[0].mxu0
    %4329 = vdwg.mxu0
    %4330 = vmatprep.subr.bf16.mxu0 %v3004
    %4331 = vmatpush1.bf16.msra.mxu0 %v3003
    %4332 = vmatprep.subr.bf16.mxu0 %v3006
    %4333 = vmatpush1.bf16.msra.mxu0 %v3005
    %4334 = vmatprep.subr.bf16.mxu0 %v3008
    %4335 = vmatpush1.bf16.msra.mxu0 %v3007
    %4336 = vmatprep.subr.bf16.mxu0 %v3010
    %4337 = vmatpush1.bf16.msra.mxu0 %v3009
    %4338 = vmatprep.subr.bf16.mxu0 %v3012
    %4339 = vmatpush1.bf16.msra.mxu0 %v3011
    %4340 = vmatprep.subr.bf16.mxu0 %v3014
    %4341 = vmatpush1.bf16.msra.mxu0 %v3013
    %4342 = vmatprep.subr.bf16.mxu0 %v3016
    %4343 = vmatpush1.bf16.msra.mxu0 %v3015
    %4344 = vmatprep.subr.bf16.mxu0 %v3018
    %4345 = vmatpush1.bf16.msra.mxu0 %v3017
    %4346 = vmatprep.subr.bf16.mxu0 %v3020
    %4347 = vmatpush1.bf16.msra.mxu0 %v3019
    %4348 = vmatprep.subr.bf16.mxu0 %v3022
    %4349 = vmatpush1.bf16.msra.mxu0 %v3021
    %4350 = vmatprep.subr.bf16.mxu0 %v3024
    %4351 = vmatpush1.bf16.msra.mxu0 %v3023
    %4352 = vmatprep.subr.bf16.mxu0 %v3026
    %4353 = vmatpush1.bf16.msra.mxu0 %v3025
    %4354 = vmatprep.subr.bf16.mxu0 %v3028
    %4355 = vmatpush1.bf16.msra.mxu0 %v3027
    %4356 = vmatprep.subr.bf16.mxu0 %v3030
    %4357 = vmatpush1.bf16.msra.mxu0 %v3029
    %4358 = vmatprep.subr.bf16.mxu0 %v3032
    %4359 = vmatpush1.bf16.msra.mxu0 %v3031
    %4360 = vmatprep.subr.bf16.mxu0 %v3034
    %4361 = vmatpush1.bf16.msra.mxu0 %v3033
    %4362 = vmatprep.mubr.bf16.mxu0 %v889
    %4363 = vmatmul.mubr.bf16.gmra.mrb[0].mxu0 %v888
    %v4364 = vpop.f32.mrb[0].mxu0
    %v4365 = vadd.f32 %v4324, %v4364
    %v4366 = vpop.f32.mrb[0].mxu0
    %v4367 = vadd.f32 %v4326, %v4366
    %v4368 = vpop.f32.mrb[0].mxu0
    %v4369 = vpop.f32.mrb[0].mxu0
    %4370 = vdwg.mxu0
    %4371 = vmatprep.subr.bf16.mxu0 %v3036
    %4372 = vmatpush1.bf16.msra.mxu0 %v3035
    %4373 = vmatprep.subr.bf16.mxu0 %v3038
    %4374 = vmatpush1.bf16.msra.mxu0 %v3037
    %4375 = vmatprep.subr.bf16.mxu0 %v3040
    %4376 = vmatpush1.bf16.msra.mxu0 %v3039
    %4377 = vmatprep.subr.bf16.mxu0 %v3042
    %4378 = vmatpush1.bf16.msra.mxu0 %v3041
    %4379 = vmatprep.subr.bf16.mxu0 %v3044
    %4380 = vmatpush1.bf16.msra.mxu0 %v3043
    %4381 = vmatprep.subr.bf16.mxu0 %v3046
    %4382 = vmatpush1.bf16.msra.mxu0 %v3045
    %4383 = vmatprep.subr.bf16.mxu0 %v3048
    %4384 = vmatpush1.bf16.msra.mxu0 %v3047
    %4385 = vmatprep.subr.bf16.mxu0 %v3050
    %4386 = vmatpush1.bf16.msra.mxu0 %v3049
    %4387 = vmatprep.subr.bf16.mxu0 %v3052
    %4388 = vmatpush1.bf16.msra.mxu0 %v3051
    %4389 = vmatprep.subr.bf16.mxu0 %v3054
    %4390 = vmatpush1.bf16.msra.mxu0 %v3053
    %4391 = vmatprep.subr.bf16.mxu0 %v3056
    %4392 = vmatpush1.bf16.msra.mxu0 %v3055
    %4393 = vmatprep.subr.bf16.mxu0 %v3058
    %4394 = vmatpush1.bf16.msra.mxu0 %v3057
    %4395 = vmatprep.subr.bf16.mxu0 %v3060
    %4396 = vmatpush1.bf16.msra.mxu0 %v3059
    %4397 = vmatprep.subr.bf16.mxu0 %v3062
    %4398 = vmatpush1.bf16.msra.mxu0 %v3061
    %4399 = vmatprep.subr.bf16.mxu0 %v3064
    %4400 = vmatpush1.bf16.msra.mxu0 %v3063
    %4401 = vmatprep.subr.bf16.mxu0 %v3066
    %4402 = vmatpush1.bf16.msra.mxu0 %v3065
    %4403 = vmatprep.mubr.bf16.mxu0 %v891
    %4404 = vmatmul.mubr.bf16.gmra.mrb[0].mxu0 %v890
    %v4405 = vpop.f32.mrb[0].mxu0
    %v4406 = vadd.f32 %v4365, %v4405
    %v4407 = vpop.f32.mrb[0].mxu0
    %v4408 = vadd.f32 %v4367, %v4407
    %v4409 = vpop.f32.mrb[0].mxu0
    %v4410 = vpop.f32.mrb[0].mxu0
    %4411 = vdwg.mxu0
    %4412 = vmatprep.subr.bf16.mxu0 %v3068
    %4413 = vmatpush1.bf16.msra.mxu0 %v3067
    %4414 = vmatprep.subr.bf16.mxu0 %v3070
    %4415 = vmatpush1.bf16.msra.mxu0 %v3069
    %4416 = vmatprep.subr.bf16.mxu0 %v3072
    %4417 = vmatpush1.bf16.msra.mxu0 %v3071
    %4418 = vmatprep.subr.bf16.mxu0 %v3074
    %4419 = vmatpush1.bf16.msra.mxu0 %v3073
    %4420 = vmatprep.subr.bf16.mxu0 %v3076
    %4421 = vmatpush1.bf16.msra.mxu0 %v3075
    %4422 = vmatprep.subr.bf16.mxu0 %v3078
    %4423 = vmatpush1.bf16.msra.mxu0 %v3077
    %4424 = vmatprep.subr.bf16.mxu0 %v3080
    %4425 = vmatpush1.bf16.msra.mxu0 %v3079
    %4426 = vmatprep.subr.bf16.mxu0 %v3082
    %4427 = vmatpush1.bf16.msra.mxu0 %v3081
    %4428 = vmatprep.subr.bf16.mxu0 %v3084
    %4429 = vmatpush1.bf16.msra.mxu0 %v3083
    %4430 = vmatprep.subr.bf16.mxu0 %v3086
    %4431 = vmatpush1.bf16.msra.mxu0 %v3085
    %4432 = vmatprep.subr.bf16.mxu0 %v3088
    %4433 = vmatpush1.bf16.msra.mxu0 %v3087
    %4434 = vmatprep.subr.bf16.mxu0 %v3090
    %4435 = vmatpush1.bf16.msra.mxu0 %v3089
    %4436 = vmatprep.subr.bf16.mxu0 %v3092
    %4437 = vmatpush1.bf16.msra.mxu0 %v3091
    %4438 = vmatprep.subr.bf16.mxu0 %v3094
    %4439 = vmatpush1.bf16.msra.mxu0 %v3093
    %4440 = vmatprep.subr.bf16.mxu0 %v3096
    %4441 = vmatpush1.bf16.msra.mxu0 %v3095
    %4442 = vmatprep.subr.bf16.mxu0 %v3098
    %4443 = vmatpush1.bf16.msra.mxu0 %v3097
    %4444 = vmatprep.mubr.bf16.mxu0 %v893
    %4445 = vmatmul.mubr.bf16.gmra.mrb[0].mxu0 %v892
    %v4446 = vpop.f32.mrb[0].mxu0
    %v4447 = vadd.f32 %v4406, %v4446
    %v4448 = vpop.f32.mrb[0].mxu0
    %v4449 = vadd.f32 %v4408, %v4448
    %v4450 = vpop.f32.mrb[0].mxu0
    %v4451 = vpop.f32.mrb[0].mxu0
    %4452 = vdwg.mxu0
    %4453 = vmatprep.subr.bf16.mxu0 %v3100
    %4454 = vmatpush1.bf16.msra.mxu0 %v3099
    %4455 = vmatprep.subr.bf16.mxu0 %v3102
    %4456 = vmatpush1.bf16.msra.mxu0 %v3101
    %4457 = vmatprep.subr.bf16.mxu0 %v3104
    %4458 = vmatpush1.bf16.msra.mxu0 %v3103
    %4459 = vmatprep.subr.bf16.mxu0 %v3106
    %4460 = vmatpush1.bf16.msra.mxu0 %v3105
    %4461 = vmatprep.subr.bf16.mxu0 %v3108
    %4462 = vmatpush1.bf16.msra.mxu0 %v3107
    %4463 = vmatprep.subr.bf16.mxu0 %v3110
    %4464 = vmatpush1.bf16.msra.mxu0 %v3109
    %4465 = vmatprep.subr.bf16.mxu0 %v3112
    %4466 = vmatpush1.bf16.msra.mxu0 %v3111
    %4467 = vmatprep.subr.bf16.mxu0 %v3114
    %4468 = vmatpush1.bf16.msra.mxu0 %v3113
    %4469 = vmatprep.subr.bf16.mxu0 %v3116
    %4470 = vmatpush1.bf16.msra.mxu0 %v3115
    %4471 = vmatprep.subr.bf16.mxu0 %v3118
    %4472 = vmatpush1.bf16.msra.mxu0 %v3117
    %4473 = vmatprep.subr.bf16.mxu0 %v3120
    %4474 = vmatpush1.bf16.msra.mxu0 %v3119
    %4475 = vmatprep.subr.bf16.mxu0 %v3122
    %4476 = vmatpush1.bf16.msra.mxu0 %v3121
    %4477 = vmatprep.subr.bf16.mxu0 %v3124
    %4478 = vmatpush1.bf16.msra.mxu0 %v3123
    %4479 = vmatprep.subr.bf16.mxu0 %v3126
    %4480 = vmatpush1.bf16.msra.mxu0 %v3125
    %4481 = vmatprep.subr.bf16.mxu0 %v3128
    %4482 = vmatpush1.bf16.msra.mxu0 %v3127
    %4483 = vmatprep.subr.bf16.mxu0 %v3130
    %4484 = vmatpush1.bf16.msra.mxu0 %v3129
    %4485 = vmatprep.mubr.bf16.mxu0 %v895
    %4486 = vmatmul.mubr.bf16.gmra.mrb[0].mxu0 %v894
    %v4487 = vpop.f32.mrb[0].mxu0
    %v4488 = vadd.f32 %v4447, %v4487
    %v4489 = vpop.f32.mrb[0].mxu0
    %v4490 = vadd.f32 %v4449, %v4489
    %v4491 = vpop.f32.mrb[0].mxu0
    %v4492 = vpop.f32.mrb[0].mxu0
    %4493 = vdwg.mxu0
    %4494 = vmatprep.subr.bf16.mxu0 %v3132
    %4495 = vmatpush1.bf16.msra.mxu0 %v3131
    %4496 = vmatprep.subr.bf16.mxu0 %v3134
    %4497 = vmatpush1.bf16.msra.mxu0 %v3133
    %4498 = vmatprep.subr.bf16.mxu0 %v3136
    %4499 = vmatpush1.bf16.msra.mxu0 %v3135
    %4500 = vmatprep.subr.bf16.mxu0 %v3138
    %4501 = vmatpush1.bf16.msra.mxu0 %v3137
    %4502 = vmatprep.subr.bf16.mxu0 %v3140
    %4503 = vmatpush1.bf16.msra.mxu0 %v3139
    %4504 = vmatprep.subr.bf16.mxu0 %v3142
    %4505 = vmatpush1.bf16.msra.mxu0 %v3141
    %4506 = vmatprep.subr.bf16.mxu0 %v3144
    %4507 = vmatpush1.bf16.msra.mxu0 %v3143
    %4508 = vmatprep.subr.bf16.mxu0 %v3146
    %4509 = vmatpush1.bf16.msra.mxu0 %v3145
    %4510 = vmatprep.subr.bf16.mxu0 %v3148
    %4511 = vmatpush1.bf16.msra.mxu0 %v3147
    %4512 = vmatprep.subr.bf16.mxu0 %v3150
    %4513 = vmatpush1.bf16.msra.mxu0 %v3149
    %4514 = vmatprep.subr.bf16.mxu0 %v3152
    %4515 = vmatpush1.bf16.msra.mxu0 %v3151
    %4516 = vmatprep.subr.bf16.mxu0 %v3154
    %4517 = vmatpush1.bf16.msra.mxu0 %v3153
    %4518 = vmatprep.subr.bf16.mxu0 %v3156
    %4519 = vmatpush1.bf16.msra.mxu0 %v3155
    %4520 = vmatprep.subr.bf16.mxu0 %v3158
    %4521 = vmatpush1.bf16.msra.mxu0 %v3157
    %4522 = vmatprep.subr.bf16.mxu0 %v3160
    %4523 = vmatpush1.bf16.msra.mxu0 %v3159
    %4524 = vmatprep.subr.bf16.mxu0 %v3162
    %4525 = vmatpush1.bf16.msra.mxu0 %v3161
    %4526 = vmatprep.mubr.bf16.mxu0 %v897
    %4527 = vmatmul.mubr.bf16.gmra.mrb[0].mxu0 %v896
    %v4528 = vpop.f32.mrb[0].mxu0
    %v4529 = vadd.f32 %v4488, %v4528
    %v4530 = vpop.f32.mrb[0].mxu0
    %v4531 = vadd.f32 %v4490, %v4530
    %v4532 = vpop.f32.mrb[0].mxu0
    %v4533 = vpop.f32.mrb[0].mxu0
    %4534 = vdwg.mxu0
    %4535 = vmatprep.subr.bf16.mxu0 %v3164
    %4536 = vmatpush1.bf16.msra.mxu0 %v3163
    %4537 = vmatprep.subr.bf16.mxu0 %v3166
    %4538 = vmatpush1.bf16.msra.mxu0 %v3165
    %4539 = vmatprep.subr.bf16.mxu0 %v3168
    %4540 = vmatpush1.bf16.msra.mxu0 %v3167
    %4541 = vmatprep.subr.bf16.mxu0 %v3170
    %4542 = vmatpush1.bf16.msra.mxu0 %v3169
    %4543 = vmatprep.subr.bf16.mxu0 %v3172
    %4544 = vmatpush1.bf16.msra.mxu0 %v3171
    %4545 = vmatprep.subr.bf16.mxu0 %v3174
    %4546 = vmatpush1.bf16.msra.mxu0 %v3173
    %4547 = vmatprep.subr.bf16.mxu0 %v3176
    %4548 = vmatpush1.bf16.msra.mxu0 %v3175
    %4549 = vmatprep.subr.bf16.mxu0 %v3178
    %4550 = vmatpush1.bf16.msra.mxu0 %v3177
    %4551 = vmatprep.subr.bf16.mxu0 %v3180
    %4552 = vmatpush1.bf16.msra.mxu0 %v3179
    %4553 = vmatprep.subr.bf16.mxu0 %v3182
    %4554 = vmatpush1.bf16.msra.mxu0 %v3181
    %4555 = vmatprep.subr.bf16.mxu0 %v3184
    %4556 = vmatpush1.bf16.msra.mxu0 %v3183
    %4557 = vmatprep.subr.bf16.mxu0 %v3186
    %4558 = vmatpush1.bf16.msra.mxu0 %v3185
    %4559 = vmatprep.subr.bf16.mxu0 %v3188
    %4560 = vmatpush1.bf16.msra.mxu0 %v3187
    %4561 = vmatprep.subr.bf16.mxu0 %v3190
    %4562 = vmatpush1.bf16.msra.mxu0 %v3189
    %4563 = vmatprep.subr.bf16.mxu0 %v3192
    %4564 = vmatpush1.bf16.msra.mxu0 %v3191
    %4565 = vmatprep.subr.bf16.mxu0 %v3194
    %4566 = vmatpush1.bf16.msra.mxu0 %v3193
    %4567 = vmatprep.mubr.bf16.mxu0 %v899
    %4568 = vmatmul.mubr.bf16.gmra.mrb[0].mxu0 %v898
    %v4569 = vpop.f32.mrb[0].mxu0
    %v4570 = vadd.f32 %v4529, %v4569
    %v4571 = vpop.f32.mrb[0].mxu0
    %v4572 = vadd.f32 %v4531, %v4571
    %v4573 = vpop.f32.mrb[0].mxu0
    %v4574 = vpop.f32.mrb[0].mxu0
    %4575 = vdwg.mxu0
    %4576 = vmatprep.subr.bf16.mxu0 %v3196
    %4577 = vmatpush1.bf16.msra.mxu0 %v3195
    %4578 = vmatprep.subr.bf16.mxu0 %v3198
    %4579 = vmatpush1.bf16.msra.mxu0 %v3197
    %4580 = vmatprep.subr.bf16.mxu0 %v3200
    %4581 = vmatpush1.bf16.msra.mxu0 %v3199
    %4582 = vmatprep.subr.bf16.mxu0 %v3202
    %4583 = vmatpush1.bf16.msra.mxu0 %v3201
    %4584 = vmatprep.subr.bf16.mxu0 %v3204
    %4585 = vmatpush1.bf16.msra.mxu0 %v3203
    %4586 = vmatprep.subr.bf16.mxu0 %v3206
    %4587 = vmatpush1.bf16.msra.mxu0 %v3205
    %4588 = vmatprep.subr.bf16.mxu0 %v3208
    %4589 = vmatpush1.bf16.msra.mxu0 %v3207
    %4590 = vmatprep.subr.bf16.mxu0 %v3210
    %4591 = vmatpush1.bf16.msra.mxu0 %v3209
    %4592 = vmatprep.subr.bf16.mxu0 %v3212
    %4593 = vmatpush1.bf16.msra.mxu0 %v3211
    %4594 = vmatprep.subr.bf16.mxu0 %v3214
    %4595 = vmatpush1.bf16.msra.mxu0 %v3213
    %4596 = vmatprep.subr.bf16.mxu0 %v3216
    %4597 = vmatpush1.bf16.msra.mxu0 %v3215
    %4598 = vmatprep.subr.bf16.mxu0 %v3218
    %4599 = vmatpush1.bf16.msra.mxu0 %v3217
    %4600 = vmatprep.subr.bf16.mxu0 %v3220
    %4601 = vmatpush1.bf16.msra.mxu0 %v3219
    %4602 = vmatprep.subr.bf16.mxu0 %v3222
    %4603 = vmatpush1.bf16.msra.mxu0 %v3221
    %4604 = vmatprep.subr.bf16.mxu0 %v3224
    %4605 = vmatpush1.bf16.msra.mxu0 %v3223
    %4606 = vmatprep.subr.bf16.mxu0 %v3226
    %4607 = vmatpush1.bf16.msra.mxu0 %v3225
    %4608 = vmatprep.mubr.bf16.mxu0 %v901
    %4609 = vmatmul.mubr.bf16.gmra.mrb[0].mxu0 %v900
    %v4610 = vpop.f32.mrb[0].mxu0
    %v4611 = vadd.f32 %v4570, %v4610
    %v4612 = vpop.f32.mrb[0].mxu0
    %v4613 = vadd.f32 %v4572, %v4612
    %v4614 = vpop.f32.mrb[0].mxu0
    %v4615 = vpop.f32.mrb[0].mxu0
    %4616 = vdwg.mxu0
    %4617 = vmatprep.subr.bf16.mxu0 %v3228
    %4618 = vmatpush1.bf16.msra.mxu0 %v3227
    %4619 = vmatprep.subr.bf16.mxu0 %v3230
    %4620 = vmatpush1.bf16.msra.mxu0 %v3229
    %4621 = vmatprep.subr.bf16.mxu0 %v3232
    %4622 = vmatpush1.bf16.msra.mxu0 %v3231
    %4623 = vmatprep.subr.bf16.mxu0 %v3234
    %4624 = vmatpush1.bf16.msra.mxu0 %v3233
    %4625 = vmatprep.subr.bf16.mxu0 %v3236
    %4626 = vmatpush1.bf16.msra.mxu0 %v3235
    %4627 = vmatprep.subr.bf16.mxu0 %v3238
    %4628 = vmatpush1.bf16.msra.mxu0 %v3237
    %4629 = vmatprep.subr.bf16.mxu0 %v3240
    %4630 = vmatpush1.bf16.msra.mxu0 %v3239
    %4631 = vmatprep.subr.bf16.mxu0 %v3242
    %4632 = vmatpush1.bf16.msra.mxu0 %v3241
    %4633 = vmatprep.subr.bf16.mxu0 %v3244
    %4634 = vmatpush1.bf16.msra.mxu0 %v3243
    %4635 = vmatprep.subr.bf16.mxu0 %v3246
    %4636 = vmatpush1.bf16.msra.mxu0 %v3245
    %4637 = vmatprep.subr.bf16.mxu0 %v3248
    %4638 = vmatpush1.bf16.msra.mxu0 %v3247
    %4639 = vmatprep.subr.bf16.mxu0 %v3250
    %4640 = vmatpush1.bf16.msra.mxu0 %v3249
    %4641 = vmatprep.subr.bf16.mxu0 %v3252
    %4642 = vmatpush1.bf16.msra.mxu0 %v3251
    %4643 = vmatprep.subr.bf16.mxu0 %v3254
    %4644 = vmatpush1.bf16.msra.mxu0 %v3253
    %4645 = vmatprep.subr.bf16.mxu0 %v3256
    %4646 = vmatpush1.bf16.msra.mxu0 %v3255
    %4647 = vmatprep.subr.bf16.mxu0 %v3258
    %4648 = vmatpush1.bf16.msra.mxu0 %v3257
    %4649 = vmatprep.mubr.bf16.mxu0 %v903
    %4650 = vmatmul.mubr.bf16.gmra.mrb[0].mxu0 %v902
    %v4651 = vpop.f32.mrb[0].mxu0
    %v4652 = vadd.f32 %v4611, %v4651
    %v4653 = vpop.f32.mrb[0].mxu0
    %v4654 = vadd.f32 %v4613, %v4653
    %v4655 = vpop.f32.mrb[0].mxu0
    %v4656 = vpop.f32.mrb[0].mxu0
    %4657 = vdwg.mxu0
    %4658 = vmatprep.subr.bf16.mxu0 %v3260
    %4659 = vmatpush1.bf16.msra.mxu0 %v3259
    %4660 = vmatprep.subr.bf16.mxu0 %v3262
    %4661 = vmatpush1.bf16.msra.mxu0 %v3261
    %4662 = vmatprep.subr.bf16.mxu0 %v3264
    %4663 = vmatpush1.bf16.msra.mxu0 %v3263
    %4664 = vmatprep.subr.bf16.mxu0 %v3266
    %4665 = vmatpush1.bf16.msra.mxu0 %v3265
    %4666 = vmatprep.subr.bf16.mxu0 %v3268
    %4667 = vmatpush1.bf16.msra.mxu0 %v3267
    %4668 = vmatprep.subr.bf16.mxu0 %v3270
    %4669 = vmatpush1.bf16.msra.mxu0 %v3269
    %4670 = vmatprep.subr.bf16.mxu0 %v3272
    %4671 = vmatpush1.bf16.msra.mxu0 %v3271
    %4672 = vmatprep.subr.bf16.mxu0 %v3274
    %4673 = vmatpush1.bf16.msra.mxu0 %v3273
    %4674 = vmatprep.subr.bf16.mxu0 %v3276
    %4675 = vmatpush1.bf16.msra.mxu0 %v3275
    %4676 = vmatprep.subr.bf16.mxu0 %v3278
    %4677 = vmatpush1.bf16.msra.mxu0 %v3277
    %4678 = vmatprep.subr.bf16.mxu0 %v3280
    %4679 = vmatpush1.bf16.msra.mxu0 %v3279
    %4680 = vmatprep.subr.bf16.mxu0 %v3282
    %4681 = vmatpush1.bf16.msra.mxu0 %v3281
    %4682 = vmatprep.subr.bf16.mxu0 %v3284
    %4683 = vmatpush1.bf16.msra.mxu0 %v3283
    %4684 = vmatprep.subr.bf16.mxu0 %v3286
    %4685 = vmatpush1.bf16.msra.mxu0 %v3285
    %4686 = vmatprep.subr.bf16.mxu0 %v3288
    %4687 = vmatpush1.bf16.msra.mxu0 %v3287
    %4688 = vmatprep.subr.bf16.mxu0 %v3290
    %4689 = vmatpush1.bf16.msra.mxu0 %v3289
    %4690 = vmatprep.mubr.bf16.mxu0 %v905
    %4691 = vmatmul.mubr.bf16.gmra.mrb[0].mxu0 %v904
    %v4692 = vpop.f32.mrb[0].mxu0
    %v4693 = vadd.f32 %v4652, %v4692
    %v4694 = vpop.f32.mrb[0].mxu0
    %v4695 = vadd.f32 %v4654, %v4694
    %v4696 = vpop.f32.mrb[0].mxu0
    %v4697 = vpop.f32.mrb[0].mxu0
    %4698 = vdwg.mxu0
    %4699 = vmatprep.subr.bf16.mxu0 %v3292
    %4700 = vmatpush1.bf16.msra.mxu0 %v3291
    %4701 = vmatprep.subr.bf16.mxu0 %v3294
    %4702 = vmatpush1.bf16.msra.mxu0 %v3293
    %4703 = vmatprep.subr.bf16.mxu0 %v3296
    %4704 = vmatpush1.bf16.msra.mxu0 %v3295
    %4705 = vmatprep.subr.bf16.mxu0 %v3298
    %4706 = vmatpush1.bf16.msra.mxu0 %v3297
    %4707 = vmatprep.subr.bf16.mxu0 %v3300
    %4708 = vmatpush1.bf16.msra.mxu0 %v3299
    %4709 = vmatprep.subr.bf16.mxu0 %v3302
    %4710 = vmatpush1.bf16.msra.mxu0 %v3301
    %4711 = vmatprep.subr.bf16.mxu0 %v3304
    %4712 = vmatpush1.bf16.msra.mxu0 %v3303
    %4713 = vmatprep.subr.bf16.mxu0 %v3306
    %4714 = vmatpush1.bf16.msra.mxu0 %v3305
    %4715 = vmatprep.subr.bf16.mxu0 %v3308
    %4716 = vmatpush1.bf16.msra.mxu0 %v3307
    %4717 = vmatprep.subr.bf16.mxu0 %v3310
    %4718 = vmatpush1.bf16.msra.mxu0 %v3309
    %4719 = vmatprep.subr.bf16.mxu0 %v3312
    %4720 = vmatpush1.bf16.msra.mxu0 %v3311
    %4721 = vmatprep.subr.bf16.mxu0 %v3314
    %4722 = vmatpush1.bf16.msra.mxu0 %v3313
    %4723 = vmatprep.subr.bf16.mxu0 %v3316
    %4724 = vmatpush1.bf16.msra.mxu0 %v3315
    %4725 = vmatprep.subr.bf16.mxu0 %v3318
    %4726 = vmatpush1.bf16.msra.mxu0 %v3317
    %4727 = vmatprep.subr.bf16.mxu0 %v3320
    %4728 = vmatpush1.bf16.msra.mxu0 %v3319
    %4729 = vmatprep.subr.bf16.mxu0 %v3322
    %4730 = vmatpush1.bf16.msra.mxu0 %v3321
    %4731 = vmatprep.mubr.bf16.mxu0 %v907
    %4732 = vmatmul.mubr.bf16.gmra.mrb[0].mxu0 %v906
    %v4733 = vpop.f32.mrb[0].mxu0
    %v4734 = vadd.f32 %v4693, %v4733
    %v4735 = vpop.f32.mrb[0].mxu0
    %v4736 = vadd.f32 %v4695, %v4735
    %v4737 = vpop.f32.mrb[0].mxu0
    %v4738 = vpop.f32.mrb[0].mxu0
    %4739 = vdwg.mxu0
    %4740 = vmatprep.subr.bf16.mxu0 %v3324
    %4741 = vmatpush1.bf16.msra.mxu0 %v3323
    %4742 = vmatprep.subr.bf16.mxu0 %v3326
    %4743 = vmatpush1.bf16.msra.mxu0 %v3325
    %4744 = vmatprep.subr.bf16.mxu0 %v3328
    %4745 = vmatpush1.bf16.msra.mxu0 %v3327
    %4746 = vmatprep.subr.bf16.mxu0 %v3330
    %4747 = vmatpush1.bf16.msra.mxu0 %v3329
    %4748 = vmatprep.subr.bf16.mxu0 %v3332
    %4749 = vmatpush1.bf16.msra.mxu0 %v3331
    %4750 = vmatprep.subr.bf16.mxu0 %v3334
    %4751 = vmatpush1.bf16.msra.mxu0 %v3333
    %4752 = vmatprep.subr.bf16.mxu0 %v3336
    %4753 = vmatpush1.bf16.msra.mxu0 %v3335
    %4754 = vmatprep.subr.bf16.mxu0 %v3338
    %4755 = vmatpush1.bf16.msra.mxu0 %v3337
    %4756 = vmatprep.subr.bf16.mxu0 %v3340
    %4757 = vmatpush1.bf16.msra.mxu0 %v3339
    %4758 = vmatprep.subr.bf16.mxu0 %v3342
    %4759 = vmatpush1.bf16.msra.mxu0 %v3341
    %4760 = vmatprep.subr.bf16.mxu0 %v3344
    %4761 = vmatpush1.bf16.msra.mxu0 %v3343
    %4762 = vmatprep.subr.bf16.mxu0 %v3346
    %4763 = vmatpush1.bf16.msra.mxu0 %v3345
    %4764 = vmatprep.subr.bf16.mxu0 %v3348
    %4765 = vmatpush1.bf16.msra.mxu0 %v3347
    %4766 = vmatprep.subr.bf16.mxu0 %v3350
    %4767 = vmatpush1.bf16.msra.mxu0 %v3349
    %4768 = vmatprep.subr.bf16.mxu0 %v3352
    %4769 = vmatpush1.bf16.msra.mxu0 %v3351
    %4770 = vmatprep.subr.bf16.mxu0 %v3354
    %4771 = vmatpush1.bf16.msra.mxu0 %v3353
    %4772 = vmatprep.mubr.bf16.mxu0 %v909
    %4773 = vmatmul.mubr.bf16.gmra.mrb[0].mxu0 %v908
    %v4774 = vpop.f32.mrb[0].mxu0
    %v4775 = vadd.f32 %v4734, %v4774
    %v4776 = vpop.f32.mrb[0].mxu0
    %v4777 = vadd.f32 %v4736, %v4776
    %v4778 = vpop.f32.mrb[0].mxu0
    %v4779 = vpop.f32.mrb[0].mxu0
    %4780 = vdwg.mxu0
    %4781 = vmatprep.subr.bf16.mxu0 %v3356
    %4782 = vmatpush1.bf16.msra.mxu0 %v3355
    %4783 = vmatprep.subr.bf16.mxu0 %v3358
    %4784 = vmatpush1.bf16.msra.mxu0 %v3357
    %4785 = vmatprep.subr.bf16.mxu0 %v3360
    %4786 = vmatpush1.bf16.msra.mxu0 %v3359
    %4787 = vmatprep.subr.bf16.mxu0 %v3362
    %4788 = vmatpush1.bf16.msra.mxu0 %v3361
    %4789 = vmatprep.subr.bf16.mxu0 %v3364
    %4790 = vmatpush1.bf16.msra.mxu0 %v3363
    %4791 = vmatprep.subr.bf16.mxu0 %v3366
    %4792 = vmatpush1.bf16.msra.mxu0 %v3365
    %4793 = vmatprep.subr.bf16.mxu0 %v3368
    %4794 = vmatpush1.bf16.msra.mxu0 %v3367
    %4795 = vmatprep.subr.bf16.mxu0 %v3370
    %4796 = vmatpush1.bf16.msra.mxu0 %v3369
    %4797 = vmatprep.subr.bf16.mxu0 %v3372
    %4798 = vmatpush1.bf16.msra.mxu0 %v3371
    %4799 = vmatprep.subr.bf16.mxu0 %v3374
    %4800 = vmatpush1.bf16.msra.mxu0 %v3373
    %4801 = vmatprep.subr.bf16.mxu0 %v3376
    %4802 = vmatpush1.bf16.msra.mxu0 %v3375
    %4803 = vmatprep.subr.bf16.mxu0 %v3378
    %4804 = vmatpush1.bf16.msra.mxu0 %v3377
    %4805 = vmatprep.subr.bf16.mxu0 %v3380
    %4806 = vmatpush1.bf16.msra.mxu0 %v3379
    %4807 = vmatprep.subr.bf16.mxu0 %v3382
    %4808 = vmatpush1.bf16.msra.mxu0 %v3381
    %4809 = vmatprep.subr.bf16.mxu0 %v3384
    %4810 = vmatpush1.bf16.msra.mxu0 %v3383
    %4811 = vmatprep.subr.bf16.mxu0 %v3386
    %4812 = vmatpush1.bf16.msra.mxu0 %v3385
    %4813 = vmatprep.mubr.bf16.mxu0 %v911
    %4814 = vmatmul.mubr.bf16.gmra.mrb[0].mxu0 %v910
    %v4815 = vpop.f32.mrb[0].mxu0
    %v4816 = vadd.f32 %v4775, %v4815
    %v4817 = vpop.f32.mrb[0].mxu0
    %v4818 = vadd.f32 %v4777, %v4817
    %v4819 = vpop.f32.mrb[0].mxu0
    %v4820 = vpop.f32.mrb[0].mxu0
    %4821 = vdwg.mxu0
    %4822 = vmatprep.subr.bf16.mxu0 %v3388
    %4823 = vmatpush1.bf16.msra.mxu0 %v3387
    %4824 = vmatprep.subr.bf16.mxu0 %v3390
    %4825 = vmatpush1.bf16.msra.mxu0 %v3389
    %4826 = vmatprep.subr.bf16.mxu0 %v3392
    %4827 = vmatpush1.bf16.msra.mxu0 %v3391
    %4828 = vmatprep.subr.bf16.mxu0 %v3394
    %4829 = vmatpush1.bf16.msra.mxu0 %v3393
    %4830 = vmatprep.subr.bf16.mxu0 %v3396
    %4831 = vmatpush1.bf16.msra.mxu0 %v3395
    %4832 = vmatprep.subr.bf16.mxu0 %v3398
    %4833 = vmatpush1.bf16.msra.mxu0 %v3397
    %4834 = vmatprep.subr.bf16.mxu0 %v3400
    %4835 = vmatpush1.bf16.msra.mxu0 %v3399
    %4836 = vmatprep.subr.bf16.mxu0 %v3402
    %4837 = vmatpush1.bf16.msra.mxu0 %v3401
    %4838 = vmatprep.subr.bf16.mxu0 %v3404
    %4839 = vmatpush1.bf16.msra.mxu0 %v3403
    %4840 = vmatprep.subr.bf16.mxu0 %v3406
    %4841 = vmatpush1.bf16.msra.mxu0 %v3405
    %4842 = vmatprep.subr.bf16.mxu0 %v3408
    %4843 = vmatpush1.bf16.msra.mxu0 %v3407
    %4844 = vmatprep.subr.bf16.mxu0 %v3410
    %4845 = vmatpush1.bf16.msra.mxu0 %v3409
    %4846 = vmatprep.subr.bf16.mxu0 %v3412
    %4847 = vmatpush1.bf16.msra.mxu0 %v3411
    %4848 = vmatprep.subr.bf16.mxu0 %v3414
    %4849 = vmatpush1.bf16.msra.mxu0 %v3413
    %4850 = vmatprep.subr.bf16.mxu0 %v3416
    %4851 = vmatpush1.bf16.msra.mxu0 %v3415
    %4852 = vmatprep.subr.bf16.mxu0 %v3418
    %4853 = vmatpush1.bf16.msra.mxu0 %v3417
    %4854 = vmatprep.mubr.bf16.mxu0 %v913
    %4855 = vmatmul.mubr.bf16.gmra.mrb[0].mxu0 %v912
    %v4856 = vpop.f32.mrb[0].mxu0
    %v4857 = vadd.f32 %v4816, %v4856
    %v4858 = vpop.f32.mrb[0].mxu0
    %v4859 = vadd.f32 %v4818, %v4858
    %v4860 = vpop.f32.mrb[0].mxu0
    %v4861 = vpop.f32.mrb[0].mxu0
    %4862 = vdwg.mxu0
    %4863 = vmatprep.subr.bf16.mxu0 %v3420
    %4864 = vmatpush1.bf16.msra.mxu0 %v3419
    %4865 = vmatprep.subr.bf16.mxu0 %v3422
    %4866 = vmatpush1.bf16.msra.mxu0 %v3421
    %4867 = vmatprep.subr.bf16.mxu0 %v3424
    %4868 = vmatpush1.bf16.msra.mxu0 %v3423
    %4869 = vmatprep.subr.bf16.mxu0 %v3426
    %4870 = vmatpush1.bf16.msra.mxu0 %v3425
    %4871 = vmatprep.subr.bf16.mxu0 %v3428
    %4872 = vmatpush1.bf16.msra.mxu0 %v3427
    %4873 = vmatprep.subr.bf16.mxu0 %v3430
    %4874 = vmatpush1.bf16.msra.mxu0 %v3429
    %4875 = vmatprep.subr.bf16.mxu0 %v3432
    %4876 = vmatpush1.bf16.msra.mxu0 %v3431
    %4877 = vmatprep.subr.bf16.mxu0 %v3434
    %4878 = vmatpush1.bf16.msra.mxu0 %v3433
    %4879 = vmatprep.subr.bf16.mxu0 %v3436
    %4880 = vmatpush1.bf16.msra.mxu0 %v3435
    %4881 = vmatprep.subr.bf16.mxu0 %v3438
    %4882 = vmatpush1.bf16.msra.mxu0 %v3437
    %4883 = vmatprep.subr.bf16.mxu0 %v3440
    %4884 = vmatpush1.bf16.msra.mxu0 %v3439
    %4885 = vmatprep.subr.bf16.mxu0 %v3442
    %4886 = vmatpush1.bf16.msra.mxu0 %v3441
    %4887 = vmatprep.subr.bf16.mxu0 %v3444
    %4888 = vmatpush1.bf16.msra.mxu0 %v3443
    %4889 = vmatprep.subr.bf16.mxu0 %v3446
    %4890 = vmatpush1.bf16.msra.mxu0 %v3445
    %4891 = vmatprep.subr.bf16.mxu0 %v3448
    %4892 = vmatpush1.bf16.msra.mxu0 %v3447
    %4893 = vmatprep.subr.bf16.mxu0 %v3450
    %4894 = vmatpush1.bf16.msra.mxu0 %v3449
    %4895 = vmatprep.mubr.bf16.mxu0 %v915
    %4896 = vmatmul.mubr.bf16.gmra.mrb[0].mxu0 %v914
    %v4897 = vpop.f32.mrb[0].mxu0
    %v4898 = vadd.f32 %v4857, %v4897
    %v4899 = vpop.f32.mrb[0].mxu0
    %v4900 = vadd.f32 %v4859, %v4899
    %v4901 = vpop.f32.mrb[0].mxu0
    %v4902 = vpop.f32.mrb[0].mxu0
    %4903 = vdwg.mxu0
    %4904 = vmatprep.subr.bf16.mxu0 %v3452
    %4905 = vmatpush1.bf16.msra.mxu0 %v3451
    %4906 = vmatprep.subr.bf16.mxu0 %v3454
    %4907 = vmatpush1.bf16.msra.mxu0 %v3453
    %4908 = vmatprep.subr.bf16.mxu0 %v3456
    %4909 = vmatpush1.bf16.msra.mxu0 %v3455
    %4910 = vmatprep.subr.bf16.mxu0 %v3458
    %4911 = vmatpush1.bf16.msra.mxu0 %v3457
    %4912 = vmatprep.subr.bf16.mxu0 %v3460
    %4913 = vmatpush1.bf16.msra.mxu0 %v3459
    %4914 = vmatprep.subr.bf16.mxu0 %v3462
    %4915 = vmatpush1.bf16.msra.mxu0 %v3461
    %4916 = vmatprep.subr.bf16.mxu0 %v3464
    %4917 = vmatpush1.bf16.msra.mxu0 %v3463
    %4918 = vmatprep.subr.bf16.mxu0 %v3466
    %4919 = vmatpush1.bf16.msra.mxu0 %v3465
    %4920 = vmatprep.subr.bf16.mxu0 %v3468
    %4921 = vmatpush1.bf16.msra.mxu0 %v3467
    %4922 = vmatprep.subr.bf16.mxu0 %v3470
    %4923 = vmatpush1.bf16.msra.mxu0 %v3469
    %4924 = vmatprep.subr.bf16.mxu0 %v3472
    %4925 = vmatpush1.bf16.msra.mxu0 %v3471
    %4926 = vmatprep.subr.bf16.mxu0 %v3474
    %4927 = vmatpush1.bf16.msra.mxu0 %v3473
    %4928 = vmatprep.subr.bf16.mxu0 %v3476
    %4929 = vmatpush1.bf16.msra.mxu0 %v3475
    %4930 = vmatprep.subr.bf16.mxu0 %v3478
    %4931 = vmatpush1.bf16.msra.mxu0 %v3477
    %4932 = vmatprep.subr.bf16.mxu0 %v3480
    %4933 = vmatpush1.bf16.msra.mxu0 %v3479
    %4934 = vmatprep.subr.bf16.mxu0 %v3482
    %4935 = vmatpush1.bf16.msra.mxu0 %v3481
    %4936 = vmatprep.mubr.bf16.mxu0 %v917
    %4937 = vmatmul.mubr.bf16.gmra.mrb[0].mxu0 %v916
    %v4938 = vpop.f32.mrb[0].mxu0
    %v4939 = vadd.f32 %v4898, %v4938
    %v4940 = vpop.f32.mrb[0].mxu0
    %v4941 = vadd.f32 %v4900, %v4940
    %v4942 = vpop.f32.mrb[0].mxu0
    %v4943 = vpop.f32.mrb[0].mxu0
    %4944 = vdwg.mxu0
    %4945 = vmatprep.subr.bf16.mxu0 %v3484
    %4946 = vmatpush1.bf16.msra.mxu0 %v3483
    %4947 = vmatprep.subr.bf16.mxu0 %v3486
    %4948 = vmatpush1.bf16.msra.mxu0 %v3485
    %4949 = vmatprep.subr.bf16.mxu0 %v3488
    %4950 = vmatpush1.bf16.msra.mxu0 %v3487
    %4951 = vmatprep.subr.bf16.mxu0 %v3490
    %4952 = vmatpush1.bf16.msra.mxu0 %v3489
    %4953 = vmatprep.subr.bf16.mxu0 %v3492
    %4954 = vmatpush1.bf16.msra.mxu0 %v3491
    %4955 = vmatprep.subr.bf16.mxu0 %v3494
    %4956 = vmatpush1.bf16.msra.mxu0 %v3493
    %4957 = vmatprep.subr.bf16.mxu0 %v3496
    %4958 = vmatpush1.bf16.msra.mxu0 %v3495
    %4959 = vmatprep.subr.bf16.mxu0 %v3498
    %4960 = vmatpush1.bf16.msra.mxu0 %v3497
    %4961 = vmatprep.subr.bf16.mxu0 %v3500
    %4962 = vmatpush1.bf16.msra.mxu0 %v3499
    %4963 = vmatprep.subr.bf16.mxu0 %v3502
    %4964 = vmatpush1.bf16.msra.mxu0 %v3501
    %4965 = vmatprep.subr.bf16.mxu0 %v3504
    %4966 = vmatpush1.bf16.msra.mxu0 %v3503
    %4967 = vmatprep.subr.bf16.mxu0 %v3506
    %4968 = vmatpush1.bf16.msra.mxu0 %v3505
    %4969 = vmatprep.subr.bf16.mxu0 %v3508
    %4970 = vmatpush1.bf16.msra.mxu0 %v3507
    %4971 = vmatprep.subr.bf16.mxu0 %v3510
    %4972 = vmatpush1.bf16.msra.mxu0 %v3509
    %4973 = vmatprep.subr.bf16.mxu0 %v3512
    %4974 = vmatpush1.bf16.msra.mxu0 %v3511
    %4975 = vmatprep.subr.bf16.mxu0 %v3514
    %4976 = vmatpush1.bf16.msra.mxu0 %v3513
    %4977 = vmatprep.mubr.bf16.mxu0 %v919
    %4978 = vmatmul.mubr.bf16.gmra.mrb[0].mxu0 %v918
    %v4979 = vpop.f32.mrb[0].mxu0
    %v4980 = vadd.f32 %v4939, %v4979
    %v4981 = vpop.f32.mrb[0].mxu0
    %v4982 = vadd.f32 %v4941, %v4981
    %v4983 = vpop.f32.mrb[0].mxu0
    %v4984 = vpop.f32.mrb[0].mxu0
    %4985 = vdwg.mxu0
    %4986 = vmatprep.subr.bf16.mxu0 %v3516
    %4987 = vmatpush1.bf16.msra.mxu0 %v3515
    %4988 = vmatprep.subr.bf16.mxu0 %v3518
    %4989 = vmatpush1.bf16.msra.mxu0 %v3517
    %4990 = vmatprep.subr.bf16.mxu0 %v3520
    %4991 = vmatpush1.bf16.msra.mxu0 %v3519
    %4992 = vmatprep.subr.bf16.mxu0 %v3522
    %4993 = vmatpush1.bf16.msra.mxu0 %v3521
    %4994 = vmatprep.subr.bf16.mxu0 %v3524
    %4995 = vmatpush1.bf16.msra.mxu0 %v3523
    %4996 = vmatprep.subr.bf16.mxu0 %v3526
    %4997 = vmatpush1.bf16.msra.mxu0 %v3525
    %4998 = vmatprep.subr.bf16.mxu0 %v3528
    %4999 = vmatpush1.bf16.msra.mxu0 %v3527
    %5000 = vmatprep.subr.bf16.mxu0 %v3530
    %5001 = vmatpush1.bf16.msra.mxu0 %v3529
    %5002 = vmatprep.subr.bf16.mxu0 %v3532
    %5003 = vmatpush1.bf16.msra.mxu0 %v3531
    %5004 = vmatprep.subr.bf16.mxu0 %v3534
    %5005 = vmatpush1.bf16.msra.mxu0 %v3533
    %5006 = vmatprep.subr.bf16.mxu0 %v3536
    %5007 = vmatpush1.bf16.msra.mxu0 %v3535
    %5008 = vmatprep.subr.bf16.mxu0 %v3538
    %5009 = vmatpush1.bf16.msra.mxu0 %v3537
    %5010 = vmatprep.subr.bf16.mxu0 %v3540
    %5011 = vmatpush1.bf16.msra.mxu0 %v3539
    %5012 = vmatprep.subr.bf16.mxu0 %v3542
    %5013 = vmatpush1.bf16.msra.mxu0 %v3541
    %5014 = vmatprep.subr.bf16.mxu0 %v3544
    %5015 = vmatpush1.bf16.msra.mxu0 %v3543
    %5016 = vmatprep.subr.bf16.mxu0 %v3546
    %5017 = vmatpush1.bf16.msra.mxu0 %v3545
    %5018 = vmatprep.mubr.bf16.mxu0 %v921
    %5019 = vmatmul.mubr.bf16.gmra.mrb[0].mxu0 %v920
    %v5020 = vpop.f32.mrb[0].mxu0
    %v5021 = vadd.f32 %v4980, %v5020
    %v5022 = vpop.f32.mrb[0].mxu0
    %v5023 = vadd.f32 %v4982, %v5022
    %v5024 = vpop.f32.mrb[0].mxu0
    %v5025 = vpop.f32.mrb[0].mxu0
    %5026 = vdwg.mxu0
    %5027 = vmatprep.subr.bf16.mxu0 %v3548
    %5028 = vmatpush1.bf16.msra.mxu0 %v3547
    %5029 = vmatprep.subr.bf16.mxu0 %v3550
    %5030 = vmatpush1.bf16.msra.mxu0 %v3549
    %5031 = vmatprep.subr.bf16.mxu0 %v3552
    %5032 = vmatpush1.bf16.msra.mxu0 %v3551
    %5033 = vmatprep.subr.bf16.mxu0 %v3554
    %5034 = vmatpush1.bf16.msra.mxu0 %v3553
    %5035 = vmatprep.subr.bf16.mxu0 0
    %5036 = vmatpush1.bf16.msra.mxu0 0
    %5037 = vmatprep.subr.bf16.mxu0 0
    %5038 = vmatpush1.bf16.msra.mxu0 0
    %5039 = vmatprep.subr.bf16.mxu0 0
    %5040 = vmatpush1.bf16.msra.mxu0 0
    %5041 = vmatprep.subr.bf16.mxu0 0
    %5042 = vmatpush1.bf16.msra.mxu0 0
    %5043 = vmatprep.subr.bf16.mxu0 0
    %5044 = vmatpush1.bf16.msra.mxu0 0
    %5045 = vmatprep.subr.bf16.mxu0 0
    %5046 = vmatpush1.bf16.msra.mxu0 0
    %5047 = vmatprep.subr.bf16.mxu0 0
    %5048 = vmatpush1.bf16.msra.mxu0 0
    %5049 = vmatprep.subr.bf16.mxu0 0
    %5050 = vmatpush1.bf16.msra.mxu0 0
    %5051 = vmatprep.subr.bf16.mxu0 0
    %5052 = vmatpush1.bf16.msra.mxu0 0
    %5053 = vmatprep.subr.bf16.mxu0 0
    %5054 = vmatpush1.bf16.msra.mxu0 0
    %5055 = vmatprep.subr.bf16.mxu0 0
    %5056 = vmatpush1.bf16.msra.mxu0 0
    %5057 = vmatprep.subr.bf16.mxu0 0
    %5058 = vmatpush1.bf16.msra.mxu0 0
    %5059 = vmatprep.mubr.bf16.mxu0 0
    %5060 = vmatmul.mubr.bf16.gmra.mrb[0].mxu0 %v4205
    %v5061 = vpop.f32.mrb[0].mxu0
    %v5062 = vadd.f32 %v5021, %v5061
    %v5063 = vpop.f32.mrb[0].mxu0
    %v5064 = vadd.f32 %v5023, %v5063
    %v5065 = vpop.f32.mrb[0].mxu0
    %v5066 = vpop.f32.mrb[0].mxu0
    %5067 = vdwg.mxu0
    %v5068 = vld [vmem:[#allocation7] sm:$0x3]
    %v5070 = vlaneseq
    %v5071 = vshrl.u32 %v5070, 7
    %v5072 = vsub.s32 0, %v5071
    %v5073 = vrot.slane %v5068, %v5072
    %v5074 = vlaneseq
    %v5075 = vshrl.u32 %v5074, 7
    %v5076 = vsub.s32 1, %v5075
    %v5077 = vrot.slane %v5068, %v5076
    %v5080 = vadd.f32 %v5062, %v5073
    %v5081 = vadd.f32 %v5064, %v5077
    %v5082 = vmax.f32 %v5080, 0.0
    %v5083 = vmax.f32 %v5081, 0.0
    %v5084 = vpack.c.bf16 %v5082, %v5082
    %v5085 = vpack.c.bf16 %v5083, %v5083
    %v5086 = vld [vmem:[%s5] sm:$0xf]
    %v5087 = vld [vmem:[%s5 + $0x4] sm:$0xf]
    %v5088 = vld [vmem:[%s5 + $0x8] sm:$0xf]
    %v5089 = vld [vmem:[%s5 + $0xc] sm:$0xf]
    %v5090 = vld [vmem:[%s5 + $0x10] sm:$0xf]
    %v5091 = vld [vmem:[%s5 + $0x14] sm:$0xf]
    %v5092 = vld [vmem:[%s5 + $0x18] sm:$0xf]
    %v5093 = vld [vmem:[%s5 + $0x1c] sm:$0xf]
    %v5094 = vld [vmem:[%s5 + $0x20] sm:$0xf]
    %v5095 = vld [vmem:[%s5 + $0x24] sm:$0xf]
    %v5096 = vld [vmem:[%s5 + $0x28] sm:$0xf]
    %v5097 = vld [vmem:[%s5 + $0x2c] sm:$0xf]
    %v5098 = vld [vmem:[%s5 + $0x30] sm:$0xf]
    %v5099 = vld [vmem:[%s5 + $0x34] sm:$0xf]
    %v5100 = vld [vmem:[%s5 + $0x38] sm:$0xf]
    %v5101 = vld [vmem:[%s5 + $0x3c] sm:$0xf]
    %v5102 = vld [vmem:[%s5 + $0x40] sm:$0xf]
    %v5103 = vld [vmem:[%s5 + $0x44] sm:$0xf]
    %v5104 = vld [vmem:[%s5 + $0x48] sm:$0xf]
    %v5105 = vld [vmem:[%s5 + $0x4c] sm:$0xf]
    %v5106 = vld [vmem:[%s5 + $0x50] sm:$0xf]
    %v5107 = vld [vmem:[%s5 + $0x54] sm:$0xf]
    %v5108 = vld [vmem:[%s5 + $0x58] sm:$0xf]
    %v5109 = vld [vmem:[%s5 + $0x5c] sm:$0xf]
    %v5110 = vld [vmem:[%s5 + $0x60] sm:$0xf]
    %v5111 = vld [vmem:[%s5 + $0x64] sm:$0xf]
    %v5112 = vld [vmem:[%s5 + $0x68] sm:$0xf]
    %v5113 = vld [vmem:[%s5 + $0x6c] sm:$0xf]
    %v5114 = vld [vmem:[%s5 + $0x70] sm:$0xf]
    %v5115 = vld [vmem:[%s5 + $0x74] sm:$0xf]
    %v5116 = vld [vmem:[%s5 + $0x78] sm:$0xf]
    %v5117 = vld [vmem:[%s5 + $0x7c] sm:$0xf]
    %v5118 = vld [vmem:[#allocation8] sm:$0x1]
    %v5120 = vlaneseq
    %v5121 = vshrl.u32 %v5120, 7
    %v5122 = vsub.s32 0, %v5121
    %v5123 = vrot.slane %v5118, %v5122
    %v5157 = vunpack.c.l.b16 %v5086
    %v5158 = vunpack.c.l.b16 %v5087
    %v5159 = vunpack.c.l.b16 %v5088
    %v5160 = vunpack.c.l.b16 %v5089
    %v5161 = vunpack.c.l.b16 %v5090
    %v5162 = vunpack.c.l.b16 %v5091
    %v5163 = vunpack.c.l.b16 %v5092
    %v5164 = vunpack.c.l.b16 %v5093
    %v5165 = vunpack.c.l.b16 %v5094
    %v5166 = vunpack.c.l.b16 %v5095
    %v5167 = vunpack.c.l.b16 %v5096
    %v5168 = vunpack.c.l.b16 %v5097
    %v5169 = vunpack.c.l.b16 %v5098
    %v5170 = vunpack.c.l.b16 %v5099
    %v5171 = vunpack.c.l.b16 %v5100
    %v5172 = vunpack.c.l.b16 %v5101
    %v5173 = vunpack.c.l.b16 %v5102
    %v5174 = vunpack.c.l.b16 %v5103
    %v5175 = vunpack.c.l.b16 %v5104
    %v5176 = vunpack.c.l.b16 %v5105
    %v5177 = vunpack.c.l.b16 %v5106
    %v5178 = vunpack.c.l.b16 %v5107
    %v5179 = vunpack.c.l.b16 %v5108
    %v5180 = vunpack.c.l.b16 %v5109
    %v5181 = vunpack.c.l.b16 %v5110
    %v5182 = vunpack.c.l.b16 %v5111
    %v5183 = vunpack.c.l.b16 %v5112
    %v5184 = vunpack.c.l.b16 %v5113
    %v5185 = vunpack.c.l.b16 %v5114
    %v5186 = vunpack.c.l.b16 %v5115
    %v5187 = vunpack.c.l.b16 %v5116
    %v5188 = vunpack.c.l.b16 %v5117
    %v5189 = vpack.c.b16 %v5158, %v5157
    %v5190 = vpack.c.b16 %v5160, %v5159
    %v5191 = vpack.c.b16 %v5162, %v5161
    %v5192 = vpack.c.b16 %v5164, %v5163
    %v5193 = vpack.c.b16 %v5166, %v5165
    %v5194 = vpack.c.b16 %v5168, %v5167
    %v5195 = vpack.c.b16 %v5170, %v5169
    %v5196 = vpack.c.b16 %v5172, %v5171
    %v5197 = vpack.c.b16 %v5174, %v5173
    %v5198 = vpack.c.b16 %v5176, %v5175
    %v5199 = vpack.c.b16 %v5178, %v5177
    %v5200 = vpack.c.b16 %v5180, %v5179
    %v5201 = vpack.c.b16 %v5182, %v5181
    %v5202 = vpack.c.b16 %v5184, %v5183
    %v5203 = vpack.c.b16 %v5186, %v5185
    %v5204 = vpack.c.b16 %v5188, %v5187
    %5221 = vmatprep.subr.bf16.mxu0 0
    %5222 = vmatpush1.bf16.msra.mxu0 %v5189
    %5223 = vmatprep.subr.bf16.mxu0 0
    %5224 = vmatpush1.bf16.msra.mxu0 %v5190
    %5225 = vmatprep.subr.bf16.mxu0 0
    %5226 = vmatpush1.bf16.msra.mxu0 %v5191
    %5227 = vmatprep.subr.bf16.mxu0 0
    %5228 = vmatpush1.bf16.msra.mxu0 %v5192
    %5229 = vmatprep.subr.bf16.mxu0 0
    %5230 = vmatpush1.bf16.msra.mxu0 %v5193
    %5231 = vmatprep.subr.bf16.mxu0 0
    %5232 = vmatpush1.bf16.msra.mxu0 %v5194
    %5233 = vmatprep.subr.bf16.mxu0 0
    %5234 = vmatpush1.bf16.msra.mxu0 %v5195
    %5235 = vmatprep.subr.bf16.mxu0 0
    %5236 = vmatpush1.bf16.msra.mxu0 %v5196
    %5237 = vmatprep.subr.bf16.mxu0 0
    %5238 = vmatpush1.bf16.msra.mxu0 %v5197
    %5239 = vmatprep.subr.bf16.mxu0 0
    %5240 = vmatpush1.bf16.msra.mxu0 %v5198
    %5241 = vmatprep.subr.bf16.mxu0 0
    %5242 = vmatpush1.bf16.msra.mxu0 %v5199
    %5243 = vmatprep.subr.bf16.mxu0 0
    %5244 = vmatpush1.bf16.msra.mxu0 %v5200
    %5245 = vmatprep.subr.bf16.mxu0 0
    %5246 = vmatpush1.bf16.msra.mxu0 %v5201
    %5247 = vmatprep.subr.bf16.mxu0 0
    %5248 = vmatpush1.bf16.msra.mxu0 %v5202
    %5249 = vmatprep.subr.bf16.mxu0 0
    %5250 = vmatpush1.bf16.msra.mxu0 %v5203
    %5251 = vmatprep.subr.bf16.mxu0 0
    %5252 = vmatpush1.bf16.msra.mxu0 %v5204
    %5253 = vmatprep.mubr.bf16.mxu0 %v5085
    %5254 = vmatmul.mubr.bf16.gmra.mrb[0].mxu0 %v5084
    %v5255 = vpop.f32.mrb[0].mxu0
    %v5256 = vadd.f32 %v5123, %v5255
    %v5257 = vpop.f32.mrb[0].mxu0
    %v5258 = vpop.f32.mrb[0].mxu0
    %v5259 = vpop.f32.mrb[0].mxu0
    %5260 = vdwg.mxu0
    %v5261 = vmax.f32 %v5256, 0.0
    %v5262 = vpack.c.bf16 %v5261, %v5261
    %v5263 = vld [vmem:[%s7] sm:$0xf]
    %v5264 = vld [vmem:[%s7 + $0x4] sm:$0xf]
    %v5265 = vld [vmem:[%s7 + $0x8] sm:$0xf]
    %v5266 = vld [vmem:[%s7 + $0xc] sm:$0xf]
    %v5267 = vld [vmem:[%s7 + $0x10] sm:$0xf]
    %v5268 = vld [vmem:[%s7 + $0x14] sm:$0xf]
    %v5269 = vld [vmem:[%s7 + $0x18] sm:$0xf]
    %v5270 = vld [vmem:[%s7 + $0x1c] sm:$0xf]
    %v5271 = vld [vmem:[#allocation2] sm:$0x1]
    %v5273 = vlaneseq
    %v5274 = vshrl.u32 %v5273, 7
    %v5275 = vsub.s32 0, %v5274
    %v5276 = vrot.slane %v5271, %v5275
    %v5286 = vunpack.c.l.b16 %v5263
    %v5287 = vunpack.c.l.b16 %v5264
    %v5288 = vunpack.c.l.b16 %v5265
    %v5289 = vunpack.c.l.b16 %v5266
    %v5290 = vunpack.c.l.b16 %v5267
    %v5291 = vunpack.c.l.b16 %v5268
    %v5292 = vunpack.c.l.b16 %v5269
    %v5293 = vunpack.c.l.b16 %v5270
    %v5294 = vpack.c.b16 %v5287, %v5286
    %v5295 = vpack.c.b16 %v5289, %v5288
    %v5296 = vpack.c.b16 %v5291, %v5290
    %v5297 = vpack.c.b16 %v5293, %v5292
    %v5303 = vsel %vm4203, %v5262, 0
    %5305 = vmatprep.subr.bf16.mxu0 0
    %5306 = vmatpush1.bf16.msra.mxu0 %v5294
    %5307 = vmatprep.subr.bf16.mxu0 0
    %5308 = vmatpush1.bf16.msra.mxu0 %v5295
    %5309 = vmatprep.subr.bf16.mxu0 0
    %5310 = vmatpush1.bf16.msra.mxu0 %v5296
    %5311 = vmatprep.subr.bf16.mxu0 0
    %5312 = vmatpush1.bf16.msra.mxu0 %v5297
    %5313 = vmatprep.subr.bf16.mxu0 0
    %5314 = vmatpush1.bf16.msra.mxu0 0
    %5315 = vmatprep.subr.bf16.mxu0 0
    %5316 = vmatpush1.bf16.msra.mxu0 0
    %5317 = vmatprep.subr.bf16.mxu0 0
    %5318 = vmatpush1.bf16.msra.mxu0 0
    %5319 = vmatprep.subr.bf16.mxu0 0
    %5320 = vmatpush1.bf16.msra.mxu0 0
    %5321 = vmatprep.subr.bf16.mxu0 0
    %5322 = vmatpush1.bf16.msra.mxu0 0
    %5323 = vmatprep.subr.bf16.mxu0 0
    %5324 = vmatpush1.bf16.msra.mxu0 0
    %5325 = vmatprep.subr.bf16.mxu0 0
    %5326 = vmatpush1.bf16.msra.mxu0 0
    %5327 = vmatprep.subr.bf16.mxu0 0
    %5328 = vmatpush1.bf16.msra.mxu0 0
    %5329 = vmatprep.subr.bf16.mxu0 0
    %5330 = vmatpush1.bf16.msra.mxu0 0
    %5331 = vmatprep.subr.bf16.mxu0 0
    %5332 = vmatpush1.bf16.msra.mxu0 0
    %5333 = vmatprep.subr.bf16.mxu0 0
    %5334 = vmatpush1.bf16.msra.mxu0 0
    %5335 = vmatprep.subr.bf16.mxu0 0
    %5336 = vmatpush1.bf16.msra.mxu0 0
    %5337 = vmatprep.mubr.bf16.mxu0 0
    %5338 = vmatmul.mubr.bf16.gmra.mrb[0].mxu0 %v5303
    %v5339 = vpop.f32.mrb[0].mxu0
    %v5340 = vadd.f32 %v5276, %v5339
    %v5341 = vpop.f32.mrb[0].mxu0
    %v5342 = vpop.f32.mrb[0].mxu0
    %v5343 = vpop.f32.mrb[0].mxu0
    %5344 = vdwg.mxu0
    %vm5345 = vcmask 7168
    %5346 = vst.msk [vmem:[%s9] sm:$0xff] %vm5345, %v5340
    // Predicated region
    $region54: #{scoring_forward.3} parent=1 // pred_check
      _
    $region55: #{scoring_forward.3} parent=1 // pred_check_branch
      %5348 = sbr.rel (0) target = $region57
    $region56: #{scoring_forward.3} parent=1 // pred_region
      _
    $region57: #{scoring_forward.3} parent=1 // pred_fallthru
      _
    // Predicated region
    $region58: #{scoring_forward.3} parent=1 // pred_check
      _
    $region59: #{scoring_forward.3} parent=1 // pred_check_branch
      %5350 = sbr.rel (0) target = $region61
    $region60: #{scoring_forward.3} parent=1 // pred_region
      _
    $region61: #{scoring_forward.3} parent=1 // pred_fallthru
      _
    %5351 = vsyncpa [#allocation4], 1
    %5352 = vsyncpa [#allocation6], 1
    %5353 = vsyncpa [#allocation9], 1

</llo_original>
